<compile_context>
chip_gen: v7x
topology: tpu7x:2x2x1
jax: 0.10.0
libtpu: 0.0.40
codegen_flags: <defaults>
</compile_context>

<pallas_src>
import numpy as np

import jax
import jax.numpy as jnp
from jax.experimental import pallas as pl
from jax.experimental.pallas import tpu as pltpu


# ----------------------------------------------------------------------------
# Fused forward kernel (whole network, B_TILE batch elements per grid step)
# ----------------------------------------------------------------------------
def _make_kernel(S, P, B, C):
    SC, PC, S8 = S * C, P * C, S * 8
    f32, bf16 = jnp.float32, jnp.bfloat16

    def kernel(x_ref,
               t_e1, b_e1, t_e2, b_e2, w1h, b1, w2h, b2h,
               t_d1, b_d1, t_d2, b_d2, t_d3, b_d3,
               out_ref,
               padx, pe1, pz, pd1, pd2):

        def conv3(pad_ref, taps_ref, bias_ref, kin, nout, relu=True):
            # pad_ref : (B, S+2, kin) bf16, rows 1..S hold the input, rows 0/S+1 zero
            # taps_ref: (3, kin, nout) bf16 band matrices (kw shift folded in)
            acc = jnp.zeros((B * S, nout), f32) + bias_ref[...]
            for a in range(3):
                x_a = pad_ref[:, a:a + S, :].reshape(B * S, kin)
                acc = acc + jnp.dot(x_a, taps_ref[a],
                                    preferred_element_type=f32)
            if relu:
                acc = jnp.maximum(acc, 0.0)
            return acc                                        # f32 (B*S, nout)

        # ---- scratch hygiene: zero only what interior writes don't cover ----
        for r in (padx, pe1, pd1, pd2):
            z = jnp.zeros((B, r.shape[2]), r.dtype)
            r[:, 0, :] = z
            r[:, S + 1, :] = z
        pz[...] = jnp.zeros(pz.shape, pz.dtype)               # stuffed rows must be 0

        # ------------------------------ encoder ------------------------------
        padx[:, 1:S + 1, :] = x_ref[...].astype(bf16)
        e1 = conv3(padx, t_e1, b_e1, S, SC)                   # Conv2d(1,16)+ReLU
        pe1[:, 1:S + 1, :] = e1.reshape(B, S, SC).astype(bf16)
        e2 = conv3(pe1, t_e2, b_e2, SC, PC)                   # Conv2d(16,16,s=2)+ReLU
        # (full-resolution rows; stride-2 row subsample happens in lin1 below,
        #  stride-2 column subsample is folded into t_e2 -> compact P*C lanes)

        # -------------------------- linear bottleneck ------------------------
        e2b = e2.astype(bf16).reshape(B, S, PC)
        acc1 = jnp.zeros((B, 100), f32) + b1[...]
        for i in range(P):
            acc1 = acc1 + jnp.dot(e2b[:, 2 * i, :], w1h[i],
                                  preferred_element_type=f32)
        y1 = jnp.maximum(acc1, 0.0).astype(bf16)              # Linear+ReLU, (B,100)

        for i in range(P):                                    # Linear+ReLU, written as
            row = jnp.dot(y1, w2h[i],                          # the vertically-stuffed
                          preferred_element_type=f32) + b2h[i:i + 1, :]
            pz[:, 1 + 2 * i, :] = jnp.maximum(row, 0.0).astype(bf16)

        # ------------------------------ decoder ------------------------------
        d1 = conv3(pz, t_d1, b_d1, PC, SC)                    # ConvTranspose2d+ReLU
        pd1[:, 1:S + 1, :] = d1.reshape(B, S, SC).astype(bf16)
        d2 = conv3(pd1, t_d2, b_d2, SC, S8)                   # Conv2d(16,8)+ReLU
        pd2[:, 1:S + 1, :] = d2.reshape(B, S, S8).astype(bf16)
        d3 = conv3(pd2, t_d3, b_d3, S8, S)                    # Conv2d(8,1)+ReLU

        out_ref[...] = d3.reshape(B, S, S)                    # pre-softmax logits

    return kernel


# ----------------------------------------------------------------------------
# Host-side one-time weight prep (band/shift-folded conv weights, merged biases)
# ----------------------------------------------------------------------------
def prepare_kernel_params(params, field_size):
    S = int(field_size)
    P = S // 2
    C = 16
    bf16 = jnp.bfloat16

    def band_taps(w_oihw, win_blocks, wout_blocks, sel_fn):
        # W_a[j*Cin+ci, wo*Cout+co] = sum_b [sel_fn(wo,b)==j] * w[co,ci,a,b]
        w = np.asarray(w_oihw, np.float32)                    # (Cout, Cin, 3, 3)
        cout, cin = int(w.shape[0]), int(w.shape[1])
        taps = np.zeros((3, win_blocks * cin, wout_blocks * cout), np.float32)
        for a in range(3):
            for b in range(3):
                m = w[:, :, a, b].T                           # (Cin, Cout)
                for wo in range(wout_blocks):
                    j = sel_fn(wo, b)
                    if j is None or j < 0 or j >= win_blocks:
                        continue
                    taps[a, j * cin:(j + 1) * cin, wo * cout:(wo + 1) * cout] += m
        return jnp.asarray(taps, bf16)

    sel_same = lambda wo, b: wo + b - 1                       # stride-1, pad-1 conv
    sel_down2 = lambda wo, b: 2 * wo + b - 1                  # stride-2 conv, even cols

    def sel_up2(wo, b):                                       # stride-2 transposed conv,
        s = wo + b - 1                                        # horizontal stuffing folded
        return s // 2 if s % 2 == 0 else None

    def merged_bias(bvec, wout):
        return jnp.asarray(np.tile(np.asarray(bvec, np.float32), wout).reshape(1, -1))

    # ConvTranspose2d(Cin,Cout,3,3) -> equivalent stride-1 conv weight (OIHW).
    w_d1 = np.flip(np.asarray(params["dec1_w"], np.float32), axis=(2, 3)
                   ).transpose(1, 0, 2, 3)

    # lin1 (torch (100, 16*P*P), in-index c*P*P + i*P + j) -> per bottleneck row i,
    # against the compact (lane = j*C + c) e2 layout.
    w1 = np.asarray(params["lin1_w"], np.float32).reshape(100, C, P, P)   # (o,c,i,j)
    w1h = np.transpose(w1, (2, 3, 1, 0)).reshape(P, P * C, 100)           # (i, j*C+c, o)

    # lin2 (torch (16*P*P, 100)) -> per bottleneck row i, producing lane = j*C + c.
    w2 = np.asarray(params["lin2_w"], np.float32).reshape(C, P, P, 100)   # (c,i,j,m)
    w2h = np.transpose(w2, (1, 3, 2, 0)).reshape(P, 100, P * C)           # (i, m, j*C+c)

    b2 = np.asarray(params["lin2_b"], np.float32).reshape(C, P, P)        # (c,i,j)
    b2h = np.transpose(b2, (1, 2, 0)).reshape(P, P * C)                   # (i, j*C+c)

    return dict(
        t_e1=band_taps(params["enc1_w"], S, S, sel_same),
        b_e1=merged_bias(params["enc1_b"], S),
        t_e2=band_taps(params["enc2_w"], S, P, sel_down2),
        b_e2=merged_bias(params["enc2_b"], P),
        w1h=jnp.asarray(w1h, bf16),
        b1=jnp.asarray(np.asarray(params["lin1_b"], np.float32).reshape(1, 100)),
        w2h=jnp.asarray(w2h, bf16),
        b2h=jnp.asarray(b2h, jnp.float32),
        t_d1=band_taps(w_d1, P, S, sel_up2),
        b_d1=merged_bias(params["dec1_b"], S),
        t_d2=band_taps(params["dec2_w"], S, S, sel_same),
        b_d2=merged_bias(params["dec2_b"], S),
        t_d3=band_taps(params["dec3_w"], S, S, sel_same),
        b_d3=merged_bias(params["dec3_b"], S),
    )


def _cost_estimate(B, S, P, C, n_steps, w_bytes, io_bytes):
    M = B * S
    flops_step = 2 * (3 * M * S * (S * C)
                      + 3 * M * (S * C) * (P * C)
                      + P * B * (P * C) * 100
                      + P * B * 100 * (P * C)
                      + 3 * M * (P * C) * (S * C)
                      + 3 * M * (S * C) * (S * 8)
                      + 3 * M * (S * 8) * S)
    return pl.CostEstimate(flops=int(flops_step * n_steps),
                           transcendentals=0,
                           bytes_accessed=int(w_bytes + io_bytes))


# ----------------------------------------------------------------------------
# Fused forward pass (single pallas_call)
# ----------------------------------------------------------------------------
def autoencoder_fused(kparams, x_nchw, *, b_tile=8):
    """Fused forward: returns (Softmax2d output, pre-softmax logits), both NCHW."""
    x = x_nchw.astype(jnp.float32)
    N, cin, S, _ = x.shape
    assert cin == 1
    P, C = S // 2, 16
    B = int(min(b_tile, N))
    n_steps = -(-N // B)
    N_pad = n_steps * B

    x_m = x[:, 0, :, :]
    if N_pad != N:
        x_m = jnp.concatenate(
            [x_m, jnp.zeros((N_pad - N, S, S), jnp.float32)], axis=0)

    order = ["t_e1", "b_e1", "t_e2", "b_e2", "w1h", "b1", "w2h", "b2h",
             "t_d1", "b_d1", "t_d2", "b_d2", "t_d3", "b_d3"]
    w_args = [kparams[k] for k in order]
    w_bytes = sum(int(a.size) * a.dtype.itemsize for a in w_args)

    def w_spec(a):                         # constant-index, single-buffered weights
        nd = a.ndim
        return pl.BlockSpec(a.shape, lambda n, _z=(0,) * nd: _z,
                            pipeline_mode=pl.Buffered(1))

    in_specs = [pl.BlockSpec((B, S, S), lambda n: (n, 0, 0))] + \
               [w_spec(a) for a in w_args]
    out_specs = pl.BlockSpec((B, S, S), lambda n: (n, 0, 0))

    scratch = [
        pltpu.VMEM((B, S + 2, S), jnp.bfloat16),          # padded input (Cin=1)
        pltpu.VMEM((B, S + 2, S * C), jnp.bfloat16),      # padded enc1 output
        pltpu.VMEM((B, S + 2, P * C), jnp.bfloat16),      # vertically-stuffed bottleneck
        pltpu.VMEM((B, S + 2, S * C), jnp.bfloat16),      # padded dec1 output
        pltpu.VMEM((B, S + 2, S * 8), jnp.bfloat16),      # padded dec2 output
    ]

    logits_raw = pl.pallas_call(
        _make_kernel(S, P, B, C),
        out_shape=jax.ShapeDtypeStruct((N_pad, S, S), jnp.float32),
        grid=(n_steps,),
        in_specs=in_specs,
        out_specs=out_specs,
        scratch_shapes=scratch,
        compiler_params=pltpu.CompilerParams(
            dimension_semantics=("parallel",)),           # batch tiles across v7x TCs
        cost_estimate=_cost_estimate(B, S, P, C, n_steps, w_bytes,
                                     2 * N_pad * S * S * 4),
    )(x_m, *w_args)

    logits = logits_raw[:N].reshape(N, 1, S, S)
    out = jax.nn.softmax(logits, axis=1)   # Softmax2d (identically 1.0 for Cout == 1)
    return out, logits


_KPARAM_CACHE = {}


def conv_autoencoder_forward(params, x):
    """Module-equivalent forward: NCHW in -> NCHW Softmax2d output.
    prepare_kernel_params is hoisted out of the per-call path via a small cache."""
    key = (id(params), int(x.shape[2]))
    if key not in _KPARAM_CACHE:
        _KPARAM_CACHE[key] = prepare_kernel_params(params, x.shape[2])
    out, _ = autoencoder_fused(_KPARAM_CACHE[key], x)
    return out


# ----------------------------------------------------------------------------
# Plain-JAX reference (mirrors the PyTorch module), used only for verification
# ----------------------------------------------------------------------------
def reference_forward(params, x):
    x = x.astype(jnp.float32)
    N, _, S, _ = x.shape
    P = S // 2

    def conv(h, w, b, stride, pad):
        y = jax.lax.conv_general_dilated(
            h, w.astype(jnp.float32), (stride, stride), [(pad, pad), (pad, pad)],
            dimension_numbers=("NCHW", "OIHW", "NCHW"))
        return y + b.reshape(1, -1, 1, 1)

    def conv_t(h, w, b, stride, pad, out_pad):
        w_conv = jnp.flip(w.astype(jnp.float32), axis=(2, 3)).transpose(1, 0, 2, 3)
        lo = w.shape[2] - 1 - pad
        hi = lo + out_pad
        y = jax.lax.conv_general_dilated(
            h, w_conv, (1, 1), [(lo, hi), (lo, hi)], lhs_dilation=(stride, stride),
            dimension_numbers=("NCHW", "OIHW", "NCHW"))
        return y + b.reshape(1, -1, 1, 1)

    relu = jax.nn.relu
    h = relu(conv(x, params["enc1_w"], params["enc1_b"], 1, 1))
    h = relu(conv(h, params["enc2_w"], params["enc2_b"], 2, 1))
    h = h.reshape(N, 16 * P * P)
    h = relu(h @ params["lin1_w"].T + params["lin1_b"])
    h = relu(h @ params["lin2_w"].T + params["lin2_b"])
    h = h.reshape(N, 16, P, P)
    h = relu(conv_t(h, params["dec1_w"], params["dec1_b"], 2, 1, 1))
    h = relu(conv(h, params["dec2_w"], params["dec2_b"], 1, 1))
    logits = relu(conv(h, params["dec3_w"], params["dec3_b"], 1, 1))
    return jax.nn.softmax(logits, axis=1), logits


# ----------------------------------------------------------------------------
# Parameter init (PyTorch layouts: Conv OIHW, ConvTranspose (Cin,Cout,k,k),
# Linear (out, in))
# ----------------------------------------------------------------------------
def init_params(key, field_size):
    P = field_size // 2
    flat = 16 * P * P
    ks = jax.random.split(key, 14)

    def w(k, shape, fan_in):
        return jax.random.normal(k, shape, jnp.float32) / jnp.sqrt(float(fan_in))

    return {
        "enc1_w": w(ks[0], (16, 1, 3, 3), 9),        "enc1_b": w(ks[1], (16,), 9),
        "enc2_w": w(ks[2], (16, 16, 3, 3), 16 * 9),  "enc2_b": w(ks[3], (16,), 16 * 9),
        "lin1_w": w(ks[4], (100, flat), flat),       "lin1_b": w(ks[5], (100,), flat),
        "lin2_w": w(ks[6], (flat, 100), 100),        "lin2_b": w(ks[7], (flat,), 100),
        "dec1_w": w(ks[8], (16, 16, 3, 3), 16 * 9),  "dec1_b": w(ks[9], (16,), 16 * 9),
        "dec2_w": w(ks[10], (8, 16, 3, 3), 16 * 9),  "dec2_b": w(ks[11], (8,), 16 * 9),
        "dec3_w": w(ks[12], (1, 8, 3, 3), 8 * 9),    "dec3_b": w(ks[13], (1,), 8 * 9),
    }


if __name__ == "__main__":
    field_size = 16            # -> nekaj = 8, bottleneck flat dim = 1024
    batch = 16                 # 2 grid steps of B_TILE=8 -> both v7x TCs busy

    key = jax.random.PRNGKey(0)
    pkey, xkey = jax.random.split(key)
    params = init_params(pkey, field_size)
    x = jax.random.normal(xkey, (batch, 1, field_size, field_size), jnp.float32)

    kparams = prepare_kernel_params(params, field_size)   # one-time host-side prep
    fused = jax.jit(autoencoder_fused)
    out, logits = fused(kparams, x)
    jax.block_until_ready((out, logits))

    ref_out, ref_logits = jax.jit(reference_forward)(params, x)
    jax.block_until_ready((ref_out, ref_logits))

    assert out.shape == (batch, 1, field_size, field_size), out.shape
    assert out.dtype == jnp.float32
    assert bool(jnp.all(jnp.isfinite(out)))
    # End-to-end numeric check of every layer against the lax reference on the
    # PRE-softmax activations.  Tolerance loosened for bf16 weights/activations
    # (accumulation stays f32); the single-channel softmax itself is exactly 1.0.
    err = float(jnp.max(jnp.abs(logits - ref_logits)))
    assert bool(jnp.allclose(logits, ref_logits, rtol=5e-2, atol=5e-2)), err
    assert bool(jnp.allclose(out, ref_out, atol=1e-6))
    print("KERNEL_OK")
</pallas_src>

<mosaic_0001>
module attributes {stable_mosaic.version = 11 : i64} {
  func.func @kernel(%arg0: i32, %arg1: memref<8x16x16xf32, #tpu.memory_space<vmem>>, %arg2: memref<3x16x256xbf16, #tpu.memory_space<vmem>>, %arg3: memref<1x256xf32, #tpu.memory_space<vmem>>, %arg4: memref<3x256x128xbf16, #tpu.memory_space<vmem>>, %arg5: memref<1x128xf32, #tpu.memory_space<vmem>>, %arg6: memref<8x128x100xbf16, #tpu.memory_space<vmem>>, %arg7: memref<1x100xf32, #tpu.memory_space<vmem>>, %arg8: memref<8x100x128xbf16, #tpu.memory_space<vmem>>, %arg9: memref<8x128xf32, #tpu.memory_space<vmem>>, %arg10: memref<3x128x256xbf16, #tpu.memory_space<vmem>>, %arg11: memref<1x256xf32, #tpu.memory_space<vmem>>, %arg12: memref<3x256x128xbf16, #tpu.memory_space<vmem>>, %arg13: memref<1x128xf32, #tpu.memory_space<vmem>>, %arg14: memref<3x128x16xbf16, #tpu.memory_space<vmem>>, %arg15: memref<1x16xf32, #tpu.memory_space<vmem>>, %arg16: memref<8x16x16xf32, #tpu.memory_space<vmem>>, %arg17: memref<8x18x16xbf16, #tpu.memory_space<vmem>>, %arg18: memref<8x18x256xbf16, #tpu.memory_space<vmem>>, %arg19: memref<8x18x128xbf16, #tpu.memory_space<vmem>>, %arg20: memref<8x18x256xbf16, #tpu.memory_space<vmem>>, %arg21: memref<8x18x128xbf16, #tpu.memory_space<vmem>>) attributes {dimension_semantics = [#tpu.dimension_semantics<parallel>], iteration_bounds = array<i64: 2>, scalar_prefetch = 0 : i64, scratch_operands = 5 : i64, tpu.core_type = #tpu.core_type<tc>, window_params = [{transform_indices = @transform_0, window_bounds = array<i64: 8, 16, 16>}, {pipeline_mode = #tpu.pipeline_mode<synchronous>, transform_indices = @transform_1, window_bounds = array<i64: 3, 16, 256>}, {pipeline_mode = #tpu.pipeline_mode<synchronous>, transform_indices = @transform_2, window_bounds = array<i64: 1, 256>}, {pipeline_mode = #tpu.pipeline_mode<synchronous>, transform_indices = @transform_3, window_bounds = array<i64: 3, 256, 128>}, {pipeline_mode = #tpu.pipeline_mode<synchronous>, transform_indices = @transform_4, window_bounds = array<i64: 1, 128>}, {pipeline_mode = #tpu.pipeline_mode<synchronous>, transform_indices = @transform_5, window_bounds = array<i64: 8, 128, 100>}, {pipeline_mode = #tpu.pipeline_mode<synchronous>, transform_indices = @transform_6, window_bounds = array<i64: 1, 100>}, {pipeline_mode = #tpu.pipeline_mode<synchronous>, transform_indices = @transform_7, window_bounds = array<i64: 8, 100, 128>}, {pipeline_mode = #tpu.pipeline_mode<synchronous>, transform_indices = @transform_8, window_bounds = array<i64: 8, 128>}, {pipeline_mode = #tpu.pipeline_mode<synchronous>, transform_indices = @transform_9, window_bounds = array<i64: 3, 128, 256>}, {pipeline_mode = #tpu.pipeline_mode<synchronous>, transform_indices = @transform_10, window_bounds = array<i64: 1, 256>}, {pipeline_mode = #tpu.pipeline_mode<synchronous>, transform_indices = @transform_11, window_bounds = array<i64: 3, 256, 128>}, {pipeline_mode = #tpu.pipeline_mode<synchronous>, transform_indices = @transform_12, window_bounds = array<i64: 1, 128>}, {pipeline_mode = #tpu.pipeline_mode<synchronous>, transform_indices = @transform_13, window_bounds = array<i64: 3, 128, 16>}, {pipeline_mode = #tpu.pipeline_mode<synchronous>, transform_indices = @transform_14, window_bounds = array<i64: 1, 16>}, {transform_indices = @transform_15, window_bounds = array<i64: 8, 16, 16>}]} {
    %cst = arith.constant 0.000000e+00 : bf16
    %0 = vector.broadcast %cst : bf16 to vector<8x16xbf16>
    %c0 = arith.constant 0 : index
    %c0_0 = arith.constant 0 : index
    %c0_1 = arith.constant 0 : index
    %1 = vector.load %arg17[%c0, %c0_0, %c0_1] : memref<8x18x16xbf16, #tpu.memory_space<vmem>>, vector<8x1x16xbf16>
    %2 = vector.shape_cast %1 : vector<8x1x16xbf16> to vector<8x16xbf16>
    %3 = vector.shape_cast %0 : vector<8x16xbf16> to vector<8x1x16xbf16>
    tpu.vector_store %arg17[%c0, %c0_0, %c0_1], %3 {strides = array<i32>} : memref<8x18x16xbf16, #tpu.memory_space<vmem>>, vector<8x1x16xbf16>,
    %c0_2 = arith.constant 0 : index
    %c17 = arith.constant 17 : index
    %c0_3 = arith.constant 0 : index
    %4 = vector.load %arg17[%c0_2, %c17, %c0_3] : memref<8x18x16xbf16, #tpu.memory_space<vmem>>, vector<8x1x16xbf16>
    %5 = vector.shape_cast %4 : vector<8x1x16xbf16> to vector<8x16xbf16>
    %6 = vector.shape_cast %0 : vector<8x16xbf16> to vector<8x1x16xbf16>
    tpu.vector_store %arg17[%c0_2, %c17, %c0_3], %6 {strides = array<i32>} : memref<8x18x16xbf16, #tpu.memory_space<vmem>>, vector<8x1x16xbf16>,
    %cst_4 = arith.constant 0.000000e+00 : bf16
    %7 = vector.broadcast %cst_4 : bf16 to vector<8x256xbf16>
    %c0_5 = arith.constant 0 : index
    %c0_6 = arith.constant 0 : index
    %c0_7 = arith.constant 0 : index
    %8 = vector.load %arg18[%c0_5, %c0_6, %c0_7] : memref<8x18x256xbf16, #tpu.memory_space<vmem>>, vector<8x1x256xbf16>
    %9 = vector.shape_cast %8 : vector<8x1x256xbf16> to vector<8x256xbf16>
    %10 = vector.shape_cast %7 : vector<8x256xbf16> to vector<8x1x256xbf16>
    tpu.vector_store %arg18[%c0_5, %c0_6, %c0_7], %10 {strides = array<i32>} : memref<8x18x256xbf16, #tpu.memory_space<vmem>>, vector<8x1x256xbf16>,
    %c0_8 = arith.constant 0 : index
    %c17_9 = arith.constant 17 : index
    %c0_10 = arith.constant 0 : index
    %11 = vector.load %arg18[%c0_8, %c17_9, %c0_10] : memref<8x18x256xbf16, #tpu.memory_space<vmem>>, vector<8x1x256xbf16>
    %12 = vector.shape_cast %11 : vector<8x1x256xbf16> to vector<8x256xbf16>
    %13 = vector.shape_cast %7 : vector<8x256xbf16> to vector<8x1x256xbf16>
    tpu.vector_store %arg18[%c0_8, %c17_9, %c0_10], %13 {strides = array<i32>} : memref<8x18x256xbf16, #tpu.memory_space<vmem>>, vector<8x1x256xbf16>,
    %cst_11 = arith.constant 0.000000e+00 : bf16
    %14 = vector.broadcast %cst_11 : bf16 to vector<8x256xbf16>
    %c0_12 = arith.constant 0 : index
    %c0_13 = arith.constant 0 : index
    %c0_14 = arith.constant 0 : index
    %15 = vector.load %arg20[%c0_12, %c0_13, %c0_14] : memref<8x18x256xbf16, #tpu.memory_space<vmem>>, vector<8x1x256xbf16>
    %16 = vector.shape_cast %15 : vector<8x1x256xbf16> to vector<8x256xbf16>
    %17 = vector.shape_cast %14 : vector<8x256xbf16> to vector<8x1x256xbf16>
    tpu.vector_store %arg20[%c0_12, %c0_13, %c0_14], %17 {strides = array<i32>} : memref<8x18x256xbf16, #tpu.memory_space<vmem>>, vector<8x1x256xbf16>,
    %c0_15 = arith.constant 0 : index
    %c17_16 = arith.constant 17 : index
    %c0_17 = arith.constant 0 : index
    %18 = vector.load %arg20[%c0_15, %c17_16, %c0_17] : memref<8x18x256xbf16, #tpu.memory_space<vmem>>, vector<8x1x256xbf16>
    %19 = vector.shape_cast %18 : vector<8x1x256xbf16> to vector<8x256xbf16>
    %20 = vector.shape_cast %14 : vector<8x256xbf16> to vector<8x1x256xbf16>
    tpu.vector_store %arg20[%c0_15, %c17_16, %c0_17], %20 {strides = array<i32>} : memref<8x18x256xbf16, #tpu.memory_space<vmem>>, vector<8x1x256xbf16>,
    %cst_18 = arith.constant 0.000000e+00 : bf16
    %21 = vector.broadcast %cst_18 : bf16 to vector<8x128xbf16>
    %c0_19 = arith.constant 0 : index
    %c0_20 = arith.constant 0 : index
    %c0_21 = arith.constant 0 : index
    %22 = vector.load %arg21[%c0_19, %c0_20, %c0_21] : memref<8x18x128xbf16, #tpu.memory_space<vmem>>, vector<8x1x128xbf16>
    %23 = vector.shape_cast %22 : vector<8x1x128xbf16> to vector<8x128xbf16>
    %24 = vector.shape_cast %21 : vector<8x128xbf16> to vector<8x1x128xbf16>
    tpu.vector_store %arg21[%c0_19, %c0_20, %c0_21], %24 {strides = array<i32>} : memref<8x18x128xbf16, #tpu.memory_space<vmem>>, vector<8x1x128xbf16>,
    %c0_22 = arith.constant 0 : index
    %c17_23 = arith.constant 17 : index
    %c0_24 = arith.constant 0 : index
    %25 = vector.load %arg21[%c0_22, %c17_23, %c0_24] : memref<8x18x128xbf16, #tpu.memory_space<vmem>>, vector<8x1x128xbf16>
    %26 = vector.shape_cast %25 : vector<8x1x128xbf16> to vector<8x128xbf16>
    %27 = vector.shape_cast %21 : vector<8x128xbf16> to vector<8x1x128xbf16>
    tpu.vector_store %arg21[%c0_22, %c17_23, %c0_24], %27 {strides = array<i32>} : memref<8x18x128xbf16, #tpu.memory_space<vmem>>, vector<8x1x128xbf16>,
    %cst_25 = arith.constant 0.000000e+00 : bf16
    %28 = vector.broadcast %cst_25 : bf16 to vector<8x18x128xbf16>
    %c0_26 = arith.constant 0 : index
    %c0_27 = arith.constant 0 : index
    %c0_28 = arith.constant 0 : index
    %29 = vector.load %arg19[%c0_26, %c0_27, %c0_28] : memref<8x18x128xbf16, #tpu.memory_space<vmem>>, vector<8x18x128xbf16>
    tpu.vector_store %arg19[%c0_26, %c0_27, %c0_28], %28 {strides = array<i32>} : memref<8x18x128xbf16, #tpu.memory_space<vmem>>, vector<8x18x128xbf16>,
    %c0_29 = arith.constant 0 : index
    %c0_30 = arith.constant 0 : index
    %c0_31 = arith.constant 0 : index
    %30 = vector.load %arg1[%c0_29, %c0_30, %c0_31] : memref<8x16x16xf32, #tpu.memory_space<vmem>>, vector<8x16x16xf32>
    %31 = arith.truncf %30 : vector<8x16x16xf32> to vector<8x16x16xbf16>
    %c0_32 = arith.constant 0 : index
    %c1 = arith.constant 1 : index
    %c0_33 = arith.constant 0 : index
    %32 = vector.load %arg17[%c0_32, %c1, %c0_33] : memref<8x18x16xbf16, #tpu.memory_space<vmem>>, vector<8x16x16xbf16>
    tpu.vector_store %arg17[%c0_32, %c1, %c0_33], %31 {strides = array<i32>} : memref<8x18x16xbf16, #tpu.memory_space<vmem>>, vector<8x16x16xbf16>,
    %cst_34 = arith.constant 0.000000e+00 : f32
    %33 = vector.broadcast %cst_34 : f32 to vector<128x256xf32>
    %c0_35 = arith.constant 0 : index
    %c0_36 = arith.constant 0 : index
    %34 = vector.load %arg3[%c0_35, %c0_36] : memref<1x256xf32, #tpu.memory_space<vmem>>, vector<1x256xf32>
    %35 = vector.broadcast %34 : vector<1x256xf32> to vector<128x256xf32>
    %36 = arith.addf %33, %35 : vector<128x256xf32>
    %c0_37 = arith.constant 0 : index
    %c0_38 = arith.constant 0 : index
    %c0_39 = arith.constant 0 : index
    %37 = vector.load %arg17[%c0_37, %c0_38, %c0_39] : memref<8x18x16xbf16, #tpu.memory_space<vmem>>, vector<8x16x16xbf16>
    %38 = vector.shape_cast %37 : vector<8x16x16xbf16> to vector<128x16xbf16>
    %c0_40 = arith.constant 0 : index
    %c0_41 = arith.constant 0 : index
    %c0_42 = arith.constant 0 : index
    %39 = vector.load %arg2[%c0_40, %c0_41, %c0_42] : memref<3x16x256xbf16, #tpu.memory_space<vmem>>, vector<1x16x256xbf16>
    %40 = vector.shape_cast %39 : vector<1x16x256xbf16> to vector<16x256xbf16>
    %cst_43 = arith.constant dense<0.000000e+00> : vector<128x256xf32>
    %41 = tpu.matmul %38, %40, %cst_43 {dimension_numbers = #tpu.dot_dimension_numbers<[1], [0], [0], [1], [0, 0, 1, 1], [], []>} : vector<128x16xbf16>, vector<16x256xbf16>, vector<128x256xf32> -> vector<128x256xf32>
    %42 = arith.addf %36, %41 : vector<128x256xf32>
    %c0_44 = arith.constant 0 : index
    %c1_45 = arith.constant 1 : index
    %c0_46 = arith.constant 0 : index
    %43 = vector.load %arg17[%c0_44, %c1_45, %c0_46] : memref<8x18x16xbf16, #tpu.memory_space<vmem>>, vector<8x16x16xbf16>
    %44 = vector.shape_cast %43 : vector<8x16x16xbf16> to vector<128x16xbf16>
    %c1_47 = arith.constant 1 : index
    %c0_48 = arith.constant 0 : index
    %c0_49 = arith.constant 0 : index
    %45 = vector.load %arg2[%c1_47, %c0_48, %c0_49] : memref<3x16x256xbf16, #tpu.memory_space<vmem>>, vector<1x16x256xbf16>
    %46 = vector.shape_cast %45 : vector<1x16x256xbf16> to vector<16x256xbf16>
    %cst_50 = arith.constant dense<0.000000e+00> : vector<128x256xf32>
    %47 = tpu.matmul %44, %46, %cst_50 {dimension_numbers = #tpu.dot_dimension_numbers<[1], [0], [0], [1], [0, 0, 1, 1], [], []>} : vector<128x16xbf16>, vector<16x256xbf16>, vector<128x256xf32> -> vector<128x256xf32>
    %48 = arith.addf %42, %47 : vector<128x256xf32>
    %c0_51 = arith.constant 0 : index
    %c2 = arith.constant 2 : index
    %c0_52 = arith.constant 0 : index
    %49 = vector.load %arg17[%c0_51, %c2, %c0_52] : memref<8x18x16xbf16, #tpu.memory_space<vmem>>, vector<8x16x16xbf16>
    %50 = vector.shape_cast %49 : vector<8x16x16xbf16> to vector<128x16xbf16>
    %c2_53 = arith.constant 2 : index
    %c0_54 = arith.constant 0 : index
    %c0_55 = arith.constant 0 : index
    %51 = vector.load %arg2[%c2_53, %c0_54, %c0_55] : memref<3x16x256xbf16, #tpu.memory_space<vmem>>, vector<1x16x256xbf16>
    %52 = vector.shape_cast %51 : vector<1x16x256xbf16> to vector<16x256xbf16>
    %cst_56 = arith.constant dense<0.000000e+00> : vector<128x256xf32>
    %53 = tpu.matmul %50, %52, %cst_56 {dimension_numbers = #tpu.dot_dimension_numbers<[1], [0], [0], [1], [0, 0, 1, 1], [], []>} : vector<128x16xbf16>, vector<16x256xbf16>, vector<128x256xf32> -> vector<128x256xf32>
    %54 = arith.addf %48, %53 : vector<128x256xf32>
    %cst_57 = arith.constant 0.000000e+00 : f32
    %55 = vector.broadcast %cst_57 : f32 to vector<128x256xf32>
    %56 = arith.maximumf %54, %55 : vector<128x256xf32>
    %57 = vector.shape_cast %56 : vector<128x256xf32> to vector<8x16x256xf32>
    %58 = arith.truncf %57 : vector<8x16x256xf32> to vector<8x16x256xbf16>
    %c0_58 = arith.constant 0 : index
    %c1_59 = arith.constant 1 : index
    %c0_60 = arith.constant 0 : index
    %59 = vector.load %arg18[%c0_58, %c1_59, %c0_60] : memref<8x18x256xbf16, #tpu.memory_space<vmem>>, vector<8x16x256xbf16>
    tpu.vector_store %arg18[%c0_58, %c1_59, %c0_60], %58 {strides = array<i32>} : memref<8x18x256xbf16, #tpu.memory_space<vmem>>, vector<8x16x256xbf16>,
    %cst_61 = arith.constant 0.000000e+00 : f32
    %60 = vector.broadcast %cst_61 : f32 to vector<128x128xf32>
    %c0_62 = arith.constant 0 : index
    %c0_63 = arith.constant 0 : index
    %61 = vector.load %arg5[%c0_62, %c0_63] : memref<1x128xf32, #tpu.memory_space<vmem>>, vector<1x128xf32>
    %62 = vector.broadcast %61 : vector<1x128xf32> to vector<128x128xf32>
    %63 = arith.addf %60, %62 : vector<128x128xf32>
    %c0_64 = arith.constant 0 : index
    %c0_65 = arith.constant 0 : index
    %c0_66 = arith.constant 0 : index
    %64 = vector.load %arg18[%c0_64, %c0_65, %c0_66] : memref<8x18x256xbf16, #tpu.memory_space<vmem>>, vector<8x16x256xbf16>
    %65 = vector.shape_cast %64 : vector<8x16x256xbf16> to vector<128x256xbf16>
    %c0_67 = arith.constant 0 : index
    %c0_68 = arith.constant 0 : index
    %c0_69 = arith.constant 0 : index
    %66 = vector.load %arg4[%c0_67, %c0_68, %c0_69] : memref<3x256x128xbf16, #tpu.memory_space<vmem>>, vector<1x256x128xbf16>
    %67 = vector.shape_cast %66 : vector<1x256x128xbf16> to vector<256x128xbf16>
    %cst_70 = arith.constant dense<0.000000e+00> : vector<128x128xf32>
    %68 = tpu.matmul %65, %67, %cst_70 {dimension_numbers = #tpu.dot_dimension_numbers<[1], [0], [0], [1], [0, 0, 1, 1], [], []>} : vector<128x256xbf16>, vector<256x128xbf16>, vector<128x128xf32> -> vector<128x128xf32>
    %69 = arith.addf %63, %68 : vector<128x128xf32>
    %c0_71 = arith.constant 0 : index
    %c1_72 = arith.constant 1 : index
    %c0_73 = arith.constant 0 : index
    %70 = vector.load %arg18[%c0_71, %c1_72, %c0_73] : memref<8x18x256xbf16, #tpu.memory_space<vmem>>, vector<8x16x256xbf16>
    %71 = vector.shape_cast %70 : vector<8x16x256xbf16> to vector<128x256xbf16>
    %c1_74 = arith.constant 1 : index
    %c0_75 = arith.constant 0 : index
    %c0_76 = arith.constant 0 : index
    %72 = vector.load %arg4[%c1_74, %c0_75, %c0_76] : memref<3x256x128xbf16, #tpu.memory_space<vmem>>, vector<1x256x128xbf16>
    %73 = vector.shape_cast %72 : vector<1x256x128xbf16> to vector<256x128xbf16>
    %cst_77 = arith.constant dense<0.000000e+00> : vector<128x128xf32>
    %74 = tpu.matmul %71, %73, %cst_77 {dimension_numbers = #tpu.dot_dimension_numbers<[1], [0], [0], [1], [0, 0, 1, 1], [], []>} : vector<128x256xbf16>, vector<256x128xbf16>, vector<128x128xf32> -> vector<128x128xf32>
    %75 = arith.addf %69, %74 : vector<128x128xf32>
    %c0_78 = arith.constant 0 : index
    %c2_79 = arith.constant 2 : index
    %c0_80 = arith.constant 0 : index
    %76 = vector.load %arg18[%c0_78, %c2_79, %c0_80] : memref<8x18x256xbf16, #tpu.memory_space<vmem>>, vector<8x16x256xbf16>
    %77 = vector.shape_cast %76 : vector<8x16x256xbf16> to vector<128x256xbf16>
    %c2_81 = arith.constant 2 : index
    %c0_82 = arith.constant 0 : index
    %c0_83 = arith.constant 0 : index
    %78 = vector.load %arg4[%c2_81, %c0_82, %c0_83] : memref<3x256x128xbf16, #tpu.memory_space<vmem>>, vector<1x256x128xbf16>
    %79 = vector.shape_cast %78 : vector<1x256x128xbf16> to vector<256x128xbf16>
    %cst_84 = arith.constant dense<0.000000e+00> : vector<128x128xf32>
    %80 = tpu.matmul %77, %79, %cst_84 {dimension_numbers = #tpu.dot_dimension_numbers<[1], [0], [0], [1], [0, 0, 1, 1], [], []>} : vector<128x256xbf16>, vector<256x128xbf16>, vector<128x128xf32> -> vector<128x128xf32>
    %81 = arith.addf %75, %80 : vector<128x128xf32>
    %cst_85 = arith.constant 0.000000e+00 : f32
    %82 = vector.broadcast %cst_85 : f32 to vector<128x128xf32>
    %83 = arith.maximumf %81, %82 : vector<128x128xf32>
    %84 = arith.truncf %83 : vector<128x128xf32> to vector<128x128xbf16>
    %85 = vector.shape_cast %84 : vector<128x128xbf16> to vector<8x16x128xbf16>
    %cst_86 = arith.constant 0.000000e+00 : f32
    %86 = vector.broadcast %cst_86 : f32 to vector<8x100xf32>
    %c0_87 = arith.constant 0 : index
    %c0_88 = arith.constant 0 : index
    %87 = vector.load %arg7[%c0_87, %c0_88] : memref<1x100xf32, #tpu.memory_space<vmem>>, vector<1x100xf32>
    %88 = vector.broadcast %87 : vector<1x100xf32> to vector<8x100xf32>
    %89 = arith.addf %86, %88 : vector<8x100xf32>
    %90 = vector.extract_strided_slice %85 {offsets = [0, 0, 0], sizes = [8, 1, 128], strides = [1, 1, 1]} : vector<8x16x128xbf16> to vector<8x1x128xbf16>
    %91 = vector.shape_cast %90 : vector<8x1x128xbf16> to vector<8x128xbf16>
    %c0_89 = arith.constant 0 : index
    %c0_90 = arith.constant 0 : index
    %c0_91 = arith.constant 0 : index
    %92 = vector.load %arg6[%c0_89, %c0_90, %c0_91] : memref<8x128x100xbf16, #tpu.memory_space<vmem>>, vector<1x128x100xbf16>
    %93 = vector.shape_cast %92 : vector<1x128x100xbf16> to vector<128x100xbf16>
    %cst_92 = arith.constant dense<0.000000e+00> : vector<8x100xf32>
    %94 = tpu.matmul %91, %93, %cst_92 {dimension_numbers = #tpu.dot_dimension_numbers<[1], [0], [0], [1], [0, 0, 1, 1], [], []>} : vector<8x128xbf16>, vector<128x100xbf16>, vector<8x100xf32> -> vector<8x100xf32>
    %95 = arith.addf %89, %94 : vector<8x100xf32>
    %96 = vector.extract_strided_slice %85 {offsets = [0, 2, 0], sizes = [8, 1, 128], strides = [1, 1, 1]} : vector<8x16x128xbf16> to vector<8x1x128xbf16>
    %97 = vector.shape_cast %96 : vector<8x1x128xbf16> to vector<8x128xbf16>
    %c1_93 = arith.constant 1 : index
    %c0_94 = arith.constant 0 : index
    %c0_95 = arith.constant 0 : index
    %98 = vector.load %arg6[%c1_93, %c0_94, %c0_95] : memref<8x128x100xbf16, #tpu.memory_space<vmem>>, vector<1x128x100xbf16>
    %99 = vector.shape_cast %98 : vector<1x128x100xbf16> to vector<128x100xbf16>
    %cst_96 = arith.constant dense<0.000000e+00> : vector<8x100xf32>
    %100 = tpu.matmul %97, %99, %cst_96 {dimension_numbers = #tpu.dot_dimension_numbers<[1], [0], [0], [1], [0, 0, 1, 1], [], []>} : vector<8x128xbf16>, vector<128x100xbf16>, vector<8x100xf32> -> vector<8x100xf32>
    %101 = arith.addf %95, %100 : vector<8x100xf32>
    %102 = vector.extract_strided_slice %85 {offsets = [0, 4, 0], sizes = [8, 1, 128], strides = [1, 1, 1]} : vector<8x16x128xbf16> to vector<8x1x128xbf16>
    %103 = vector.shape_cast %102 : vector<8x1x128xbf16> to vector<8x128xbf16>
    %c2_97 = arith.constant 2 : index
    %c0_98 = arith.constant 0 : index
    %c0_99 = arith.constant 0 : index
    %104 = vector.load %arg6[%c2_97, %c0_98, %c0_99] : memref<8x128x100xbf16, #tpu.memory_space<vmem>>, vector<1x128x100xbf16>
    %105 = vector.shape_cast %104 : vector<1x128x100xbf16> to vector<128x100xbf16>
    %cst_100 = arith.constant dense<0.000000e+00> : vector<8x100xf32>
    %106 = tpu.matmul %103, %105, %cst_100 {dimension_numbers = #tpu.dot_dimension_numbers<[1], [0], [0], [1], [0, 0, 1, 1], [], []>} : vector<8x128xbf16>, vector<128x100xbf16>, vector<8x100xf32> -> vector<8x100xf32>
    %107 = arith.addf %101, %106 : vector<8x100xf32>
    %108 = vector.extract_strided_slice %85 {offsets = [0, 6, 0], sizes = [8, 1, 128], strides = [1, 1, 1]} : vector<8x16x128xbf16> to vector<8x1x128xbf16>
    %109 = vector.shape_cast %108 : vector<8x1x128xbf16> to vector<8x128xbf16>
    %c3 = arith.constant 3 : index
    %c0_101 = arith.constant 0 : index
    %c0_102 = arith.constant 0 : index
    %110 = vector.load %arg6[%c3, %c0_101, %c0_102] : memref<8x128x100xbf16, #tpu.memory_space<vmem>>, vector<1x128x100xbf16>
    %111 = vector.shape_cast %110 : vector<1x128x100xbf16> to vector<128x100xbf16>
    %cst_103 = arith.constant dense<0.000000e+00> : vector<8x100xf32>
    %112 = tpu.matmul %109, %111, %cst_103 {dimension_numbers = #tpu.dot_dimension_numbers<[1], [0], [0], [1], [0, 0, 1, 1], [], []>} : vector<8x128xbf16>, vector<128x100xbf16>, vector<8x100xf32> -> vector<8x100xf32>
    %113 = arith.addf %107, %112 : vector<8x100xf32>
    %114 = vector.extract_strided_slice %85 {offsets = [0, 8, 0], sizes = [8, 1, 128], strides = [1, 1, 1]} : vector<8x16x128xbf16> to vector<8x1x128xbf16>
    %115 = vector.shape_cast %114 : vector<8x1x128xbf16> to vector<8x128xbf16>
    %c4 = arith.constant 4 : index
    %c0_104 = arith.constant 0 : index
    %c0_105 = arith.constant 0 : index
    %116 = vector.load %arg6[%c4, %c0_104, %c0_105] : memref<8x128x100xbf16, #tpu.memory_space<vmem>>, vector<1x128x100xbf16>
    %117 = vector.shape_cast %116 : vector<1x128x100xbf16> to vector<128x100xbf16>
    %cst_106 = arith.constant dense<0.000000e+00> : vector<8x100xf32>
    %118 = tpu.matmul %115, %117, %cst_106 {dimension_numbers = #tpu.dot_dimension_numbers<[1], [0], [0], [1], [0, 0, 1, 1], [], []>} : vector<8x128xbf16>, vector<128x100xbf16>, vector<8x100xf32> -> vector<8x100xf32>
    %119 = arith.addf %113, %118 : vector<8x100xf32>
    %120 = vector.extract_strided_slice %85 {offsets = [0, 10, 0], sizes = [8, 1, 128], strides = [1, 1, 1]} : vector<8x16x128xbf16> to vector<8x1x128xbf16>
    %121 = vector.shape_cast %120 : vector<8x1x128xbf16> to vector<8x128xbf16>
    %c5 = arith.constant 5 : index
    %c0_107 = arith.constant 0 : index
    %c0_108 = arith.constant 0 : index
    %122 = vector.load %arg6[%c5, %c0_107, %c0_108] : memref<8x128x100xbf16, #tpu.memory_space<vmem>>, vector<1x128x100xbf16>
    %123 = vector.shape_cast %122 : vector<1x128x100xbf16> to vector<128x100xbf16>
    %cst_109 = arith.constant dense<0.000000e+00> : vector<8x100xf32>
    %124 = tpu.matmul %121, %123, %cst_109 {dimension_numbers = #tpu.dot_dimension_numbers<[1], [0], [0], [1], [0, 0, 1, 1], [], []>} : vector<8x128xbf16>, vector<128x100xbf16>, vector<8x100xf32> -> vector<8x100xf32>
    %125 = arith.addf %119, %124 : vector<8x100xf32>
    %126 = vector.extract_strided_slice %85 {offsets = [0, 12, 0], sizes = [8, 1, 128], strides = [1, 1, 1]} : vector<8x16x128xbf16> to vector<8x1x128xbf16>
    %127 = vector.shape_cast %126 : vector<8x1x128xbf16> to vector<8x128xbf16>
    %c6 = arith.constant 6 : index
    %c0_110 = arith.constant 0 : index
    %c0_111 = arith.constant 0 : index
    %128 = vector.load %arg6[%c6, %c0_110, %c0_111] : memref<8x128x100xbf16, #tpu.memory_space<vmem>>, vector<1x128x100xbf16>
    %129 = vector.shape_cast %128 : vector<1x128x100xbf16> to vector<128x100xbf16>
    %cst_112 = arith.constant dense<0.000000e+00> : vector<8x100xf32>
    %130 = tpu.matmul %127, %129, %cst_112 {dimension_numbers = #tpu.dot_dimension_numbers<[1], [0], [0], [1], [0, 0, 1, 1], [], []>} : vector<8x128xbf16>, vector<128x100xbf16>, vector<8x100xf32> -> vector<8x100xf32>
    %131 = arith.addf %125, %130 : vector<8x100xf32>
    %132 = vector.extract_strided_slice %85 {offsets = [0, 14, 0], sizes = [8, 1, 128], strides = [1, 1, 1]} : vector<8x16x128xbf16> to vector<8x1x128xbf16>
    %133 = vector.shape_cast %132 : vector<8x1x128xbf16> to vector<8x128xbf16>
    %c7 = arith.constant 7 : index
    %c0_113 = arith.constant 0 : index
    %c0_114 = arith.constant 0 : index
    %134 = vector.load %arg6[%c7, %c0_113, %c0_114] : memref<8x128x100xbf16, #tpu.memory_space<vmem>>, vector<1x128x100xbf16>
    %135 = vector.shape_cast %134 : vector<1x128x100xbf16> to vector<128x100xbf16>
    %cst_115 = arith.constant dense<0.000000e+00> : vector<8x100xf32>
    %136 = tpu.matmul %133, %135, %cst_115 {dimension_numbers = #tpu.dot_dimension_numbers<[1], [0], [0], [1], [0, 0, 1, 1], [], []>} : vector<8x128xbf16>, vector<128x100xbf16>, vector<8x100xf32> -> vector<8x100xf32>
    %137 = arith.addf %131, %136 : vector<8x100xf32>
    %cst_116 = arith.constant 0.000000e+00 : f32
    %138 = vector.broadcast %cst_116 : f32 to vector<8x100xf32>
    %139 = arith.maximumf %137, %138 : vector<8x100xf32>
    %140 = arith.truncf %139 : vector<8x100xf32> to vector<8x100xbf16>
    %c0_117 = arith.constant 0 : index
    %c0_118 = arith.constant 0 : index
    %c0_119 = arith.constant 0 : index
    %141 = vector.load %arg8[%c0_117, %c0_118, %c0_119] : memref<8x100x128xbf16, #tpu.memory_space<vmem>>, vector<1x100x128xbf16>
    %142 = vector.shape_cast %141 : vector<1x100x128xbf16> to vector<100x128xbf16>
    %cst_120 = arith.constant dense<0.000000e+00> : vector<8x128xf32>
    %143 = tpu.matmul %140, %142, %cst_120 {dimension_numbers = #tpu.dot_dimension_numbers<[1], [0], [0], [1], [0, 0, 1, 1], [], []>} : vector<8x100xbf16>, vector<100x128xbf16>, vector<8x128xf32> -> vector<8x128xf32>
    %c0_121 = arith.constant 0 : index
    %c0_122 = arith.constant 0 : index
    %144 = vector.load %arg9[%c0_121, %c0_122] : memref<8x128xf32, #tpu.memory_space<vmem>>, vector<1x128xf32>
    %145 = vector.broadcast %144 : vector<1x128xf32> to vector<8x128xf32>
    %146 = arith.addf %143, %145 : vector<8x128xf32>
    %cst_123 = arith.constant 0.000000e+00 : f32
    %147 = vector.broadcast %cst_123 : f32 to vector<8x128xf32>
    %148 = arith.maximumf %146, %147 : vector<8x128xf32>
    %149 = arith.truncf %148 : vector<8x128xf32> to vector<8x128xbf16>
    %c0_124 = arith.constant 0 : index
    %c1_125 = arith.constant 1 : index
    %c0_126 = arith.constant 0 : index
    %150 = vector.load %arg19[%c0_124, %c1_125, %c0_126] : memref<8x18x128xbf16, #tpu.memory_space<vmem>>, vector<8x1x128xbf16>
    %151 = vector.shape_cast %150 : vector<8x1x128xbf16> to vector<8x128xbf16>
    %152 = vector.shape_cast %149 : vector<8x128xbf16> to vector<8x1x128xbf16>
    tpu.vector_store %arg19[%c0_124, %c1_125, %c0_126], %152 {strides = array<i32>} : memref<8x18x128xbf16, #tpu.memory_space<vmem>>, vector<8x1x128xbf16>,
    %c1_127 = arith.constant 1 : index
    %c0_128 = arith.constant 0 : index
    %c0_129 = arith.constant 0 : index
    %153 = vector.load %arg8[%c1_127, %c0_128, %c0_129] : memref<8x100x128xbf16, #tpu.memory_space<vmem>>, vector<1x100x128xbf16>
    %154 = vector.shape_cast %153 : vector<1x100x128xbf16> to vector<100x128xbf16>
    %cst_130 = arith.constant dense<0.000000e+00> : vector<8x128xf32>
    %155 = tpu.matmul %140, %154, %cst_130 {dimension_numbers = #tpu.dot_dimension_numbers<[1], [0], [0], [1], [0, 0, 1, 1], [], []>} : vector<8x100xbf16>, vector<100x128xbf16>, vector<8x128xf32> -> vector<8x128xf32>
    %c1_131 = arith.constant 1 : index
    %c0_132 = arith.constant 0 : index
    %156 = vector.load %arg9[%c1_131, %c0_132] : memref<8x128xf32, #tpu.memory_space<vmem>>, vector<1x128xf32>
    %157 = vector.broadcast %156 : vector<1x128xf32> to vector<8x128xf32>
    %158 = arith.addf %155, %157 : vector<8x128xf32>
    %cst_133 = arith.constant 0.000000e+00 : f32
    %159 = vector.broadcast %cst_133 : f32 to vector<8x128xf32>
    %160 = arith.maximumf %158, %159 : vector<8x128xf32>
    %161 = arith.truncf %160 : vector<8x128xf32> to vector<8x128xbf16>
    %c0_134 = arith.constant 0 : index
    %c3_135 = arith.constant 3 : index
    %c0_136 = arith.constant 0 : index
    %162 = vector.load %arg19[%c0_134, %c3_135, %c0_136] : memref<8x18x128xbf16, #tpu.memory_space<vmem>>, vector<8x1x128xbf16>
    %163 = vector.shape_cast %162 : vector<8x1x128xbf16> to vector<8x128xbf16>
    %164 = vector.shape_cast %161 : vector<8x128xbf16> to vector<8x1x128xbf16>
    tpu.vector_store %arg19[%c0_134, %c3_135, %c0_136], %164 {strides = array<i32>} : memref<8x18x128xbf16, #tpu.memory_space<vmem>>, vector<8x1x128xbf16>,
    %c2_137 = arith.constant 2 : index
    %c0_138 = arith.constant 0 : index
    %c0_139 = arith.constant 0 : index
    %165 = vector.load %arg8[%c2_137, %c0_138, %c0_139] : memref<8x100x128xbf16, #tpu.memory_space<vmem>>, vector<1x100x128xbf16>
    %166 = vector.shape_cast %165 : vector<1x100x128xbf16> to vector<100x128xbf16>
    %cst_140 = arith.constant dense<0.000000e+00> : vector<8x128xf32>
    %167 = tpu.matmul %140, %166, %cst_140 {dimension_numbers = #tpu.dot_dimension_numbers<[1], [0], [0], [1], [0, 0, 1, 1], [], []>} : vector<8x100xbf16>, vector<100x128xbf16>, vector<8x128xf32> -> vector<8x128xf32>
    %c2_141 = arith.constant 2 : index
    %c0_142 = arith.constant 0 : index
    %168 = vector.load %arg9[%c2_141, %c0_142] : memref<8x128xf32, #tpu.memory_space<vmem>>, vector<1x128xf32>
    %169 = vector.broadcast %168 : vector<1x128xf32> to vector<8x128xf32>
    %170 = arith.addf %167, %169 : vector<8x128xf32>
    %cst_143 = arith.constant 0.000000e+00 : f32
    %171 = vector.broadcast %cst_143 : f32 to vector<8x128xf32>
    %172 = arith.maximumf %170, %171 : vector<8x128xf32>
    %173 = arith.truncf %172 : vector<8x128xf32> to vector<8x128xbf16>
    %c0_144 = arith.constant 0 : index
    %c5_145 = arith.constant 5 : index
    %c0_146 = arith.constant 0 : index
    %174 = vector.load %arg19[%c0_144, %c5_145, %c0_146] : memref<8x18x128xbf16, #tpu.memory_space<vmem>>, vector<8x1x128xbf16>
    %175 = vector.shape_cast %174 : vector<8x1x128xbf16> to vector<8x128xbf16>
    %176 = vector.shape_cast %173 : vector<8x128xbf16> to vector<8x1x128xbf16>
    tpu.vector_store %arg19[%c0_144, %c5_145, %c0_146], %176 {strides = array<i32>} : memref<8x18x128xbf16, #tpu.memory_space<vmem>>, vector<8x1x128xbf16>,
    %c3_147 = arith.constant 3 : index
    %c0_148 = arith.constant 0 : index
    %c0_149 = arith.constant 0 : index
    %177 = vector.load %arg8[%c3_147, %c0_148, %c0_149] : memref<8x100x128xbf16, #tpu.memory_space<vmem>>, vector<1x100x128xbf16>
    %178 = vector.shape_cast %177 : vector<1x100x128xbf16> to vector<100x128xbf16>
    %cst_150 = arith.constant dense<0.000000e+00> : vector<8x128xf32>
    %179 = tpu.matmul %140, %178, %cst_150 {dimension_numbers = #tpu.dot_dimension_numbers<[1], [0], [0], [1], [0, 0, 1, 1], [], []>} : vector<8x100xbf16>, vector<100x128xbf16>, vector<8x128xf32> -> vector<8x128xf32>
    %c3_151 = arith.constant 3 : index
    %c0_152 = arith.constant 0 : index
    %180 = vector.load %arg9[%c3_151, %c0_152] : memref<8x128xf32, #tpu.memory_space<vmem>>, vector<1x128xf32>
    %181 = vector.broadcast %180 : vector<1x128xf32> to vector<8x128xf32>
    %182 = arith.addf %179, %181 : vector<8x128xf32>
    %cst_153 = arith.constant 0.000000e+00 : f32
    %183 = vector.broadcast %cst_153 : f32 to vector<8x128xf32>
    %184 = arith.maximumf %182, %183 : vector<8x128xf32>
    %185 = arith.truncf %184 : vector<8x128xf32> to vector<8x128xbf16>
    %c0_154 = arith.constant 0 : index
    %c7_155 = arith.constant 7 : index
    %c0_156 = arith.constant 0 : index
    %186 = vector.load %arg19[%c0_154, %c7_155, %c0_156] : memref<8x18x128xbf16, #tpu.memory_space<vmem>>, vector<8x1x128xbf16>
    %187 = vector.shape_cast %186 : vector<8x1x128xbf16> to vector<8x128xbf16>
    %188 = vector.shape_cast %185 : vector<8x128xbf16> to vector<8x1x128xbf16>
    tpu.vector_store %arg19[%c0_154, %c7_155, %c0_156], %188 {strides = array<i32>} : memref<8x18x128xbf16, #tpu.memory_space<vmem>>, vector<8x1x128xbf16>,
    %c4_157 = arith.constant 4 : index
    %c0_158 = arith.constant 0 : index
    %c0_159 = arith.constant 0 : index
    %189 = vector.load %arg8[%c4_157, %c0_158, %c0_159] : memref<8x100x128xbf16, #tpu.memory_space<vmem>>, vector<1x100x128xbf16>
    %190 = vector.shape_cast %189 : vector<1x100x128xbf16> to vector<100x128xbf16>
    %cst_160 = arith.constant dense<0.000000e+00> : vector<8x128xf32>
    %191 = tpu.matmul %140, %190, %cst_160 {dimension_numbers = #tpu.dot_dimension_numbers<[1], [0], [0], [1], [0, 0, 1, 1], [], []>} : vector<8x100xbf16>, vector<100x128xbf16>, vector<8x128xf32> -> vector<8x128xf32>
    %c4_161 = arith.constant 4 : index
    %c0_162 = arith.constant 0 : index
    %192 = vector.load %arg9[%c4_161, %c0_162] : memref<8x128xf32, #tpu.memory_space<vmem>>, vector<1x128xf32>
    %193 = vector.broadcast %192 : vector<1x128xf32> to vector<8x128xf32>
    %194 = arith.addf %191, %193 : vector<8x128xf32>
    %cst_163 = arith.constant 0.000000e+00 : f32
    %195 = vector.broadcast %cst_163 : f32 to vector<8x128xf32>
    %196 = arith.maximumf %194, %195 : vector<8x128xf32>
    %197 = arith.truncf %196 : vector<8x128xf32> to vector<8x128xbf16>
    %c0_164 = arith.constant 0 : index
    %c9 = arith.constant 9 : index
    %c0_165 = arith.constant 0 : index
    %198 = vector.load %arg19[%c0_164, %c9, %c0_165] : memref<8x18x128xbf16, #tpu.memory_space<vmem>>, vector<8x1x128xbf16>
    %199 = vector.shape_cast %198 : vector<8x1x128xbf16> to vector<8x128xbf16>
    %200 = vector.shape_cast %197 : vector<8x128xbf16> to vector<8x1x128xbf16>
    tpu.vector_store %arg19[%c0_164, %c9, %c0_165], %200 {strides = array<i32>} : memref<8x18x128xbf16, #tpu.memory_space<vmem>>, vector<8x1x128xbf16>,
    %c5_166 = arith.constant 5 : index
    %c0_167 = arith.constant 0 : index
    %c0_168 = arith.constant 0 : index
    %201 = vector.load %arg8[%c5_166, %c0_167, %c0_168] : memref<8x100x128xbf16, #tpu.memory_space<vmem>>, vector<1x100x128xbf16>
    %202 = vector.shape_cast %201 : vector<1x100x128xbf16> to vector<100x128xbf16>
    %cst_169 = arith.constant dense<0.000000e+00> : vector<8x128xf32>
    %203 = tpu.matmul %140, %202, %cst_169 {dimension_numbers = #tpu.dot_dimension_numbers<[1], [0], [0], [1], [0, 0, 1, 1], [], []>} : vector<8x100xbf16>, vector<100x128xbf16>, vector<8x128xf32> -> vector<8x128xf32>
    %c5_170 = arith.constant 5 : index
    %c0_171 = arith.constant 0 : index
    %204 = vector.load %arg9[%c5_170, %c0_171] : memref<8x128xf32, #tpu.memory_space<vmem>>, vector<1x128xf32>
    %205 = vector.broadcast %204 : vector<1x128xf32> to vector<8x128xf32>
    %206 = arith.addf %203, %205 : vector<8x128xf32>
    %cst_172 = arith.constant 0.000000e+00 : f32
    %207 = vector.broadcast %cst_172 : f32 to vector<8x128xf32>
    %208 = arith.maximumf %206, %207 : vector<8x128xf32>
    %209 = arith.truncf %208 : vector<8x128xf32> to vector<8x128xbf16>
    %c0_173 = arith.constant 0 : index
    %c11 = arith.constant 11 : index
    %c0_174 = arith.constant 0 : index
    %210 = vector.load %arg19[%c0_173, %c11, %c0_174] : memref<8x18x128xbf16, #tpu.memory_space<vmem>>, vector<8x1x128xbf16>
    %211 = vector.shape_cast %210 : vector<8x1x128xbf16> to vector<8x128xbf16>
    %212 = vector.shape_cast %209 : vector<8x128xbf16> to vector<8x1x128xbf16>
    tpu.vector_store %arg19[%c0_173, %c11, %c0_174], %212 {strides = array<i32>} : memref<8x18x128xbf16, #tpu.memory_space<vmem>>, vector<8x1x128xbf16>,
    %c6_175 = arith.constant 6 : index
    %c0_176 = arith.constant 0 : index
    %c0_177 = arith.constant 0 : index
    %213 = vector.load %arg8[%c6_175, %c0_176, %c0_177] : memref<8x100x128xbf16, #tpu.memory_space<vmem>>, vector<1x100x128xbf16>
    %214 = vector.shape_cast %213 : vector<1x100x128xbf16> to vector<100x128xbf16>
    %cst_178 = arith.constant dense<0.000000e+00> : vector<8x128xf32>
    %215 = tpu.matmul %140, %214, %cst_178 {dimension_numbers = #tpu.dot_dimension_numbers<[1], [0], [0], [1], [0, 0, 1, 1], [], []>} : vector<8x100xbf16>, vector<100x128xbf16>, vector<8x128xf32> -> vector<8x128xf32>
    %c6_179 = arith.constant 6 : index
    %c0_180 = arith.constant 0 : index
    %216 = vector.load %arg9[%c6_179, %c0_180] : memref<8x128xf32, #tpu.memory_space<vmem>>, vector<1x128xf32>
    %217 = vector.broadcast %216 : vector<1x128xf32> to vector<8x128xf32>
    %218 = arith.addf %215, %217 : vector<8x128xf32>
    %cst_181 = arith.constant 0.000000e+00 : f32
    %219 = vector.broadcast %cst_181 : f32 to vector<8x128xf32>
    %220 = arith.maximumf %218, %219 : vector<8x128xf32>
    %221 = arith.truncf %220 : vector<8x128xf32> to vector<8x128xbf16>
    %c0_182 = arith.constant 0 : index
    %c13 = arith.constant 13 : index
    %c0_183 = arith.constant 0 : index
    %222 = vector.load %arg19[%c0_182, %c13, %c0_183] : memref<8x18x128xbf16, #tpu.memory_space<vmem>>, vector<8x1x128xbf16>
    %223 = vector.shape_cast %222 : vector<8x1x128xbf16> to vector<8x128xbf16>
    %224 = vector.shape_cast %221 : vector<8x128xbf16> to vector<8x1x128xbf16>
    tpu.vector_store %arg19[%c0_182, %c13, %c0_183], %224 {strides = array<i32>} : memref<8x18x128xbf16, #tpu.memory_space<vmem>>, vector<8x1x128xbf16>,
    %c7_184 = arith.constant 7 : index
    %c0_185 = arith.constant 0 : index
    %c0_186 = arith.constant 0 : index
    %225 = vector.load %arg8[%c7_184, %c0_185, %c0_186] : memref<8x100x128xbf16, #tpu.memory_space<vmem>>, vector<1x100x128xbf16>
    %226 = vector.shape_cast %225 : vector<1x100x128xbf16> to vector<100x128xbf16>
    %cst_187 = arith.constant dense<0.000000e+00> : vector<8x128xf32>
    %227 = tpu.matmul %140, %226, %cst_187 {dimension_numbers = #tpu.dot_dimension_numbers<[1], [0], [0], [1], [0, 0, 1, 1], [], []>} : vector<8x100xbf16>, vector<100x128xbf16>, vector<8x128xf32> -> vector<8x128xf32>
    %c7_188 = arith.constant 7 : index
    %c0_189 = arith.constant 0 : index
    %228 = vector.load %arg9[%c7_188, %c0_189] : memref<8x128xf32, #tpu.memory_space<vmem>>, vector<1x128xf32>
    %229 = vector.broadcast %228 : vector<1x128xf32> to vector<8x128xf32>
    %230 = arith.addf %227, %229 : vector<8x128xf32>
    %cst_190 = arith.constant 0.000000e+00 : f32
    %231 = vector.broadcast %cst_190 : f32 to vector<8x128xf32>
    %232 = arith.maximumf %230, %231 : vector<8x128xf32>
    %233 = arith.truncf %232 : vector<8x128xf32> to vector<8x128xbf16>
    %c0_191 = arith.constant 0 : index
    %c15 = arith.constant 15 : index
    %c0_192 = arith.constant 0 : index
    %234 = vector.load %arg19[%c0_191, %c15, %c0_192] : memref<8x18x128xbf16, #tpu.memory_space<vmem>>, vector<8x1x128xbf16>
    %235 = vector.shape_cast %234 : vector<8x1x128xbf16> to vector<8x128xbf16>
    %236 = vector.shape_cast %233 : vector<8x128xbf16> to vector<8x1x128xbf16>
    tpu.vector_store %arg19[%c0_191, %c15, %c0_192], %236 {strides = array<i32>} : memref<8x18x128xbf16, #tpu.memory_space<vmem>>, vector<8x1x128xbf16>,
    %cst_193 = arith.constant 0.000000e+00 : f32
    %237 = vector.broadcast %cst_193 : f32 to vector<128x256xf32>
    %c0_194 = arith.constant 0 : index
    %c0_195 = arith.constant 0 : index
    %238 = vector.load %arg11[%c0_194, %c0_195] : memref<1x256xf32, #tpu.memory_space<vmem>>, vector<1x256xf32>
    %239 = vector.broadcast %238 : vector<1x256xf32> to vector<128x256xf32>
    %240 = arith.addf %237, %239 : vector<128x256xf32>
    %c0_196 = arith.constant 0 : index
    %c0_197 = arith.constant 0 : index
    %c0_198 = arith.constant 0 : index
    %241 = vector.load %arg19[%c0_196, %c0_197, %c0_198] : memref<8x18x128xbf16, #tpu.memory_space<vmem>>, vector<8x16x128xbf16>
    %242 = vector.shape_cast %241 : vector<8x16x128xbf16> to vector<128x128xbf16>
    %c0_199 = arith.constant 0 : index
    %c0_200 = arith.constant 0 : index
    %c0_201 = arith.constant 0 : index
    %243 = vector.load %arg10[%c0_199, %c0_200, %c0_201] : memref<3x128x256xbf16, #tpu.memory_space<vmem>>, vector<1x128x256xbf16>
    %244 = vector.shape_cast %243 : vector<1x128x256xbf16> to vector<128x256xbf16>
    %cst_202 = arith.constant dense<0.000000e+00> : vector<128x256xf32>
    %245 = tpu.matmul %242, %244, %cst_202 {dimension_numbers = #tpu.dot_dimension_numbers<[1], [0], [0], [1], [0, 0, 1, 1], [], []>} : vector<128x128xbf16>, vector<128x256xbf16>, vector<128x256xf32> -> vector<128x256xf32>
    %246 = arith.addf %240, %245 : vector<128x256xf32>
    %c0_203 = arith.constant 0 : index
    %c1_204 = arith.constant 1 : index
    %c0_205 = arith.constant 0 : index
    %247 = vector.load %arg19[%c0_203, %c1_204, %c0_205] : memref<8x18x128xbf16, #tpu.memory_space<vmem>>, vector<8x16x128xbf16>
    %248 = vector.shape_cast %247 : vector<8x16x128xbf16> to vector<128x128xbf16>
    %c1_206 = arith.constant 1 : index
    %c0_207 = arith.constant 0 : index
    %c0_208 = arith.constant 0 : index
    %249 = vector.load %arg10[%c1_206, %c0_207, %c0_208] : memref<3x128x256xbf16, #tpu.memory_space<vmem>>, vector<1x128x256xbf16>
    %250 = vector.shape_cast %249 : vector<1x128x256xbf16> to vector<128x256xbf16>
    %cst_209 = arith.constant dense<0.000000e+00> : vector<128x256xf32>
    %251 = tpu.matmul %248, %250, %cst_209 {dimension_numbers = #tpu.dot_dimension_numbers<[1], [0], [0], [1], [0, 0, 1, 1], [], []>} : vector<128x128xbf16>, vector<128x256xbf16>, vector<128x256xf32> -> vector<128x256xf32>
    %252 = arith.addf %246, %251 : vector<128x256xf32>
    %c0_210 = arith.constant 0 : index
    %c2_211 = arith.constant 2 : index
    %c0_212 = arith.constant 0 : index
    %253 = vector.load %arg19[%c0_210, %c2_211, %c0_212] : memref<8x18x128xbf16, #tpu.memory_space<vmem>>, vector<8x16x128xbf16>
    %254 = vector.shape_cast %253 : vector<8x16x128xbf16> to vector<128x128xbf16>
    %c2_213 = arith.constant 2 : index
    %c0_214 = arith.constant 0 : index
    %c0_215 = arith.constant 0 : index
    %255 = vector.load %arg10[%c2_213, %c0_214, %c0_215] : memref<3x128x256xbf16, #tpu.memory_space<vmem>>, vector<1x128x256xbf16>
    %256 = vector.shape_cast %255 : vector<1x128x256xbf16> to vector<128x256xbf16>
    %cst_216 = arith.constant dense<0.000000e+00> : vector<128x256xf32>
    %257 = tpu.matmul %254, %256, %cst_216 {dimension_numbers = #tpu.dot_dimension_numbers<[1], [0], [0], [1], [0, 0, 1, 1], [], []>} : vector<128x128xbf16>, vector<128x256xbf16>, vector<128x256xf32> -> vector<128x256xf32>
    %258 = arith.addf %252, %257 : vector<128x256xf32>
    %cst_217 = arith.constant 0.000000e+00 : f32
    %259 = vector.broadcast %cst_217 : f32 to vector<128x256xf32>
    %260 = arith.maximumf %258, %259 : vector<128x256xf32>
    %261 = vector.shape_cast %260 : vector<128x256xf32> to vector<8x16x256xf32>
    %262 = arith.truncf %261 : vector<8x16x256xf32> to vector<8x16x256xbf16>
    %c0_218 = arith.constant 0 : index
    %c1_219 = arith.constant 1 : index
    %c0_220 = arith.constant 0 : index
    %263 = vector.load %arg20[%c0_218, %c1_219, %c0_220] : memref<8x18x256xbf16, #tpu.memory_space<vmem>>, vector<8x16x256xbf16>
    tpu.vector_store %arg20[%c0_218, %c1_219, %c0_220], %262 {strides = array<i32>} : memref<8x18x256xbf16, #tpu.memory_space<vmem>>, vector<8x16x256xbf16>,
    %cst_221 = arith.constant 0.000000e+00 : f32
    %264 = vector.broadcast %cst_221 : f32 to vector<128x128xf32>
    %c0_222 = arith.constant 0 : index
    %c0_223 = arith.constant 0 : index
    %265 = vector.load %arg13[%c0_222, %c0_223] : memref<1x128xf32, #tpu.memory_space<vmem>>, vector<1x128xf32>
    %266 = vector.broadcast %265 : vector<1x128xf32> to vector<128x128xf32>
    %267 = arith.addf %264, %266 : vector<128x128xf32>
    %c0_224 = arith.constant 0 : index
    %c0_225 = arith.constant 0 : index
    %c0_226 = arith.constant 0 : index
    %268 = vector.load %arg20[%c0_224, %c0_225, %c0_226] : memref<8x18x256xbf16, #tpu.memory_space<vmem>>, vector<8x16x256xbf16>
    %269 = vector.shape_cast %268 : vector<8x16x256xbf16> to vector<128x256xbf16>
    %c0_227 = arith.constant 0 : index
    %c0_228 = arith.constant 0 : index
    %c0_229 = arith.constant 0 : index
    %270 = vector.load %arg12[%c0_227, %c0_228, %c0_229] : memref<3x256x128xbf16, #tpu.memory_space<vmem>>, vector<1x256x128xbf16>
    %271 = vector.shape_cast %270 : vector<1x256x128xbf16> to vector<256x128xbf16>
    %cst_230 = arith.constant dense<0.000000e+00> : vector<128x128xf32>
    %272 = tpu.matmul %269, %271, %cst_230 {dimension_numbers = #tpu.dot_dimension_numbers<[1], [0], [0], [1], [0, 0, 1, 1], [], []>} : vector<128x256xbf16>, vector<256x128xbf16>, vector<128x128xf32> -> vector<128x128xf32>
    %273 = arith.addf %267, %272 : vector<128x128xf32>
    %c0_231 = arith.constant 0 : index
    %c1_232 = arith.constant 1 : index
    %c0_233 = arith.constant 0 : index
    %274 = vector.load %arg20[%c0_231, %c1_232, %c0_233] : memref<8x18x256xbf16, #tpu.memory_space<vmem>>, vector<8x16x256xbf16>
    %275 = vector.shape_cast %274 : vector<8x16x256xbf16> to vector<128x256xbf16>
    %c1_234 = arith.constant 1 : index
    %c0_235 = arith.constant 0 : index
    %c0_236 = arith.constant 0 : index
    %276 = vector.load %arg12[%c1_234, %c0_235, %c0_236] : memref<3x256x128xbf16, #tpu.memory_space<vmem>>, vector<1x256x128xbf16>
    %277 = vector.shape_cast %276 : vector<1x256x128xbf16> to vector<256x128xbf16>
    %cst_237 = arith.constant dense<0.000000e+00> : vector<128x128xf32>
    %278 = tpu.matmul %275, %277, %cst_237 {dimension_numbers = #tpu.dot_dimension_numbers<[1], [0], [0], [1], [0, 0, 1, 1], [], []>} : vector<128x256xbf16>, vector<256x128xbf16>, vector<128x128xf32> -> vector<128x128xf32>
    %279 = arith.addf %273, %278 : vector<128x128xf32>
    %c0_238 = arith.constant 0 : index
    %c2_239 = arith.constant 2 : index
    %c0_240 = arith.constant 0 : index
    %280 = vector.load %arg20[%c0_238, %c2_239, %c0_240] : memref<8x18x256xbf16, #tpu.memory_space<vmem>>, vector<8x16x256xbf16>
    %281 = vector.shape_cast %280 : vector<8x16x256xbf16> to vector<128x256xbf16>
    %c2_241 = arith.constant 2 : index
    %c0_242 = arith.constant 0 : index
    %c0_243 = arith.constant 0 : index
    %282 = vector.load %arg12[%c2_241, %c0_242, %c0_243] : memref<3x256x128xbf16, #tpu.memory_space<vmem>>, vector<1x256x128xbf16>
    %283 = vector.shape_cast %282 : vector<1x256x128xbf16> to vector<256x128xbf16>
    %cst_244 = arith.constant dense<0.000000e+00> : vector<128x128xf32>
    %284 = tpu.matmul %281, %283, %cst_244 {dimension_numbers = #tpu.dot_dimension_numbers<[1], [0], [0], [1], [0, 0, 1, 1], [], []>} : vector<128x256xbf16>, vector<256x128xbf16>, vector<128x128xf32> -> vector<128x128xf32>
    %285 = arith.addf %279, %284 : vector<128x128xf32>
    %cst_245 = arith.constant 0.000000e+00 : f32
    %286 = vector.broadcast %cst_245 : f32 to vector<128x128xf32>
    %287 = arith.maximumf %285, %286 : vector<128x128xf32>
    %288 = vector.shape_cast %287 : vector<128x128xf32> to vector<8x16x128xf32>
    %289 = arith.truncf %288 : vector<8x16x128xf32> to vector<8x16x128xbf16>
    %c0_246 = arith.constant 0 : index
    %c1_247 = arith.constant 1 : index
    %c0_248 = arith.constant 0 : index
    %290 = vector.load %arg21[%c0_246, %c1_247, %c0_248] : memref<8x18x128xbf16, #tpu.memory_space<vmem>>, vector<8x16x128xbf16>
    tpu.vector_store %arg21[%c0_246, %c1_247, %c0_248], %289 {strides = array<i32>} : memref<8x18x128xbf16, #tpu.memory_space<vmem>>, vector<8x16x128xbf16>,
    %cst_249 = arith.constant 0.000000e+00 : f32
    %291 = vector.broadcast %cst_249 : f32 to vector<128x16xf32>
    %c0_250 = arith.constant 0 : index
    %c0_251 = arith.constant 0 : index
    %292 = vector.load %arg15[%c0_250, %c0_251] : memref<1x16xf32, #tpu.memory_space<vmem>>, vector<1x16xf32>
    %293 = vector.broadcast %292 : vector<1x16xf32> to vector<128x16xf32>
    %294 = arith.addf %291, %293 : vector<128x16xf32>
    %c0_252 = arith.constant 0 : index
    %c0_253 = arith.constant 0 : index
    %c0_254 = arith.constant 0 : index
    %295 = vector.load %arg21[%c0_252, %c0_253, %c0_254] : memref<8x18x128xbf16, #tpu.memory_space<vmem>>, vector<8x16x128xbf16>
    %296 = vector.shape_cast %295 : vector<8x16x128xbf16> to vector<128x128xbf16>
    %c0_255 = arith.constant 0 : index
    %c0_256 = arith.constant 0 : index
    %c0_257 = arith.constant 0 : index
    %297 = vector.load %arg14[%c0_255, %c0_256, %c0_257] : memref<3x128x16xbf16, #tpu.memory_space<vmem>>, vector<1x128x16xbf16>
    %298 = vector.shape_cast %297 : vector<1x128x16xbf16> to vector<128x16xbf16>
    %cst_258 = arith.constant dense<0.000000e+00> : vector<128x16xf32>
    %299 = tpu.matmul %296, %298, %cst_258 {dimension_numbers = #tpu.dot_dimension_numbers<[1], [0], [0], [1], [0, 0, 1, 1], [], []>} : vector<128x128xbf16>, vector<128x16xbf16>, vector<128x16xf32> -> vector<128x16xf32>
    %300 = arith.addf %294, %299 : vector<128x16xf32>
    %c0_259 = arith.constant 0 : index
    %c1_260 = arith.constant 1 : index
    %c0_261 = arith.constant 0 : index
    %301 = vector.load %arg21[%c0_259, %c1_260, %c0_261] : memref<8x18x128xbf16, #tpu.memory_space<vmem>>, vector<8x16x128xbf16>
    %302 = vector.shape_cast %301 : vector<8x16x128xbf16> to vector<128x128xbf16>
    %c1_262 = arith.constant 1 : index
    %c0_263 = arith.constant 0 : index
    %c0_264 = arith.constant 0 : index
    %303 = vector.load %arg14[%c1_262, %c0_263, %c0_264] : memref<3x128x16xbf16, #tpu.memory_space<vmem>>, vector<1x128x16xbf16>
    %304 = vector.shape_cast %303 : vector<1x128x16xbf16> to vector<128x16xbf16>
    %cst_265 = arith.constant dense<0.000000e+00> : vector<128x16xf32>
    %305 = tpu.matmul %302, %304, %cst_265 {dimension_numbers = #tpu.dot_dimension_numbers<[1], [0], [0], [1], [0, 0, 1, 1], [], []>} : vector<128x128xbf16>, vector<128x16xbf16>, vector<128x16xf32> -> vector<128x16xf32>
    %306 = arith.addf %300, %305 : vector<128x16xf32>
    %c0_266 = arith.constant 0 : index
    %c2_267 = arith.constant 2 : index
    %c0_268 = arith.constant 0 : index
    %307 = vector.load %arg21[%c0_266, %c2_267, %c0_268] : memref<8x18x128xbf16, #tpu.memory_space<vmem>>, vector<8x16x128xbf16>
    %308 = vector.shape_cast %307 : vector<8x16x128xbf16> to vector<128x128xbf16>
    %c2_269 = arith.constant 2 : index
    %c0_270 = arith.constant 0 : index
    %c0_271 = arith.constant 0 : index
    %309 = vector.load %arg14[%c2_269, %c0_270, %c0_271] : memref<3x128x16xbf16, #tpu.memory_space<vmem>>, vector<1x128x16xbf16>
    %310 = vector.shape_cast %309 : vector<1x128x16xbf16> to vector<128x16xbf16>
    %cst_272 = arith.constant dense<0.000000e+00> : vector<128x16xf32>
    %311 = tpu.matmul %308, %310, %cst_272 {dimension_numbers = #tpu.dot_dimension_numbers<[1], [0], [0], [1], [0, 0, 1, 1], [], []>} : vector<128x128xbf16>, vector<128x16xbf16>, vector<128x16xf32> -> vector<128x16xf32>
    %312 = arith.addf %306, %311 : vector<128x16xf32>
    %cst_273 = arith.constant 0.000000e+00 : f32
    %313 = vector.broadcast %cst_273 : f32 to vector<128x16xf32>
    %314 = arith.maximumf %312, %313 : vector<128x16xf32>
    %315 = vector.shape_cast %314 : vector<128x16xf32> to vector<8x16x16xf32>
    %c0_274 = arith.constant 0 : index
    %c0_275 = arith.constant 0 : index
    %c0_276 = arith.constant 0 : index
    %316 = vector.load %arg16[%c0_274, %c0_275, %c0_276] : memref<8x16x16xf32, #tpu.memory_space<vmem>>, vector<8x16x16xf32>
    tpu.vector_store %arg16[%c0_274, %c0_275, %c0_276], %315 {strides = array<i32>} : memref<8x16x16xf32, #tpu.memory_space<vmem>>, vector<8x16x16xf32>,
    return
  }
  func.func @transform_0(%arg0: i32) -> (i32, i32, i32) {
    %c0_i32 = arith.constant 0 : i32
    %c0_i32_0 = arith.constant 0 : i32
    %c0_i32_1 = arith.constant 0 : i32
    return %arg0, %c0_i32, %c0_i32_0 : i32, i32, i32
  }
  func.func @transform_1(%arg0: i32) -> (i32, i32, i32) {
    %c0_i32 = arith.constant 0 : i32
    %c0_i32_0 = arith.constant 0 : i32
    %c0_i32_1 = arith.constant 0 : i32
    %c0_i32_2 = arith.constant 0 : i32
    return %c0_i32, %c0_i32_0, %c0_i32_1 : i32, i32, i32
  }
  func.func @transform_2(%arg0: i32) -> (i32, i32) {
    %c0_i32 = arith.constant 0 : i32
    %c0_i32_0 = arith.constant 0 : i32
    %c0_i32_1 = arith.constant 0 : i32
    return %c0_i32, %c0_i32_0 : i32, i32
  }
  func.func @transform_3(%arg0: i32) -> (i32, i32, i32) {
    %c0_i32 = arith.constant 0 : i32
    %c0_i32_0 = arith.constant 0 : i32
    %c0_i32_1 = arith.constant 0 : i32
    %c0_i32_2 = arith.constant 0 : i32
    return %c0_i32, %c0_i32_0, %c0_i32_1 : i32, i32, i32
  }
  func.func @transform_4(%arg0: i32) -> (i32, i32) {
    %c0_i32 = arith.constant 0 : i32
    %c0_i32_0 = arith.constant 0 : i32
    %c0_i32_1 = arith.constant 0 : i32
    return %c0_i32, %c0_i32_0 : i32, i32
  }
  func.func @transform_5(%arg0: i32) -> (i32, i32, i32) {
    %c0_i32 = arith.constant 0 : i32
    %c0_i32_0 = arith.constant 0 : i32
    %c0_i32_1 = arith.constant 0 : i32
    %c0_i32_2 = arith.constant 0 : i32
    return %c0_i32, %c0_i32_0, %c0_i32_1 : i32, i32, i32
  }
  func.func @transform_6(%arg0: i32) -> (i32, i32) {
    %c0_i32 = arith.constant 0 : i32
    %c0_i32_0 = arith.constant 0 : i32
    %c0_i32_1 = arith.constant 0 : i32
    return %c0_i32, %c0_i32_0 : i32, i32
  }
  func.func @transform_7(%arg0: i32) -> (i32, i32, i32) {
    %c0_i32 = arith.constant 0 : i32
    %c0_i32_0 = arith.constant 0 : i32
    %c0_i32_1 = arith.constant 0 : i32
    %c0_i32_2 = arith.constant 0 : i32
    return %c0_i32, %c0_i32_0, %c0_i32_1 : i32, i32, i32
  }
  func.func @transform_8(%arg0: i32) -> (i32, i32) {
    %c0_i32 = arith.constant 0 : i32
    %c0_i32_0 = arith.constant 0 : i32
    %c0_i32_1 = arith.constant 0 : i32
    return %c0_i32, %c0_i32_0 : i32, i32
  }
  func.func @transform_9(%arg0: i32) -> (i32, i32, i32) {
    %c0_i32 = arith.constant 0 : i32
    %c0_i32_0 = arith.constant 0 : i32
    %c0_i32_1 = arith.constant 0 : i32
    %c0_i32_2 = arith.constant 0 : i32
    return %c0_i32, %c0_i32_0, %c0_i32_1 : i32, i32, i32
  }
  func.func @transform_10(%arg0: i32) -> (i32, i32) {
    %c0_i32 = arith.constant 0 : i32
    %c0_i32_0 = arith.constant 0 : i32
    %c0_i32_1 = arith.constant 0 : i32
    return %c0_i32, %c0_i32_0 : i32, i32
  }
  func.func @transform_11(%arg0: i32) -> (i32, i32, i32) {
    %c0_i32 = arith.constant 0 : i32
    %c0_i32_0 = arith.constant 0 : i32
    %c0_i32_1 = arith.constant 0 : i32
    %c0_i32_2 = arith.constant 0 : i32
    return %c0_i32, %c0_i32_0, %c0_i32_1 : i32, i32, i32
  }
  func.func @transform_12(%arg0: i32) -> (i32, i32) {
    %c0_i32 = arith.constant 0 : i32
    %c0_i32_0 = arith.constant 0 : i32
    %c0_i32_1 = arith.constant 0 : i32
    return %c0_i32, %c0_i32_0 : i32, i32
  }
  func.func @transform_13(%arg0: i32) -> (i32, i32, i32) {
    %c0_i32 = arith.constant 0 : i32
    %c0_i32_0 = arith.constant 0 : i32
    %c0_i32_1 = arith.constant 0 : i32
    %c0_i32_2 = arith.constant 0 : i32
    return %c0_i32, %c0_i32_0, %c0_i32_1 : i32, i32, i32
  }
  func.func @transform_14(%arg0: i32) -> (i32, i32) {
    %c0_i32 = arith.constant 0 : i32
    %c0_i32_0 = arith.constant 0 : i32
    %c0_i32_1 = arith.constant 0 : i32
    return %c0_i32, %c0_i32_0 : i32, i32
  }
  func.func @transform_15(%arg0: i32) -> (i32, i32, i32) {
    %c0_i32 = arith.constant 0 : i32
    %c0_i32_0 = arith.constant 0 : i32
    %c0_i32_1 = arith.constant 0 : i32
    return %arg0, %c0_i32, %c0_i32_0 : i32, i32, i32
  }
}

</mosaic_0001>

<llo_original>
// kernel: autoencoder_fused.1
$region0: #{autoencoder_fused.1}
  #allocation0 [shape = 'u32[]', space=smem, size = 0x4, offset = 0x4, fixed_abs, tag = 'smem constant byte address 0x4 - core index']
  #allocation1 [shape = 'u32[144,128]{1,0:T(1,128)}', space=vmem, size = 0x12000, scoped, tag = 'internal scratch']
  #allocation2 [shape = 'bf16[8,18,16]{2,1,0:T(8,128)(2,1)}', space=vmem, size = 0xc000, scoped, tag = 'scratch operand']
  #allocation3 [shape = 'bf16[8,18,256]{2,1,0:T(8,128)(2,1)}', space=vmem, size = 0x18000, scoped, tag = 'scratch operand']
  #allocation4 [shape = 'bf16[8,18,128]{2,1,0:T(8,128)(2,1)}', space=vmem, size = 0xc000, scoped, tag = 'scratch operand']
  #allocation5 [shape = 'bf16[8,18,256]{2,1,0:T(8,128)(2,1)}', space=vmem, size = 0x18000, scoped, tag = 'scratch operand']
  #allocation6 [shape = 'bf16[8,18,128]{2,1,0:T(8,128)(2,1)}', space=vmem, size = 0xc000, scoped, tag = 'scratch operand']
  %s0 = inlined_call_operand.vmem [shape: f32[16,16,16], index: 0, kind: input, shape index: {}]
  %s1 = inlined_call_operand.vmem [shape: bf16[3,16,256], index: 1, kind: input, shape index: {}]
  %s2 = inlined_call_operand.vmem [shape: f32[1,256], index: 2, kind: input, shape index: {}]
  %s3 = inlined_call_operand.vmem [shape: bf16[3,256,128], index: 3, kind: input, shape index: {}]
  %s4 = inlined_call_operand.vmem [shape: f32[1,128], index: 4, kind: input, shape index: {}]
  %s5 = inlined_call_operand.vmem [shape: bf16[8,128,100], index: 5, kind: input, shape index: {}]
  %s6 = inlined_call_operand.vmem [shape: f32[1,100], index: 6, kind: input, shape index: {}]
  %s7 = inlined_call_operand.vmem [shape: bf16[8,100,128], index: 7, kind: input, shape index: {}]
  %s8 = inlined_call_operand.vmem [shape: f32[8,128], index: 8, kind: input, shape index: {}]
  %s9 = inlined_call_operand.vmem [shape: bf16[3,128,256], index: 9, kind: input, shape index: {}]
  %s10 = inlined_call_operand.vmem [shape: f32[1,256], index: 10, kind: input, shape index: {}]
  %s11 = inlined_call_operand.vmem [shape: bf16[3,256,128], index: 11, kind: input, shape index: {}]
  %s12 = inlined_call_operand.vmem [shape: f32[1,128], index: 12, kind: input, shape index: {}]
  %s13 = inlined_call_operand.vmem [shape: bf16[3,128,16], index: 13, kind: input, shape index: {}]
  %s14 = inlined_call_operand.vmem [shape: f32[1,16], index: 14, kind: input, shape index: {}]
  %s15 = inlined_call_operand.vmem [shape: f32[16,16,16], index: 15, kind: output, shape index: {}]
  %s16 = sld [smem:[#allocation0]]
  $region93: #{autoencoder_fused.1} parent=0
    _
  %s18 = ssub.s32 1, %s16
  %s19 = scalar_select 0, %s18, %s16
  loop: start=0, step=1, limit=4
  $region2: #{autoencoder_fused.1} parent=0 // loop_pre_header
    _
  $region3: #{autoencoder_fused.1} parent=0 // loop_header
    %s21 = sphi 0, %s25
    %p22 = scmp.ge.s32.totalorder %s21, 4
    %s31 = sphi 0, %s33
    %s34 = sphi 0, %s31
    %s35 = sphi 0, %s34
    %s51 = sphi 0, %s35
    %s55 = sphi 0, %s55
    %s57 = sphi 0, %s55
    %s58 = sphi 0, %s57
    %s72 = sphi 0, %s58
    %s76 = sphi 0, %s76
    %s78 = sphi 0, %s76
    %s79 = sphi 0, %s78
    %s93 = sphi 0, %s79
    %s97 = sphi 0, %s97
    %s99 = sphi 0, %s97
    %s100 = sphi 0, %s99
    %s114 = sphi 0, %s100
    %s118 = sphi 0, %s118
    %s120 = sphi 0, %s118
    %s121 = sphi 0, %s120
    %s135 = sphi 0, %s121
    %s139 = sphi 0, %s139
    %s141 = sphi 0, %s139
    %s142 = sphi 0, %s141
    %s156 = sphi 0, %s142
    %s160 = sphi 0, %s160
    %s162 = sphi 0, %s160
    %s163 = sphi 0, %s162
    %s177 = sphi 0, %s163
    %s181 = sphi 0, %s181
    %s183 = sphi 0, %s181
    %s184 = sphi 0, %s183
    %s198 = sphi 0, %s184
    %s202 = sphi 0, %s202
    %s204 = sphi 0, %s202
    %s205 = sphi 0, %s204
    %s219 = sphi 0, %s205
    %s223 = sphi 0, %s223
    %s225 = sphi 0, %s223
    %s226 = sphi 0, %s225
    %s240 = sphi 0, %s226
    %s244 = sphi 0, %s244
    %s246 = sphi 0, %s244
    %s247 = sphi 0, %s246
    %s261 = sphi 0, %s247
    %s265 = sphi 0, %s265
    %s267 = sphi 0, %s265
    %s268 = sphi 0, %s267
    %s282 = sphi 0, %s268
    %s286 = sphi 0, %s286
    %s288 = sphi 0, %s286
    %s289 = sphi 0, %s288
    %s303 = sphi 0, %s289
    %s307 = sphi 0, %s307
    %s309 = sphi 0, %s307
    %s310 = sphi 0, %s309
    %s324 = sphi 0, %s310
    %s328 = sphi 0, %s328
    %s330 = sphi 0, %s328
    %s331 = sphi 0, %s330
    %s345 = sphi 0, %s331
    %s351 = sphi 0, %s353
    %s354 = sphi 0, %s351
    %s355 = sphi 0, %s354
    %s371 = sphi 0, %s355
  $region4: #{autoencoder_fused.1} parent=0 // loop_header_branch
    %24 = sbr.rel (%p22) target = $region8
  $region5: #{autoencoder_fused.1} parent=0 // loop_body
    %s26 = ssub.s32 %s21, 1
    %s27 = ssub.s32 %s21, 2
    %s28 = sadd.s32 %s21, 1
    %s29 = ssub.s32 %s21, %s28
    %p30 = scmp.eq.s32.totalorder %s29, 0
    %s32 = sadd.s32 %s31, 1
    %s33 = scalar_select %p30, %s31, %s32
    %p36 = pneg %p30
    %p37 = scmp.eq.s32.totalorder %s21, 1
    %p38 = por %p36, %p37
    %p39 = scmp.ne.s32.totalorder %s31, %s34
    %p40 = scmp.eq.s32.totalorder %s21, 0
    %p41 = por %p39, %p40
    %p42 = scmp.ne.s32.totalorder %s31, %s34
    %p43 = scmp.eq.s32.totalorder %s26, 1
    %p44 = por %p42, %p43
    %p45 = scmp.ne.s32.totalorder %s34, %s35
    %p46 = scmp.eq.s32.totalorder %s26, 0
    %p47 = por %p45, %p46
    %p48 = scmp.ne.s32.totalorder %s34, %s35
    %p49 = scmp.eq.s32.totalorder %s27, 1
    %p50 = por %p48, %p49
    %p52 = scmp.ne.s32.totalorder %s35, %s51
    %p53 = scmp.eq.s32.totalorder %s27, 0
    %p54 = por %p52, %p53
    %s56 = sadd.s32 %s55, 1
    %p59 = scmp.eq.s32.totalorder %s21, 1
    %p60 = scmp.ne.s32.totalorder %s55, %s57
    %p61 = scmp.eq.s32.totalorder %s21, 0
    %p62 = por %p60, %p61
    %p63 = scmp.ne.s32.totalorder %s55, %s57
    %p64 = scmp.eq.s32.totalorder %s26, 1
    %p65 = por %p63, %p64
    %p66 = scmp.ne.s32.totalorder %s57, %s58
    %p67 = scmp.eq.s32.totalorder %s26, 0
    %p68 = por %p66, %p67
    %p69 = scmp.ne.s32.totalorder %s57, %s58
    %p70 = scmp.eq.s32.totalorder %s27, 1
    %p71 = por %p69, %p70
    %p73 = scmp.ne.s32.totalorder %s58, %s72
    %p74 = scmp.eq.s32.totalorder %s27, 0
    %p75 = por %p73, %p74
    %s77 = sadd.s32 %s76, 1
    %p80 = scmp.eq.s32.totalorder %s21, 1
    %p81 = scmp.ne.s32.totalorder %s76, %s78
    %p82 = scmp.eq.s32.totalorder %s21, 0
    %p83 = por %p81, %p82
    %p84 = scmp.ne.s32.totalorder %s76, %s78
    %p85 = scmp.eq.s32.totalorder %s26, 1
    %p86 = por %p84, %p85
    %p87 = scmp.ne.s32.totalorder %s78, %s79
    %p88 = scmp.eq.s32.totalorder %s26, 0
    %p89 = por %p87, %p88
    %p90 = scmp.ne.s32.totalorder %s78, %s79
    %p91 = scmp.eq.s32.totalorder %s27, 1
    %p92 = por %p90, %p91
    %p94 = scmp.ne.s32.totalorder %s79, %s93
    %p95 = scmp.eq.s32.totalorder %s27, 0
    %p96 = por %p94, %p95
    %s98 = sadd.s32 %s97, 1
    %p101 = scmp.eq.s32.totalorder %s21, 1
    %p102 = scmp.ne.s32.totalorder %s97, %s99
    %p103 = scmp.eq.s32.totalorder %s21, 0
    %p104 = por %p102, %p103
    %p105 = scmp.ne.s32.totalorder %s97, %s99
    %p106 = scmp.eq.s32.totalorder %s26, 1
    %p107 = por %p105, %p106
    %p108 = scmp.ne.s32.totalorder %s99, %s100
    %p109 = scmp.eq.s32.totalorder %s26, 0
    %p110 = por %p108, %p109
    %p111 = scmp.ne.s32.totalorder %s99, %s100
    %p112 = scmp.eq.s32.totalorder %s27, 1
    %p113 = por %p111, %p112
    %p115 = scmp.ne.s32.totalorder %s100, %s114
    %p116 = scmp.eq.s32.totalorder %s27, 0
    %p117 = por %p115, %p116
    %s119 = sadd.s32 %s118, 1
    %p122 = scmp.eq.s32.totalorder %s21, 1
    %p123 = scmp.ne.s32.totalorder %s118, %s120
    %p124 = scmp.eq.s32.totalorder %s21, 0
    %p125 = por %p123, %p124
    %p126 = scmp.ne.s32.totalorder %s118, %s120
    %p127 = scmp.eq.s32.totalorder %s26, 1
    %p128 = por %p126, %p127
    %p129 = scmp.ne.s32.totalorder %s120, %s121
    %p130 = scmp.eq.s32.totalorder %s26, 0
    %p131 = por %p129, %p130
    %p132 = scmp.ne.s32.totalorder %s120, %s121
    %p133 = scmp.eq.s32.totalorder %s27, 1
    %p134 = por %p132, %p133
    %p136 = scmp.ne.s32.totalorder %s121, %s135
    %p137 = scmp.eq.s32.totalorder %s27, 0
    %p138 = por %p136, %p137
    %s140 = sadd.s32 %s139, 1
    %p143 = scmp.eq.s32.totalorder %s21, 1
    %p144 = scmp.ne.s32.totalorder %s139, %s141
    %p145 = scmp.eq.s32.totalorder %s21, 0
    %p146 = por %p144, %p145
    %p147 = scmp.ne.s32.totalorder %s139, %s141
    %p148 = scmp.eq.s32.totalorder %s26, 1
    %p149 = por %p147, %p148
    %p150 = scmp.ne.s32.totalorder %s141, %s142
    %p151 = scmp.eq.s32.totalorder %s26, 0
    %p152 = por %p150, %p151
    %p153 = scmp.ne.s32.totalorder %s141, %s142
    %p154 = scmp.eq.s32.totalorder %s27, 1
    %p155 = por %p153, %p154
    %p157 = scmp.ne.s32.totalorder %s142, %s156
    %p158 = scmp.eq.s32.totalorder %s27, 0
    %p159 = por %p157, %p158
    %s161 = sadd.s32 %s160, 1
    %p164 = scmp.eq.s32.totalorder %s21, 1
    %p165 = scmp.ne.s32.totalorder %s160, %s162
    %p166 = scmp.eq.s32.totalorder %s21, 0
    %p167 = por %p165, %p166
    %p168 = scmp.ne.s32.totalorder %s160, %s162
    %p169 = scmp.eq.s32.totalorder %s26, 1
    %p170 = por %p168, %p169
    %p171 = scmp.ne.s32.totalorder %s162, %s163
    %p172 = scmp.eq.s32.totalorder %s26, 0
    %p173 = por %p171, %p172
    %p174 = scmp.ne.s32.totalorder %s162, %s163
    %p175 = scmp.eq.s32.totalorder %s27, 1
    %p176 = por %p174, %p175
    %p178 = scmp.ne.s32.totalorder %s163, %s177
    %p179 = scmp.eq.s32.totalorder %s27, 0
    %p180 = por %p178, %p179
    %s182 = sadd.s32 %s181, 1
    %p185 = scmp.eq.s32.totalorder %s21, 1
    %p186 = scmp.ne.s32.totalorder %s181, %s183
    %p187 = scmp.eq.s32.totalorder %s21, 0
    %p188 = por %p186, %p187
    %p189 = scmp.ne.s32.totalorder %s181, %s183
    %p190 = scmp.eq.s32.totalorder %s26, 1
    %p191 = por %p189, %p190
    %p192 = scmp.ne.s32.totalorder %s183, %s184
    %p193 = scmp.eq.s32.totalorder %s26, 0
    %p194 = por %p192, %p193
    %p195 = scmp.ne.s32.totalorder %s183, %s184
    %p196 = scmp.eq.s32.totalorder %s27, 1
    %p197 = por %p195, %p196
    %p199 = scmp.ne.s32.totalorder %s184, %s198
    %p200 = scmp.eq.s32.totalorder %s27, 0
    %p201 = por %p199, %p200
    %s203 = sadd.s32 %s202, 1
    %p206 = scmp.eq.s32.totalorder %s21, 1
    %p207 = scmp.ne.s32.totalorder %s202, %s204
    %p208 = scmp.eq.s32.totalorder %s21, 0
    %p209 = por %p207, %p208
    %p210 = scmp.ne.s32.totalorder %s202, %s204
    %p211 = scmp.eq.s32.totalorder %s26, 1
    %p212 = por %p210, %p211
    %p213 = scmp.ne.s32.totalorder %s204, %s205
    %p214 = scmp.eq.s32.totalorder %s26, 0
    %p215 = por %p213, %p214
    %p216 = scmp.ne.s32.totalorder %s204, %s205
    %p217 = scmp.eq.s32.totalorder %s27, 1
    %p218 = por %p216, %p217
    %p220 = scmp.ne.s32.totalorder %s205, %s219
    %p221 = scmp.eq.s32.totalorder %s27, 0
    %p222 = por %p220, %p221
    %s224 = sadd.s32 %s223, 1
    %p227 = scmp.eq.s32.totalorder %s21, 1
    %p228 = scmp.ne.s32.totalorder %s223, %s225
    %p229 = scmp.eq.s32.totalorder %s21, 0
    %p230 = por %p228, %p229
    %p231 = scmp.ne.s32.totalorder %s223, %s225
    %p232 = scmp.eq.s32.totalorder %s26, 1
    %p233 = por %p231, %p232
    %p234 = scmp.ne.s32.totalorder %s225, %s226
    %p235 = scmp.eq.s32.totalorder %s26, 0
    %p236 = por %p234, %p235
    %p237 = scmp.ne.s32.totalorder %s225, %s226
    %p238 = scmp.eq.s32.totalorder %s27, 1
    %p239 = por %p237, %p238
    %p241 = scmp.ne.s32.totalorder %s226, %s240
    %p242 = scmp.eq.s32.totalorder %s27, 0
    %p243 = por %p241, %p242
    %s245 = sadd.s32 %s244, 1
    %p248 = scmp.eq.s32.totalorder %s21, 1
    %p249 = scmp.ne.s32.totalorder %s244, %s246
    %p250 = scmp.eq.s32.totalorder %s21, 0
    %p251 = por %p249, %p250
    %p252 = scmp.ne.s32.totalorder %s244, %s246
    %p253 = scmp.eq.s32.totalorder %s26, 1
    %p254 = por %p252, %p253
    %p255 = scmp.ne.s32.totalorder %s246, %s247
    %p256 = scmp.eq.s32.totalorder %s26, 0
    %p257 = por %p255, %p256
    %p258 = scmp.ne.s32.totalorder %s246, %s247
    %p259 = scmp.eq.s32.totalorder %s27, 1
    %p260 = por %p258, %p259
    %p262 = scmp.ne.s32.totalorder %s247, %s261
    %p263 = scmp.eq.s32.totalorder %s27, 0
    %p264 = por %p262, %p263
    %s266 = sadd.s32 %s265, 1
    %p269 = scmp.eq.s32.totalorder %s21, 1
    %p270 = scmp.ne.s32.totalorder %s265, %s267
    %p271 = scmp.eq.s32.totalorder %s21, 0
    %p272 = por %p270, %p271
    %p273 = scmp.ne.s32.totalorder %s265, %s267
    %p274 = scmp.eq.s32.totalorder %s26, 1
    %p275 = por %p273, %p274
    %p276 = scmp.ne.s32.totalorder %s267, %s268
    %p277 = scmp.eq.s32.totalorder %s26, 0
    %p278 = por %p276, %p277
    %p279 = scmp.ne.s32.totalorder %s267, %s268
    %p280 = scmp.eq.s32.totalorder %s27, 1
    %p281 = por %p279, %p280
    %p283 = scmp.ne.s32.totalorder %s268, %s282
    %p284 = scmp.eq.s32.totalorder %s27, 0
    %p285 = por %p283, %p284
    %s287 = sadd.s32 %s286, 1
    %p290 = scmp.eq.s32.totalorder %s21, 1
    %p291 = scmp.ne.s32.totalorder %s286, %s288
    %p292 = scmp.eq.s32.totalorder %s21, 0
    %p293 = por %p291, %p292
    %p294 = scmp.ne.s32.totalorder %s286, %s288
    %p295 = scmp.eq.s32.totalorder %s26, 1
    %p296 = por %p294, %p295
    %p297 = scmp.ne.s32.totalorder %s288, %s289
    %p298 = scmp.eq.s32.totalorder %s26, 0
    %p299 = por %p297, %p298
    %p300 = scmp.ne.s32.totalorder %s288, %s289
    %p301 = scmp.eq.s32.totalorder %s27, 1
    %p302 = por %p300, %p301
    %p304 = scmp.ne.s32.totalorder %s289, %s303
    %p305 = scmp.eq.s32.totalorder %s27, 0
    %p306 = por %p304, %p305
    %s308 = sadd.s32 %s307, 1
    %p311 = scmp.eq.s32.totalorder %s21, 1
    %p312 = scmp.ne.s32.totalorder %s307, %s309
    %p313 = scmp.eq.s32.totalorder %s21, 0
    %p314 = por %p312, %p313
    %p315 = scmp.ne.s32.totalorder %s307, %s309
    %p316 = scmp.eq.s32.totalorder %s26, 1
    %p317 = por %p315, %p316
    %p318 = scmp.ne.s32.totalorder %s309, %s310
    %p319 = scmp.eq.s32.totalorder %s26, 0
    %p320 = por %p318, %p319
    %p321 = scmp.ne.s32.totalorder %s309, %s310
    %p322 = scmp.eq.s32.totalorder %s27, 1
    %p323 = por %p321, %p322
    %p325 = scmp.ne.s32.totalorder %s310, %s324
    %p326 = scmp.eq.s32.totalorder %s27, 0
    %p327 = por %p325, %p326
    %s329 = sadd.s32 %s328, 1
    %p332 = scmp.eq.s32.totalorder %s21, 1
    %p333 = scmp.ne.s32.totalorder %s328, %s330
    %p334 = scmp.eq.s32.totalorder %s21, 0
    %p335 = por %p333, %p334
    %p336 = scmp.ne.s32.totalorder %s328, %s330
    %p337 = scmp.eq.s32.totalorder %s26, 1
    %p338 = por %p336, %p337
    %p339 = scmp.ne.s32.totalorder %s330, %s331
    %p340 = scmp.eq.s32.totalorder %s26, 0
    %p341 = por %p339, %p340
    %p342 = scmp.ne.s32.totalorder %s330, %s331
    %p343 = scmp.eq.s32.totalorder %s27, 1
    %p344 = por %p342, %p343
    %p346 = scmp.ne.s32.totalorder %s331, %s345
    %p347 = scmp.eq.s32.totalorder %s27, 0
    %p348 = por %p346, %p347
    %s349 = ssub.s32 %s21, %s28
    %p350 = scmp.eq.s32.totalorder %s349, 0
    %s352 = sadd.s32 %s351, 1
    %s353 = scalar_select %p350, %s351, %s352
    %p356 = pneg %p350
    %p357 = scmp.eq.s32.totalorder %s21, 1
    %p358 = por %p356, %p357
    %p359 = scmp.ne.s32.totalorder %s351, %s354
    %p360 = scmp.eq.s32.totalorder %s21, 0
    %p361 = por %p359, %p360
    %p362 = scmp.ne.s32.totalorder %s351, %s354
    %p363 = scmp.eq.s32.totalorder %s26, 1
    %p364 = por %p362, %p363
    %p365 = scmp.ne.s32.totalorder %s354, %s355
    %p366 = scmp.eq.s32.totalorder %s26, 0
    %p367 = por %p365, %p366
    %p368 = scmp.ne.s32.totalorder %s354, %s355
    %p369 = scmp.eq.s32.totalorder %s27, 1
    %p370 = por %p368, %p369
    %p372 = scmp.ne.s32.totalorder %s355, %s371
    %p373 = scmp.eq.s32.totalorder %s27, 0
    %p374 = por %p372, %p373
    %p375 = scmp.le.s32.totalorder 1, %s21
    %p376 = scmp.lt.s32.totalorder %s21, 3
    %p377 = pnand %p375, %p376
    %p378 = pneg %p377
    // Predicated region
    $region9: #{autoencoder_fused.1} parent=5 // pred_check
      _
    $region10: #{autoencoder_fused.1} parent=5 // pred_check_branch
      %380 = sbr.rel (%p377) target = $region12
    $region11: #{autoencoder_fused.1} parent=5 // pred_region
      %s381 = ssub.s32 %s21, 1
      // Predicated region
      $region13: #{autoencoder_fused.1} parent=11 // pred_check
        %p382 = pneg %p68
      $region14: #{autoencoder_fused.1} parent=11 // pred_check_branch
        %384 = sbr.rel (%p382) target = $region16
      $region15: #{autoencoder_fused.1} parent=11 // pred_region
        _
      $region16: #{autoencoder_fused.1} parent=11 // pred_fallthru
        _
      // Predicated region
      $region17: #{autoencoder_fused.1} parent=11 // pred_check
        %p385 = pneg %p89
      $region18: #{autoencoder_fused.1} parent=11 // pred_check_branch
        %387 = sbr.rel (%p385) target = $region20
      $region19: #{autoencoder_fused.1} parent=11 // pred_region
        _
      $region20: #{autoencoder_fused.1} parent=11 // pred_fallthru
        _
      // Predicated region
      $region21: #{autoencoder_fused.1} parent=11 // pred_check
        %p388 = pneg %p110
      $region22: #{autoencoder_fused.1} parent=11 // pred_check_branch
        %390 = sbr.rel (%p388) target = $region24
      $region23: #{autoencoder_fused.1} parent=11 // pred_region
        _
      $region24: #{autoencoder_fused.1} parent=11 // pred_fallthru
        _
      // Predicated region
      $region25: #{autoencoder_fused.1} parent=11 // pred_check
        %p391 = pneg %p131
      $region26: #{autoencoder_fused.1} parent=11 // pred_check_branch
        %393 = sbr.rel (%p391) target = $region28
      $region27: #{autoencoder_fused.1} parent=11 // pred_region
        _
      $region28: #{autoencoder_fused.1} parent=11 // pred_fallthru
        _
      // Predicated region
      $region29: #{autoencoder_fused.1} parent=11 // pred_check
        %p394 = pneg %p152
      $region30: #{autoencoder_fused.1} parent=11 // pred_check_branch
        %396 = sbr.rel (%p394) target = $region32
      $region31: #{autoencoder_fused.1} parent=11 // pred_region
        _
      $region32: #{autoencoder_fused.1} parent=11 // pred_fallthru
        _
      // Predicated region
      $region33: #{autoencoder_fused.1} parent=11 // pred_check
        %p397 = pneg %p173
      $region34: #{autoencoder_fused.1} parent=11 // pred_check_branch
        %399 = sbr.rel (%p397) target = $region36
      $region35: #{autoencoder_fused.1} parent=11 // pred_region
        _
      $region36: #{autoencoder_fused.1} parent=11 // pred_fallthru
        _
      // Predicated region
      $region37: #{autoencoder_fused.1} parent=11 // pred_check
        %p400 = pneg %p194
      $region38: #{autoencoder_fused.1} parent=11 // pred_check_branch
        %402 = sbr.rel (%p400) target = $region40
      $region39: #{autoencoder_fused.1} parent=11 // pred_region
        _
      $region40: #{autoencoder_fused.1} parent=11 // pred_fallthru
        _
      // Predicated region
      $region41: #{autoencoder_fused.1} parent=11 // pred_check
        %p403 = pneg %p215
      $region42: #{autoencoder_fused.1} parent=11 // pred_check_branch
        %405 = sbr.rel (%p403) target = $region44
      $region43: #{autoencoder_fused.1} parent=11 // pred_region
        _
      $region44: #{autoencoder_fused.1} parent=11 // pred_fallthru
        _
      // Predicated region
      $region45: #{autoencoder_fused.1} parent=11 // pred_check
        %p406 = pneg %p236
      $region46: #{autoencoder_fused.1} parent=11 // pred_check_branch
        %408 = sbr.rel (%p406) target = $region48
      $region47: #{autoencoder_fused.1} parent=11 // pred_region
        _
      $region48: #{autoencoder_fused.1} parent=11 // pred_fallthru
        _
      // Predicated region
      $region49: #{autoencoder_fused.1} parent=11 // pred_check
        %p409 = pneg %p257
      $region50: #{autoencoder_fused.1} parent=11 // pred_check_branch
        %411 = sbr.rel (%p409) target = $region52
      $region51: #{autoencoder_fused.1} parent=11 // pred_region
        _
      $region52: #{autoencoder_fused.1} parent=11 // pred_fallthru
        _
      // Predicated region
      $region53: #{autoencoder_fused.1} parent=11 // pred_check
        %p412 = pneg %p278
      $region54: #{autoencoder_fused.1} parent=11 // pred_check_branch
        %414 = sbr.rel (%p412) target = $region56
      $region55: #{autoencoder_fused.1} parent=11 // pred_region
        _
      $region56: #{autoencoder_fused.1} parent=11 // pred_fallthru
        _
      // Predicated region
      $region57: #{autoencoder_fused.1} parent=11 // pred_check
        %p415 = pneg %p299
      $region58: #{autoencoder_fused.1} parent=11 // pred_check_branch
        %417 = sbr.rel (%p415) target = $region60
      $region59: #{autoencoder_fused.1} parent=11 // pred_region
        _
      $region60: #{autoencoder_fused.1} parent=11 // pred_fallthru
        _
      // Predicated region
      $region61: #{autoencoder_fused.1} parent=11 // pred_check
        %p418 = pneg %p320
      $region62: #{autoencoder_fused.1} parent=11 // pred_check_branch
        %420 = sbr.rel (%p418) target = $region64
      $region63: #{autoencoder_fused.1} parent=11 // pred_region
        _
      $region64: #{autoencoder_fused.1} parent=11 // pred_fallthru
        _
      // Predicated region
      $region65: #{autoencoder_fused.1} parent=11 // pred_check
        %p421 = pneg %p341
      $region66: #{autoencoder_fused.1} parent=11 // pred_check_branch
        %423 = sbr.rel (%p421) target = $region68
      $region67: #{autoencoder_fused.1} parent=11 // pred_region
        _
      $region68: #{autoencoder_fused.1} parent=11 // pred_fallthru
        _
    $region12: #{autoencoder_fused.1} parent=5 // pred_fallthru
      _
    %p424 = scmp.lt.s32.totalorder %s21, 2
    // Predicated region
    $region69: #{autoencoder_fused.1} parent=5 // pred_check
      %p425 = pneg %p424
    $region70: #{autoencoder_fused.1} parent=5 // pred_check_branch
      %427 = sbr.rel (%p425) target = $region72
    $region71: #{autoencoder_fused.1} parent=5 // pred_region
      // Predicated region
      $region73: #{autoencoder_fused.1} parent=71 // pred_check
        %p428 = pneg %p41
      $region74: #{autoencoder_fused.1} parent=71 // pred_check_branch
        %430 = sbr.rel (%p428) target = $region76
      $region75: #{autoencoder_fused.1} parent=71 // pred_region
        %s431 = smul.u32 8, %s21
        %p432 = scmp.lt.s32.totalorder %s431, 15
        %s433 = scalar_select %p432, %s431, 15
        %s434 = smul.addr %s433, 2
        %s435 = smul.addr %s434, 8
        %s436 = scalar_lea.vmem %s0, %s435
        %s437 = smul.u32 8, %s21
      $region76: #{autoencoder_fused.1} parent=71 // pred_fallthru
        _
    $region72: #{autoencoder_fused.1} parent=5 // pred_fallthru
      _
    %p438 = scmp.le.s32.totalorder 1, %s21
    %p439 = scmp.lt.s32.totalorder %s21, 3
    %p440 = pnand %p438, %p439
    %p441 = pneg %p440
    // Predicated region
    $region77: #{autoencoder_fused.1} parent=5 // pred_check
      _
    $region78: #{autoencoder_fused.1} parent=5 // pred_check_branch
      %443 = sbr.rel (%p440) target = $region80
    $region79: #{autoencoder_fused.1} parent=5 // pred_region
      %s444 = ssub.s32 %s21, 1
      %s445 = smul.u32 8, %s26
      %p446 = scmp.lt.s32.totalorder %s445, 15
      %s447 = scalar_select %p446, %s445, 15
      %s448 = smul.addr %s447, 2
      %s449 = smul.addr %s448, 8
      %s450 = scalar_lea.vmem %s0, %s449
      %p451 = pneg %p47
      %p452 = pneg %p44
      %p453 = pneg %p68
      %p454 = pneg %p65
      %p455 = pneg %p89
      %p456 = pneg %p86
      %p457 = pneg %p110
      %p458 = pneg %p107
      %p459 = pneg %p131
      %p460 = pneg %p128
      %p461 = pneg %p152
      %p462 = pneg %p149
      %p463 = pneg %p173
      %p464 = pneg %p170
      %p465 = pneg %p194
      %p466 = pneg %p191
      %p467 = pneg %p215
      %p468 = pneg %p212
      %p469 = pneg %p236
      %p470 = pneg %p233
      %p471 = pneg %p257
      %p472 = pneg %p254
      %p473 = pneg %p278
      %p474 = pneg %p275
      %p475 = pneg %p299
      %p476 = pneg %p296
      %p477 = pneg %p320
      %p478 = pneg %p317
      %p479 = pneg %p341
      %p480 = pneg %p338
      %p481 = pneg %p367
      %p482 = pneg %p364
      %s483 = smul.u32 8, %s26
      %p484 = scmp.lt.s32.totalorder %s483, 15
      %s485 = scalar_select %p484, %s483, 15
      %s486 = smul.addr %s485, 2
      %s487 = smul.addr %s486, 8
      %s488 = scalar_lea.vmem %s15, %s487
      %s489 = smul.u32 8, %s26
      %p490 = scmp.lt.s32.totalorder %s489, 15
      %s491 = scalar_select %p490, %s489, 15
      %s492 = smul.addr %s491, 2
      %s493 = smul.addr %s492, 8
      %s494 = scalar_lea.vmem %s0, %s493
      %s495 = smul.u32 8, %s26
      %s496 = smul.u32 8, %s26
      %p497 = scmp.lt.s32.totalorder %s496, 15
      %s498 = scalar_select %p497, %s496, 15
      %s499 = smul.addr %s498, 2
      %s500 = smul.addr %s499, 8
      %s501 = scalar_lea.vmem %s15, %s500
      %s502 = smul.u32 8, %s26
      %vm504 = vcmask 122880
      %vm505 = vsmask.f32 256
      %vm506 = vmand %vm504, %vm505
      %v507 = vld [vmem:[#allocation2] sm:$0x1]
      %v508 = vsel %vm506, 0, %v507
      %509 = vst [vmem:[#allocation2] sm:$0x1] %v508
      %v510 = vld [vmem:[#allocation2 + $0xc] sm:$0x1]
      %v511 = vsel %vm506, 0, %v510
      %512 = vst [vmem:[#allocation2 + $0xc] sm:$0x1] %v511
      %v513 = vld [vmem:[#allocation2 + $0x18] sm:$0x1]
      %v514 = vsel %vm506, 0, %v513
      %515 = vst [vmem:[#allocation2 + $0x18] sm:$0x1] %v514
      %v516 = vld [vmem:[#allocation2 + $0x24] sm:$0x1]
      %v517 = vsel %vm506, 0, %v516
      %518 = vst [vmem:[#allocation2 + $0x24] sm:$0x1] %v517
      %v519 = vld [vmem:[#allocation2 + $0x30] sm:$0x1]
      %v520 = vsel %vm506, 0, %v519
      %521 = vst [vmem:[#allocation2 + $0x30] sm:$0x1] %v520
      %v522 = vld [vmem:[#allocation2 + $0x3c] sm:$0x1]
      %v523 = vsel %vm506, 0, %v522
      %524 = vst [vmem:[#allocation2 + $0x3c] sm:$0x1] %v523
      %v525 = vld [vmem:[#allocation2 + $0x48] sm:$0x1]
      %v526 = vsel %vm506, 0, %v525
      %527 = vst [vmem:[#allocation2 + $0x48] sm:$0x1] %v526
      %v528 = vld [vmem:[#allocation2 + $0x54] sm:$0x1]
      %v529 = vsel %vm506, 0, %v528
      %530 = vst [vmem:[#allocation2 + $0x54] sm:$0x1] %v529
      %vm531 = vsmask.f32 7938
      %vm532 = vmand %vm504, %vm531
      %v533 = vld [vmem:[#allocation2 + $0x8] sm:$0x1]
      %v534 = vsel %vm532, 0, %v533
      %535 = vst [vmem:[#allocation2 + $0x8] sm:$0x1] %v534
      %v536 = vld [vmem:[#allocation2 + $0x14] sm:$0x1]
      %v537 = vsel %vm532, 0, %v536
      %538 = vst [vmem:[#allocation2 + $0x14] sm:$0x1] %v537
      %v539 = vld [vmem:[#allocation2 + $0x20] sm:$0x1]
      %v540 = vsel %vm532, 0, %v539
      %541 = vst [vmem:[#allocation2 + $0x20] sm:$0x1] %v540
      %v542 = vld [vmem:[#allocation2 + $0x2c] sm:$0x1]
      %v543 = vsel %vm532, 0, %v542
      %544 = vst [vmem:[#allocation2 + $0x2c] sm:$0x1] %v543
      %v545 = vld [vmem:[#allocation2 + $0x38] sm:$0x1]
      %v546 = vsel %vm532, 0, %v545
      %547 = vst [vmem:[#allocation2 + $0x38] sm:$0x1] %v546
      %v548 = vld [vmem:[#allocation2 + $0x44] sm:$0x1]
      %v549 = vsel %vm532, 0, %v548
      %550 = vst [vmem:[#allocation2 + $0x44] sm:$0x1] %v549
      %v551 = vld [vmem:[#allocation2 + $0x50] sm:$0x1]
      %v552 = vsel %vm532, 0, %v551
      %553 = vst [vmem:[#allocation2 + $0x50] sm:$0x1] %v552
      %v554 = vld [vmem:[#allocation2 + $0x5c] sm:$0x1]
      %v555 = vsel %vm532, 0, %v554
      %556 = vst [vmem:[#allocation2 + $0x5c] sm:$0x1] %v555
      %vm557 = vcmask 1040384
      %vm558 = vmand %vm557, %vm505
      %vm559 = vcmask 1044484
      %vm560 = vsmask.f32 4352
      %vm561 = vmand %vm559, %vm560
      %vm562 = vmor %vm561, %vm558
      %v563 = vld [vmem:[#allocation3] sm:$0x11]
      %v564 = vsel %vm562, 0, %v563
      %565 = vst [vmem:[#allocation3] sm:$0x11] %v564
      %v566 = vld [vmem:[#allocation3 + $0x18] sm:$0x11]
      %v567 = vsel %vm562, 0, %v566
      %568 = vst [vmem:[#allocation3 + $0x18] sm:$0x11] %v567
      %v569 = vld [vmem:[#allocation3 + $0x30] sm:$0x11]
      %v570 = vsel %vm562, 0, %v569
      %571 = vst [vmem:[#allocation3 + $0x30] sm:$0x11] %v570
      %v572 = vld [vmem:[#allocation3 + $0x48] sm:$0x11]
      %v573 = vsel %vm562, 0, %v572
      %574 = vst [vmem:[#allocation3 + $0x48] sm:$0x11] %v573
      %v575 = vld [vmem:[#allocation3 + $0x60] sm:$0x11]
      %v576 = vsel %vm562, 0, %v575
      %577 = vst [vmem:[#allocation3 + $0x60] sm:$0x11] %v576
      %v578 = vld [vmem:[#allocation3 + $0x78] sm:$0x11]
      %v579 = vsel %vm562, 0, %v578
      %580 = vst [vmem:[#allocation3 + $0x78] sm:$0x11] %v579
      %v581 = vld [vmem:[#allocation3 + $0x90] sm:$0x11]
      %v582 = vsel %vm562, 0, %v581
      %583 = vst [vmem:[#allocation3 + $0x90] sm:$0x11] %v582
      %v584 = vld [vmem:[#allocation3 + $0xa8] sm:$0x11]
      %v585 = vsel %vm562, 0, %v584
      %586 = vst [vmem:[#allocation3 + $0xa8] sm:$0x11] %v585
      %vm587 = vmand %vm557, %vm531
      %vm588 = vsmask.f32 7954
      %vm589 = vmand %vm559, %vm588
      %vm590 = vmor %vm589, %vm587
      %v591 = vld [vmem:[#allocation3 + $0x10] sm:$0x11]
      %v592 = vsel %vm590, 0, %v591
      %593 = vst [vmem:[#allocation3 + $0x10] sm:$0x11] %v592
      %v594 = vld [vmem:[#allocation3 + $0x28] sm:$0x11]
      %v595 = vsel %vm590, 0, %v594
      %596 = vst [vmem:[#allocation3 + $0x28] sm:$0x11] %v595
      %v597 = vld [vmem:[#allocation3 + $0x40] sm:$0x11]
      %v598 = vsel %vm590, 0, %v597
      %599 = vst [vmem:[#allocation3 + $0x40] sm:$0x11] %v598
      %v600 = vld [vmem:[#allocation3 + $0x58] sm:$0x11]
      %v601 = vsel %vm590, 0, %v600
      %602 = vst [vmem:[#allocation3 + $0x58] sm:$0x11] %v601
      %v603 = vld [vmem:[#allocation3 + $0x70] sm:$0x11]
      %v604 = vsel %vm590, 0, %v603
      %605 = vst [vmem:[#allocation3 + $0x70] sm:$0x11] %v604
      %v606 = vld [vmem:[#allocation3 + $0x88] sm:$0x11]
      %v607 = vsel %vm590, 0, %v606
      %608 = vst [vmem:[#allocation3 + $0x88] sm:$0x11] %v607
      %v609 = vld [vmem:[#allocation3 + $0xa0] sm:$0x11]
      %v610 = vsel %vm590, 0, %v609
      %611 = vst [vmem:[#allocation3 + $0xa0] sm:$0x11] %v610
      %v612 = vld [vmem:[#allocation3 + $0xb8] sm:$0x11]
      %v613 = vsel %vm590, 0, %v612
      %614 = vst [vmem:[#allocation3 + $0xb8] sm:$0x11] %v613
      %v615 = vld [vmem:[#allocation5] sm:$0x11]
      %v616 = vsel %vm562, 0, %v615
      %617 = vst [vmem:[#allocation5] sm:$0x11] %v616
      %v618 = vld [vmem:[#allocation5 + $0x18] sm:$0x11]
      %v619 = vsel %vm562, 0, %v618
      %620 = vst [vmem:[#allocation5 + $0x18] sm:$0x11] %v619
      %v621 = vld [vmem:[#allocation5 + $0x30] sm:$0x11]
      %v622 = vsel %vm562, 0, %v621
      %623 = vst [vmem:[#allocation5 + $0x30] sm:$0x11] %v622
      %v624 = vld [vmem:[#allocation5 + $0x48] sm:$0x11]
      %v625 = vsel %vm562, 0, %v624
      %626 = vst [vmem:[#allocation5 + $0x48] sm:$0x11] %v625
      %v627 = vld [vmem:[#allocation5 + $0x60] sm:$0x11]
      %v628 = vsel %vm562, 0, %v627
      %629 = vst [vmem:[#allocation5 + $0x60] sm:$0x11] %v628
      %v630 = vld [vmem:[#allocation5 + $0x78] sm:$0x11]
      %v631 = vsel %vm562, 0, %v630
      %632 = vst [vmem:[#allocation5 + $0x78] sm:$0x11] %v631
      %v633 = vld [vmem:[#allocation5 + $0x90] sm:$0x11]
      %v634 = vsel %vm562, 0, %v633
      %635 = vst [vmem:[#allocation5 + $0x90] sm:$0x11] %v634
      %v636 = vld [vmem:[#allocation5 + $0xa8] sm:$0x11]
      %v637 = vsel %vm562, 0, %v636
      %638 = vst [vmem:[#allocation5 + $0xa8] sm:$0x11] %v637
      %v639 = vld [vmem:[#allocation5 + $0x10] sm:$0x11]
      %v640 = vsel %vm590, 0, %v639
      %641 = vst [vmem:[#allocation5 + $0x10] sm:$0x11] %v640
      %v642 = vld [vmem:[#allocation5 + $0x28] sm:$0x11]
      %v643 = vsel %vm590, 0, %v642
      %644 = vst [vmem:[#allocation5 + $0x28] sm:$0x11] %v643
      %v645 = vld [vmem:[#allocation5 + $0x40] sm:$0x11]
      %v646 = vsel %vm590, 0, %v645
      %647 = vst [vmem:[#allocation5 + $0x40] sm:$0x11] %v646
      %v648 = vld [vmem:[#allocation5 + $0x58] sm:$0x11]
      %v649 = vsel %vm590, 0, %v648
      %650 = vst [vmem:[#allocation5 + $0x58] sm:$0x11] %v649
      %v651 = vld [vmem:[#allocation5 + $0x70] sm:$0x11]
      %v652 = vsel %vm590, 0, %v651
      %653 = vst [vmem:[#allocation5 + $0x70] sm:$0x11] %v652
      %v654 = vld [vmem:[#allocation5 + $0x88] sm:$0x11]
      %v655 = vsel %vm590, 0, %v654
      %656 = vst [vmem:[#allocation5 + $0x88] sm:$0x11] %v655
      %v657 = vld [vmem:[#allocation5 + $0xa0] sm:$0x11]
      %v658 = vsel %vm590, 0, %v657
      %659 = vst [vmem:[#allocation5 + $0xa0] sm:$0x11] %v658
      %v660 = vld [vmem:[#allocation5 + $0xb8] sm:$0x11]
      %v661 = vsel %vm590, 0, %v660
      %662 = vst [vmem:[#allocation5 + $0xb8] sm:$0x11] %v661
      %v663 = vld [vmem:[#allocation6] sm:$0x1]
      %v664 = vsel %vm558, 0, %v663
      %665 = vst [vmem:[#allocation6] sm:$0x1] %v664
      %v666 = vld [vmem:[#allocation6 + $0xc] sm:$0x1]
      %v667 = vsel %vm558, 0, %v666
      %668 = vst [vmem:[#allocation6 + $0xc] sm:$0x1] %v667
      %v669 = vld [vmem:[#allocation6 + $0x18] sm:$0x1]
      %v670 = vsel %vm558, 0, %v669
      %671 = vst [vmem:[#allocation6 + $0x18] sm:$0x1] %v670
      %v672 = vld [vmem:[#allocation6 + $0x24] sm:$0x1]
      %v673 = vsel %vm558, 0, %v672
      %674 = vst [vmem:[#allocation6 + $0x24] sm:$0x1] %v673
      %v675 = vld [vmem:[#allocation6 + $0x30] sm:$0x1]
      %v676 = vsel %vm558, 0, %v675
      %677 = vst [vmem:[#allocation6 + $0x30] sm:$0x1] %v676
      %v678 = vld [vmem:[#allocation6 + $0x3c] sm:$0x1]
      %v679 = vsel %vm558, 0, %v678
      %680 = vst [vmem:[#allocation6 + $0x3c] sm:$0x1] %v679
      %v681 = vld [vmem:[#allocation6 + $0x48] sm:$0x1]
      %v682 = vsel %vm558, 0, %v681
      %683 = vst [vmem:[#allocation6 + $0x48] sm:$0x1] %v682
      %v684 = vld [vmem:[#allocation6 + $0x54] sm:$0x1]
      %v685 = vsel %vm558, 0, %v684
      %686 = vst [vmem:[#allocation6 + $0x54] sm:$0x1] %v685
      %v687 = vld [vmem:[#allocation6 + $0x8] sm:$0x1]
      %v688 = vsel %vm587, 0, %v687
      %689 = vst [vmem:[#allocation6 + $0x8] sm:$0x1] %v688
      %v690 = vld [vmem:[#allocation6 + $0x14] sm:$0x1]
      %v691 = vsel %vm587, 0, %v690
      %692 = vst [vmem:[#allocation6 + $0x14] sm:$0x1] %v691
      %v693 = vld [vmem:[#allocation6 + $0x20] sm:$0x1]
      %v694 = vsel %vm587, 0, %v693
      %695 = vst [vmem:[#allocation6 + $0x20] sm:$0x1] %v694
      %v696 = vld [vmem:[#allocation6 + $0x2c] sm:$0x1]
      %v697 = vsel %vm587, 0, %v696
      %698 = vst [vmem:[#allocation6 + $0x2c] sm:$0x1] %v697
      %v699 = vld [vmem:[#allocation6 + $0x38] sm:$0x1]
      %v700 = vsel %vm587, 0, %v699
      %701 = vst [vmem:[#allocation6 + $0x38] sm:$0x1] %v700
      %v702 = vld [vmem:[#allocation6 + $0x44] sm:$0x1]
      %v703 = vsel %vm587, 0, %v702
      %704 = vst [vmem:[#allocation6 + $0x44] sm:$0x1] %v703
      %v705 = vld [vmem:[#allocation6 + $0x50] sm:$0x1]
      %v706 = vsel %vm587, 0, %v705
      %707 = vst [vmem:[#allocation6 + $0x50] sm:$0x1] %v706
      %v708 = vld [vmem:[#allocation6 + $0x5c] sm:$0x1]
      %v709 = vsel %vm587, 0, %v708
      %710 = vst [vmem:[#allocation6 + $0x5c] sm:$0x1] %v709
      %711 = vst [vmem:[#allocation4] sm:$0xf] 0
      %712 = vst [vmem:[#allocation4 + $0x4] sm:$0xf] 0
      %713 = vst [vmem:[#allocation4 + $0x8] sm:$0x1] 0
      %714 = vst [vmem:[#allocation4 + $0xc] sm:$0xf] 0
      %715 = vst [vmem:[#allocation4 + $0x10] sm:$0xf] 0
      %716 = vst [vmem:[#allocation4 + $0x14] sm:$0x1] 0
      %717 = vst [vmem:[#allocation4 + $0x18] sm:$0xf] 0
      %718 = vst [vmem:[#allocation4 + $0x1c] sm:$0xf] 0
      %719 = vst [vmem:[#allocation4 + $0x20] sm:$0x1] 0
      %720 = vst [vmem:[#allocation4 + $0x24] sm:$0xf] 0
      %721 = vst [vmem:[#allocation4 + $0x28] sm:$0xf] 0
      %722 = vst [vmem:[#allocation4 + $0x2c] sm:$0x1] 0
      %723 = vst [vmem:[#allocation4 + $0x30] sm:$0xf] 0
      %724 = vst [vmem:[#allocation4 + $0x34] sm:$0xf] 0
      %725 = vst [vmem:[#allocation4 + $0x38] sm:$0x1] 0
      %726 = vst [vmem:[#allocation4 + $0x3c] sm:$0xf] 0
      %727 = vst [vmem:[#allocation4 + $0x40] sm:$0xf] 0
      %728 = vst [vmem:[#allocation4 + $0x44] sm:$0x1] 0
      %729 = vst [vmem:[#allocation4 + $0x48] sm:$0xf] 0
      %730 = vst [vmem:[#allocation4 + $0x4c] sm:$0xf] 0
      %731 = vst [vmem:[#allocation4 + $0x50] sm:$0x1] 0
      %732 = vst [vmem:[#allocation4 + $0x54] sm:$0xf] 0
      %733 = vst [vmem:[#allocation4 + $0x58] sm:$0xf] 0
      %734 = vst [vmem:[#allocation4 + $0x5c] sm:$0x1] 0
      %v735 = vld [vmem:[%s494] sm:$0xff]
      %v736 = vld [vmem:[%s494 + $0x8] sm:$0xff]
      %v737 = vld [vmem:[%s494 + $0x10] sm:$0xff]
      %v738 = vld [vmem:[%s494 + $0x18] sm:$0xff]
      %v739 = vld [vmem:[%s494 + $0x20] sm:$0xff]
      %v740 = vld [vmem:[%s494 + $0x28] sm:$0xff]
      %v741 = vld [vmem:[%s494 + $0x30] sm:$0xff]
      %v742 = vld [vmem:[%s494 + $0x38] sm:$0xff]
      %v743 = vld [vmem:[%s494 + $0x40] sm:$0xff]
      %v744 = vld [vmem:[%s494 + $0x48] sm:$0xff]
      %v745 = vld [vmem:[%s494 + $0x50] sm:$0xff]
      %v746 = vld [vmem:[%s494 + $0x58] sm:$0xff]
      %v747 = vld [vmem:[%s494 + $0x60] sm:$0xff]
      %v748 = vld [vmem:[%s494 + $0x68] sm:$0xff]
      %v749 = vld [vmem:[%s494 + $0x70] sm:$0xff]
      %v750 = vld [vmem:[%s494 + $0x78] sm:$0xff]
      %v751 = vpack.c.bf16 %v736, %v735
      %v752 = vpack.c.bf16 %v738, %v737
      %v753 = vpack.c.bf16 %v740, %v739
      %v754 = vpack.c.bf16 %v742, %v741
      %v755 = vpack.c.bf16 %v744, %v743
      %v756 = vpack.c.bf16 %v746, %v745
      %v757 = vpack.c.bf16 %v748, %v747
      %v758 = vpack.c.bf16 %v750, %v749
      %v767 = vunpack.c.l.b16 %v751
      %v768 = vunpack.c.h.b16 %v751
      %v769 = vunpack.c.l.b16 %v752
      %v770 = vunpack.c.h.b16 %v752
      %v771 = vunpack.c.l.b16 %v753
      %v772 = vunpack.c.h.b16 %v753
      %v773 = vunpack.c.l.b16 %v754
      %v774 = vunpack.c.h.b16 %v754
      %v775 = vunpack.c.l.b16 %v755
      %v776 = vunpack.c.h.b16 %v755
      %v777 = vunpack.c.l.b16 %v756
      %v778 = vunpack.c.h.b16 %v756
      %v779 = vunpack.c.l.b16 %v757
      %v780 = vunpack.c.h.b16 %v757
      %v781 = vunpack.c.l.b16 %v758
      %v782 = vunpack.c.h.b16 %v758
      %v783 = vpack.c.b16 %v767, %v767
      %v784 = vpack.c.b16 %v768, %v768
      %v785 = vpack.c.b16 %v769, %v769
      %v786 = vpack.c.b16 %v770, %v770
      %v787 = vpack.c.b16 %v771, %v771
      %v788 = vpack.c.b16 %v772, %v772
      %v789 = vpack.c.b16 %v773, %v773
      %v790 = vpack.c.b16 %v774, %v774
      %v791 = vpack.c.b16 %v775, %v775
      %v792 = vpack.c.b16 %v776, %v776
      %v793 = vpack.c.b16 %v777, %v777
      %v794 = vpack.c.b16 %v778, %v778
      %v795 = vpack.c.b16 %v779, %v779
      %v796 = vpack.c.b16 %v780, %v780
      %v797 = vpack.c.b16 %v781, %v781
      %v798 = vpack.c.b16 %v782, %v782
      %vm799 = vsmask.f32 4368
      %vm800 = vmor %vm505, %vm799
      %v802 = vshrl.u32 %v783, 16
      %v804 = vrot.slane %v802, 7
      %v805 = vshll.u32 %v783, 16
      %v807 = vor.u32 %v804, %v805
      %v808 = vrot.slane %v804, 4
      %v810 = vshrl.u32 %v784, 16
      %v812 = vrot.slane %v810, 7
      %v813 = vshll.u32 %v784, 16
      %v815 = vor.u32 %v812, %v813
      %v816 = vsel %vm800, %v808, %v815
      %v817 = vrot.slane %v812, 4
      %v819 = vshrl.u32 %v785, 16
      %v821 = vrot.slane %v819, 7
      %v822 = vshll.u32 %v785, 16
      %v824 = vor.u32 %v821, %v822
      %v825 = vrot.slane %v821, 4
      %v827 = vshrl.u32 %v786, 16
      %v829 = vrot.slane %v827, 7
      %v830 = vshll.u32 %v786, 16
      %v832 = vor.u32 %v829, %v830
      %v833 = vsel %vm800, %v825, %v832
      %v834 = vrot.slane %v829, 4
      %v836 = vshrl.u32 %v787, 16
      %v838 = vrot.slane %v836, 7
      %v839 = vshll.u32 %v787, 16
      %v841 = vor.u32 %v838, %v839
      %v842 = vrot.slane %v838, 4
      %v844 = vshrl.u32 %v788, 16
      %v846 = vrot.slane %v844, 7
      %v847 = vshll.u32 %v788, 16
      %v849 = vor.u32 %v846, %v847
      %v850 = vsel %vm800, %v842, %v849
      %v851 = vrot.slane %v846, 4
      %v853 = vshrl.u32 %v789, 16
      %v855 = vrot.slane %v853, 7
      %v856 = vshll.u32 %v789, 16
      %v858 = vor.u32 %v855, %v856
      %v859 = vrot.slane %v855, 4
      %v861 = vshrl.u32 %v790, 16
      %v863 = vrot.slane %v861, 7
      %v864 = vshll.u32 %v790, 16
      %v866 = vor.u32 %v863, %v864
      %v867 = vsel %vm800, %v859, %v866
      %v868 = vrot.slane %v863, 4
      %v870 = vshrl.u32 %v791, 16
      %v872 = vrot.slane %v870, 7
      %v873 = vshll.u32 %v791, 16
      %v875 = vor.u32 %v872, %v873
      %v876 = vrot.slane %v872, 4
      %v878 = vshrl.u32 %v792, 16
      %v880 = vrot.slane %v878, 7
      %v881 = vshll.u32 %v792, 16
      %v883 = vor.u32 %v880, %v881
      %v884 = vsel %vm800, %v876, %v883
      %v885 = vrot.slane %v880, 4
      %v887 = vshrl.u32 %v793, 16
      %v889 = vrot.slane %v887, 7
      %v890 = vshll.u32 %v793, 16
      %v892 = vor.u32 %v889, %v890
      %v893 = vrot.slane %v889, 4
      %v895 = vshrl.u32 %v794, 16
      %v897 = vrot.slane %v895, 7
      %v898 = vshll.u32 %v794, 16
      %v900 = vor.u32 %v897, %v898
      %v901 = vsel %vm800, %v893, %v900
      %v902 = vrot.slane %v897, 4
      %v904 = vshrl.u32 %v795, 16
      %v906 = vrot.slane %v904, 7
      %v907 = vshll.u32 %v795, 16
      %v909 = vor.u32 %v906, %v907
      %v910 = vrot.slane %v906, 4
      %v912 = vshrl.u32 %v796, 16
      %v914 = vrot.slane %v912, 7
      %v915 = vshll.u32 %v796, 16
      %v917 = vor.u32 %v914, %v915
      %v918 = vsel %vm800, %v910, %v917
      %v919 = vrot.slane %v914, 4
      %v921 = vshrl.u32 %v797, 16
      %v923 = vrot.slane %v921, 7
      %v924 = vshll.u32 %v797, 16
      %v926 = vor.u32 %v923, %v924
      %v927 = vrot.slane %v923, 4
      %v929 = vshrl.u32 %v798, 16
      %v931 = vrot.slane %v929, 7
      %v932 = vshll.u32 %v798, 16
      %v934 = vor.u32 %v931, %v932
      %v935 = vsel %vm800, %v927, %v934
      %v936 = vrot.slane %v931, 4
      %vm961 = vcmask 125952
      %vm962 = vmand %vm961, %vm531
      %v963 = vld [vmem:[#allocation2] sm:$0xf]
      %v964 = vsel %vm962, %v807, %v963
      %965 = vst [vmem:[#allocation2] sm:$0xf] %v964
      %vm966 = vcmask 125952
      %967 = vst.msk [vmem:[#allocation2 + $0x4] sm:$0xf] %vm966, %v816
      %v968 = vld [vmem:[#allocation2 + $0x8] sm:$0x1]
      %v969 = vsel %vm506, %v817, %v968
      %970 = vst [vmem:[#allocation2 + $0x8] sm:$0x1] %v969
      %v971 = vld [vmem:[#allocation2 + $0xc] sm:$0xf]
      %v972 = vsel %vm962, %v824, %v971
      %973 = vst [vmem:[#allocation2 + $0xc] sm:$0xf] %v972
      %974 = vst.msk [vmem:[#allocation2 + $0x10] sm:$0xf] %vm966, %v833
      %v975 = vld [vmem:[#allocation2 + $0x14] sm:$0x1]
      %v976 = vsel %vm506, %v834, %v975
      %977 = vst [vmem:[#allocation2 + $0x14] sm:$0x1] %v976
      %v978 = vld [vmem:[#allocation2 + $0x18] sm:$0xf]
      %v979 = vsel %vm962, %v841, %v978
      %980 = vst [vmem:[#allocation2 + $0x18] sm:$0xf] %v979
      %981 = vst.msk [vmem:[#allocation2 + $0x1c] sm:$0xf] %vm966, %v850
      %v982 = vld [vmem:[#allocation2 + $0x20] sm:$0x1]
      %v983 = vsel %vm506, %v851, %v982
      %984 = vst [vmem:[#allocation2 + $0x20] sm:$0x1] %v983
      %v985 = vld [vmem:[#allocation2 + $0x24] sm:$0xf]
      %v986 = vsel %vm962, %v858, %v985
      %987 = vst [vmem:[#allocation2 + $0x24] sm:$0xf] %v986
      %988 = vst.msk [vmem:[#allocation2 + $0x28] sm:$0xf] %vm966, %v867
      %v989 = vld [vmem:[#allocation2 + $0x2c] sm:$0x1]
      %v990 = vsel %vm506, %v868, %v989
      %991 = vst [vmem:[#allocation2 + $0x2c] sm:$0x1] %v990
      %v992 = vld [vmem:[#allocation2 + $0x30] sm:$0xf]
      %v993 = vsel %vm962, %v875, %v992
      %994 = vst [vmem:[#allocation2 + $0x30] sm:$0xf] %v993
      %995 = vst.msk [vmem:[#allocation2 + $0x34] sm:$0xf] %vm966, %v884
      %v996 = vld [vmem:[#allocation2 + $0x38] sm:$0x1]
      %v997 = vsel %vm506, %v885, %v996
      %998 = vst [vmem:[#allocation2 + $0x38] sm:$0x1] %v997
      %v999 = vld [vmem:[#allocation2 + $0x3c] sm:$0xf]
      %v1000 = vsel %vm962, %v892, %v999
      %1001 = vst [vmem:[#allocation2 + $0x3c] sm:$0xf] %v1000
      %1002 = vst.msk [vmem:[#allocation2 + $0x40] sm:$0xf] %vm966, %v901
      %v1003 = vld [vmem:[#allocation2 + $0x44] sm:$0x1]
      %v1004 = vsel %vm506, %v902, %v1003
      %1005 = vst [vmem:[#allocation2 + $0x44] sm:$0x1] %v1004
      %v1006 = vld [vmem:[#allocation2 + $0x48] sm:$0xf]
      %v1007 = vsel %vm962, %v909, %v1006
      %1008 = vst [vmem:[#allocation2 + $0x48] sm:$0xf] %v1007
      %1009 = vst.msk [vmem:[#allocation2 + $0x4c] sm:$0xf] %vm966, %v918
      %v1010 = vld [vmem:[#allocation2 + $0x50] sm:$0x1]
      %v1011 = vsel %vm506, %v919, %v1010
      %1012 = vst [vmem:[#allocation2 + $0x50] sm:$0x1] %v1011
      %v1013 = vld [vmem:[#allocation2 + $0x54] sm:$0xf]
      %v1014 = vsel %vm962, %v926, %v1013
      %1015 = vst [vmem:[#allocation2 + $0x54] sm:$0xf] %v1014
      %1016 = vst.msk [vmem:[#allocation2 + $0x58] sm:$0xf] %vm966, %v935
      %v1017 = vld [vmem:[#allocation2 + $0x5c] sm:$0x1]
      %v1018 = vsel %vm506, %v936, %v1017
      %1019 = vst [vmem:[#allocation2 + $0x5c] sm:$0x1] %v1018
      %v1020 = vld [vmem:[%s2] sm:$0x3]
      %v1022 = vlaneseq
      %v1023 = vshrl.u32 %v1022, 7
      %v1024 = vsub.s32 0, %v1023
      %v1025 = vrot.slane %v1020, %v1024
      %v1026 = vlaneseq
      %v1027 = vshrl.u32 %v1026, 7
      %v1028 = vsub.s32 1, %v1027
      %v1029 = vrot.slane %v1020, %v1028
      %v1032 = vadd.f32 %v1025, 0.0
      %v1033 = vadd.f32 %v1029, 0.0
      %v1034 = vld [vmem:[#allocation2] sm:$0xf]
      %v1035 = vld [vmem:[#allocation2 + $0x4] sm:$0xf]
      %v1036 = vld [vmem:[#allocation2 + $0xc] sm:$0xf]
      %v1037 = vld [vmem:[#allocation2 + $0x10] sm:$0xf]
      %v1038 = vld [vmem:[#allocation2 + $0x18] sm:$0xf]
      %v1039 = vld [vmem:[#allocation2 + $0x1c] sm:$0xf]
      %v1040 = vld [vmem:[#allocation2 + $0x24] sm:$0xf]
      %v1041 = vld [vmem:[#allocation2 + $0x28] sm:$0xf]
      %v1042 = vld [vmem:[#allocation2 + $0x30] sm:$0xf]
      %v1043 = vld [vmem:[#allocation2 + $0x34] sm:$0xf]
      %v1044 = vld [vmem:[#allocation2 + $0x3c] sm:$0xf]
      %v1045 = vld [vmem:[#allocation2 + $0x40] sm:$0xf]
      %v1046 = vld [vmem:[#allocation2 + $0x48] sm:$0xf]
      %v1047 = vld [vmem:[#allocation2 + $0x4c] sm:$0xf]
      %v1048 = vld [vmem:[#allocation2 + $0x54] sm:$0xf]
      %v1049 = vld [vmem:[#allocation2 + $0x58] sm:$0xf]
      %v1050 = vld [vmem:[%s1] sm:$0xff]
      %v1051 = vld [vmem:[%s1 + $0x8] sm:$0xff]
      %v1068 = vunpack.c.l.b16 %v1034
      %v1069 = vunpack.c.l.b16 %v1035
      %v1070 = vunpack.c.l.b16 %v1036
      %v1071 = vunpack.c.l.b16 %v1037
      %v1072 = vunpack.c.l.b16 %v1038
      %v1073 = vunpack.c.l.b16 %v1039
      %v1074 = vunpack.c.l.b16 %v1040
      %v1075 = vunpack.c.l.b16 %v1041
      %v1076 = vunpack.c.l.b16 %v1042
      %v1077 = vunpack.c.l.b16 %v1043
      %v1078 = vunpack.c.l.b16 %v1044
      %v1079 = vunpack.c.l.b16 %v1045
      %v1080 = vunpack.c.l.b16 %v1046
      %v1081 = vunpack.c.l.b16 %v1047
      %v1082 = vunpack.c.l.b16 %v1048
      %v1083 = vunpack.c.l.b16 %v1049
      %v1084 = vpack.c.b16 %v1069, %v1068
      %v1085 = vpack.c.b16 %v1071, %v1070
      %v1086 = vpack.c.b16 %v1073, %v1072
      %v1087 = vpack.c.b16 %v1075, %v1074
      %v1088 = vpack.c.b16 %v1077, %v1076
      %v1089 = vpack.c.b16 %v1079, %v1078
      %v1090 = vpack.c.b16 %v1081, %v1080
      %v1091 = vpack.c.b16 %v1083, %v1082
      %v1094 = vunpack.c.l.b16 %v1050
      %v1095 = vunpack.c.h.b16 %v1050
      %v1096 = vunpack.c.l.b16 %v1051
      %v1097 = vunpack.c.h.b16 %v1051
      %v1098 = vpack.c.b16 %v1096, %v1094
      %v1099 = vpack.c.b16 %v1097, %v1095
      %vm1102 = vcmask 130048
      %v1104 = vsel %vm1102, %v1084, 0
      %v1107 = vsel %vm1102, %v1085, 0
      %v1110 = vsel %vm1102, %v1086, 0
      %v1113 = vsel %vm1102, %v1087, 0
      %v1116 = vsel %vm1102, %v1088, 0
      %v1119 = vsel %vm1102, %v1089, 0
      %v1122 = vsel %vm1102, %v1090, 0
      %v1125 = vsel %vm1102, %v1091, 0
      %1127 = vmatprep.subr.bf16.mxu0 %v1099
      %1128 = vmatpush1.bf16.msra.mxu0 %v1098
      %1129 = vmatprep.subr.bf16.mxu0 0
      %1130 = vmatpush1.bf16.msra.mxu0 0
      %1131 = vmatprep.subr.bf16.mxu0 0
      %1132 = vmatpush1.bf16.msra.mxu0 0
      %1133 = vmatprep.subr.bf16.mxu0 0
      %1134 = vmatpush1.bf16.msra.mxu0 0
      %1135 = vmatprep.subr.bf16.mxu0 0
      %1136 = vmatpush1.bf16.msra.mxu0 0
      %1137 = vmatprep.subr.bf16.mxu0 0
      %1138 = vmatpush1.bf16.msra.mxu0 0
      %1139 = vmatprep.subr.bf16.mxu0 0
      %1140 = vmatpush1.bf16.msra.mxu0 0
      %1141 = vmatprep.subr.bf16.mxu0 0
      %1142 = vmatpush1.bf16.msra.mxu0 0
      %1143 = vmatprep.subr.bf16.mxu0 0
      %1144 = vmatpush1.bf16.msra.mxu0 0
      %1145 = vmatprep.subr.bf16.mxu0 0
      %1146 = vmatpush1.bf16.msra.mxu0 0
      %1147 = vmatprep.subr.bf16.mxu0 0
      %1148 = vmatpush1.bf16.msra.mxu0 0
      %1149 = vmatprep.subr.bf16.mxu0 0
      %1150 = vmatpush1.bf16.msra.mxu0 0
      %1151 = vmatprep.subr.bf16.mxu0 0
      %1152 = vmatpush1.bf16.msra.mxu0 0
      %1153 = vmatprep.subr.bf16.mxu0 0
      %1154 = vmatpush1.bf16.msra.mxu0 0
      %1155 = vmatprep.subr.bf16.mxu0 0
      %1156 = vmatpush1.bf16.msra.mxu0 0
      %1157 = vmatprep.subr.bf16.mxu0 0
      %1158 = vmatpush1.bf16.msra.mxu0 0
      %1159 = vmatprep.mubr.bf16.mxu0 0
      %1160 = vmatmul.mubr.bf16.gmra.mrb[0].mxu0 %v1104
      %v1161 = vpop.f32.mrb[0].mxu0
      %v1162 = vadd.f32 0.0, %v1161
      %v1163 = vpop.f32.mrb[0].mxu0
      %v1164 = vadd.f32 0.0, %v1163
      %v1165 = vpop.f32.mrb[0].mxu0
      %v1166 = vadd.f32 0.0, %v1165
      %v1167 = vpop.f32.mrb[0].mxu0
      %v1168 = vadd.f32 0.0, %v1167
      %1169 = vmatprep.mubr.bf16.mxu0 0
      %1170 = vmatmul.mubr.bf16.gmra.mrb[0].mxu0 %v1107
      %v1171 = vpop.f32.mrb[0].mxu0
      %v1172 = vadd.f32 0.0, %v1171
      %v1173 = vpop.f32.mrb[0].mxu0
      %v1174 = vadd.f32 0.0, %v1173
      %v1175 = vpop.f32.mrb[0].mxu0
      %v1176 = vadd.f32 0.0, %v1175
      %v1177 = vpop.f32.mrb[0].mxu0
      %v1178 = vadd.f32 0.0, %v1177
      %1179 = vmatprep.mubr.bf16.mxu0 0
      %1180 = vmatmul.mubr.bf16.gmra.mrb[0].mxu0 %v1110
      %v1181 = vpop.f32.mrb[0].mxu0
      %v1182 = vadd.f32 0.0, %v1181
      %v1183 = vpop.f32.mrb[0].mxu0
      %v1184 = vadd.f32 0.0, %v1183
      %v1185 = vpop.f32.mrb[0].mxu0
      %v1186 = vadd.f32 0.0, %v1185
      %v1187 = vpop.f32.mrb[0].mxu0
      %v1188 = vadd.f32 0.0, %v1187
      %1189 = vmatprep.mubr.bf16.mxu0 0
      %1190 = vmatmul.mubr.bf16.gmra.mrb[0].mxu0 %v1113
      %v1191 = vpop.f32.mrb[0].mxu0
      %v1192 = vadd.f32 0.0, %v1191
      %v1193 = vpop.f32.mrb[0].mxu0
      %v1194 = vadd.f32 0.0, %v1193
      %v1195 = vpop.f32.mrb[0].mxu0
      %v1196 = vadd.f32 0.0, %v1195
      %v1197 = vpop.f32.mrb[0].mxu0
      %v1198 = vadd.f32 0.0, %v1197
      %1199 = vmatprep.mubr.bf16.mxu0 0
      %1200 = vmatmul.mubr.bf16.gmra.mrb[0].mxu0 %v1116
      %v1201 = vpop.f32.mrb[0].mxu0
      %v1202 = vadd.f32 0.0, %v1201
      %v1203 = vpop.f32.mrb[0].mxu0
      %v1204 = vadd.f32 0.0, %v1203
      %v1205 = vpop.f32.mrb[0].mxu0
      %v1206 = vadd.f32 0.0, %v1205
      %v1207 = vpop.f32.mrb[0].mxu0
      %v1208 = vadd.f32 0.0, %v1207
      %1209 = vmatprep.mubr.bf16.mxu0 0
      %1210 = vmatmul.mubr.bf16.gmra.mrb[0].mxu0 %v1119
      %v1211 = vpop.f32.mrb[0].mxu0
      %v1212 = vadd.f32 0.0, %v1211
      %v1213 = vpop.f32.mrb[0].mxu0
      %v1214 = vadd.f32 0.0, %v1213
      %v1215 = vpop.f32.mrb[0].mxu0
      %v1216 = vadd.f32 0.0, %v1215
      %v1217 = vpop.f32.mrb[0].mxu0
      %v1218 = vadd.f32 0.0, %v1217
      %1219 = vmatprep.mubr.bf16.mxu0 0
      %1220 = vmatmul.mubr.bf16.gmra.mrb[0].mxu0 %v1122
      %v1221 = vpop.f32.mrb[0].mxu0
      %v1222 = vadd.f32 0.0, %v1221
      %v1223 = vpop.f32.mrb[0].mxu0
      %v1224 = vadd.f32 0.0, %v1223
      %v1225 = vpop.f32.mrb[0].mxu0
      %v1226 = vadd.f32 0.0, %v1225
      %v1227 = vpop.f32.mrb[0].mxu0
      %v1228 = vadd.f32 0.0, %v1227
      %1229 = vmatprep.mubr.bf16.mxu0 0
      %1230 = vmatmul.mubr.bf16.gmra.mrb[0].mxu0 %v1125
      %v1231 = vpop.f32.mrb[0].mxu0
      %v1232 = vadd.f32 0.0, %v1231
      %v1233 = vpop.f32.mrb[0].mxu0
      %v1234 = vadd.f32 0.0, %v1233
      %v1235 = vpop.f32.mrb[0].mxu0
      %v1236 = vadd.f32 0.0, %v1235
      %v1237 = vpop.f32.mrb[0].mxu0
      %v1238 = vadd.f32 0.0, %v1237
      %1239 = vdwg.mxu0
      %v1240 = vadd.f32 %v1032, %v1162
      %v1241 = vadd.f32 %v1033, %v1164
      %v1242 = vadd.f32 %v1032, %v1166
      %v1243 = vadd.f32 %v1033, %v1168
      %v1244 = vadd.f32 %v1032, %v1172
      %v1245 = vadd.f32 %v1033, %v1174
      %v1246 = vadd.f32 %v1032, %v1176
      %v1247 = vadd.f32 %v1033, %v1178
      %v1248 = vadd.f32 %v1032, %v1182
      %v1249 = vadd.f32 %v1033, %v1184
      %v1250 = vadd.f32 %v1032, %v1186
      %v1251 = vadd.f32 %v1033, %v1188
      %v1252 = vadd.f32 %v1032, %v1192
      %v1253 = vadd.f32 %v1033, %v1194
      %v1254 = vadd.f32 %v1032, %v1196
      %v1255 = vadd.f32 %v1033, %v1198
      %v1256 = vadd.f32 %v1032, %v1202
      %v1257 = vadd.f32 %v1033, %v1204
      %v1258 = vadd.f32 %v1032, %v1206
      %v1259 = vadd.f32 %v1033, %v1208
      %v1260 = vadd.f32 %v1032, %v1212
      %v1261 = vadd.f32 %v1033, %v1214
      %v1262 = vadd.f32 %v1032, %v1216
      %v1263 = vadd.f32 %v1033, %v1218
      %v1264 = vadd.f32 %v1032, %v1222
      %v1265 = vadd.f32 %v1033, %v1224
      %v1266 = vadd.f32 %v1032, %v1226
      %v1267 = vadd.f32 %v1033, %v1228
      %v1268 = vadd.f32 %v1032, %v1232
      %v1269 = vadd.f32 %v1033, %v1234
      %v1270 = vadd.f32 %v1032, %v1236
      %v1271 = vadd.f32 %v1033, %v1238
      %v1272 = vld [vmem:[#allocation2] sm:$0xf]
      %v1273 = vld [vmem:[#allocation2 + $0x4] sm:$0xf]
      %v1274 = vld [vmem:[#allocation2 + $0x8] sm:$0x1]
      %v1275 = vld [vmem:[#allocation2 + $0xc] sm:$0xf]
      %v1276 = vld [vmem:[#allocation2 + $0x10] sm:$0xf]
      %v1277 = vld [vmem:[#allocation2 + $0x14] sm:$0x1]
      %v1278 = vld [vmem:[#allocation2 + $0x18] sm:$0xf]
      %v1279 = vld [vmem:[#allocation2 + $0x1c] sm:$0xf]
      %v1280 = vld [vmem:[#allocation2 + $0x20] sm:$0x1]
      %v1281 = vld [vmem:[#allocation2 + $0x24] sm:$0xf]
      %v1282 = vld [vmem:[#allocation2 + $0x28] sm:$0xf]
      %v1283 = vld [vmem:[#allocation2 + $0x2c] sm:$0x1]
      %v1284 = vld [vmem:[#allocation2 + $0x30] sm:$0xf]
      %v1285 = vld [vmem:[#allocation2 + $0x34] sm:$0xf]
      %v1286 = vld [vmem:[#allocation2 + $0x38] sm:$0x1]
      %v1287 = vld [vmem:[#allocation2 + $0x3c] sm:$0xf]
      %v1288 = vld [vmem:[#allocation2 + $0x40] sm:$0xf]
      %v1289 = vld [vmem:[#allocation2 + $0x44] sm:$0x1]
      %v1290 = vld [vmem:[#allocation2 + $0x48] sm:$0xf]
      %v1291 = vld [vmem:[#allocation2 + $0x4c] sm:$0xf]
      %v1292 = vld [vmem:[#allocation2 + $0x50] sm:$0x1]
      %v1293 = vld [vmem:[#allocation2 + $0x54] sm:$0xf]
      %v1294 = vld [vmem:[#allocation2 + $0x58] sm:$0xf]
      %v1295 = vld [vmem:[#allocation2 + $0x5c] sm:$0x1]
      %vm1296 = vsmask.f32 3328
      %vm1297 = vsmask.f32 7440
      %vm1298 = vmor %vm1296, %vm1297
      %v1300 = vshrl.u32 %v1272, 16
      %v1302 = vrot.slane %v1300, 4
      %v1303 = vshll.u32 %v1272, 16
      %v1305 = vrot.slane %v1303, 5
      %v1306 = vor.u32 %v1302, %v1305
      %v1307 = vrot.slane %v1306, 4
      %v1309 = vshll.u32 %v1273, 16
      %v1311 = vrot.slane %v1309, 5
      %v1312 = vsel %vm1298, %v1307, %v1311
      %v1313 = vshrl.u32 %v1273, 16
      %v1315 = vrot.slane %v1313, 4
      %v1316 = vor.u32 %v1315, %v1311
      %v1317 = vrot.slane %v1316, 4
      %v1319 = vshll.u32 %v1274, 16
      %v1321 = vrot.slane %v1319, 5
      %v1322 = vsel %vm1298, %v1317, %v1321
      %v1324 = vshrl.u32 %v1275, 16
      %v1326 = vrot.slane %v1324, 4
      %v1327 = vshll.u32 %v1275, 16
      %v1329 = vrot.slane %v1327, 5
      %v1330 = vor.u32 %v1326, %v1329
      %v1331 = vrot.slane %v1330, 4
      %v1333 = vshll.u32 %v1276, 16
      %v1335 = vrot.slane %v1333, 5
      %v1336 = vsel %vm1298, %v1331, %v1335
      %v1337 = vshrl.u32 %v1276, 16
      %v1339 = vrot.slane %v1337, 4
      %v1340 = vor.u32 %v1339, %v1335
      %v1341 = vrot.slane %v1340, 4
      %v1343 = vshll.u32 %v1277, 16
      %v1345 = vrot.slane %v1343, 5
      %v1346 = vsel %vm1298, %v1341, %v1345
      %v1348 = vshrl.u32 %v1278, 16
      %v1350 = vrot.slane %v1348, 4
      %v1351 = vshll.u32 %v1278, 16
      %v1353 = vrot.slane %v1351, 5
      %v1354 = vor.u32 %v1350, %v1353
      %v1355 = vrot.slane %v1354, 4
      %v1357 = vshll.u32 %v1279, 16
      %v1359 = vrot.slane %v1357, 5
      %v1360 = vsel %vm1298, %v1355, %v1359
      %v1361 = vshrl.u32 %v1279, 16
      %v1363 = vrot.slane %v1361, 4
      %v1364 = vor.u32 %v1363, %v1359
      %v1365 = vrot.slane %v1364, 4
      %v1367 = vshll.u32 %v1280, 16
      %v1369 = vrot.slane %v1367, 5
      %v1370 = vsel %vm1298, %v1365, %v1369
      %v1372 = vshrl.u32 %v1281, 16
      %v1374 = vrot.slane %v1372, 4
      %v1375 = vshll.u32 %v1281, 16
      %v1377 = vrot.slane %v1375, 5
      %v1378 = vor.u32 %v1374, %v1377
      %v1379 = vrot.slane %v1378, 4
      %v1381 = vshll.u32 %v1282, 16
      %v1383 = vrot.slane %v1381, 5
      %v1384 = vsel %vm1298, %v1379, %v1383
      %v1385 = vshrl.u32 %v1282, 16
      %v1387 = vrot.slane %v1385, 4
      %v1388 = vor.u32 %v1387, %v1383
      %v1389 = vrot.slane %v1388, 4
      %v1391 = vshll.u32 %v1283, 16
      %v1393 = vrot.slane %v1391, 5
      %v1394 = vsel %vm1298, %v1389, %v1393
      %v1396 = vshrl.u32 %v1284, 16
      %v1398 = vrot.slane %v1396, 4
      %v1399 = vshll.u32 %v1284, 16
      %v1401 = vrot.slane %v1399, 5
      %v1402 = vor.u32 %v1398, %v1401
      %v1403 = vrot.slane %v1402, 4
      %v1405 = vshll.u32 %v1285, 16
      %v1407 = vrot.slane %v1405, 5
      %v1408 = vsel %vm1298, %v1403, %v1407
      %v1409 = vshrl.u32 %v1285, 16
      %v1411 = vrot.slane %v1409, 4
      %v1412 = vor.u32 %v1411, %v1407
      %v1413 = vrot.slane %v1412, 4
      %v1415 = vshll.u32 %v1286, 16
      %v1417 = vrot.slane %v1415, 5
      %v1418 = vsel %vm1298, %v1413, %v1417
      %v1420 = vshrl.u32 %v1287, 16
      %v1422 = vrot.slane %v1420, 4
      %v1423 = vshll.u32 %v1287, 16
      %v1425 = vrot.slane %v1423, 5
      %v1426 = vor.u32 %v1422, %v1425
      %v1427 = vrot.slane %v1426, 4
      %v1429 = vshll.u32 %v1288, 16
      %v1431 = vrot.slane %v1429, 5
      %v1432 = vsel %vm1298, %v1427, %v1431
      %v1433 = vshrl.u32 %v1288, 16
      %v1435 = vrot.slane %v1433, 4
      %v1436 = vor.u32 %v1435, %v1431
      %v1437 = vrot.slane %v1436, 4
      %v1439 = vshll.u32 %v1289, 16
      %v1441 = vrot.slane %v1439, 5
      %v1442 = vsel %vm1298, %v1437, %v1441
      %v1444 = vshrl.u32 %v1290, 16
      %v1446 = vrot.slane %v1444, 4
      %v1447 = vshll.u32 %v1290, 16
      %v1449 = vrot.slane %v1447, 5
      %v1450 = vor.u32 %v1446, %v1449
      %v1451 = vrot.slane %v1450, 4
      %v1453 = vshll.u32 %v1291, 16
      %v1455 = vrot.slane %v1453, 5
      %v1456 = vsel %vm1298, %v1451, %v1455
      %v1457 = vshrl.u32 %v1291, 16
      %v1459 = vrot.slane %v1457, 4
      %v1460 = vor.u32 %v1459, %v1455
      %v1461 = vrot.slane %v1460, 4
      %v1463 = vshll.u32 %v1292, 16
      %v1465 = vrot.slane %v1463, 5
      %v1466 = vsel %vm1298, %v1461, %v1465
      %v1468 = vshrl.u32 %v1293, 16
      %v1470 = vrot.slane %v1468, 4
      %v1471 = vshll.u32 %v1293, 16
      %v1473 = vrot.slane %v1471, 5
      %v1474 = vor.u32 %v1470, %v1473
      %v1475 = vrot.slane %v1474, 4
      %v1477 = vshll.u32 %v1294, 16
      %v1479 = vrot.slane %v1477, 5
      %v1480 = vsel %vm1298, %v1475, %v1479
      %v1481 = vshrl.u32 %v1294, 16
      %v1483 = vrot.slane %v1481, 4
      %v1484 = vor.u32 %v1483, %v1479
      %v1485 = vrot.slane %v1484, 4
      %v1487 = vshll.u32 %v1295, 16
      %v1489 = vrot.slane %v1487, 5
      %v1490 = vsel %vm1298, %v1485, %v1489
      %s1491 = scalar_lea.vmem %s1, 16
      %v1492 = vld [vmem:[%s1491] sm:$0xff]
      %v1493 = vld [vmem:[%s1491 + $0x8] sm:$0xff]
      %v1494 = vunpack.c.l.b16 %v1312
      %v1495 = vunpack.c.l.b16 %v1322
      %v1496 = vunpack.c.l.b16 %v1336
      %v1497 = vunpack.c.l.b16 %v1346
      %v1498 = vunpack.c.l.b16 %v1360
      %v1499 = vunpack.c.l.b16 %v1370
      %v1500 = vunpack.c.l.b16 %v1384
      %v1501 = vunpack.c.l.b16 %v1394
      %v1502 = vunpack.c.l.b16 %v1408
      %v1503 = vunpack.c.l.b16 %v1418
      %v1504 = vunpack.c.l.b16 %v1432
      %v1505 = vunpack.c.l.b16 %v1442
      %v1506 = vunpack.c.l.b16 %v1456
      %v1507 = vunpack.c.l.b16 %v1466
      %v1508 = vunpack.c.l.b16 %v1480
      %v1509 = vunpack.c.l.b16 %v1490
      %v1510 = vpack.c.b16 %v1495, %v1494
      %v1511 = vpack.c.b16 %v1497, %v1496
      %v1512 = vpack.c.b16 %v1499, %v1498
      %v1513 = vpack.c.b16 %v1501, %v1500
      %v1514 = vpack.c.b16 %v1503, %v1502
      %v1515 = vpack.c.b16 %v1505, %v1504
      %v1516 = vpack.c.b16 %v1507, %v1506
      %v1517 = vpack.c.b16 %v1509, %v1508
      %v1520 = vunpack.c.l.b16 %v1492
      %v1521 = vunpack.c.h.b16 %v1492
      %v1522 = vunpack.c.l.b16 %v1493
      %v1523 = vunpack.c.h.b16 %v1493
      %v1524 = vpack.c.b16 %v1522, %v1520
      %v1525 = vpack.c.b16 %v1523, %v1521
      %v1529 = vsel %vm1102, %v1510, 0
      %v1532 = vsel %vm1102, %v1511, 0
      %v1535 = vsel %vm1102, %v1512, 0
      %v1538 = vsel %vm1102, %v1513, 0
      %v1541 = vsel %vm1102, %v1514, 0
      %v1544 = vsel %vm1102, %v1515, 0
      %v1547 = vsel %vm1102, %v1516, 0
      %v1550 = vsel %vm1102, %v1517, 0
      %1552 = vmatprep.subr.bf16.mxu0 %v1525
      %1553 = vmatpush1.bf16.msra.mxu0 %v1524
      %1554 = vmatprep.subr.bf16.mxu0 0
      %1555 = vmatpush1.bf16.msra.mxu0 0
      %1556 = vmatprep.subr.bf16.mxu0 0
      %1557 = vmatpush1.bf16.msra.mxu0 0
      %1558 = vmatprep.subr.bf16.mxu0 0
      %1559 = vmatpush1.bf16.msra.mxu0 0
      %1560 = vmatprep.subr.bf16.mxu0 0
      %1561 = vmatpush1.bf16.msra.mxu0 0
      %1562 = vmatprep.subr.bf16.mxu0 0
      %1563 = vmatpush1.bf16.msra.mxu0 0
      %1564 = vmatprep.subr.bf16.mxu0 0
      %1565 = vmatpush1.bf16.msra.mxu0 0
      %1566 = vmatprep.subr.bf16.mxu0 0
      %1567 = vmatpush1.bf16.msra.mxu0 0
      %1568 = vmatprep.subr.bf16.mxu0 0
      %1569 = vmatpush1.bf16.msra.mxu0 0
      %1570 = vmatprep.subr.bf16.mxu0 0
      %1571 = vmatpush1.bf16.msra.mxu0 0
      %1572 = vmatprep.subr.bf16.mxu0 0
      %1573 = vmatpush1.bf16.msra.mxu0 0
      %1574 = vmatprep.subr.bf16.mxu0 0
      %1575 = vmatpush1.bf16.msra.mxu0 0
      %1576 = vmatprep.subr.bf16.mxu0 0
      %1577 = vmatpush1.bf16.msra.mxu0 0
      %1578 = vmatprep.subr.bf16.mxu0 0
      %1579 = vmatpush1.bf16.msra.mxu0 0
      %1580 = vmatprep.subr.bf16.mxu0 0
      %1581 = vmatpush1.bf16.msra.mxu0 0
      %1582 = vmatprep.subr.bf16.mxu0 0
      %1583 = vmatpush1.bf16.msra.mxu0 0
      %1584 = vmatprep.mubr.bf16.mxu0 0
      %1585 = vmatmul.mubr.bf16.gmra.mrb[0].mxu0 %v1529
      %v1586 = vpop.f32.mrb[0].mxu0
      %v1587 = vadd.f32 0.0, %v1586
      %v1588 = vpop.f32.mrb[0].mxu0
      %v1589 = vadd.f32 0.0, %v1588
      %v1590 = vpop.f32.mrb[0].mxu0
      %v1591 = vadd.f32 0.0, %v1590
      %v1592 = vpop.f32.mrb[0].mxu0
      %v1593 = vadd.f32 0.0, %v1592
      %1594 = vmatprep.mubr.bf16.mxu0 0
      %1595 = vmatmul.mubr.bf16.gmra.mrb[0].mxu0 %v1532
      %v1596 = vpop.f32.mrb[0].mxu0
      %v1597 = vadd.f32 0.0, %v1596
      %v1598 = vpop.f32.mrb[0].mxu0
      %v1599 = vadd.f32 0.0, %v1598
      %v1600 = vpop.f32.mrb[0].mxu0
      %v1601 = vadd.f32 0.0, %v1600
      %v1602 = vpop.f32.mrb[0].mxu0
      %v1603 = vadd.f32 0.0, %v1602
      %1604 = vmatprep.mubr.bf16.mxu0 0
      %1605 = vmatmul.mubr.bf16.gmra.mrb[0].mxu0 %v1535
      %v1606 = vpop.f32.mrb[0].mxu0
      %v1607 = vadd.f32 0.0, %v1606
      %v1608 = vpop.f32.mrb[0].mxu0
      %v1609 = vadd.f32 0.0, %v1608
      %v1610 = vpop.f32.mrb[0].mxu0
      %v1611 = vadd.f32 0.0, %v1610
      %v1612 = vpop.f32.mrb[0].mxu0
      %v1613 = vadd.f32 0.0, %v1612
      %1614 = vmatprep.mubr.bf16.mxu0 0
      %1615 = vmatmul.mubr.bf16.gmra.mrb[0].mxu0 %v1538
      %v1616 = vpop.f32.mrb[0].mxu0
      %v1617 = vadd.f32 0.0, %v1616
      %v1618 = vpop.f32.mrb[0].mxu0
      %v1619 = vadd.f32 0.0, %v1618
      %v1620 = vpop.f32.mrb[0].mxu0
      %v1621 = vadd.f32 0.0, %v1620
      %v1622 = vpop.f32.mrb[0].mxu0
      %v1623 = vadd.f32 0.0, %v1622
      %1624 = vmatprep.mubr.bf16.mxu0 0
      %1625 = vmatmul.mubr.bf16.gmra.mrb[0].mxu0 %v1541
      %v1626 = vpop.f32.mrb[0].mxu0
      %v1627 = vadd.f32 0.0, %v1626
      %v1628 = vpop.f32.mrb[0].mxu0
      %v1629 = vadd.f32 0.0, %v1628
      %v1630 = vpop.f32.mrb[0].mxu0
      %v1631 = vadd.f32 0.0, %v1630
      %v1632 = vpop.f32.mrb[0].mxu0
      %v1633 = vadd.f32 0.0, %v1632
      %1634 = vmatprep.mubr.bf16.mxu0 0
      %1635 = vmatmul.mubr.bf16.gmra.mrb[0].mxu0 %v1544
      %v1636 = vpop.f32.mrb[0].mxu0
      %v1637 = vadd.f32 0.0, %v1636
      %v1638 = vpop.f32.mrb[0].mxu0
      %v1639 = vadd.f32 0.0, %v1638
      %v1640 = vpop.f32.mrb[0].mxu0
      %v1641 = vadd.f32 0.0, %v1640
      %v1642 = vpop.f32.mrb[0].mxu0
      %v1643 = vadd.f32 0.0, %v1642
      %1644 = vmatprep.mubr.bf16.mxu0 0
      %1645 = vmatmul.mubr.bf16.gmra.mrb[0].mxu0 %v1547
      %v1646 = vpop.f32.mrb[0].mxu0
      %v1647 = vadd.f32 0.0, %v1646
      %v1648 = vpop.f32.mrb[0].mxu0
      %v1649 = vadd.f32 0.0, %v1648
      %v1650 = vpop.f32.mrb[0].mxu0
      %v1651 = vadd.f32 0.0, %v1650
      %v1652 = vpop.f32.mrb[0].mxu0
      %v1653 = vadd.f32 0.0, %v1652
      %1654 = vmatprep.mubr.bf16.mxu0 0
      %1655 = vmatmul.mubr.bf16.gmra.mrb[0].mxu0 %v1550
      %v1656 = vpop.f32.mrb[0].mxu0
      %v1657 = vadd.f32 0.0, %v1656
      %v1658 = vpop.f32.mrb[0].mxu0
      %v1659 = vadd.f32 0.0, %v1658
      %v1660 = vpop.f32.mrb[0].mxu0
      %v1661 = vadd.f32 0.0, %v1660
      %v1662 = vpop.f32.mrb[0].mxu0
      %v1663 = vadd.f32 0.0, %v1662
      %1664 = vdwg.mxu0
      %v1665 = vadd.f32 %v1240, %v1587
      %v1666 = vadd.f32 %v1241, %v1589
      %v1667 = vadd.f32 %v1242, %v1591
      %v1668 = vadd.f32 %v1243, %v1593
      %v1669 = vadd.f32 %v1244, %v1597
      %v1670 = vadd.f32 %v1245, %v1599
      %v1671 = vadd.f32 %v1246, %v1601
      %v1672 = vadd.f32 %v1247, %v1603
      %v1673 = vadd.f32 %v1248, %v1607
      %v1674 = vadd.f32 %v1249, %v1609
      %v1675 = vadd.f32 %v1250, %v1611
      %v1676 = vadd.f32 %v1251, %v1613
      %v1677 = vadd.f32 %v1252, %v1617
      %v1678 = vadd.f32 %v1253, %v1619
      %v1679 = vadd.f32 %v1254, %v1621
      %v1680 = vadd.f32 %v1255, %v1623
      %v1681 = vadd.f32 %v1256, %v1627
      %v1682 = vadd.f32 %v1257, %v1629
      %v1683 = vadd.f32 %v1258, %v1631
      %v1684 = vadd.f32 %v1259, %v1633
      %v1685 = vadd.f32 %v1260, %v1637
      %v1686 = vadd.f32 %v1261, %v1639
      %v1687 = vadd.f32 %v1262, %v1641
      %v1688 = vadd.f32 %v1263, %v1643
      %v1689 = vadd.f32 %v1264, %v1647
      %v1690 = vadd.f32 %v1265, %v1649
      %v1691 = vadd.f32 %v1266, %v1651
      %v1692 = vadd.f32 %v1267, %v1653
      %v1693 = vadd.f32 %v1268, %v1657
      %v1694 = vadd.f32 %v1269, %v1659
      %v1695 = vadd.f32 %v1270, %v1661
      %v1696 = vadd.f32 %v1271, %v1663
      %v1697 = vld [vmem:[#allocation2] sm:$0xe]
      %v1698 = vld [vmem:[#allocation2 + $0xc] sm:$0xe]
      %v1699 = vld [vmem:[#allocation2 + $0x18] sm:$0xe]
      %v1700 = vld [vmem:[#allocation2 + $0x24] sm:$0xe]
      %v1701 = vld [vmem:[#allocation2 + $0x30] sm:$0xe]
      %v1702 = vld [vmem:[#allocation2 + $0x3c] sm:$0xe]
      %v1703 = vld [vmem:[#allocation2 + $0x48] sm:$0xe]
      %v1704 = vld [vmem:[#allocation2 + $0x54] sm:$0xe]
      %vm1729 = vcmask 1042432
      %vm1730 = vcmask 1046532
      %vm1731 = vmor %vm1729, %vm1730
      %v1732 = vrot.slane %v1697, 5
      %v1733 = vrot.slane %v1732, 4
      %v1734 = vrot.slane %v1273, 5
      %v1735 = vsel %vm1731, %v1733, %v1734
      %v1736 = vrot.slane %v1734, 4
      %v1737 = vrot.slane %v1274, 5
      %v1738 = vsel %vm1731, %v1736, %v1737
      %v1739 = vrot.slane %v1698, 5
      %v1740 = vrot.slane %v1739, 4
      %v1741 = vrot.slane %v1276, 5
      %v1742 = vsel %vm1731, %v1740, %v1741
      %v1743 = vrot.slane %v1741, 4
      %v1744 = vrot.slane %v1277, 5
      %v1745 = vsel %vm1731, %v1743, %v1744
      %v1746 = vrot.slane %v1699, 5
      %v1747 = vrot.slane %v1746, 4
      %v1748 = vrot.slane %v1279, 5
      %v1749 = vsel %vm1731, %v1747, %v1748
      %v1750 = vrot.slane %v1748, 4
      %v1751 = vrot.slane %v1280, 5
      %v1752 = vsel %vm1731, %v1750, %v1751
      %v1753 = vrot.slane %v1700, 5
      %v1754 = vrot.slane %v1753, 4
      %v1755 = vrot.slane %v1282, 5
      %v1756 = vsel %vm1731, %v1754, %v1755
      %v1757 = vrot.slane %v1755, 4
      %v1758 = vrot.slane %v1283, 5
      %v1759 = vsel %vm1731, %v1757, %v1758
      %v1760 = vrot.slane %v1701, 5
      %v1761 = vrot.slane %v1760, 4
      %v1762 = vrot.slane %v1285, 5
      %v1763 = vsel %vm1731, %v1761, %v1762
      %v1764 = vrot.slane %v1762, 4
      %v1765 = vrot.slane %v1286, 5
      %v1766 = vsel %vm1731, %v1764, %v1765
      %v1767 = vrot.slane %v1702, 5
      %v1768 = vrot.slane %v1767, 4
      %v1769 = vrot.slane %v1288, 5
      %v1770 = vsel %vm1731, %v1768, %v1769
      %v1771 = vrot.slane %v1769, 4
      %v1772 = vrot.slane %v1289, 5
      %v1773 = vsel %vm1731, %v1771, %v1772
      %v1774 = vrot.slane %v1703, 5
      %v1775 = vrot.slane %v1774, 4
      %v1776 = vrot.slane %v1291, 5
      %v1777 = vsel %vm1731, %v1775, %v1776
      %v1778 = vrot.slane %v1776, 4
      %v1779 = vrot.slane %v1292, 5
      %v1780 = vsel %vm1731, %v1778, %v1779
      %v1781 = vrot.slane %v1704, 5
      %v1782 = vrot.slane %v1781, 4
      %v1783 = vrot.slane %v1294, 5
      %v1784 = vsel %vm1731, %v1782, %v1783
      %v1785 = vrot.slane %v1783, 4
      %v1786 = vrot.slane %v1295, 5
      %v1787 = vsel %vm1731, %v1785, %v1786
      %s1788 = scalar_lea.vmem %s1, 32
      %v1789 = vld [vmem:[%s1788] sm:$0xff]
      %v1790 = vld [vmem:[%s1788 + $0x8] sm:$0xff]
      %v1791 = vunpack.c.l.b16 %v1735
      %v1792 = vunpack.c.l.b16 %v1738
      %v1793 = vunpack.c.l.b16 %v1742
      %v1794 = vunpack.c.l.b16 %v1745
      %v1795 = vunpack.c.l.b16 %v1749
      %v1796 = vunpack.c.l.b16 %v1752
      %v1797 = vunpack.c.l.b16 %v1756
      %v1798 = vunpack.c.l.b16 %v1759
      %v1799 = vunpack.c.l.b16 %v1763
      %v1800 = vunpack.c.l.b16 %v1766
      %v1801 = vunpack.c.l.b16 %v1770
      %v1802 = vunpack.c.l.b16 %v1773
      %v1803 = vunpack.c.l.b16 %v1777
      %v1804 = vunpack.c.l.b16 %v1780
      %v1805 = vunpack.c.l.b16 %v1784
      %v1806 = vunpack.c.l.b16 %v1787
      %v1807 = vpack.c.b16 %v1792, %v1791
      %v1808 = vpack.c.b16 %v1794, %v1793
      %v1809 = vpack.c.b16 %v1796, %v1795
      %v1810 = vpack.c.b16 %v1798, %v1797
      %v1811 = vpack.c.b16 %v1800, %v1799
      %v1812 = vpack.c.b16 %v1802, %v1801
      %v1813 = vpack.c.b16 %v1804, %v1803
      %v1814 = vpack.c.b16 %v1806, %v1805
      %v1817 = vunpack.c.l.b16 %v1789
      %v1818 = vunpack.c.h.b16 %v1789
      %v1819 = vunpack.c.l.b16 %v1790
      %v1820 = vunpack.c.h.b16 %v1790
      %v1821 = vpack.c.b16 %v1819, %v1817
      %v1822 = vpack.c.b16 %v1820, %v1818
      %v1826 = vsel %vm1102, %v1807, 0
      %v1829 = vsel %vm1102, %v1808, 0
      %v1832 = vsel %vm1102, %v1809, 0
      %v1835 = vsel %vm1102, %v1810, 0
      %v1838 = vsel %vm1102, %v1811, 0
      %v1841 = vsel %vm1102, %v1812, 0
      %v1844 = vsel %vm1102, %v1813, 0
      %v1847 = vsel %vm1102, %v1814, 0
      %1849 = vmatprep.subr.bf16.mxu0 %v1822
      %1850 = vmatpush1.bf16.msra.mxu0 %v1821
      %1851 = vmatprep.subr.bf16.mxu0 0
      %1852 = vmatpush1.bf16.msra.mxu0 0
      %1853 = vmatprep.subr.bf16.mxu0 0
      %1854 = vmatpush1.bf16.msra.mxu0 0
      %1855 = vmatprep.subr.bf16.mxu0 0
      %1856 = vmatpush1.bf16.msra.mxu0 0
      %1857 = vmatprep.subr.bf16.mxu0 0
      %1858 = vmatpush1.bf16.msra.mxu0 0
      %1859 = vmatprep.subr.bf16.mxu0 0
      %1860 = vmatpush1.bf16.msra.mxu0 0
      %1861 = vmatprep.subr.bf16.mxu0 0
      %1862 = vmatpush1.bf16.msra.mxu0 0
      %1863 = vmatprep.subr.bf16.mxu0 0
      %1864 = vmatpush1.bf16.msra.mxu0 0
      %1865 = vmatprep.subr.bf16.mxu0 0
      %1866 = vmatpush1.bf16.msra.mxu0 0
      %1867 = vmatprep.subr.bf16.mxu0 0
      %1868 = vmatpush1.bf16.msra.mxu0 0
      %1869 = vmatprep.subr.bf16.mxu0 0
      %1870 = vmatpush1.bf16.msra.mxu0 0
      %1871 = vmatprep.subr.bf16.mxu0 0
      %1872 = vmatpush1.bf16.msra.mxu0 0
      %1873 = vmatprep.subr.bf16.mxu0 0
      %1874 = vmatpush1.bf16.msra.mxu0 0
      %1875 = vmatprep.subr.bf16.mxu0 0
      %1876 = vmatpush1.bf16.msra.mxu0 0
      %1877 = vmatprep.subr.bf16.mxu0 0
      %1878 = vmatpush1.bf16.msra.mxu0 0
      %1879 = vmatprep.subr.bf16.mxu0 0
      %1880 = vmatpush1.bf16.msra.mxu0 0
      %1881 = vmatprep.mubr.bf16.mxu0 0
      %1882 = vmatmul.mubr.bf16.gmra.mrb[0].mxu0 %v1826
      %v1883 = vpop.f32.mrb[0].mxu0
      %v1884 = vadd.f32 0.0, %v1883
      %v1885 = vpop.f32.mrb[0].mxu0
      %v1886 = vadd.f32 0.0, %v1885
      %v1887 = vpop.f32.mrb[0].mxu0
      %v1888 = vadd.f32 0.0, %v1887
      %v1889 = vpop.f32.mrb[0].mxu0
      %v1890 = vadd.f32 0.0, %v1889
      %1891 = vmatprep.mubr.bf16.mxu0 0
      %1892 = vmatmul.mubr.bf16.gmra.mrb[0].mxu0 %v1829
      %v1893 = vpop.f32.mrb[0].mxu0
      %v1894 = vadd.f32 0.0, %v1893
      %v1895 = vpop.f32.mrb[0].mxu0
      %v1896 = vadd.f32 0.0, %v1895
      %v1897 = vpop.f32.mrb[0].mxu0
      %v1898 = vadd.f32 0.0, %v1897
      %v1899 = vpop.f32.mrb[0].mxu0
      %v1900 = vadd.f32 0.0, %v1899
      %1901 = vmatprep.mubr.bf16.mxu0 0
      %1902 = vmatmul.mubr.bf16.gmra.mrb[0].mxu0 %v1832
      %v1903 = vpop.f32.mrb[0].mxu0
      %v1904 = vadd.f32 0.0, %v1903
      %v1905 = vpop.f32.mrb[0].mxu0
      %v1906 = vadd.f32 0.0, %v1905
      %v1907 = vpop.f32.mrb[0].mxu0
      %v1908 = vadd.f32 0.0, %v1907
      %v1909 = vpop.f32.mrb[0].mxu0
      %v1910 = vadd.f32 0.0, %v1909
      %1911 = vmatprep.mubr.bf16.mxu0 0
      %1912 = vmatmul.mubr.bf16.gmra.mrb[0].mxu0 %v1835
      %v1913 = vpop.f32.mrb[0].mxu0
      %v1914 = vadd.f32 0.0, %v1913
      %v1915 = vpop.f32.mrb[0].mxu0
      %v1916 = vadd.f32 0.0, %v1915
      %v1917 = vpop.f32.mrb[0].mxu0
      %v1918 = vadd.f32 0.0, %v1917
      %v1919 = vpop.f32.mrb[0].mxu0
      %v1920 = vadd.f32 0.0, %v1919
      %1921 = vmatprep.mubr.bf16.mxu0 0
      %1922 = vmatmul.mubr.bf16.gmra.mrb[0].mxu0 %v1838
      %v1923 = vpop.f32.mrb[0].mxu0
      %v1924 = vadd.f32 0.0, %v1923
      %v1925 = vpop.f32.mrb[0].mxu0
      %v1926 = vadd.f32 0.0, %v1925
      %v1927 = vpop.f32.mrb[0].mxu0
      %v1928 = vadd.f32 0.0, %v1927
      %v1929 = vpop.f32.mrb[0].mxu0
      %v1930 = vadd.f32 0.0, %v1929
      %1931 = vmatprep.mubr.bf16.mxu0 0
      %1932 = vmatmul.mubr.bf16.gmra.mrb[0].mxu0 %v1841
      %v1933 = vpop.f32.mrb[0].mxu0
      %v1934 = vadd.f32 0.0, %v1933
      %v1935 = vpop.f32.mrb[0].mxu0
      %v1936 = vadd.f32 0.0, %v1935
      %v1937 = vpop.f32.mrb[0].mxu0
      %v1938 = vadd.f32 0.0, %v1937
      %v1939 = vpop.f32.mrb[0].mxu0
      %v1940 = vadd.f32 0.0, %v1939
      %1941 = vmatprep.mubr.bf16.mxu0 0
      %1942 = vmatmul.mubr.bf16.gmra.mrb[0].mxu0 %v1844
      %v1943 = vpop.f32.mrb[0].mxu0
      %v1944 = vadd.f32 0.0, %v1943
      %v1945 = vpop.f32.mrb[0].mxu0
      %v1946 = vadd.f32 0.0, %v1945
      %v1947 = vpop.f32.mrb[0].mxu0
      %v1948 = vadd.f32 0.0, %v1947
      %v1949 = vpop.f32.mrb[0].mxu0
      %v1950 = vadd.f32 0.0, %v1949
      %1951 = vmatprep.mubr.bf16.mxu0 0
      %1952 = vmatmul.mubr.bf16.gmra.mrb[0].mxu0 %v1847
      %v1953 = vpop.f32.mrb[0].mxu0
      %v1954 = vadd.f32 0.0, %v1953
      %v1955 = vpop.f32.mrb[0].mxu0
      %v1956 = vadd.f32 0.0, %v1955
      %v1957 = vpop.f32.mrb[0].mxu0
      %v1958 = vadd.f32 0.0, %v1957
      %v1959 = vpop.f32.mrb[0].mxu0
      %v1960 = vadd.f32 0.0, %v1959
      %1961 = vdwg.mxu0
      %v1962 = vadd.f32 %v1665, %v1884
      %v1963 = vadd.f32 %v1666, %v1886
      %v1964 = vadd.f32 %v1667, %v1888
      %v1965 = vadd.f32 %v1668, %v1890
      %v1966 = vadd.f32 %v1669, %v1894
      %v1967 = vadd.f32 %v1670, %v1896
      %v1968 = vadd.f32 %v1671, %v1898
      %v1969 = vadd.f32 %v1672, %v1900
      %v1970 = vadd.f32 %v1673, %v1904
      %v1971 = vadd.f32 %v1674, %v1906
      %v1972 = vadd.f32 %v1675, %v1908
      %v1973 = vadd.f32 %v1676, %v1910
      %v1974 = vadd.f32 %v1677, %v1914
      %v1975 = vadd.f32 %v1678, %v1916
      %v1976 = vadd.f32 %v1679, %v1918
      %v1977 = vadd.f32 %v1680, %v1920
      %v1978 = vadd.f32 %v1681, %v1924
      %v1979 = vadd.f32 %v1682, %v1926
      %v1980 = vadd.f32 %v1683, %v1928
      %v1981 = vadd.f32 %v1684, %v1930
      %v1982 = vadd.f32 %v1685, %v1934
      %v1983 = vadd.f32 %v1686, %v1936
      %v1984 = vadd.f32 %v1687, %v1938
      %v1985 = vadd.f32 %v1688, %v1940
      %v1986 = vadd.f32 %v1689, %v1944
      %v1987 = vadd.f32 %v1690, %v1946
      %v1988 = vadd.f32 %v1691, %v1948
      %v1989 = vadd.f32 %v1692, %v1950
      %v1990 = vadd.f32 %v1693, %v1954
      %v1991 = vadd.f32 %v1694, %v1956
      %v1992 = vadd.f32 %v1695, %v1958
      %v1993 = vadd.f32 %v1696, %v1960
      %v1994 = vmax.f32 %v1962, 0.0
      %v1995 = vmax.f32 %v1963, 0.0
      %v1996 = vmax.f32 %v1964, 0.0
      %v1997 = vmax.f32 %v1965, 0.0
      %v1998 = vmax.f32 %v1966, 0.0
      %v1999 = vmax.f32 %v1967, 0.0
      %v2000 = vmax.f32 %v1968, 0.0
      %v2001 = vmax.f32 %v1969, 0.0
      %v2002 = vmax.f32 %v1970, 0.0
      %v2003 = vmax.f32 %v1971, 0.0
      %v2004 = vmax.f32 %v1972, 0.0
      %v2005 = vmax.f32 %v1973, 0.0
      %v2006 = vmax.f32 %v1974, 0.0
      %v2007 = vmax.f32 %v1975, 0.0
      %v2008 = vmax.f32 %v1976, 0.0
      %v2009 = vmax.f32 %v1977, 0.0
      %v2010 = vmax.f32 %v1978, 0.0
      %v2011 = vmax.f32 %v1979, 0.0
      %v2012 = vmax.f32 %v1980, 0.0
      %v2013 = vmax.f32 %v1981, 0.0
      %v2014 = vmax.f32 %v1982, 0.0
      %v2015 = vmax.f32 %v1983, 0.0
      %v2016 = vmax.f32 %v1984, 0.0
      %v2017 = vmax.f32 %v1985, 0.0
      %v2018 = vmax.f32 %v1986, 0.0
      %v2019 = vmax.f32 %v1987, 0.0
      %v2020 = vmax.f32 %v1988, 0.0
      %v2021 = vmax.f32 %v1989, 0.0
      %v2022 = vmax.f32 %v1990, 0.0
      %v2023 = vmax.f32 %v1991, 0.0
      %v2024 = vmax.f32 %v1992, 0.0
      %v2025 = vmax.f32 %v1993, 0.0
      %v2026 = vpack.c.bf16 %v1996, %v1994
      %v2027 = vpack.c.bf16 %v1997, %v1995
      %v2028 = vpack.c.bf16 %v2000, %v1998
      %v2029 = vpack.c.bf16 %v2001, %v1999
      %v2030 = vpack.c.bf16 %v2004, %v2002
      %v2031 = vpack.c.bf16 %v2005, %v2003
      %v2032 = vpack.c.bf16 %v2008, %v2006
      %v2033 = vpack.c.bf16 %v2009, %v2007
      %v2034 = vpack.c.bf16 %v2012, %v2010
      %v2035 = vpack.c.bf16 %v2013, %v2011
      %v2036 = vpack.c.bf16 %v2016, %v2014
      %v2037 = vpack.c.bf16 %v2017, %v2015
      %v2038 = vpack.c.bf16 %v2020, %v2018
      %v2039 = vpack.c.bf16 %v2021, %v2019
      %v2040 = vpack.c.bf16 %v2024, %v2022
      %v2041 = vpack.c.bf16 %v2025, %v2023
      %v2058 = vunpack.c.l.b16 %v2026
      %v2059 = vunpack.c.l.b16 %v2027
      %v2060 = vunpack.c.h.b16 %v2026
      %v2061 = vunpack.c.h.b16 %v2027
      %v2062 = vunpack.c.l.b16 %v2028
      %v2063 = vunpack.c.l.b16 %v2029
      %v2064 = vunpack.c.h.b16 %v2028
      %v2065 = vunpack.c.h.b16 %v2029
      %v2066 = vunpack.c.l.b16 %v2030
      %v2067 = vunpack.c.l.b16 %v2031
      %v2068 = vunpack.c.h.b16 %v2030
      %v2069 = vunpack.c.h.b16 %v2031
      %v2070 = vunpack.c.l.b16 %v2032
      %v2071 = vunpack.c.l.b16 %v2033
      %v2072 = vunpack.c.h.b16 %v2032
      %v2073 = vunpack.c.h.b16 %v2033
      %v2074 = vunpack.c.l.b16 %v2034
      %v2075 = vunpack.c.l.b16 %v2035
      %v2076 = vunpack.c.h.b16 %v2034
      %v2077 = vunpack.c.h.b16 %v2035
      %v2078 = vunpack.c.l.b16 %v2036
      %v2079 = vunpack.c.l.b16 %v2037
      %v2080 = vunpack.c.h.b16 %v2036
      %v2081 = vunpack.c.h.b16 %v2037
      %v2082 = vunpack.c.l.b16 %v2038
      %v2083 = vunpack.c.l.b16 %v2039
      %v2084 = vunpack.c.h.b16 %v2038
      %v2085 = vunpack.c.h.b16 %v2039
      %v2086 = vunpack.c.l.b16 %v2040
      %v2087 = vunpack.c.l.b16 %v2041
      %v2088 = vunpack.c.h.b16 %v2040
      %v2089 = vunpack.c.h.b16 %v2041
      %v2090 = vpack.c.b16 %v2059, %v2058
      %v2091 = vpack.c.b16 %v2061, %v2060
      %v2092 = vpack.c.b16 %v2063, %v2062
      %v2093 = vpack.c.b16 %v2065, %v2064
      %v2094 = vpack.c.b16 %v2067, %v2066
      %v2095 = vpack.c.b16 %v2069, %v2068
      %v2096 = vpack.c.b16 %v2071, %v2070
      %v2097 = vpack.c.b16 %v2073, %v2072
      %v2098 = vpack.c.b16 %v2075, %v2074
      %v2099 = vpack.c.b16 %v2077, %v2076
      %v2100 = vpack.c.b16 %v2079, %v2078
      %v2101 = vpack.c.b16 %v2081, %v2080
      %v2102 = vpack.c.b16 %v2083, %v2082
      %v2103 = vpack.c.b16 %v2085, %v2084
      %v2104 = vpack.c.b16 %v2087, %v2086
      %v2105 = vpack.c.b16 %v2089, %v2088
      %v2107 = vshrl.u32 %v2090, 16
      %v2109 = vrot.slane %v2107, 7
      %v2110 = vshll.u32 %v2090, 16
      %v2112 = vor.u32 %v2109, %v2110
      %v2113 = vrot.slane %v2109, 4
      %v2115 = vshrl.u32 %v2091, 16
      %v2117 = vrot.slane %v2115, 7
      %v2118 = vshll.u32 %v2091, 16
      %v2120 = vor.u32 %v2117, %v2118
      %v2121 = vsel %vm800, %v2113, %v2120
      %v2122 = vrot.slane %v2117, 4
      %v2124 = vshrl.u32 %v2092, 16
      %v2126 = vrot.slane %v2124, 7
      %v2127 = vshll.u32 %v2092, 16
      %v2129 = vor.u32 %v2126, %v2127
      %v2130 = vrot.slane %v2126, 4
      %v2132 = vshrl.u32 %v2093, 16
      %v2134 = vrot.slane %v2132, 7
      %v2135 = vshll.u32 %v2093, 16
      %v2137 = vor.u32 %v2134, %v2135
      %v2138 = vsel %vm800, %v2130, %v2137
      %v2139 = vrot.slane %v2134, 4
      %v2141 = vshrl.u32 %v2094, 16
      %v2143 = vrot.slane %v2141, 7
      %v2144 = vshll.u32 %v2094, 16
      %v2146 = vor.u32 %v2143, %v2144
      %v2147 = vrot.slane %v2143, 4
      %v2149 = vshrl.u32 %v2095, 16
      %v2151 = vrot.slane %v2149, 7
      %v2152 = vshll.u32 %v2095, 16
      %v2154 = vor.u32 %v2151, %v2152
      %v2155 = vsel %vm800, %v2147, %v2154
      %v2156 = vrot.slane %v2151, 4
      %v2158 = vshrl.u32 %v2096, 16
      %v2160 = vrot.slane %v2158, 7
      %v2161 = vshll.u32 %v2096, 16
      %v2163 = vor.u32 %v2160, %v2161
      %v2164 = vrot.slane %v2160, 4
      %v2166 = vshrl.u32 %v2097, 16
      %v2168 = vrot.slane %v2166, 7
      %v2169 = vshll.u32 %v2097, 16
      %v2171 = vor.u32 %v2168, %v2169
      %v2172 = vsel %vm800, %v2164, %v2171
      %v2173 = vrot.slane %v2168, 4
      %v2175 = vshrl.u32 %v2098, 16
      %v2177 = vrot.slane %v2175, 7
      %v2178 = vshll.u32 %v2098, 16
      %v2180 = vor.u32 %v2177, %v2178
      %v2181 = vrot.slane %v2177, 4
      %v2183 = vshrl.u32 %v2099, 16
      %v2185 = vrot.slane %v2183, 7
      %v2186 = vshll.u32 %v2099, 16
      %v2188 = vor.u32 %v2185, %v2186
      %v2189 = vsel %vm800, %v2181, %v2188
      %v2190 = vrot.slane %v2185, 4
      %v2192 = vshrl.u32 %v2100, 16
      %v2194 = vrot.slane %v2192, 7
      %v2195 = vshll.u32 %v2100, 16
      %v2197 = vor.u32 %v2194, %v2195
      %v2198 = vrot.slane %v2194, 4
      %v2200 = vshrl.u32 %v2101, 16
      %v2202 = vrot.slane %v2200, 7
      %v2203 = vshll.u32 %v2101, 16
      %v2205 = vor.u32 %v2202, %v2203
      %v2206 = vsel %vm800, %v2198, %v2205
      %v2207 = vrot.slane %v2202, 4
      %v2209 = vshrl.u32 %v2102, 16
      %v2211 = vrot.slane %v2209, 7
      %v2212 = vshll.u32 %v2102, 16
      %v2214 = vor.u32 %v2211, %v2212
      %v2215 = vrot.slane %v2211, 4
      %v2217 = vshrl.u32 %v2103, 16
      %v2219 = vrot.slane %v2217, 7
      %v2220 = vshll.u32 %v2103, 16
      %v2222 = vor.u32 %v2219, %v2220
      %v2223 = vsel %vm800, %v2215, %v2222
      %v2224 = vrot.slane %v2219, 4
      %v2226 = vshrl.u32 %v2104, 16
      %v2228 = vrot.slane %v2226, 7
      %v2229 = vshll.u32 %v2104, 16
      %v2231 = vor.u32 %v2228, %v2229
      %v2232 = vrot.slane %v2228, 4
      %v2234 = vshrl.u32 %v2105, 16
      %v2236 = vrot.slane %v2234, 7
      %v2237 = vshll.u32 %v2105, 16
      %v2239 = vor.u32 %v2236, %v2237
      %v2240 = vsel %vm800, %v2232, %v2239
      %v2241 = vrot.slane %v2236, 4
      %vm2266 = vcmask 1043456
      %vm2267 = vmand %vm2266, %vm531
      %vm2268 = vcmask 1047556
      %vm2269 = vmand %vm2268, %vm588
      %vm2270 = vmor %vm2269, %vm2267
      %v2271 = vld [vmem:[#allocation3] sm:$0xff]
      %v2272 = vsel %vm2270, %v2112, %v2271
      %2273 = vst [vmem:[#allocation3] sm:$0xff] %v2272
      %2274 = vst [vmem:[#allocation3 + $0x8] sm:$0xff] %v2121
      %v2275 = vld [vmem:[#allocation3 + $0x10] sm:$0x11]
      %v2276 = vsel %vm562, %v2122, %v2275
      %2277 = vst [vmem:[#allocation3 + $0x10] sm:$0x11] %v2276
      %v2278 = vld [vmem:[#allocation3 + $0x18] sm:$0xff]
      %v2279 = vsel %vm2270, %v2129, %v2278
      %2280 = vst [vmem:[#allocation3 + $0x18] sm:$0xff] %v2279
      %2281 = vst [vmem:[#allocation3 + $0x20] sm:$0xff] %v2138
      %v2282 = vld [vmem:[#allocation3 + $0x28] sm:$0x11]
      %v2283 = vsel %vm562, %v2139, %v2282
      %2284 = vst [vmem:[#allocation3 + $0x28] sm:$0x11] %v2283
      %v2285 = vld [vmem:[#allocation3 + $0x30] sm:$0xff]
      %v2286 = vsel %vm2270, %v2146, %v2285
      %2287 = vst [vmem:[#allocation3 + $0x30] sm:$0xff] %v2286
      %2288 = vst [vmem:[#allocation3 + $0x38] sm:$0xff] %v2155
      %v2289 = vld [vmem:[#allocation3 + $0x40] sm:$0x11]
      %v2290 = vsel %vm562, %v2156, %v2289
      %2291 = vst [vmem:[#allocation3 + $0x40] sm:$0x11] %v2290
      %v2292 = vld [vmem:[#allocation3 + $0x48] sm:$0xff]
      %v2293 = vsel %vm2270, %v2163, %v2292
      %2294 = vst [vmem:[#allocation3 + $0x48] sm:$0xff] %v2293
      %2295 = vst [vmem:[#allocation3 + $0x50] sm:$0xff] %v2172
      %v2296 = vld [vmem:[#allocation3 + $0x58] sm:$0x11]
      %v2297 = vsel %vm562, %v2173, %v2296
      %2298 = vst [vmem:[#allocation3 + $0x58] sm:$0x11] %v2297
      %v2299 = vld [vmem:[#allocation3 + $0x60] sm:$0xff]
      %v2300 = vsel %vm2270, %v2180, %v2299
      %2301 = vst [vmem:[#allocation3 + $0x60] sm:$0xff] %v2300
      %2302 = vst [vmem:[#allocation3 + $0x68] sm:$0xff] %v2189
      %v2303 = vld [vmem:[#allocation3 + $0x70] sm:$0x11]
      %v2304 = vsel %vm562, %v2190, %v2303
      %2305 = vst [vmem:[#allocation3 + $0x70] sm:$0x11] %v2304
      %v2306 = vld [vmem:[#allocation3 + $0x78] sm:$0xff]
      %v2307 = vsel %vm2270, %v2197, %v2306
      %2308 = vst [vmem:[#allocation3 + $0x78] sm:$0xff] %v2307
      %2309 = vst [vmem:[#allocation3 + $0x80] sm:$0xff] %v2206
      %v2310 = vld [vmem:[#allocation3 + $0x88] sm:$0x11]
      %v2311 = vsel %vm562, %v2207, %v2310
      %2312 = vst [vmem:[#allocation3 + $0x88] sm:$0x11] %v2311
      %v2313 = vld [vmem:[#allocation3 + $0x90] sm:$0xff]
      %v2314 = vsel %vm2270, %v2214, %v2313
      %2315 = vst [vmem:[#allocation3 + $0x90] sm:$0xff] %v2314
      %2316 = vst [vmem:[#allocation3 + $0x98] sm:$0xff] %v2223
      %v2317 = vld [vmem:[#allocation3 + $0xa0] sm:$0x11]
      %v2318 = vsel %vm562, %v2224, %v2317
      %2319 = vst [vmem:[#allocation3 + $0xa0] sm:$0x11] %v2318
      %v2320 = vld [vmem:[#allocation3 + $0xa8] sm:$0xff]
      %v2321 = vsel %vm2270, %v2231, %v2320
      %2322 = vst [vmem:[#allocation3 + $0xa8] sm:$0xff] %v2321
      %2323 = vst [vmem:[#allocation3 + $0xb0] sm:$0xff] %v2240
      %v2324 = vld [vmem:[#allocation3 + $0xb8] sm:$0x11]
      %v2325 = vsel %vm562, %v2241, %v2324
      %2326 = vst [vmem:[#allocation3 + $0xb8] sm:$0x11] %v2325
      %v2327 = vld [vmem:[%s4] sm:$0x1]
      %v2329 = vlaneseq
      %v2330 = vshrl.u32 %v2329, 7
      %v2331 = vsub.s32 0, %v2330
      %v2332 = vrot.slane %v2327, %v2331
      %v2334 = vadd.f32 %v2332, 0.0
      %v2335 = vld [vmem:[#allocation3] sm:$0xff]
      %v2336 = vld [vmem:[#allocation3 + $0x8] sm:$0xff]
      %v2337 = vld [vmem:[#allocation3 + $0x18] sm:$0xff]
      %v2338 = vld [vmem:[#allocation3 + $0x20] sm:$0xff]
      %v2339 = vld [vmem:[#allocation3 + $0x30] sm:$0xff]
      %v2340 = vld [vmem:[#allocation3 + $0x38] sm:$0xff]
      %v2341 = vld [vmem:[#allocation3 + $0x48] sm:$0xff]
      %v2342 = vld [vmem:[#allocation3 + $0x50] sm:$0xff]
      %v2343 = vld [vmem:[#allocation3 + $0x60] sm:$0xff]
      %v2344 = vld [vmem:[#allocation3 + $0x68] sm:$0xff]
      %v2345 = vld [vmem:[#allocation3 + $0x78] sm:$0xff]
      %v2346 = vld [vmem:[#allocation3 + $0x80] sm:$0xff]
      %v2347 = vld [vmem:[#allocation3 + $0x90] sm:$0xff]
      %v2348 = vld [vmem:[#allocation3 + $0x98] sm:$0xff]
      %v2349 = vld [vmem:[#allocation3 + $0xa8] sm:$0xff]
      %v2350 = vld [vmem:[#allocation3 + $0xb0] sm:$0xff]
      %v2351 = vld [vmem:[%s3] sm:$0xf]
      %v2352 = vld [vmem:[%s3 + $0x4] sm:$0xf]
      %v2353 = vld [vmem:[%s3 + $0x8] sm:$0xf]
      %v2354 = vld [vmem:[%s3 + $0xc] sm:$0xf]
      %v2355 = vld [vmem:[%s3 + $0x10] sm:$0xf]
      %v2356 = vld [vmem:[%s3 + $0x14] sm:$0xf]
      %v2357 = vld [vmem:[%s3 + $0x18] sm:$0xf]
      %v2358 = vld [vmem:[%s3 + $0x1c] sm:$0xf]
      %v2359 = vld [vmem:[%s3 + $0x20] sm:$0xf]
      %v2360 = vld [vmem:[%s3 + $0x24] sm:$0xf]
      %v2361 = vld [vmem:[%s3 + $0x28] sm:$0xf]
      %v2362 = vld [vmem:[%s3 + $0x2c] sm:$0xf]
      %v2363 = vld [vmem:[%s3 + $0x30] sm:$0xf]
      %v2364 = vld [vmem:[%s3 + $0x34] sm:$0xf]
      %v2365 = vld [vmem:[%s3 + $0x38] sm:$0xf]
      %v2366 = vld [vmem:[%s3 + $0x3c] sm:$0xf]
      %v2367 = vld [vmem:[%s3 + $0x40] sm:$0xf]
      %v2368 = vld [vmem:[%s3 + $0x44] sm:$0xf]
      %v2369 = vld [vmem:[%s3 + $0x48] sm:$0xf]
      %v2370 = vld [vmem:[%s3 + $0x4c] sm:$0xf]
      %v2371 = vld [vmem:[%s3 + $0x50] sm:$0xf]
      %v2372 = vld [vmem:[%s3 + $0x54] sm:$0xf]
      %v2373 = vld [vmem:[%s3 + $0x58] sm:$0xf]
      %v2374 = vld [vmem:[%s3 + $0x5c] sm:$0xf]
      %v2375 = vld [vmem:[%s3 + $0x60] sm:$0xf]
      %v2376 = vld [vmem:[%s3 + $0x64] sm:$0xf]
      %v2377 = vld [vmem:[%s3 + $0x68] sm:$0xf]
      %v2378 = vld [vmem:[%s3 + $0x6c] sm:$0xf]
      %v2379 = vld [vmem:[%s3 + $0x70] sm:$0xf]
      %v2380 = vld [vmem:[%s3 + $0x74] sm:$0xf]
      %v2381 = vld [vmem:[%s3 + $0x78] sm:$0xf]
      %v2382 = vld [vmem:[%s3 + $0x7c] sm:$0xf]
      %v2399 = vunpack.c.l.b16 %v2335
      %v2400 = vunpack.c.h.b16 %v2335
      %v2401 = vunpack.c.l.b16 %v2336
      %v2402 = vunpack.c.h.b16 %v2336
      %v2403 = vunpack.c.l.b16 %v2337
      %v2404 = vunpack.c.h.b16 %v2337
      %v2405 = vunpack.c.l.b16 %v2338
      %v2406 = vunpack.c.h.b16 %v2338
      %v2407 = vunpack.c.l.b16 %v2339
      %v2408 = vunpack.c.h.b16 %v2339
      %v2409 = vunpack.c.l.b16 %v2340
      %v2410 = vunpack.c.h.b16 %v2340
      %v2411 = vunpack.c.l.b16 %v2341
      %v2412 = vunpack.c.h.b16 %v2341
      %v2413 = vunpack.c.l.b16 %v2342
      %v2414 = vunpack.c.h.b16 %v2342
      %v2415 = vunpack.c.l.b16 %v2343
      %v2416 = vunpack.c.h.b16 %v2343
      %v2417 = vunpack.c.l.b16 %v2344
      %v2418 = vunpack.c.h.b16 %v2344
      %v2419 = vunpack.c.l.b16 %v2345
      %v2420 = vunpack.c.h.b16 %v2345
      %v2421 = vunpack.c.l.b16 %v2346
      %v2422 = vunpack.c.h.b16 %v2346
      %v2423 = vunpack.c.l.b16 %v2347
      %v2424 = vunpack.c.h.b16 %v2347
      %v2425 = vunpack.c.l.b16 %v2348
      %v2426 = vunpack.c.h.b16 %v2348
      %v2427 = vunpack.c.l.b16 %v2349
      %v2428 = vunpack.c.h.b16 %v2349
      %v2429 = vunpack.c.l.b16 %v2350
      %v2430 = vunpack.c.h.b16 %v2350
      %v2431 = vpack.c.b16 %v2401, %v2399
      %v2432 = vpack.c.b16 %v2402, %v2400
      %v2433 = vpack.c.b16 %v2405, %v2403
      %v2434 = vpack.c.b16 %v2406, %v2404
      %v2435 = vpack.c.b16 %v2409, %v2407
      %v2436 = vpack.c.b16 %v2410, %v2408
      %v2437 = vpack.c.b16 %v2413, %v2411
      %v2438 = vpack.c.b16 %v2414, %v2412
      %v2439 = vpack.c.b16 %v2417, %v2415
      %v2440 = vpack.c.b16 %v2418, %v2416
      %v2441 = vpack.c.b16 %v2421, %v2419
      %v2442 = vpack.c.b16 %v2422, %v2420
      %v2443 = vpack.c.b16 %v2425, %v2423
      %v2444 = vpack.c.b16 %v2426, %v2424
      %v2445 = vpack.c.b16 %v2429, %v2427
      %v2446 = vpack.c.b16 %v2430, %v2428
      %v2495 = vunpack.c.l.b16 %v2351
      %v2496 = vunpack.c.l.b16 %v2352
      %v2497 = vunpack.c.l.b16 %v2353
      %v2498 = vunpack.c.l.b16 %v2354
      %v2499 = vunpack.c.l.b16 %v2355
      %v2500 = vunpack.c.l.b16 %v2356
      %v2501 = vunpack.c.l.b16 %v2357
      %v2502 = vunpack.c.l.b16 %v2358
      %v2503 = vunpack.c.l.b16 %v2359
      %v2504 = vunpack.c.l.b16 %v2360
      %v2505 = vunpack.c.l.b16 %v2361
      %v2506 = vunpack.c.l.b16 %v2362
      %v2507 = vunpack.c.l.b16 %v2363
      %v2508 = vunpack.c.l.b16 %v2364
      %v2509 = vunpack.c.l.b16 %v2365
      %v2510 = vunpack.c.l.b16 %v2366
      %v2511 = vunpack.c.l.b16 %v2367
      %v2512 = vunpack.c.l.b16 %v2368
      %v2513 = vunpack.c.l.b16 %v2369
      %v2514 = vunpack.c.l.b16 %v2370
      %v2515 = vunpack.c.l.b16 %v2371
      %v2516 = vunpack.c.l.b16 %v2372
      %v2517 = vunpack.c.l.b16 %v2373
      %v2518 = vunpack.c.l.b16 %v2374
      %v2519 = vunpack.c.l.b16 %v2375
      %v2520 = vunpack.c.l.b16 %v2376
      %v2521 = vunpack.c.l.b16 %v2377
      %v2522 = vunpack.c.l.b16 %v2378
      %v2523 = vunpack.c.l.b16 %v2379
      %v2524 = vunpack.c.l.b16 %v2380
      %v2525 = vunpack.c.l.b16 %v2381
      %v2526 = vunpack.c.l.b16 %v2382
      %v2527 = vpack.c.b16 %v2496, %v2495
      %v2528 = vpack.c.b16 %v2498, %v2497
      %v2529 = vpack.c.b16 %v2500, %v2499
      %v2530 = vpack.c.b16 %v2502, %v2501
      %v2531 = vpack.c.b16 %v2504, %v2503
      %v2532 = vpack.c.b16 %v2506, %v2505
      %v2533 = vpack.c.b16 %v2508, %v2507
      %v2534 = vpack.c.b16 %v2510, %v2509
      %v2535 = vpack.c.b16 %v2512, %v2511
      %v2536 = vpack.c.b16 %v2514, %v2513
      %v2537 = vpack.c.b16 %v2516, %v2515
      %v2538 = vpack.c.b16 %v2518, %v2517
      %v2539 = vpack.c.b16 %v2520, %v2519
      %v2540 = vpack.c.b16 %v2522, %v2521
      %v2541 = vpack.c.b16 %v2524, %v2523
      %v2542 = vpack.c.b16 %v2526, %v2525
      %2559 = vmatprep.subr.bf16.mxu0 0
      %2560 = vmatpush1.bf16.msra.mxu0 %v2527
      %2561 = vmatprep.subr.bf16.mxu0 0
      %2562 = vmatpush1.bf16.msra.mxu0 %v2528
      %2563 = vmatprep.subr.bf16.mxu0 0
      %2564 = vmatpush1.bf16.msra.mxu0 %v2529
      %2565 = vmatprep.subr.bf16.mxu0 0
      %2566 = vmatpush1.bf16.msra.mxu0 %v2530
      %2567 = vmatprep.subr.bf16.mxu0 0
      %2568 = vmatpush1.bf16.msra.mxu0 %v2531
      %2569 = vmatprep.subr.bf16.mxu0 0
      %2570 = vmatpush1.bf16.msra.mxu0 %v2532
      %2571 = vmatprep.subr.bf16.mxu0 0
      %2572 = vmatpush1.bf16.msra.mxu0 %v2533
      %2573 = vmatprep.subr.bf16.mxu0 0
      %2574 = vmatpush1.bf16.msra.mxu0 %v2534
      %2575 = vmatprep.subr.bf16.mxu0 0
      %2576 = vmatpush1.bf16.msra.mxu0 %v2535
      %2577 = vmatprep.subr.bf16.mxu0 0
      %2578 = vmatpush1.bf16.msra.mxu0 %v2536
      %2579 = vmatprep.subr.bf16.mxu0 0
      %2580 = vmatpush1.bf16.msra.mxu0 %v2537
      %2581 = vmatprep.subr.bf16.mxu0 0
      %2582 = vmatpush1.bf16.msra.mxu0 %v2538
      %2583 = vmatprep.subr.bf16.mxu0 0
      %2584 = vmatpush1.bf16.msra.mxu0 %v2539
      %2585 = vmatprep.subr.bf16.mxu0 0
      %2586 = vmatpush1.bf16.msra.mxu0 %v2540
      %2587 = vmatprep.subr.bf16.mxu0 0
      %2588 = vmatpush1.bf16.msra.mxu0 %v2541
      %2589 = vmatprep.subr.bf16.mxu0 0
      %2590 = vmatpush1.bf16.msra.mxu0 %v2542
      %2591 = vmatprep.mubr.bf16.mxu0 %v2432
      %2592 = vmatmul.mubr.bf16.gmra.mrb[0].mxu0 %v2431
      %v2593 = vpop.f32.mrb[0].mxu0
      %v2594 = vadd.f32 0.0, %v2593
      %v2595 = vpop.f32.mrb[0].mxu0
      %v2596 = vpop.f32.mrb[0].mxu0
      %v2597 = vadd.f32 0.0, %v2596
      %v2598 = vpop.f32.mrb[0].mxu0
      %2599 = vmatprep.mubr.bf16.mxu0 %v2434
      %2600 = vmatmul.mubr.bf16.gmra.mrb[0].mxu0 %v2433
      %v2601 = vpop.f32.mrb[0].mxu0
      %v2602 = vadd.f32 0.0, %v2601
      %v2603 = vpop.f32.mrb[0].mxu0
      %v2604 = vpop.f32.mrb[0].mxu0
      %v2605 = vadd.f32 0.0, %v2604
      %v2606 = vpop.f32.mrb[0].mxu0
      %2607 = vmatprep.mubr.bf16.mxu0 %v2436
      %2608 = vmatmul.mubr.bf16.gmra.mrb[0].mxu0 %v2435
      %v2609 = vpop.f32.mrb[0].mxu0
      %v2610 = vadd.f32 0.0, %v2609
      %v2611 = vpop.f32.mrb[0].mxu0
      %v2612 = vpop.f32.mrb[0].mxu0
      %v2613 = vadd.f32 0.0, %v2612
      %v2614 = vpop.f32.mrb[0].mxu0
      %2615 = vmatprep.mubr.bf16.mxu0 %v2438
      %2616 = vmatmul.mubr.bf16.gmra.mrb[0].mxu0 %v2437
      %v2617 = vpop.f32.mrb[0].mxu0
      %v2618 = vadd.f32 0.0, %v2617
      %v2619 = vpop.f32.mrb[0].mxu0
      %v2620 = vpop.f32.mrb[0].mxu0
      %v2621 = vadd.f32 0.0, %v2620
      %v2622 = vpop.f32.mrb[0].mxu0
      %2623 = vmatprep.mubr.bf16.mxu0 %v2440
      %2624 = vmatmul.mubr.bf16.gmra.mrb[0].mxu0 %v2439
      %v2625 = vpop.f32.mrb[0].mxu0
      %v2626 = vadd.f32 0.0, %v2625
      %v2627 = vpop.f32.mrb[0].mxu0
      %v2628 = vpop.f32.mrb[0].mxu0
      %v2629 = vadd.f32 0.0, %v2628
      %v2630 = vpop.f32.mrb[0].mxu0
      %2631 = vmatprep.mubr.bf16.mxu0 %v2442
      %2632 = vmatmul.mubr.bf16.gmra.mrb[0].mxu0 %v2441
      %v2633 = vpop.f32.mrb[0].mxu0
      %v2634 = vadd.f32 0.0, %v2633
      %v2635 = vpop.f32.mrb[0].mxu0
      %v2636 = vpop.f32.mrb[0].mxu0
      %v2637 = vadd.f32 0.0, %v2636
      %v2638 = vpop.f32.mrb[0].mxu0
      %2639 = vmatprep.mubr.bf16.mxu0 %v2444
      %2640 = vmatmul.mubr.bf16.gmra.mrb[0].mxu0 %v2443
      %v2641 = vpop.f32.mrb[0].mxu0
      %v2642 = vadd.f32 0.0, %v2641
      %v2643 = vpop.f32.mrb[0].mxu0
      %v2644 = vpop.f32.mrb[0].mxu0
      %v2645 = vadd.f32 0.0, %v2644
      %v2646 = vpop.f32.mrb[0].mxu0
      %2647 = vmatprep.mubr.bf16.mxu0 %v2446
      %2648 = vmatmul.mubr.bf16.gmra.mrb[0].mxu0 %v2445
      %v2649 = vpop.f32.mrb[0].mxu0
      %v2650 = vadd.f32 0.0, %v2649
      %v2651 = vpop.f32.mrb[0].mxu0
      %v2652 = vpop.f32.mrb[0].mxu0
      %v2653 = vadd.f32 0.0, %v2652
      %v2654 = vpop.f32.mrb[0].mxu0
      %2655 = vdwg.mxu0
      %v2656 = vadd.f32 %v2334, %v2594
      %v2657 = vadd.f32 %v2334, %v2597
      %v2658 = vadd.f32 %v2334, %v2602
      %v2659 = vadd.f32 %v2334, %v2605
      %v2660 = vadd.f32 %v2334, %v2610
      %v2661 = vadd.f32 %v2334, %v2613
      %v2662 = vadd.f32 %v2334, %v2618
      %v2663 = vadd.f32 %v2334, %v2621
      %v2664 = vadd.f32 %v2334, %v2626
      %v2665 = vadd.f32 %v2334, %v2629
      %v2666 = vadd.f32 %v2334, %v2634
      %v2667 = vadd.f32 %v2334, %v2637
      %v2668 = vadd.f32 %v2334, %v2642
      %v2669 = vadd.f32 %v2334, %v2645
      %v2670 = vadd.f32 %v2334, %v2650
      %v2671 = vadd.f32 %v2334, %v2653
      %v2672 = vld [vmem:[#allocation3] sm:$0xff]
      %v2673 = vld [vmem:[#allocation3 + $0x8] sm:$0xff]
      %v2674 = vld [vmem:[#allocation3 + $0x10] sm:$0x11]
      %v2675 = vld [vmem:[#allocation3 + $0x18] sm:$0xff]
      %v2676 = vld [vmem:[#allocation3 + $0x20] sm:$0xff]
      %v2677 = vld [vmem:[#allocation3 + $0x28] sm:$0x11]
      %v2678 = vld [vmem:[#allocation3 + $0x30] sm:$0xff]
      %v2679 = vld [vmem:[#allocation3 + $0x38] sm:$0xff]
      %v2680 = vld [vmem:[#allocation3 + $0x40] sm:$0x11]
      %v2681 = vld [vmem:[#allocation3 + $0x48] sm:$0xff]
      %v2682 = vld [vmem:[#allocation3 + $0x50] sm:$0xff]
      %v2683 = vld [vmem:[#allocation3 + $0x58] sm:$0x11]
      %v2684 = vld [vmem:[#allocation3 + $0x60] sm:$0xff]
      %v2685 = vld [vmem:[#allocation3 + $0x68] sm:$0xff]
      %v2686 = vld [vmem:[#allocation3 + $0x70] sm:$0x11]
      %v2687 = vld [vmem:[#allocation3 + $0x78] sm:$0xff]
      %v2688 = vld [vmem:[#allocation3 + $0x80] sm:$0xff]
      %v2689 = vld [vmem:[#allocation3 + $0x88] sm:$0x11]
      %v2690 = vld [vmem:[#allocation3 + $0x90] sm:$0xff]
      %v2691 = vld [vmem:[#allocation3 + $0x98] sm:$0xff]
      %v2692 = vld [vmem:[#allocation3 + $0xa0] sm:$0x11]
      %v2693 = vld [vmem:[#allocation3 + $0xa8] sm:$0xff]
      %v2694 = vld [vmem:[#allocation3 + $0xb0] sm:$0xff]
      %v2695 = vld [vmem:[#allocation3 + $0xb8] sm:$0x11]
      %v2697 = vshrl.u32 %v2672, 16
      %v2699 = vrot.slane %v2697, 4
      %v2700 = vshll.u32 %v2672, 16
      %v2702 = vrot.slane %v2700, 5
      %v2703 = vor.u32 %v2699, %v2702
      %v2704 = vrot.slane %v2703, 4
      %v2706 = vshll.u32 %v2673, 16
      %v2708 = vrot.slane %v2706, 5
      %v2709 = vsel %vm1298, %v2704, %v2708
      %v2710 = vshrl.u32 %v2673, 16
      %v2712 = vrot.slane %v2710, 4
      %v2713 = vor.u32 %v2712, %v2708
      %v2714 = vrot.slane %v2713, 4
      %v2716 = vshll.u32 %v2674, 16
      %v2718 = vrot.slane %v2716, 5
      %v2719 = vsel %vm1298, %v2714, %v2718
      %v2721 = vshrl.u32 %v2675, 16
      %v2723 = vrot.slane %v2721, 4
      %v2724 = vshll.u32 %v2675, 16
      %v2726 = vrot.slane %v2724, 5
      %v2727 = vor.u32 %v2723, %v2726
      %v2728 = vrot.slane %v2727, 4
      %v2730 = vshll.u32 %v2676, 16
      %v2732 = vrot.slane %v2730, 5
      %v2733 = vsel %vm1298, %v2728, %v2732
      %v2734 = vshrl.u32 %v2676, 16
      %v2736 = vrot.slane %v2734, 4
      %v2737 = vor.u32 %v2736, %v2732
      %v2738 = vrot.slane %v2737, 4
      %v2740 = vshll.u32 %v2677, 16
      %v2742 = vrot.slane %v2740, 5
      %v2743 = vsel %vm1298, %v2738, %v2742
      %v2745 = vshrl.u32 %v2678, 16
      %v2747 = vrot.slane %v2745, 4
      %v2748 = vshll.u32 %v2678, 16
      %v2750 = vrot.slane %v2748, 5
      %v2751 = vor.u32 %v2747, %v2750
      %v2752 = vrot.slane %v2751, 4
      %v2754 = vshll.u32 %v2679, 16
      %v2756 = vrot.slane %v2754, 5
      %v2757 = vsel %vm1298, %v2752, %v2756
      %v2758 = vshrl.u32 %v2679, 16
      %v2760 = vrot.slane %v2758, 4
      %v2761 = vor.u32 %v2760, %v2756
      %v2762 = vrot.slane %v2761, 4
      %v2764 = vshll.u32 %v2680, 16
      %v2766 = vrot.slane %v2764, 5
      %v2767 = vsel %vm1298, %v2762, %v2766
      %v2769 = vshrl.u32 %v2681, 16
      %v2771 = vrot.slane %v2769, 4
      %v2772 = vshll.u32 %v2681, 16
      %v2774 = vrot.slane %v2772, 5
      %v2775 = vor.u32 %v2771, %v2774
      %v2776 = vrot.slane %v2775, 4
      %v2778 = vshll.u32 %v2682, 16
      %v2780 = vrot.slane %v2778, 5
      %v2781 = vsel %vm1298, %v2776, %v2780
      %v2782 = vshrl.u32 %v2682, 16
      %v2784 = vrot.slane %v2782, 4
      %v2785 = vor.u32 %v2784, %v2780
      %v2786 = vrot.slane %v2785, 4
      %v2788 = vshll.u32 %v2683, 16
      %v2790 = vrot.slane %v2788, 5
      %v2791 = vsel %vm1298, %v2786, %v2790
      %v2793 = vshrl.u32 %v2684, 16
      %v2795 = vrot.slane %v2793, 4
      %v2796 = vshll.u32 %v2684, 16
      %v2798 = vrot.slane %v2796, 5
      %v2799 = vor.u32 %v2795, %v2798
      %v2800 = vrot.slane %v2799, 4
      %v2802 = vshll.u32 %v2685, 16
      %v2804 = vrot.slane %v2802, 5
      %v2805 = vsel %vm1298, %v2800, %v2804
      %v2806 = vshrl.u32 %v2685, 16
      %v2808 = vrot.slane %v2806, 4
      %v2809 = vor.u32 %v2808, %v2804
      %v2810 = vrot.slane %v2809, 4
      %v2812 = vshll.u32 %v2686, 16
      %v2814 = vrot.slane %v2812, 5
      %v2815 = vsel %vm1298, %v2810, %v2814
      %v2817 = vshrl.u32 %v2687, 16
      %v2819 = vrot.slane %v2817, 4
      %v2820 = vshll.u32 %v2687, 16
      %v2822 = vrot.slane %v2820, 5
      %v2823 = vor.u32 %v2819, %v2822
      %v2824 = vrot.slane %v2823, 4
      %v2826 = vshll.u32 %v2688, 16
      %v2828 = vrot.slane %v2826, 5
      %v2829 = vsel %vm1298, %v2824, %v2828
      %v2830 = vshrl.u32 %v2688, 16
      %v2832 = vrot.slane %v2830, 4
      %v2833 = vor.u32 %v2832, %v2828
      %v2834 = vrot.slane %v2833, 4
      %v2836 = vshll.u32 %v2689, 16
      %v2838 = vrot.slane %v2836, 5
      %v2839 = vsel %vm1298, %v2834, %v2838
      %v2841 = vshrl.u32 %v2690, 16
      %v2843 = vrot.slane %v2841, 4
      %v2844 = vshll.u32 %v2690, 16
      %v2846 = vrot.slane %v2844, 5
      %v2847 = vor.u32 %v2843, %v2846
      %v2848 = vrot.slane %v2847, 4
      %v2850 = vshll.u32 %v2691, 16
      %v2852 = vrot.slane %v2850, 5
      %v2853 = vsel %vm1298, %v2848, %v2852
      %v2854 = vshrl.u32 %v2691, 16
      %v2856 = vrot.slane %v2854, 4
      %v2857 = vor.u32 %v2856, %v2852
      %v2858 = vrot.slane %v2857, 4
      %v2860 = vshll.u32 %v2692, 16
      %v2862 = vrot.slane %v2860, 5
      %v2863 = vsel %vm1298, %v2858, %v2862
      %v2865 = vshrl.u32 %v2693, 16
      %v2867 = vrot.slane %v2865, 4
      %v2868 = vshll.u32 %v2693, 16
      %v2870 = vrot.slane %v2868, 5
      %v2871 = vor.u32 %v2867, %v2870
      %v2872 = vrot.slane %v2871, 4
      %v2874 = vshll.u32 %v2694, 16
      %v2876 = vrot.slane %v2874, 5
      %v2877 = vsel %vm1298, %v2872, %v2876
      %v2878 = vshrl.u32 %v2694, 16
      %v2880 = vrot.slane %v2878, 4
      %v2881 = vor.u32 %v2880, %v2876
      %v2882 = vrot.slane %v2881, 4
      %v2884 = vshll.u32 %v2695, 16
      %v2886 = vrot.slane %v2884, 5
      %v2887 = vsel %vm1298, %v2882, %v2886
      %s2888 = scalar_lea.vmem %s3, 128
      %v2889 = vld [vmem:[%s2888] sm:$0xf]
      %v2890 = vld [vmem:[%s2888 + $0x4] sm:$0xf]
      %v2891 = vld [vmem:[%s2888 + $0x8] sm:$0xf]
      %v2892 = vld [vmem:[%s2888 + $0xc] sm:$0xf]
      %v2893 = vld [vmem:[%s2888 + $0x10] sm:$0xf]
      %v2894 = vld [vmem:[%s2888 + $0x14] sm:$0xf]
      %v2895 = vld [vmem:[%s2888 + $0x18] sm:$0xf]
      %v2896 = vld [vmem:[%s2888 + $0x1c] sm:$0xf]
      %v2897 = vld [vmem:[%s2888 + $0x20] sm:$0xf]
      %v2898 = vld [vmem:[%s2888 + $0x24] sm:$0xf]
      %v2899 = vld [vmem:[%s2888 + $0x28] sm:$0xf]
      %v2900 = vld [vmem:[%s2888 + $0x2c] sm:$0xf]
      %v2901 = vld [vmem:[%s2888 + $0x30] sm:$0xf]
      %v2902 = vld [vmem:[%s2888 + $0x34] sm:$0xf]
      %v2903 = vld [vmem:[%s2888 + $0x38] sm:$0xf]
      %v2904 = vld [vmem:[%s2888 + $0x3c] sm:$0xf]
      %v2905 = vld [vmem:[%s2888 + $0x40] sm:$0xf]
      %v2906 = vld [vmem:[%s2888 + $0x44] sm:$0xf]
      %v2907 = vld [vmem:[%s2888 + $0x48] sm:$0xf]
      %v2908 = vld [vmem:[%s2888 + $0x4c] sm:$0xf]
      %v2909 = vld [vmem:[%s2888 + $0x50] sm:$0xf]
      %v2910 = vld [vmem:[%s2888 + $0x54] sm:$0xf]
      %v2911 = vld [vmem:[%s2888 + $0x58] sm:$0xf]
      %v2912 = vld [vmem:[%s2888 + $0x5c] sm:$0xf]
      %v2913 = vld [vmem:[%s2888 + $0x60] sm:$0xf]
      %v2914 = vld [vmem:[%s2888 + $0x64] sm:$0xf]
      %v2915 = vld [vmem:[%s2888 + $0x68] sm:$0xf]
      %v2916 = vld [vmem:[%s2888 + $0x6c] sm:$0xf]
      %v2917 = vld [vmem:[%s2888 + $0x70] sm:$0xf]
      %v2918 = vld [vmem:[%s2888 + $0x74] sm:$0xf]
      %v2919 = vld [vmem:[%s2888 + $0x78] sm:$0xf]
      %v2920 = vld [vmem:[%s2888 + $0x7c] sm:$0xf]
      %v2921 = vunpack.c.l.b16 %v2709
      %v2922 = vunpack.c.h.b16 %v2709
      %v2923 = vunpack.c.l.b16 %v2719
      %v2924 = vunpack.c.h.b16 %v2719
      %v2925 = vunpack.c.l.b16 %v2733
      %v2926 = vunpack.c.h.b16 %v2733
      %v2927 = vunpack.c.l.b16 %v2743
      %v2928 = vunpack.c.h.b16 %v2743
      %v2929 = vunpack.c.l.b16 %v2757
      %v2930 = vunpack.c.h.b16 %v2757
      %v2931 = vunpack.c.l.b16 %v2767
      %v2932 = vunpack.c.h.b16 %v2767
      %v2933 = vunpack.c.l.b16 %v2781
      %v2934 = vunpack.c.h.b16 %v2781
      %v2935 = vunpack.c.l.b16 %v2791
      %v2936 = vunpack.c.h.b16 %v2791
      %v2937 = vunpack.c.l.b16 %v2805
      %v2938 = vunpack.c.h.b16 %v2805
      %v2939 = vunpack.c.l.b16 %v2815
      %v2940 = vunpack.c.h.b16 %v2815
      %v2941 = vunpack.c.l.b16 %v2829
      %v2942 = vunpack.c.h.b16 %v2829
      %v2943 = vunpack.c.l.b16 %v2839
      %v2944 = vunpack.c.h.b16 %v2839
      %v2945 = vunpack.c.l.b16 %v2853
      %v2946 = vunpack.c.h.b16 %v2853
      %v2947 = vunpack.c.l.b16 %v2863
      %v2948 = vunpack.c.h.b16 %v2863
      %v2949 = vunpack.c.l.b16 %v2877
      %v2950 = vunpack.c.h.b16 %v2877
      %v2951 = vunpack.c.l.b16 %v2887
      %v2952 = vunpack.c.h.b16 %v2887
      %v2953 = vpack.c.b16 %v2923, %v2921
      %v2954 = vpack.c.b16 %v2924, %v2922
      %v2955 = vpack.c.b16 %v2927, %v2925
      %v2956 = vpack.c.b16 %v2928, %v2926
      %v2957 = vpack.c.b16 %v2931, %v2929
      %v2958 = vpack.c.b16 %v2932, %v2930
      %v2959 = vpack.c.b16 %v2935, %v2933
      %v2960 = vpack.c.b16 %v2936, %v2934
      %v2961 = vpack.c.b16 %v2939, %v2937
      %v2962 = vpack.c.b16 %v2940, %v2938
      %v2963 = vpack.c.b16 %v2943, %v2941
      %v2964 = vpack.c.b16 %v2944, %v2942
      %v2965 = vpack.c.b16 %v2947, %v2945
      %v2966 = vpack.c.b16 %v2948, %v2946
      %v2967 = vpack.c.b16 %v2951, %v2949
      %v2968 = vpack.c.b16 %v2952, %v2950
      %v3017 = vunpack.c.l.b16 %v2889
      %v3018 = vunpack.c.l.b16 %v2890
      %v3019 = vunpack.c.l.b16 %v2891
      %v3020 = vunpack.c.l.b16 %v2892
      %v3021 = vunpack.c.l.b16 %v2893
      %v3022 = vunpack.c.l.b16 %v2894
      %v3023 = vunpack.c.l.b16 %v2895
      %v3024 = vunpack.c.l.b16 %v2896
      %v3025 = vunpack.c.l.b16 %v2897
      %v3026 = vunpack.c.l.b16 %v2898
      %v3027 = vunpack.c.l.b16 %v2899
      %v3028 = vunpack.c.l.b16 %v2900
      %v3029 = vunpack.c.l.b16 %v2901
      %v3030 = vunpack.c.l.b16 %v2902
      %v3031 = vunpack.c.l.b16 %v2903
      %v3032 = vunpack.c.l.b16 %v2904
      %v3033 = vunpack.c.l.b16 %v2905
      %v3034 = vunpack.c.l.b16 %v2906
      %v3035 = vunpack.c.l.b16 %v2907
      %v3036 = vunpack.c.l.b16 %v2908
      %v3037 = vunpack.c.l.b16 %v2909
      %v3038 = vunpack.c.l.b16 %v2910
      %v3039 = vunpack.c.l.b16 %v2911
      %v3040 = vunpack.c.l.b16 %v2912
      %v3041 = vunpack.c.l.b16 %v2913
      %v3042 = vunpack.c.l.b16 %v2914
      %v3043 = vunpack.c.l.b16 %v2915
      %v3044 = vunpack.c.l.b16 %v2916
      %v3045 = vunpack.c.l.b16 %v2917
      %v3046 = vunpack.c.l.b16 %v2918
      %v3047 = vunpack.c.l.b16 %v2919
      %v3048 = vunpack.c.l.b16 %v2920
      %v3049 = vpack.c.b16 %v3018, %v3017
      %v3050 = vpack.c.b16 %v3020, %v3019
      %v3051 = vpack.c.b16 %v3022, %v3021
      %v3052 = vpack.c.b16 %v3024, %v3023
      %v3053 = vpack.c.b16 %v3026, %v3025
      %v3054 = vpack.c.b16 %v3028, %v3027
      %v3055 = vpack.c.b16 %v3030, %v3029
      %v3056 = vpack.c.b16 %v3032, %v3031
      %v3057 = vpack.c.b16 %v3034, %v3033
      %v3058 = vpack.c.b16 %v3036, %v3035
      %v3059 = vpack.c.b16 %v3038, %v3037
      %v3060 = vpack.c.b16 %v3040, %v3039
      %v3061 = vpack.c.b16 %v3042, %v3041
      %v3062 = vpack.c.b16 %v3044, %v3043
      %v3063 = vpack.c.b16 %v3046, %v3045
      %v3064 = vpack.c.b16 %v3048, %v3047
      %3081 = vmatprep.subr.bf16.mxu0 0
      %3082 = vmatpush1.bf16.msra.mxu0 %v3049
      %3083 = vmatprep.subr.bf16.mxu0 0
      %3084 = vmatpush1.bf16.msra.mxu0 %v3050
      %3085 = vmatprep.subr.bf16.mxu0 0
      %3086 = vmatpush1.bf16.msra.mxu0 %v3051
      %3087 = vmatprep.subr.bf16.mxu0 0
      %3088 = vmatpush1.bf16.msra.mxu0 %v3052
      %3089 = vmatprep.subr.bf16.mxu0 0
      %3090 = vmatpush1.bf16.msra.mxu0 %v3053
      %3091 = vmatprep.subr.bf16.mxu0 0
      %3092 = vmatpush1.bf16.msra.mxu0 %v3054
      %3093 = vmatprep.subr.bf16.mxu0 0
      %3094 = vmatpush1.bf16.msra.mxu0 %v3055
      %3095 = vmatprep.subr.bf16.mxu0 0
      %3096 = vmatpush1.bf16.msra.mxu0 %v3056
      %3097 = vmatprep.subr.bf16.mxu0 0
      %3098 = vmatpush1.bf16.msra.mxu0 %v3057
      %3099 = vmatprep.subr.bf16.mxu0 0
      %3100 = vmatpush1.bf16.msra.mxu0 %v3058
      %3101 = vmatprep.subr.bf16.mxu0 0
      %3102 = vmatpush1.bf16.msra.mxu0 %v3059
      %3103 = vmatprep.subr.bf16.mxu0 0
      %3104 = vmatpush1.bf16.msra.mxu0 %v3060
      %3105 = vmatprep.subr.bf16.mxu0 0
      %3106 = vmatpush1.bf16.msra.mxu0 %v3061
      %3107 = vmatprep.subr.bf16.mxu0 0
      %3108 = vmatpush1.bf16.msra.mxu0 %v3062
      %3109 = vmatprep.subr.bf16.mxu0 0
      %3110 = vmatpush1.bf16.msra.mxu0 %v3063
      %3111 = vmatprep.subr.bf16.mxu0 0
      %3112 = vmatpush1.bf16.msra.mxu0 %v3064
      %3113 = vmatprep.mubr.bf16.mxu0 %v2954
      %3114 = vmatmul.mubr.bf16.gmra.mrb[0].mxu0 %v2953
      %v3115 = vpop.f32.mrb[0].mxu0
      %v3116 = vadd.f32 0.0, %v3115
      %v3117 = vpop.f32.mrb[0].mxu0
      %v3118 = vpop.f32.mrb[0].mxu0
      %v3119 = vadd.f32 0.0, %v3118
      %v3120 = vpop.f32.mrb[0].mxu0
      %3121 = vmatprep.mubr.bf16.mxu0 %v2956
      %3122 = vmatmul.mubr.bf16.gmra.mrb[0].mxu0 %v2955
      %v3123 = vpop.f32.mrb[0].mxu0
      %v3124 = vadd.f32 0.0, %v3123
      %v3125 = vpop.f32.mrb[0].mxu0
      %v3126 = vpop.f32.mrb[0].mxu0
      %v3127 = vadd.f32 0.0, %v3126
      %v3128 = vpop.f32.mrb[0].mxu0
      %3129 = vmatprep.mubr.bf16.mxu0 %v2958
      %3130 = vmatmul.mubr.bf16.gmra.mrb[0].mxu0 %v2957
      %v3131 = vpop.f32.mrb[0].mxu0
      %v3132 = vadd.f32 0.0, %v3131
      %v3133 = vpop.f32.mrb[0].mxu0
      %v3134 = vpop.f32.mrb[0].mxu0
      %v3135 = vadd.f32 0.0, %v3134
      %v3136 = vpop.f32.mrb[0].mxu0
      %3137 = vmatprep.mubr.bf16.mxu0 %v2960
      %3138 = vmatmul.mubr.bf16.gmra.mrb[0].mxu0 %v2959
      %v3139 = vpop.f32.mrb[0].mxu0
      %v3140 = vadd.f32 0.0, %v3139
      %v3141 = vpop.f32.mrb[0].mxu0
      %v3142 = vpop.f32.mrb[0].mxu0
      %v3143 = vadd.f32 0.0, %v3142
      %v3144 = vpop.f32.mrb[0].mxu0
      %3145 = vmatprep.mubr.bf16.mxu0 %v2962
      %3146 = vmatmul.mubr.bf16.gmra.mrb[0].mxu0 %v2961
      %v3147 = vpop.f32.mrb[0].mxu0
      %v3148 = vadd.f32 0.0, %v3147
      %v3149 = vpop.f32.mrb[0].mxu0
      %v3150 = vpop.f32.mrb[0].mxu0
      %v3151 = vadd.f32 0.0, %v3150
      %v3152 = vpop.f32.mrb[0].mxu0
      %3153 = vmatprep.mubr.bf16.mxu0 %v2964
      %3154 = vmatmul.mubr.bf16.gmra.mrb[0].mxu0 %v2963
      %v3155 = vpop.f32.mrb[0].mxu0
      %v3156 = vadd.f32 0.0, %v3155
      %v3157 = vpop.f32.mrb[0].mxu0
      %v3158 = vpop.f32.mrb[0].mxu0
      %v3159 = vadd.f32 0.0, %v3158
      %v3160 = vpop.f32.mrb[0].mxu0
      %3161 = vmatprep.mubr.bf16.mxu0 %v2966
      %3162 = vmatmul.mubr.bf16.gmra.mrb[0].mxu0 %v2965
      %v3163 = vpop.f32.mrb[0].mxu0
      %v3164 = vadd.f32 0.0, %v3163
      %v3165 = vpop.f32.mrb[0].mxu0
      %v3166 = vpop.f32.mrb[0].mxu0
      %v3167 = vadd.f32 0.0, %v3166
      %v3168 = vpop.f32.mrb[0].mxu0
      %3169 = vmatprep.mubr.bf16.mxu0 %v2968
      %3170 = vmatmul.mubr.bf16.gmra.mrb[0].mxu0 %v2967
      %v3171 = vpop.f32.mrb[0].mxu0
      %v3172 = vadd.f32 0.0, %v3171
      %v3173 = vpop.f32.mrb[0].mxu0
      %v3174 = vpop.f32.mrb[0].mxu0
      %v3175 = vadd.f32 0.0, %v3174
      %v3176 = vpop.f32.mrb[0].mxu0
      %3177 = vdwg.mxu0
      %v3178 = vadd.f32 %v2656, %v3116
      %v3179 = vadd.f32 %v2657, %v3119
      %v3180 = vadd.f32 %v2658, %v3124
      %v3181 = vadd.f32 %v2659, %v3127
      %v3182 = vadd.f32 %v2660, %v3132
      %v3183 = vadd.f32 %v2661, %v3135
      %v3184 = vadd.f32 %v2662, %v3140
      %v3185 = vadd.f32 %v2663, %v3143
      %v3186 = vadd.f32 %v2664, %v3148
      %v3187 = vadd.f32 %v2665, %v3151
      %v3188 = vadd.f32 %v2666, %v3156
      %v3189 = vadd.f32 %v2667, %v3159
      %v3190 = vadd.f32 %v2668, %v3164
      %v3191 = vadd.f32 %v2669, %v3167
      %v3192 = vadd.f32 %v2670, %v3172
      %v3193 = vadd.f32 %v2671, %v3175
      %v3194 = vld [vmem:[#allocation3] sm:$0xee]
      %v3195 = vld [vmem:[#allocation3 + $0x18] sm:$0xee]
      %v3196 = vld [vmem:[#allocation3 + $0x30] sm:$0xee]
      %v3197 = vld [vmem:[#allocation3 + $0x48] sm:$0xee]
      %v3198 = vld [vmem:[#allocation3 + $0x60] sm:$0xee]
      %v3199 = vld [vmem:[#allocation3 + $0x78] sm:$0xee]
      %v3200 = vld [vmem:[#allocation3 + $0x90] sm:$0xee]
      %v3201 = vld [vmem:[#allocation3 + $0xa8] sm:$0xee]
      %v3226 = vrot.slane %v3194, 5
      %v3227 = vrot.slane %v3226, 4
      %v3228 = vrot.slane %v2673, 5
      %v3229 = vsel %vm1731, %v3227, %v3228
      %v3230 = vrot.slane %v3228, 4
      %v3231 = vrot.slane %v2674, 5
      %v3232 = vsel %vm1731, %v3230, %v3231
      %v3233 = vrot.slane %v3195, 5
      %v3234 = vrot.slane %v3233, 4
      %v3235 = vrot.slane %v2676, 5
      %v3236 = vsel %vm1731, %v3234, %v3235
      %v3237 = vrot.slane %v3235, 4
      %v3238 = vrot.slane %v2677, 5
      %v3239 = vsel %vm1731, %v3237, %v3238
      %v3240 = vrot.slane %v3196, 5
      %v3241 = vrot.slane %v3240, 4
      %v3242 = vrot.slane %v2679, 5
      %v3243 = vsel %vm1731, %v3241, %v3242
      %v3244 = vrot.slane %v3242, 4
      %v3245 = vrot.slane %v2680, 5
      %v3246 = vsel %vm1731, %v3244, %v3245
      %v3247 = vrot.slane %v3197, 5
      %v3248 = vrot.slane %v3247, 4
      %v3249 = vrot.slane %v2682, 5
      %v3250 = vsel %vm1731, %v3248, %v3249
      %v3251 = vrot.slane %v3249, 4
      %v3252 = vrot.slane %v2683, 5
      %v3253 = vsel %vm1731, %v3251, %v3252
      %v3254 = vrot.slane %v3198, 5
      %v3255 = vrot.slane %v3254, 4
      %v3256 = vrot.slane %v2685, 5
      %v3257 = vsel %vm1731, %v3255, %v3256
      %v3258 = vrot.slane %v3256, 4
      %v3259 = vrot.slane %v2686, 5
      %v3260 = vsel %vm1731, %v3258, %v3259
      %v3261 = vrot.slane %v3199, 5
      %v3262 = vrot.slane %v3261, 4
      %v3263 = vrot.slane %v2688, 5
      %v3264 = vsel %vm1731, %v3262, %v3263
      %v3265 = vrot.slane %v3263, 4
      %v3266 = vrot.slane %v2689, 5
      %v3267 = vsel %vm1731, %v3265, %v3266
      %v3268 = vrot.slane %v3200, 5
      %v3269 = vrot.slane %v3268, 4
      %v3270 = vrot.slane %v2691, 5
      %v3271 = vsel %vm1731, %v3269, %v3270
      %v3272 = vrot.slane %v3270, 4
      %v3273 = vrot.slane %v2692, 5
      %v3274 = vsel %vm1731, %v3272, %v3273
      %v3275 = vrot.slane %v3201, 5
      %v3276 = vrot.slane %v3275, 4
      %v3277 = vrot.slane %v2694, 5
      %v3278 = vsel %vm1731, %v3276, %v3277
      %v3279 = vrot.slane %v3277, 4
      %v3280 = vrot.slane %v2695, 5
      %v3281 = vsel %vm1731, %v3279, %v3280
      %s3282 = scalar_lea.vmem %s3, 256
      %v3283 = vld [vmem:[%s3282] sm:$0xf]
      %v3284 = vld [vmem:[%s3282 + $0x4] sm:$0xf]
      %v3285 = vld [vmem:[%s3282 + $0x8] sm:$0xf]
      %v3286 = vld [vmem:[%s3282 + $0xc] sm:$0xf]
      %v3287 = vld [vmem:[%s3282 + $0x10] sm:$0xf]
      %v3288 = vld [vmem:[%s3282 + $0x14] sm:$0xf]
      %v3289 = vld [vmem:[%s3282 + $0x18] sm:$0xf]
      %v3290 = vld [vmem:[%s3282 + $0x1c] sm:$0xf]
      %v3291 = vld [vmem:[%s3282 + $0x20] sm:$0xf]
      %v3292 = vld [vmem:[%s3282 + $0x24] sm:$0xf]
      %v3293 = vld [vmem:[%s3282 + $0x28] sm:$0xf]
      %v3294 = vld [vmem:[%s3282 + $0x2c] sm:$0xf]
      %v3295 = vld [vmem:[%s3282 + $0x30] sm:$0xf]
      %v3296 = vld [vmem:[%s3282 + $0x34] sm:$0xf]
      %v3297 = vld [vmem:[%s3282 + $0x38] sm:$0xf]
      %v3298 = vld [vmem:[%s3282 + $0x3c] sm:$0xf]
      %v3299 = vld [vmem:[%s3282 + $0x40] sm:$0xf]
      %v3300 = vld [vmem:[%s3282 + $0x44] sm:$0xf]
      %v3301 = vld [vmem:[%s3282 + $0x48] sm:$0xf]
      %v3302 = vld [vmem:[%s3282 + $0x4c] sm:$0xf]
      %v3303 = vld [vmem:[%s3282 + $0x50] sm:$0xf]
      %v3304 = vld [vmem:[%s3282 + $0x54] sm:$0xf]
      %v3305 = vld [vmem:[%s3282 + $0x58] sm:$0xf]
      %v3306 = vld [vmem:[%s3282 + $0x5c] sm:$0xf]
      %v3307 = vld [vmem:[%s3282 + $0x60] sm:$0xf]
      %v3308 = vld [vmem:[%s3282 + $0x64] sm:$0xf]
      %v3309 = vld [vmem:[%s3282 + $0x68] sm:$0xf]
      %v3310 = vld [vmem:[%s3282 + $0x6c] sm:$0xf]
      %v3311 = vld [vmem:[%s3282 + $0x70] sm:$0xf]
      %v3312 = vld [vmem:[%s3282 + $0x74] sm:$0xf]
      %v3313 = vld [vmem:[%s3282 + $0x78] sm:$0xf]
      %v3314 = vld [vmem:[%s3282 + $0x7c] sm:$0xf]
      %v3315 = vunpack.c.l.b16 %v3229
      %v3316 = vunpack.c.h.b16 %v3229
      %v3317 = vunpack.c.l.b16 %v3232
      %v3318 = vunpack.c.h.b16 %v3232
      %v3319 = vunpack.c.l.b16 %v3236
      %v3320 = vunpack.c.h.b16 %v3236
      %v3321 = vunpack.c.l.b16 %v3239
      %v3322 = vunpack.c.h.b16 %v3239
      %v3323 = vunpack.c.l.b16 %v3243
      %v3324 = vunpack.c.h.b16 %v3243
      %v3325 = vunpack.c.l.b16 %v3246
      %v3326 = vunpack.c.h.b16 %v3246
      %v3327 = vunpack.c.l.b16 %v3250
      %v3328 = vunpack.c.h.b16 %v3250
      %v3329 = vunpack.c.l.b16 %v3253
      %v3330 = vunpack.c.h.b16 %v3253
      %v3331 = vunpack.c.l.b16 %v3257
      %v3332 = vunpack.c.h.b16 %v3257
      %v3333 = vunpack.c.l.b16 %v3260
      %v3334 = vunpack.c.h.b16 %v3260
      %v3335 = vunpack.c.l.b16 %v3264
      %v3336 = vunpack.c.h.b16 %v3264
      %v3337 = vunpack.c.l.b16 %v3267
      %v3338 = vunpack.c.h.b16 %v3267
      %v3339 = vunpack.c.l.b16 %v3271
      %v3340 = vunpack.c.h.b16 %v3271
      %v3341 = vunpack.c.l.b16 %v3274
      %v3342 = vunpack.c.h.b16 %v3274
      %v3343 = vunpack.c.l.b16 %v3278
      %v3344 = vunpack.c.h.b16 %v3278
      %v3345 = vunpack.c.l.b16 %v3281
      %v3346 = vunpack.c.h.b16 %v3281
      %v3347 = vpack.c.b16 %v3317, %v3315
      %v3348 = vpack.c.b16 %v3318, %v3316
      %v3349 = vpack.c.b16 %v3321, %v3319
      %v3350 = vpack.c.b16 %v3322, %v3320
      %v3351 = vpack.c.b16 %v3325, %v3323
      %v3352 = vpack.c.b16 %v3326, %v3324
      %v3353 = vpack.c.b16 %v3329, %v3327
      %v3354 = vpack.c.b16 %v3330, %v3328
      %v3355 = vpack.c.b16 %v3333, %v3331
      %v3356 = vpack.c.b16 %v3334, %v3332
      %v3357 = vpack.c.b16 %v3337, %v3335
      %v3358 = vpack.c.b16 %v3338, %v3336
      %v3359 = vpack.c.b16 %v3341, %v3339
      %v3360 = vpack.c.b16 %v3342, %v3340
      %v3361 = vpack.c.b16 %v3345, %v3343
      %v3362 = vpack.c.b16 %v3346, %v3344
      %v3411 = vunpack.c.l.b16 %v3283
      %v3412 = vunpack.c.l.b16 %v3284
      %v3413 = vunpack.c.l.b16 %v3285
      %v3414 = vunpack.c.l.b16 %v3286
      %v3415 = vunpack.c.l.b16 %v3287
      %v3416 = vunpack.c.l.b16 %v3288
      %v3417 = vunpack.c.l.b16 %v3289
      %v3418 = vunpack.c.l.b16 %v3290
      %v3419 = vunpack.c.l.b16 %v3291
      %v3420 = vunpack.c.l.b16 %v3292
      %v3421 = vunpack.c.l.b16 %v3293
      %v3422 = vunpack.c.l.b16 %v3294
      %v3423 = vunpack.c.l.b16 %v3295
      %v3424 = vunpack.c.l.b16 %v3296
      %v3425 = vunpack.c.l.b16 %v3297
      %v3426 = vunpack.c.l.b16 %v3298
      %v3427 = vunpack.c.l.b16 %v3299
      %v3428 = vunpack.c.l.b16 %v3300
      %v3429 = vunpack.c.l.b16 %v3301
      %v3430 = vunpack.c.l.b16 %v3302
      %v3431 = vunpack.c.l.b16 %v3303
      %v3432 = vunpack.c.l.b16 %v3304
      %v3433 = vunpack.c.l.b16 %v3305
      %v3434 = vunpack.c.l.b16 %v3306
      %v3435 = vunpack.c.l.b16 %v3307
      %v3436 = vunpack.c.l.b16 %v3308
      %v3437 = vunpack.c.l.b16 %v3309
      %v3438 = vunpack.c.l.b16 %v3310
      %v3439 = vunpack.c.l.b16 %v3311
      %v3440 = vunpack.c.l.b16 %v3312
      %v3441 = vunpack.c.l.b16 %v3313
      %v3442 = vunpack.c.l.b16 %v3314
      %v3443 = vpack.c.b16 %v3412, %v3411
      %v3444 = vpack.c.b16 %v3414, %v3413
      %v3445 = vpack.c.b16 %v3416, %v3415
      %v3446 = vpack.c.b16 %v3418, %v3417
      %v3447 = vpack.c.b16 %v3420, %v3419
      %v3448 = vpack.c.b16 %v3422, %v3421
      %v3449 = vpack.c.b16 %v3424, %v3423
      %v3450 = vpack.c.b16 %v3426, %v3425
      %v3451 = vpack.c.b16 %v3428, %v3427
      %v3452 = vpack.c.b16 %v3430, %v3429
      %v3453 = vpack.c.b16 %v3432, %v3431
      %v3454 = vpack.c.b16 %v3434, %v3433
      %v3455 = vpack.c.b16 %v3436, %v3435
      %v3456 = vpack.c.b16 %v3438, %v3437
      %v3457 = vpack.c.b16 %v3440, %v3439
      %v3458 = vpack.c.b16 %v3442, %v3441
      %3475 = vmatprep.subr.bf16.mxu0 0
      %3476 = vmatpush1.bf16.msra.mxu0 %v3443
      %3477 = vmatprep.subr.bf16.mxu0 0
      %3478 = vmatpush1.bf16.msra.mxu0 %v3444
      %3479 = vmatprep.subr.bf16.mxu0 0
      %3480 = vmatpush1.bf16.msra.mxu0 %v3445
      %3481 = vmatprep.subr.bf16.mxu0 0
      %3482 = vmatpush1.bf16.msra.mxu0 %v3446
      %3483 = vmatprep.subr.bf16.mxu0 0
      %3484 = vmatpush1.bf16.msra.mxu0 %v3447
      %3485 = vmatprep.subr.bf16.mxu0 0
      %3486 = vmatpush1.bf16.msra.mxu0 %v3448
      %3487 = vmatprep.subr.bf16.mxu0 0
      %3488 = vmatpush1.bf16.msra.mxu0 %v3449
      %3489 = vmatprep.subr.bf16.mxu0 0
      %3490 = vmatpush1.bf16.msra.mxu0 %v3450
      %3491 = vmatprep.subr.bf16.mxu0 0
      %3492 = vmatpush1.bf16.msra.mxu0 %v3451
      %3493 = vmatprep.subr.bf16.mxu0 0
      %3494 = vmatpush1.bf16.msra.mxu0 %v3452
      %3495 = vmatprep.subr.bf16.mxu0 0
      %3496 = vmatpush1.bf16.msra.mxu0 %v3453
      %3497 = vmatprep.subr.bf16.mxu0 0
      %3498 = vmatpush1.bf16.msra.mxu0 %v3454
      %3499 = vmatprep.subr.bf16.mxu0 0
      %3500 = vmatpush1.bf16.msra.mxu0 %v3455
      %3501 = vmatprep.subr.bf16.mxu0 0
      %3502 = vmatpush1.bf16.msra.mxu0 %v3456
      %3503 = vmatprep.subr.bf16.mxu0 0
      %3504 = vmatpush1.bf16.msra.mxu0 %v3457
      %3505 = vmatprep.subr.bf16.mxu0 0
      %3506 = vmatpush1.bf16.msra.mxu0 %v3458
      %3507 = vmatprep.mubr.bf16.mxu0 %v3348
      %3508 = vmatmul.mubr.bf16.gmra.mrb[0].mxu0 %v3347
      %v3509 = vpop.f32.mrb[0].mxu0
      %v3510 = vadd.f32 0.0, %v3509
      %v3511 = vpop.f32.mrb[0].mxu0
      %v3512 = vpop.f32.mrb[0].mxu0
      %v3513 = vadd.f32 0.0, %v3512
      %v3514 = vpop.f32.mrb[0].mxu0
      %3515 = vmatprep.mubr.bf16.mxu0 %v3350
      %3516 = vmatmul.mubr.bf16.gmra.mrb[0].mxu0 %v3349
      %v3517 = vpop.f32.mrb[0].mxu0
      %v3518 = vadd.f32 0.0, %v3517
      %v3519 = vpop.f32.mrb[0].mxu0
      %v3520 = vpop.f32.mrb[0].mxu0
      %v3521 = vadd.f32 0.0, %v3520
      %v3522 = vpop.f32.mrb[0].mxu0
      %3523 = vmatprep.mubr.bf16.mxu0 %v3352
      %3524 = vmatmul.mubr.bf16.gmra.mrb[0].mxu0 %v3351
      %v3525 = vpop.f32.mrb[0].mxu0
      %v3526 = vadd.f32 0.0, %v3525
      %v3527 = vpop.f32.mrb[0].mxu0
      %v3528 = vpop.f32.mrb[0].mxu0
      %v3529 = vadd.f32 0.0, %v3528
      %v3530 = vpop.f32.mrb[0].mxu0
      %3531 = vmatprep.mubr.bf16.mxu0 %v3354
      %3532 = vmatmul.mubr.bf16.gmra.mrb[0].mxu0 %v3353
      %v3533 = vpop.f32.mrb[0].mxu0
      %v3534 = vadd.f32 0.0, %v3533
      %v3535 = vpop.f32.mrb[0].mxu0
      %v3536 = vpop.f32.mrb[0].mxu0
      %v3537 = vadd.f32 0.0, %v3536
      %v3538 = vpop.f32.mrb[0].mxu0
      %3539 = vmatprep.mubr.bf16.mxu0 %v3356
      %3540 = vmatmul.mubr.bf16.gmra.mrb[0].mxu0 %v3355
      %v3541 = vpop.f32.mrb[0].mxu0
      %v3542 = vadd.f32 0.0, %v3541
      %v3543 = vpop.f32.mrb[0].mxu0
      %v3544 = vpop.f32.mrb[0].mxu0
      %v3545 = vadd.f32 0.0, %v3544
      %v3546 = vpop.f32.mrb[0].mxu0
      %3547 = vmatprep.mubr.bf16.mxu0 %v3358
      %3548 = vmatmul.mubr.bf16.gmra.mrb[0].mxu0 %v3357
      %v3549 = vpop.f32.mrb[0].mxu0
      %v3550 = vadd.f32 0.0, %v3549
      %v3551 = vpop.f32.mrb[0].mxu0
      %v3552 = vpop.f32.mrb[0].mxu0
      %v3553 = vadd.f32 0.0, %v3552
      %v3554 = vpop.f32.mrb[0].mxu0
      %3555 = vmatprep.mubr.bf16.mxu0 %v3360
      %3556 = vmatmul.mubr.bf16.gmra.mrb[0].mxu0 %v3359
      %v3557 = vpop.f32.mrb[0].mxu0
      %v3558 = vadd.f32 0.0, %v3557
      %v3559 = vpop.f32.mrb[0].mxu0
      %v3560 = vpop.f32.mrb[0].mxu0
      %v3561 = vadd.f32 0.0, %v3560
      %v3562 = vpop.f32.mrb[0].mxu0
      %3563 = vmatprep.mubr.bf16.mxu0 %v3362
      %3564 = vmatmul.mubr.bf16.gmra.mrb[0].mxu0 %v3361
      %v3565 = vpop.f32.mrb[0].mxu0
      %v3566 = vadd.f32 0.0, %v3565
      %v3567 = vpop.f32.mrb[0].mxu0
      %v3568 = vpop.f32.mrb[0].mxu0
      %v3569 = vadd.f32 0.0, %v3568
      %v3570 = vpop.f32.mrb[0].mxu0
      %3571 = vdwg.mxu0
      %v3572 = vadd.f32 %v3178, %v3510
      %v3573 = vadd.f32 %v3179, %v3513
      %v3574 = vadd.f32 %v3180, %v3518
      %v3575 = vadd.f32 %v3181, %v3521
      %v3576 = vadd.f32 %v3182, %v3526
      %v3577 = vadd.f32 %v3183, %v3529
      %v3578 = vadd.f32 %v3184, %v3534
      %v3579 = vadd.f32 %v3185, %v3537
      %v3580 = vadd.f32 %v3186, %v3542
      %v3581 = vadd.f32 %v3187, %v3545
      %v3582 = vadd.f32 %v3188, %v3550
      %v3583 = vadd.f32 %v3189, %v3553
      %v3584 = vadd.f32 %v3190, %v3558
      %v3585 = vadd.f32 %v3191, %v3561
      %v3586 = vadd.f32 %v3192, %v3566
      %v3587 = vadd.f32 %v3193, %v3569
      %v3588 = vmax.f32 %v3572, 0.0
      %v3589 = vmax.f32 %v3573, 0.0
      %v3590 = vmax.f32 %v3574, 0.0
      %v3591 = vmax.f32 %v3575, 0.0
      %v3592 = vmax.f32 %v3576, 0.0
      %v3593 = vmax.f32 %v3577, 0.0
      %v3594 = vmax.f32 %v3578, 0.0
      %v3595 = vmax.f32 %v3579, 0.0
      %v3596 = vmax.f32 %v3580, 0.0
      %v3597 = vmax.f32 %v3581, 0.0
      %v3598 = vmax.f32 %v3582, 0.0
      %v3599 = vmax.f32 %v3583, 0.0
      %v3600 = vmax.f32 %v3584, 0.0
      %v3601 = vmax.f32 %v3585, 0.0
      %v3602 = vmax.f32 %v3586, 0.0
      %v3603 = vmax.f32 %v3587, 0.0
      %v3604 = vpack.c.bf16 %v3589, %v3588
      %v3605 = vpack.c.bf16 %v3591, %v3590
      %v3606 = vpack.c.bf16 %v3593, %v3592
      %v3607 = vpack.c.bf16 %v3595, %v3594
      %v3608 = vpack.c.bf16 %v3597, %v3596
      %v3609 = vpack.c.bf16 %v3599, %v3598
      %v3610 = vpack.c.bf16 %v3601, %v3600
      %v3611 = vpack.c.bf16 %v3603, %v3602
      %v3612 = vld [vmem:[%s6] sm:$0x1]
      %v3614 = vlaneseq
      %v3615 = vshrl.u32 %v3614, 7
      %v3616 = vsub.s32 0, %v3615
      %v3617 = vrot.slane %v3612, %v3616
      %v3619 = vadd.f32 %v3617, 0.0
      %v3620 = vld [vmem:[%s5] sm:$0xf]
      %v3621 = vld [vmem:[%s5 + $0x4] sm:$0xf]
      %v3622 = vld [vmem:[%s5 + $0x8] sm:$0xf]
      %v3623 = vld [vmem:[%s5 + $0xc] sm:$0xf]
      %v3624 = vld [vmem:[%s5 + $0x10] sm:$0xf]
      %v3625 = vld [vmem:[%s5 + $0x14] sm:$0xf]
      %v3626 = vld [vmem:[%s5 + $0x18] sm:$0xf]
      %v3627 = vld [vmem:[%s5 + $0x1c] sm:$0xf]
      %v3628 = vld [vmem:[%s5 + $0x20] sm:$0xf]
      %v3629 = vld [vmem:[%s5 + $0x24] sm:$0xf]
      %v3630 = vld [vmem:[%s5 + $0x28] sm:$0xf]
      %v3631 = vld [vmem:[%s5 + $0x2c] sm:$0xf]
      %v3632 = vld [vmem:[%s5 + $0x30] sm:$0xf]
      %v3633 = vld [vmem:[%s5 + $0x34] sm:$0xf]
      %v3634 = vld [vmem:[%s5 + $0x38] sm:$0xf]
      %v3635 = vld [vmem:[%s5 + $0x3c] sm:$0xf]
      %v3644 = vunpack.c.l.b16 %v3604
      %v3645 = vunpack.c.l.b16 %v3605
      %v3646 = vunpack.c.l.b16 %v3606
      %v3647 = vunpack.c.l.b16 %v3607
      %v3648 = vunpack.c.l.b16 %v3608
      %v3649 = vunpack.c.l.b16 %v3609
      %v3650 = vunpack.c.l.b16 %v3610
      %v3651 = vunpack.c.l.b16 %v3611
      %v3652 = vrot.slane %v3645, 7
      %vm3653 = vcmask 1041409
      %v3654 = vsel %vm3653, %v3652, %v3644
      %v3655 = vrot.slane %v3646, 6
      %vm3656 = vcmask 1042434
      %v3657 = vsel %vm3656, %v3655, %v3654
      %v3658 = vrot.slane %v3647, 5
      %vm3659 = vcmask 1043459
      %v3660 = vsel %vm3659, %v3658, %v3657
      %v3661 = vrot.slane %v3648, 4
      %vm3662 = vcmask 1044484
      %v3663 = vsel %vm3662, %v3661, %v3660
      %v3664 = vrot.slane %v3649, 3
      %vm3665 = vcmask 1045509
      %v3666 = vsel %vm3665, %v3664, %v3663
      %v3667 = vrot.slane %v3650, 2
      %vm3668 = vcmask 1046534
      %v3669 = vsel %vm3668, %v3667, %v3666
      %v3670 = vrot.slane %v3651, 1
      %vm3671 = vcmask 1047559
      %v3672 = vsel %vm3671, %v3670, %v3669
      %v3673 = vpack.c.b16 %v3672, %v3672
      %v3691 = vunpack.c.l.b16 %v3620
      %v3692 = vunpack.c.l.b16 %v3621
      %v3693 = vunpack.c.l.b16 %v3622
      %v3694 = vunpack.c.l.b16 %v3623
      %v3695 = vunpack.c.l.b16 %v3624
      %v3696 = vunpack.c.l.b16 %v3625
      %v3697 = vunpack.c.l.b16 %v3626
      %v3698 = vunpack.c.l.b16 %v3627
      %v3699 = vunpack.c.l.b16 %v3628
      %v3700 = vunpack.c.l.b16 %v3629
      %v3701 = vunpack.c.l.b16 %v3630
      %v3702 = vunpack.c.l.b16 %v3631
      %v3703 = vunpack.c.l.b16 %v3632
      %v3704 = vunpack.c.l.b16 %v3633
      %v3705 = vunpack.c.l.b16 %v3634
      %v3706 = vunpack.c.l.b16 %v3635
      %v3707 = vpack.c.b16 %v3692, %v3691
      %v3708 = vpack.c.b16 %v3694, %v3693
      %v3709 = vpack.c.b16 %v3696, %v3695
      %v3710 = vpack.c.b16 %v3698, %v3697
      %v3711 = vpack.c.b16 %v3700, %v3699
      %v3712 = vpack.c.b16 %v3702, %v3701
      %v3713 = vpack.c.b16 %v3704, %v3703
      %v3714 = vpack.c.b16 %v3706, %v3705
      %3723 = vmatprep.subr.bf16.mxu0 0
      %3724 = vmatpush1.bf16.msra.mxu0 %v3707
      %3725 = vmatprep.subr.bf16.mxu0 0
      %3726 = vmatpush1.bf16.msra.mxu0 %v3708
      %3727 = vmatprep.subr.bf16.mxu0 0
      %3728 = vmatpush1.bf16.msra.mxu0 %v3709
      %3729 = vmatprep.subr.bf16.mxu0 0
      %3730 = vmatpush1.bf16.msra.mxu0 %v3710
      %3731 = vmatprep.subr.bf16.mxu0 0
      %3732 = vmatpush1.bf16.msra.mxu0 %v3711
      %3733 = vmatprep.subr.bf16.mxu0 0
      %3734 = vmatpush1.bf16.msra.mxu0 %v3712
      %3735 = vmatprep.subr.bf16.mxu0 0
      %3736 = vmatpush1.bf16.msra.mxu0 %v3713
      %3737 = vmatprep.subr.bf16.mxu0 0
      %3738 = vmatpush1.bf16.msra.mxu0 %v3714
      %3739 = vmatprep.subr.bf16.mxu0 0
      %3740 = vmatpush1.bf16.msra.mxu0 0
      %3741 = vmatprep.subr.bf16.mxu0 0
      %3742 = vmatpush1.bf16.msra.mxu0 0
      %3743 = vmatprep.subr.bf16.mxu0 0
      %3744 = vmatpush1.bf16.msra.mxu0 0
      %3745 = vmatprep.subr.bf16.mxu0 0
      %3746 = vmatpush1.bf16.msra.mxu0 0
      %3747 = vmatprep.subr.bf16.mxu0 0
      %3748 = vmatpush1.bf16.msra.mxu0 0
      %3749 = vmatprep.subr.bf16.mxu0 0
      %3750 = vmatpush1.bf16.msra.mxu0 0
      %3751 = vmatprep.subr.bf16.mxu0 0
      %3752 = vmatpush1.bf16.msra.mxu0 0
      %3753 = vmatprep.subr.bf16.mxu0 0
      %3754 = vmatpush1.bf16.msra.mxu0 0
      %3755 = vmatprep.mubr.bf16.mxu0 0
      %3756 = vmatmul.mubr.bf16.gmra.mrb[0].mxu0 %v3673
      %v3757 = vpop.f32.mrb[0].mxu0
      %v3758 = vadd.f32 0.0, %v3757
      %v3759 = vpop.f32.mrb[0].mxu0
      %v3760 = vpop.f32.mrb[0].mxu0
      %v3761 = vpop.f32.mrb[0].mxu0
      %3762 = vdwg.mxu0
      %v3763 = vadd.f32 %v3619, %v3758
      %s3764 = scalar_lea.vmem %s5, 64
      %v3765 = vld [vmem:[%s3764] sm:$0xf]
      %v3766 = vld [vmem:[%s3764 + $0x4] sm:$0xf]
      %v3767 = vld [vmem:[%s3764 + $0x8] sm:$0xf]
      %v3768 = vld [vmem:[%s3764 + $0xc] sm:$0xf]
      %v3769 = vld [vmem:[%s3764 + $0x10] sm:$0xf]
      %v3770 = vld [vmem:[%s3764 + $0x14] sm:$0xf]
      %v3771 = vld [vmem:[%s3764 + $0x18] sm:$0xf]
      %v3772 = vld [vmem:[%s3764 + $0x1c] sm:$0xf]
      %v3773 = vld [vmem:[%s3764 + $0x20] sm:$0xf]
      %v3774 = vld [vmem:[%s3764 + $0x24] sm:$0xf]
      %v3775 = vld [vmem:[%s3764 + $0x28] sm:$0xf]
      %v3776 = vld [vmem:[%s3764 + $0x2c] sm:$0xf]
      %v3777 = vld [vmem:[%s3764 + $0x30] sm:$0xf]
      %v3778 = vld [vmem:[%s3764 + $0x34] sm:$0xf]
      %v3779 = vld [vmem:[%s3764 + $0x38] sm:$0xf]
      %v3780 = vld [vmem:[%s3764 + $0x3c] sm:$0xf]
      %v3781 = vrot.slane %v3644, 2
      %v3782 = vrot.slane %v3645, 1
      %v3783 = vsel %vm3653, %v3782, %v3781
      %v3784 = vsel %vm3656, %v3646, %v3783
      %v3785 = vrot.slane %v3647, 7
      %v3786 = vsel %vm3659, %v3785, %v3784
      %v3787 = vrot.slane %v3648, 6
      %v3788 = vsel %vm3662, %v3787, %v3786
      %v3789 = vrot.slane %v3649, 5
      %v3790 = vsel %vm3665, %v3789, %v3788
      %v3791 = vrot.slane %v3650, 4
      %v3792 = vsel %vm3668, %v3791, %v3790
      %v3793 = vrot.slane %v3651, 3
      %v3794 = vsel %vm3671, %v3793, %v3792
      %v3795 = vpack.c.b16 %v3794, %v3794
      %v3813 = vunpack.c.l.b16 %v3765
      %v3814 = vunpack.c.l.b16 %v3766
      %v3815 = vunpack.c.l.b16 %v3767
      %v3816 = vunpack.c.l.b16 %v3768
      %v3817 = vunpack.c.l.b16 %v3769
      %v3818 = vunpack.c.l.b16 %v3770
      %v3819 = vunpack.c.l.b16 %v3771
      %v3820 = vunpack.c.l.b16 %v3772
      %v3821 = vunpack.c.l.b16 %v3773
      %v3822 = vunpack.c.l.b16 %v3774
      %v3823 = vunpack.c.l.b16 %v3775
      %v3824 = vunpack.c.l.b16 %v3776
      %v3825 = vunpack.c.l.b16 %v3777
      %v3826 = vunpack.c.l.b16 %v3778
      %v3827 = vunpack.c.l.b16 %v3779
      %v3828 = vunpack.c.l.b16 %v3780
      %v3829 = vpack.c.b16 %v3814, %v3813
      %v3830 = vpack.c.b16 %v3816, %v3815
      %v3831 = vpack.c.b16 %v3818, %v3817
      %v3832 = vpack.c.b16 %v3820, %v3819
      %v3833 = vpack.c.b16 %v3822, %v3821
      %v3834 = vpack.c.b16 %v3824, %v3823
      %v3835 = vpack.c.b16 %v3826, %v3825
      %v3836 = vpack.c.b16 %v3828, %v3827
      %3845 = vmatprep.subr.bf16.mxu0 0
      %3846 = vmatpush1.bf16.msra.mxu0 %v3829
      %3847 = vmatprep.subr.bf16.mxu0 0
      %3848 = vmatpush1.bf16.msra.mxu0 %v3830
      %3849 = vmatprep.subr.bf16.mxu0 0
      %3850 = vmatpush1.bf16.msra.mxu0 %v3831
      %3851 = vmatprep.subr.bf16.mxu0 0
      %3852 = vmatpush1.bf16.msra.mxu0 %v3832
      %3853 = vmatprep.subr.bf16.mxu0 0
      %3854 = vmatpush1.bf16.msra.mxu0 %v3833
      %3855 = vmatprep.subr.bf16.mxu0 0
      %3856 = vmatpush1.bf16.msra.mxu0 %v3834
      %3857 = vmatprep.subr.bf16.mxu0 0
      %3858 = vmatpush1.bf16.msra.mxu0 %v3835
      %3859 = vmatprep.subr.bf16.mxu0 0
      %3860 = vmatpush1.bf16.msra.mxu0 %v3836
      %3861 = vmatprep.subr.bf16.mxu0 0
      %3862 = vmatpush1.bf16.msra.mxu0 0
      %3863 = vmatprep.subr.bf16.mxu0 0
      %3864 = vmatpush1.bf16.msra.mxu0 0
      %3865 = vmatprep.subr.bf16.mxu0 0
      %3866 = vmatpush1.bf16.msra.mxu0 0
      %3867 = vmatprep.subr.bf16.mxu0 0
      %3868 = vmatpush1.bf16.msra.mxu0 0
      %3869 = vmatprep.subr.bf16.mxu0 0
      %3870 = vmatpush1.bf16.msra.mxu0 0
      %3871 = vmatprep.subr.bf16.mxu0 0
      %3872 = vmatpush1.bf16.msra.mxu0 0
      %3873 = vmatprep.subr.bf16.mxu0 0
      %3874 = vmatpush1.bf16.msra.mxu0 0
      %3875 = vmatprep.subr.bf16.mxu0 0
      %3876 = vmatpush1.bf16.msra.mxu0 0
      %3877 = vmatprep.mubr.bf16.mxu0 0
      %3878 = vmatmul.mubr.bf16.gmra.mrb[0].mxu0 %v3795
      %v3879 = vpop.f32.mrb[0].mxu0
      %v3880 = vadd.f32 0.0, %v3879
      %v3881 = vpop.f32.mrb[0].mxu0
      %v3882 = vpop.f32.mrb[0].mxu0
      %v3883 = vpop.f32.mrb[0].mxu0
      %3884 = vdwg.mxu0
      %v3885 = vadd.f32 %v3763, %v3880
      %s3886 = scalar_lea.vmem %s5, 128
      %v3887 = vld [vmem:[%s3886] sm:$0xf]
      %v3888 = vld [vmem:[%s3886 + $0x4] sm:$0xf]
      %v3889 = vld [vmem:[%s3886 + $0x8] sm:$0xf]
      %v3890 = vld [vmem:[%s3886 + $0xc] sm:$0xf]
      %v3891 = vld [vmem:[%s3886 + $0x10] sm:$0xf]
      %v3892 = vld [vmem:[%s3886 + $0x14] sm:$0xf]
      %v3893 = vld [vmem:[%s3886 + $0x18] sm:$0xf]
      %v3894 = vld [vmem:[%s3886 + $0x1c] sm:$0xf]
      %v3895 = vld [vmem:[%s3886 + $0x20] sm:$0xf]
      %v3896 = vld [vmem:[%s3886 + $0x24] sm:$0xf]
      %v3897 = vld [vmem:[%s3886 + $0x28] sm:$0xf]
      %v3898 = vld [vmem:[%s3886 + $0x2c] sm:$0xf]
      %v3899 = vld [vmem:[%s3886 + $0x30] sm:$0xf]
      %v3900 = vld [vmem:[%s3886 + $0x34] sm:$0xf]
      %v3901 = vld [vmem:[%s3886 + $0x38] sm:$0xf]
      %v3902 = vld [vmem:[%s3886 + $0x3c] sm:$0xf]
      %v3903 = vrot.slane %v3644, 4
      %v3904 = vrot.slane %v3645, 3
      %v3905 = vsel %vm3653, %v3904, %v3903
      %v3906 = vrot.slane %v3646, 2
      %v3907 = vsel %vm3656, %v3906, %v3905
      %v3908 = vrot.slane %v3647, 1
      %v3909 = vsel %vm3659, %v3908, %v3907
      %v3910 = vsel %vm3662, %v3648, %v3909
      %v3911 = vrot.slane %v3649, 7
      %v3912 = vsel %vm3665, %v3911, %v3910
      %v3913 = vrot.slane %v3650, 6
      %v3914 = vsel %vm3668, %v3913, %v3912
      %v3915 = vrot.slane %v3651, 5
      %v3916 = vsel %vm3671, %v3915, %v3914
      %v3917 = vpack.c.b16 %v3916, %v3916
      %v3935 = vunpack.c.l.b16 %v3887
      %v3936 = vunpack.c.l.b16 %v3888
      %v3937 = vunpack.c.l.b16 %v3889
      %v3938 = vunpack.c.l.b16 %v3890
      %v3939 = vunpack.c.l.b16 %v3891
      %v3940 = vunpack.c.l.b16 %v3892
      %v3941 = vunpack.c.l.b16 %v3893
      %v3942 = vunpack.c.l.b16 %v3894
      %v3943 = vunpack.c.l.b16 %v3895
      %v3944 = vunpack.c.l.b16 %v3896
      %v3945 = vunpack.c.l.b16 %v3897
      %v3946 = vunpack.c.l.b16 %v3898
      %v3947 = vunpack.c.l.b16 %v3899
      %v3948 = vunpack.c.l.b16 %v3900
      %v3949 = vunpack.c.l.b16 %v3901
      %v3950 = vunpack.c.l.b16 %v3902
      %v3951 = vpack.c.b16 %v3936, %v3935
      %v3952 = vpack.c.b16 %v3938, %v3937
      %v3953 = vpack.c.b16 %v3940, %v3939
      %v3954 = vpack.c.b16 %v3942, %v3941
      %v3955 = vpack.c.b16 %v3944, %v3943
      %v3956 = vpack.c.b16 %v3946, %v3945
      %v3957 = vpack.c.b16 %v3948, %v3947
      %v3958 = vpack.c.b16 %v3950, %v3949
      %3967 = vmatprep.subr.bf16.mxu0 0
      %3968 = vmatpush1.bf16.msra.mxu0 %v3951
      %3969 = vmatprep.subr.bf16.mxu0 0
      %3970 = vmatpush1.bf16.msra.mxu0 %v3952
      %3971 = vmatprep.subr.bf16.mxu0 0
      %3972 = vmatpush1.bf16.msra.mxu0 %v3953
      %3973 = vmatprep.subr.bf16.mxu0 0
      %3974 = vmatpush1.bf16.msra.mxu0 %v3954
      %3975 = vmatprep.subr.bf16.mxu0 0
      %3976 = vmatpush1.bf16.msra.mxu0 %v3955
      %3977 = vmatprep.subr.bf16.mxu0 0
      %3978 = vmatpush1.bf16.msra.mxu0 %v3956
      %3979 = vmatprep.subr.bf16.mxu0 0
      %3980 = vmatpush1.bf16.msra.mxu0 %v3957
      %3981 = vmatprep.subr.bf16.mxu0 0
      %3982 = vmatpush1.bf16.msra.mxu0 %v3958
      %3983 = vmatprep.subr.bf16.mxu0 0
      %3984 = vmatpush1.bf16.msra.mxu0 0
      %3985 = vmatprep.subr.bf16.mxu0 0
      %3986 = vmatpush1.bf16.msra.mxu0 0
      %3987 = vmatprep.subr.bf16.mxu0 0
      %3988 = vmatpush1.bf16.msra.mxu0 0
      %3989 = vmatprep.subr.bf16.mxu0 0
      %3990 = vmatpush1.bf16.msra.mxu0 0
      %3991 = vmatprep.subr.bf16.mxu0 0
      %3992 = vmatpush1.bf16.msra.mxu0 0
      %3993 = vmatprep.subr.bf16.mxu0 0
      %3994 = vmatpush1.bf16.msra.mxu0 0
      %3995 = vmatprep.subr.bf16.mxu0 0
      %3996 = vmatpush1.bf16.msra.mxu0 0
      %3997 = vmatprep.subr.bf16.mxu0 0
      %3998 = vmatpush1.bf16.msra.mxu0 0
      %3999 = vmatprep.mubr.bf16.mxu0 0
      %4000 = vmatmul.mubr.bf16.gmra.mrb[0].mxu0 %v3917
      %v4001 = vpop.f32.mrb[0].mxu0
      %v4002 = vadd.f32 0.0, %v4001
      %v4003 = vpop.f32.mrb[0].mxu0
      %v4004 = vpop.f32.mrb[0].mxu0
      %v4005 = vpop.f32.mrb[0].mxu0
      %4006 = vdwg.mxu0
      %v4007 = vadd.f32 %v3885, %v4002
      %s4008 = scalar_lea.vmem %s5, 192
      %v4009 = vld [vmem:[%s4008] sm:$0xf]
      %v4010 = vld [vmem:[%s4008 + $0x4] sm:$0xf]
      %v4011 = vld [vmem:[%s4008 + $0x8] sm:$0xf]
      %v4012 = vld [vmem:[%s4008 + $0xc] sm:$0xf]
      %v4013 = vld [vmem:[%s4008 + $0x10] sm:$0xf]
      %v4014 = vld [vmem:[%s4008 + $0x14] sm:$0xf]
      %v4015 = vld [vmem:[%s4008 + $0x18] sm:$0xf]
      %v4016 = vld [vmem:[%s4008 + $0x1c] sm:$0xf]
      %v4017 = vld [vmem:[%s4008 + $0x20] sm:$0xf]
      %v4018 = vld [vmem:[%s4008 + $0x24] sm:$0xf]
      %v4019 = vld [vmem:[%s4008 + $0x28] sm:$0xf]
      %v4020 = vld [vmem:[%s4008 + $0x2c] sm:$0xf]
      %v4021 = vld [vmem:[%s4008 + $0x30] sm:$0xf]
      %v4022 = vld [vmem:[%s4008 + $0x34] sm:$0xf]
      %v4023 = vld [vmem:[%s4008 + $0x38] sm:$0xf]
      %v4024 = vld [vmem:[%s4008 + $0x3c] sm:$0xf]
      %v4025 = vrot.slane %v3644, 6
      %v4026 = vrot.slane %v3645, 5
      %v4027 = vsel %vm3653, %v4026, %v4025
      %v4028 = vrot.slane %v3646, 4
      %v4029 = vsel %vm3656, %v4028, %v4027
      %v4030 = vrot.slane %v3647, 3
      %v4031 = vsel %vm3659, %v4030, %v4029
      %v4032 = vrot.slane %v3648, 2
      %v4033 = vsel %vm3662, %v4032, %v4031
      %v4034 = vrot.slane %v3649, 1
      %v4035 = vsel %vm3665, %v4034, %v4033
      %v4036 = vsel %vm3668, %v3650, %v4035
      %v4037 = vrot.slane %v3651, 7
      %v4038 = vsel %vm3671, %v4037, %v4036
      %v4039 = vpack.c.b16 %v4038, %v4038
      %v4057 = vunpack.c.l.b16 %v4009
      %v4058 = vunpack.c.l.b16 %v4010
      %v4059 = vunpack.c.l.b16 %v4011
      %v4060 = vunpack.c.l.b16 %v4012
      %v4061 = vunpack.c.l.b16 %v4013
      %v4062 = vunpack.c.l.b16 %v4014
      %v4063 = vunpack.c.l.b16 %v4015
      %v4064 = vunpack.c.l.b16 %v4016
      %v4065 = vunpack.c.l.b16 %v4017
      %v4066 = vunpack.c.l.b16 %v4018
      %v4067 = vunpack.c.l.b16 %v4019
      %v4068 = vunpack.c.l.b16 %v4020
      %v4069 = vunpack.c.l.b16 %v4021
      %v4070 = vunpack.c.l.b16 %v4022
      %v4071 = vunpack.c.l.b16 %v4023
      %v4072 = vunpack.c.l.b16 %v4024
      %v4073 = vpack.c.b16 %v4058, %v4057
      %v4074 = vpack.c.b16 %v4060, %v4059
      %v4075 = vpack.c.b16 %v4062, %v4061
      %v4076 = vpack.c.b16 %v4064, %v4063
      %v4077 = vpack.c.b16 %v4066, %v4065
      %v4078 = vpack.c.b16 %v4068, %v4067
      %v4079 = vpack.c.b16 %v4070, %v4069
      %v4080 = vpack.c.b16 %v4072, %v4071
      %4089 = vmatprep.subr.bf16.mxu0 0
      %4090 = vmatpush1.bf16.msra.mxu0 %v4073
      %4091 = vmatprep.subr.bf16.mxu0 0
      %4092 = vmatpush1.bf16.msra.mxu0 %v4074
      %4093 = vmatprep.subr.bf16.mxu0 0
      %4094 = vmatpush1.bf16.msra.mxu0 %v4075
      %4095 = vmatprep.subr.bf16.mxu0 0
      %4096 = vmatpush1.bf16.msra.mxu0 %v4076
      %4097 = vmatprep.subr.bf16.mxu0 0
      %4098 = vmatpush1.bf16.msra.mxu0 %v4077
      %4099 = vmatprep.subr.bf16.mxu0 0
      %4100 = vmatpush1.bf16.msra.mxu0 %v4078
      %4101 = vmatprep.subr.bf16.mxu0 0
      %4102 = vmatpush1.bf16.msra.mxu0 %v4079
      %4103 = vmatprep.subr.bf16.mxu0 0
      %4104 = vmatpush1.bf16.msra.mxu0 %v4080
      %4105 = vmatprep.subr.bf16.mxu0 0
      %4106 = vmatpush1.bf16.msra.mxu0 0
      %4107 = vmatprep.subr.bf16.mxu0 0
      %4108 = vmatpush1.bf16.msra.mxu0 0
      %4109 = vmatprep.subr.bf16.mxu0 0
      %4110 = vmatpush1.bf16.msra.mxu0 0
      %4111 = vmatprep.subr.bf16.mxu0 0
      %4112 = vmatpush1.bf16.msra.mxu0 0
      %4113 = vmatprep.subr.bf16.mxu0 0
      %4114 = vmatpush1.bf16.msra.mxu0 0
      %4115 = vmatprep.subr.bf16.mxu0 0
      %4116 = vmatpush1.bf16.msra.mxu0 0
      %4117 = vmatprep.subr.bf16.mxu0 0
      %4118 = vmatpush1.bf16.msra.mxu0 0
      %4119 = vmatprep.subr.bf16.mxu0 0
      %4120 = vmatpush1.bf16.msra.mxu0 0
      %4121 = vmatprep.mubr.bf16.mxu0 0
      %4122 = vmatmul.mubr.bf16.gmra.mrb[0].mxu0 %v4039
      %v4123 = vpop.f32.mrb[0].mxu0
      %v4124 = vadd.f32 0.0, %v4123
      %v4125 = vpop.f32.mrb[0].mxu0
      %v4126 = vpop.f32.mrb[0].mxu0
      %v4127 = vpop.f32.mrb[0].mxu0
      %4128 = vdwg.mxu0
      %v4129 = vadd.f32 %v4007, %v4124
      %s4130 = scalar_lea.vmem %s5, 256
      %v4131 = vld [vmem:[%s4130] sm:$0xf]
      %v4132 = vld [vmem:[%s4130 + $0x4] sm:$0xf]
      %v4133 = vld [vmem:[%s4130 + $0x8] sm:$0xf]
      %v4134 = vld [vmem:[%s4130 + $0xc] sm:$0xf]
      %v4135 = vld [vmem:[%s4130 + $0x10] sm:$0xf]
      %v4136 = vld [vmem:[%s4130 + $0x14] sm:$0xf]
      %v4137 = vld [vmem:[%s4130 + $0x18] sm:$0xf]
      %v4138 = vld [vmem:[%s4130 + $0x1c] sm:$0xf]
      %v4139 = vld [vmem:[%s4130 + $0x20] sm:$0xf]
      %v4140 = vld [vmem:[%s4130 + $0x24] sm:$0xf]
      %v4141 = vld [vmem:[%s4130 + $0x28] sm:$0xf]
      %v4142 = vld [vmem:[%s4130 + $0x2c] sm:$0xf]
      %v4143 = vld [vmem:[%s4130 + $0x30] sm:$0xf]
      %v4144 = vld [vmem:[%s4130 + $0x34] sm:$0xf]
      %v4145 = vld [vmem:[%s4130 + $0x38] sm:$0xf]
      %v4146 = vld [vmem:[%s4130 + $0x3c] sm:$0xf]
      %v4147 = vunpack.c.h.b16 %v3604
      %v4148 = vunpack.c.h.b16 %v3605
      %v4149 = vunpack.c.h.b16 %v3606
      %v4150 = vunpack.c.h.b16 %v3607
      %v4151 = vunpack.c.h.b16 %v3608
      %v4152 = vunpack.c.h.b16 %v3609
      %v4153 = vunpack.c.h.b16 %v3610
      %v4154 = vunpack.c.h.b16 %v3611
      %v4155 = vrot.slane %v4148, 7
      %v4156 = vsel %vm3653, %v4155, %v4147
      %v4157 = vrot.slane %v4149, 6
      %v4158 = vsel %vm3656, %v4157, %v4156
      %v4159 = vrot.slane %v4150, 5
      %v4160 = vsel %vm3659, %v4159, %v4158
      %v4161 = vrot.slane %v4151, 4
      %v4162 = vsel %vm3662, %v4161, %v4160
      %v4163 = vrot.slane %v4152, 3
      %v4164 = vsel %vm3665, %v4163, %v4162
      %v4165 = vrot.slane %v4153, 2
      %v4166 = vsel %vm3668, %v4165, %v4164
      %v4167 = vrot.slane %v4154, 1
      %v4168 = vsel %vm3671, %v4167, %v4166
      %v4169 = vpack.c.b16 %v4168, %v4168
      %v4187 = vunpack.c.l.b16 %v4131
      %v4188 = vunpack.c.l.b16 %v4132
      %v4189 = vunpack.c.l.b16 %v4133
      %v4190 = vunpack.c.l.b16 %v4134
      %v4191 = vunpack.c.l.b16 %v4135
      %v4192 = vunpack.c.l.b16 %v4136
      %v4193 = vunpack.c.l.b16 %v4137
      %v4194 = vunpack.c.l.b16 %v4138
      %v4195 = vunpack.c.l.b16 %v4139
      %v4196 = vunpack.c.l.b16 %v4140
      %v4197 = vunpack.c.l.b16 %v4141
      %v4198 = vunpack.c.l.b16 %v4142
      %v4199 = vunpack.c.l.b16 %v4143
      %v4200 = vunpack.c.l.b16 %v4144
      %v4201 = vunpack.c.l.b16 %v4145
      %v4202 = vunpack.c.l.b16 %v4146
      %v4203 = vpack.c.b16 %v4188, %v4187
      %v4204 = vpack.c.b16 %v4190, %v4189
      %v4205 = vpack.c.b16 %v4192, %v4191
      %v4206 = vpack.c.b16 %v4194, %v4193
      %v4207 = vpack.c.b16 %v4196, %v4195
      %v4208 = vpack.c.b16 %v4198, %v4197
      %v4209 = vpack.c.b16 %v4200, %v4199
      %v4210 = vpack.c.b16 %v4202, %v4201
      %4219 = vmatprep.subr.bf16.mxu0 0
      %4220 = vmatpush1.bf16.msra.mxu0 %v4203
      %4221 = vmatprep.subr.bf16.mxu0 0
      %4222 = vmatpush1.bf16.msra.mxu0 %v4204
      %4223 = vmatprep.subr.bf16.mxu0 0
      %4224 = vmatpush1.bf16.msra.mxu0 %v4205
      %4225 = vmatprep.subr.bf16.mxu0 0
      %4226 = vmatpush1.bf16.msra.mxu0 %v4206
      %4227 = vmatprep.subr.bf16.mxu0 0
      %4228 = vmatpush1.bf16.msra.mxu0 %v4207
      %4229 = vmatprep.subr.bf16.mxu0 0
      %4230 = vmatpush1.bf16.msra.mxu0 %v4208
      %4231 = vmatprep.subr.bf16.mxu0 0
      %4232 = vmatpush1.bf16.msra.mxu0 %v4209
      %4233 = vmatprep.subr.bf16.mxu0 0
      %4234 = vmatpush1.bf16.msra.mxu0 %v4210
      %4235 = vmatprep.subr.bf16.mxu0 0
      %4236 = vmatpush1.bf16.msra.mxu0 0
      %4237 = vmatprep.subr.bf16.mxu0 0
      %4238 = vmatpush1.bf16.msra.mxu0 0
      %4239 = vmatprep.subr.bf16.mxu0 0
      %4240 = vmatpush1.bf16.msra.mxu0 0
      %4241 = vmatprep.subr.bf16.mxu0 0
      %4242 = vmatpush1.bf16.msra.mxu0 0
      %4243 = vmatprep.subr.bf16.mxu0 0
      %4244 = vmatpush1.bf16.msra.mxu0 0
      %4245 = vmatprep.subr.bf16.mxu0 0
      %4246 = vmatpush1.bf16.msra.mxu0 0
      %4247 = vmatprep.subr.bf16.mxu0 0
      %4248 = vmatpush1.bf16.msra.mxu0 0
      %4249 = vmatprep.subr.bf16.mxu0 0
      %4250 = vmatpush1.bf16.msra.mxu0 0
      %4251 = vmatprep.mubr.bf16.mxu0 0
      %4252 = vmatmul.mubr.bf16.gmra.mrb[0].mxu0 %v4169
      %v4253 = vpop.f32.mrb[0].mxu0
      %v4254 = vadd.f32 0.0, %v4253
      %v4255 = vpop.f32.mrb[0].mxu0
      %v4256 = vpop.f32.mrb[0].mxu0
      %v4257 = vpop.f32.mrb[0].mxu0
      %4258 = vdwg.mxu0
      %v4259 = vadd.f32 %v4129, %v4254
      %s4260 = scalar_lea.vmem %s5, 320
      %v4261 = vld [vmem:[%s4260] sm:$0xf]
      %v4262 = vld [vmem:[%s4260 + $0x4] sm:$0xf]
      %v4263 = vld [vmem:[%s4260 + $0x8] sm:$0xf]
      %v4264 = vld [vmem:[%s4260 + $0xc] sm:$0xf]
      %v4265 = vld [vmem:[%s4260 + $0x10] sm:$0xf]
      %v4266 = vld [vmem:[%s4260 + $0x14] sm:$0xf]
      %v4267 = vld [vmem:[%s4260 + $0x18] sm:$0xf]
      %v4268 = vld [vmem:[%s4260 + $0x1c] sm:$0xf]
      %v4269 = vld [vmem:[%s4260 + $0x20] sm:$0xf]
      %v4270 = vld [vmem:[%s4260 + $0x24] sm:$0xf]
      %v4271 = vld [vmem:[%s4260 + $0x28] sm:$0xf]
      %v4272 = vld [vmem:[%s4260 + $0x2c] sm:$0xf]
      %v4273 = vld [vmem:[%s4260 + $0x30] sm:$0xf]
      %v4274 = vld [vmem:[%s4260 + $0x34] sm:$0xf]
      %v4275 = vld [vmem:[%s4260 + $0x38] sm:$0xf]
      %v4276 = vld [vmem:[%s4260 + $0x3c] sm:$0xf]
      %v4277 = vrot.slane %v4147, 2
      %v4278 = vrot.slane %v4148, 1
      %v4279 = vsel %vm3653, %v4278, %v4277
      %v4280 = vsel %vm3656, %v4149, %v4279
      %v4281 = vrot.slane %v4150, 7
      %v4282 = vsel %vm3659, %v4281, %v4280
      %v4283 = vrot.slane %v4151, 6
      %v4284 = vsel %vm3662, %v4283, %v4282
      %v4285 = vrot.slane %v4152, 5
      %v4286 = vsel %vm3665, %v4285, %v4284
      %v4287 = vrot.slane %v4153, 4
      %v4288 = vsel %vm3668, %v4287, %v4286
      %v4289 = vrot.slane %v4154, 3
      %v4290 = vsel %vm3671, %v4289, %v4288
      %v4291 = vpack.c.b16 %v4290, %v4290
      %v4309 = vunpack.c.l.b16 %v4261
      %v4310 = vunpack.c.l.b16 %v4262
      %v4311 = vunpack.c.l.b16 %v4263
      %v4312 = vunpack.c.l.b16 %v4264
      %v4313 = vunpack.c.l.b16 %v4265
      %v4314 = vunpack.c.l.b16 %v4266
      %v4315 = vunpack.c.l.b16 %v4267
      %v4316 = vunpack.c.l.b16 %v4268
      %v4317 = vunpack.c.l.b16 %v4269
      %v4318 = vunpack.c.l.b16 %v4270
      %v4319 = vunpack.c.l.b16 %v4271
      %v4320 = vunpack.c.l.b16 %v4272
      %v4321 = vunpack.c.l.b16 %v4273
      %v4322 = vunpack.c.l.b16 %v4274
      %v4323 = vunpack.c.l.b16 %v4275
      %v4324 = vunpack.c.l.b16 %v4276
      %v4325 = vpack.c.b16 %v4310, %v4309
      %v4326 = vpack.c.b16 %v4312, %v4311
      %v4327 = vpack.c.b16 %v4314, %v4313
      %v4328 = vpack.c.b16 %v4316, %v4315
      %v4329 = vpack.c.b16 %v4318, %v4317
      %v4330 = vpack.c.b16 %v4320, %v4319
      %v4331 = vpack.c.b16 %v4322, %v4321
      %v4332 = vpack.c.b16 %v4324, %v4323
      %4341 = vmatprep.subr.bf16.mxu0 0
      %4342 = vmatpush1.bf16.msra.mxu0 %v4325
      %4343 = vmatprep.subr.bf16.mxu0 0
      %4344 = vmatpush1.bf16.msra.mxu0 %v4326
      %4345 = vmatprep.subr.bf16.mxu0 0
      %4346 = vmatpush1.bf16.msra.mxu0 %v4327
      %4347 = vmatprep.subr.bf16.mxu0 0
      %4348 = vmatpush1.bf16.msra.mxu0 %v4328
      %4349 = vmatprep.subr.bf16.mxu0 0
      %4350 = vmatpush1.bf16.msra.mxu0 %v4329
      %4351 = vmatprep.subr.bf16.mxu0 0
      %4352 = vmatpush1.bf16.msra.mxu0 %v4330
      %4353 = vmatprep.subr.bf16.mxu0 0
      %4354 = vmatpush1.bf16.msra.mxu0 %v4331
      %4355 = vmatprep.subr.bf16.mxu0 0
      %4356 = vmatpush1.bf16.msra.mxu0 %v4332
      %4357 = vmatprep.subr.bf16.mxu0 0
      %4358 = vmatpush1.bf16.msra.mxu0 0
      %4359 = vmatprep.subr.bf16.mxu0 0
      %4360 = vmatpush1.bf16.msra.mxu0 0
      %4361 = vmatprep.subr.bf16.mxu0 0
      %4362 = vmatpush1.bf16.msra.mxu0 0
      %4363 = vmatprep.subr.bf16.mxu0 0
      %4364 = vmatpush1.bf16.msra.mxu0 0
      %4365 = vmatprep.subr.bf16.mxu0 0
      %4366 = vmatpush1.bf16.msra.mxu0 0
      %4367 = vmatprep.subr.bf16.mxu0 0
      %4368 = vmatpush1.bf16.msra.mxu0 0
      %4369 = vmatprep.subr.bf16.mxu0 0
      %4370 = vmatpush1.bf16.msra.mxu0 0
      %4371 = vmatprep.subr.bf16.mxu0 0
      %4372 = vmatpush1.bf16.msra.mxu0 0
      %4373 = vmatprep.mubr.bf16.mxu0 0
      %4374 = vmatmul.mubr.bf16.gmra.mrb[0].mxu0 %v4291
      %v4375 = vpop.f32.mrb[0].mxu0
      %v4376 = vadd.f32 0.0, %v4375
      %v4377 = vpop.f32.mrb[0].mxu0
      %v4378 = vpop.f32.mrb[0].mxu0
      %v4379 = vpop.f32.mrb[0].mxu0
      %4380 = vdwg.mxu0
      %v4381 = vadd.f32 %v4259, %v4376
      %s4382 = scalar_lea.vmem %s5, 384
      %v4383 = vld [vmem:[%s4382] sm:$0xf]
      %v4384 = vld [vmem:[%s4382 + $0x4] sm:$0xf]
      %v4385 = vld [vmem:[%s4382 + $0x8] sm:$0xf]
      %v4386 = vld [vmem:[%s4382 + $0xc] sm:$0xf]
      %v4387 = vld [vmem:[%s4382 + $0x10] sm:$0xf]
      %v4388 = vld [vmem:[%s4382 + $0x14] sm:$0xf]
      %v4389 = vld [vmem:[%s4382 + $0x18] sm:$0xf]
      %v4390 = vld [vmem:[%s4382 + $0x1c] sm:$0xf]
      %v4391 = vld [vmem:[%s4382 + $0x20] sm:$0xf]
      %v4392 = vld [vmem:[%s4382 + $0x24] sm:$0xf]
      %v4393 = vld [vmem:[%s4382 + $0x28] sm:$0xf]
      %v4394 = vld [vmem:[%s4382 + $0x2c] sm:$0xf]
      %v4395 = vld [vmem:[%s4382 + $0x30] sm:$0xf]
      %v4396 = vld [vmem:[%s4382 + $0x34] sm:$0xf]
      %v4397 = vld [vmem:[%s4382 + $0x38] sm:$0xf]
      %v4398 = vld [vmem:[%s4382 + $0x3c] sm:$0xf]
      %v4399 = vrot.slane %v4147, 4
      %v4400 = vrot.slane %v4148, 3
      %v4401 = vsel %vm3653, %v4400, %v4399
      %v4402 = vrot.slane %v4149, 2
      %v4403 = vsel %vm3656, %v4402, %v4401
      %v4404 = vrot.slane %v4150, 1
      %v4405 = vsel %vm3659, %v4404, %v4403
      %v4406 = vsel %vm3662, %v4151, %v4405
      %v4407 = vrot.slane %v4152, 7
      %v4408 = vsel %vm3665, %v4407, %v4406
      %v4409 = vrot.slane %v4153, 6
      %v4410 = vsel %vm3668, %v4409, %v4408
      %v4411 = vrot.slane %v4154, 5
      %v4412 = vsel %vm3671, %v4411, %v4410
      %v4413 = vpack.c.b16 %v4412, %v4412
      %v4431 = vunpack.c.l.b16 %v4383
      %v4432 = vunpack.c.l.b16 %v4384
      %v4433 = vunpack.c.l.b16 %v4385
      %v4434 = vunpack.c.l.b16 %v4386
      %v4435 = vunpack.c.l.b16 %v4387
      %v4436 = vunpack.c.l.b16 %v4388
      %v4437 = vunpack.c.l.b16 %v4389
      %v4438 = vunpack.c.l.b16 %v4390
      %v4439 = vunpack.c.l.b16 %v4391
      %v4440 = vunpack.c.l.b16 %v4392
      %v4441 = vunpack.c.l.b16 %v4393
      %v4442 = vunpack.c.l.b16 %v4394
      %v4443 = vunpack.c.l.b16 %v4395
      %v4444 = vunpack.c.l.b16 %v4396
      %v4445 = vunpack.c.l.b16 %v4397
      %v4446 = vunpack.c.l.b16 %v4398
      %v4447 = vpack.c.b16 %v4432, %v4431
      %v4448 = vpack.c.b16 %v4434, %v4433
      %v4449 = vpack.c.b16 %v4436, %v4435
      %v4450 = vpack.c.b16 %v4438, %v4437
      %v4451 = vpack.c.b16 %v4440, %v4439
      %v4452 = vpack.c.b16 %v4442, %v4441
      %v4453 = vpack.c.b16 %v4444, %v4443
      %v4454 = vpack.c.b16 %v4446, %v4445
      %4463 = vmatprep.subr.bf16.mxu0 0
      %4464 = vmatpush1.bf16.msra.mxu0 %v4447
      %4465 = vmatprep.subr.bf16.mxu0 0
      %4466 = vmatpush1.bf16.msra.mxu0 %v4448
      %4467 = vmatprep.subr.bf16.mxu0 0
      %4468 = vmatpush1.bf16.msra.mxu0 %v4449
      %4469 = vmatprep.subr.bf16.mxu0 0
      %4470 = vmatpush1.bf16.msra.mxu0 %v4450
      %4471 = vmatprep.subr.bf16.mxu0 0
      %4472 = vmatpush1.bf16.msra.mxu0 %v4451
      %4473 = vmatprep.subr.bf16.mxu0 0
      %4474 = vmatpush1.bf16.msra.mxu0 %v4452
      %4475 = vmatprep.subr.bf16.mxu0 0
      %4476 = vmatpush1.bf16.msra.mxu0 %v4453
      %4477 = vmatprep.subr.bf16.mxu0 0
      %4478 = vmatpush1.bf16.msra.mxu0 %v4454
      %4479 = vmatprep.subr.bf16.mxu0 0
      %4480 = vmatpush1.bf16.msra.mxu0 0
      %4481 = vmatprep.subr.bf16.mxu0 0
      %4482 = vmatpush1.bf16.msra.mxu0 0
      %4483 = vmatprep.subr.bf16.mxu0 0
      %4484 = vmatpush1.bf16.msra.mxu0 0
      %4485 = vmatprep.subr.bf16.mxu0 0
      %4486 = vmatpush1.bf16.msra.mxu0 0
      %4487 = vmatprep.subr.bf16.mxu0 0
      %4488 = vmatpush1.bf16.msra.mxu0 0
      %4489 = vmatprep.subr.bf16.mxu0 0
      %4490 = vmatpush1.bf16.msra.mxu0 0
      %4491 = vmatprep.subr.bf16.mxu0 0
      %4492 = vmatpush1.bf16.msra.mxu0 0
      %4493 = vmatprep.subr.bf16.mxu0 0
      %4494 = vmatpush1.bf16.msra.mxu0 0
      %4495 = vmatprep.mubr.bf16.mxu0 0
      %4496 = vmatmul.mubr.bf16.gmra.mrb[0].mxu0 %v4413
      %v4497 = vpop.f32.mrb[0].mxu0
      %v4498 = vadd.f32 0.0, %v4497
      %v4499 = vpop.f32.mrb[0].mxu0
      %v4500 = vpop.f32.mrb[0].mxu0
      %v4501 = vpop.f32.mrb[0].mxu0
      %4502 = vdwg.mxu0
      %v4503 = vadd.f32 %v4381, %v4498
      %s4504 = scalar_lea.vmem %s5, 448
      %v4505 = vld [vmem:[%s4504] sm:$0xf]
      %v4506 = vld [vmem:[%s4504 + $0x4] sm:$0xf]
      %v4507 = vld [vmem:[%s4504 + $0x8] sm:$0xf]
      %v4508 = vld [vmem:[%s4504 + $0xc] sm:$0xf]
      %v4509 = vld [vmem:[%s4504 + $0x10] sm:$0xf]
      %v4510 = vld [vmem:[%s4504 + $0x14] sm:$0xf]
      %v4511 = vld [vmem:[%s4504 + $0x18] sm:$0xf]
      %v4512 = vld [vmem:[%s4504 + $0x1c] sm:$0xf]
      %v4513 = vld [vmem:[%s4504 + $0x20] sm:$0xf]
      %v4514 = vld [vmem:[%s4504 + $0x24] sm:$0xf]
      %v4515 = vld [vmem:[%s4504 + $0x28] sm:$0xf]
      %v4516 = vld [vmem:[%s4504 + $0x2c] sm:$0xf]
      %v4517 = vld [vmem:[%s4504 + $0x30] sm:$0xf]
      %v4518 = vld [vmem:[%s4504 + $0x34] sm:$0xf]
      %v4519 = vld [vmem:[%s4504 + $0x38] sm:$0xf]
      %v4520 = vld [vmem:[%s4504 + $0x3c] sm:$0xf]
      %v4521 = vrot.slane %v4147, 6
      %v4522 = vrot.slane %v4148, 5
      %v4523 = vsel %vm3653, %v4522, %v4521
      %v4524 = vrot.slane %v4149, 4
      %v4525 = vsel %vm3656, %v4524, %v4523
      %v4526 = vrot.slane %v4150, 3
      %v4527 = vsel %vm3659, %v4526, %v4525
      %v4528 = vrot.slane %v4151, 2
      %v4529 = vsel %vm3662, %v4528, %v4527
      %v4530 = vrot.slane %v4152, 1
      %v4531 = vsel %vm3665, %v4530, %v4529
      %v4532 = vsel %vm3668, %v4153, %v4531
      %v4533 = vrot.slane %v4154, 7
      %v4534 = vsel %vm3671, %v4533, %v4532
      %v4535 = vpack.c.b16 %v4534, %v4534
      %v4553 = vunpack.c.l.b16 %v4505
      %v4554 = vunpack.c.l.b16 %v4506
      %v4555 = vunpack.c.l.b16 %v4507
      %v4556 = vunpack.c.l.b16 %v4508
      %v4557 = vunpack.c.l.b16 %v4509
      %v4558 = vunpack.c.l.b16 %v4510
      %v4559 = vunpack.c.l.b16 %v4511
      %v4560 = vunpack.c.l.b16 %v4512
      %v4561 = vunpack.c.l.b16 %v4513
      %v4562 = vunpack.c.l.b16 %v4514
      %v4563 = vunpack.c.l.b16 %v4515
      %v4564 = vunpack.c.l.b16 %v4516
      %v4565 = vunpack.c.l.b16 %v4517
      %v4566 = vunpack.c.l.b16 %v4518
      %v4567 = vunpack.c.l.b16 %v4519
      %v4568 = vunpack.c.l.b16 %v4520
      %v4569 = vpack.c.b16 %v4554, %v4553
      %v4570 = vpack.c.b16 %v4556, %v4555
      %v4571 = vpack.c.b16 %v4558, %v4557
      %v4572 = vpack.c.b16 %v4560, %v4559
      %v4573 = vpack.c.b16 %v4562, %v4561
      %v4574 = vpack.c.b16 %v4564, %v4563
      %v4575 = vpack.c.b16 %v4566, %v4565
      %v4576 = vpack.c.b16 %v4568, %v4567
      %4585 = vmatprep.subr.bf16.mxu0 0
      %4586 = vmatpush1.bf16.msra.mxu0 %v4569
      %4587 = vmatprep.subr.bf16.mxu0 0
      %4588 = vmatpush1.bf16.msra.mxu0 %v4570
      %4589 = vmatprep.subr.bf16.mxu0 0
      %4590 = vmatpush1.bf16.msra.mxu0 %v4571
      %4591 = vmatprep.subr.bf16.mxu0 0
      %4592 = vmatpush1.bf16.msra.mxu0 %v4572
      %4593 = vmatprep.subr.bf16.mxu0 0
      %4594 = vmatpush1.bf16.msra.mxu0 %v4573
      %4595 = vmatprep.subr.bf16.mxu0 0
      %4596 = vmatpush1.bf16.msra.mxu0 %v4574
      %4597 = vmatprep.subr.bf16.mxu0 0
      %4598 = vmatpush1.bf16.msra.mxu0 %v4575
      %4599 = vmatprep.subr.bf16.mxu0 0
      %4600 = vmatpush1.bf16.msra.mxu0 %v4576
      %4601 = vmatprep.subr.bf16.mxu0 0
      %4602 = vmatpush1.bf16.msra.mxu0 0
      %4603 = vmatprep.subr.bf16.mxu0 0
      %4604 = vmatpush1.bf16.msra.mxu0 0
      %4605 = vmatprep.subr.bf16.mxu0 0
      %4606 = vmatpush1.bf16.msra.mxu0 0
      %4607 = vmatprep.subr.bf16.mxu0 0
      %4608 = vmatpush1.bf16.msra.mxu0 0
      %4609 = vmatprep.subr.bf16.mxu0 0
      %4610 = vmatpush1.bf16.msra.mxu0 0
      %4611 = vmatprep.subr.bf16.mxu0 0
      %4612 = vmatpush1.bf16.msra.mxu0 0
      %4613 = vmatprep.subr.bf16.mxu0 0
      %4614 = vmatpush1.bf16.msra.mxu0 0
      %4615 = vmatprep.subr.bf16.mxu0 0
      %4616 = vmatpush1.bf16.msra.mxu0 0
      %4617 = vmatprep.mubr.bf16.mxu0 0
      %4618 = vmatmul.mubr.bf16.gmra.mrb[0].mxu0 %v4535
      %v4619 = vpop.f32.mrb[0].mxu0
      %v4620 = vadd.f32 0.0, %v4619
      %v4621 = vpop.f32.mrb[0].mxu0
      %v4622 = vpop.f32.mrb[0].mxu0
      %v4623 = vpop.f32.mrb[0].mxu0
      %4624 = vdwg.mxu0
      %v4625 = vadd.f32 %v4503, %v4620
      %v4626 = vmax.f32 %v4625, 0.0
      %v4627 = vpack.c.bf16 %v4626, %v4626
      %v4628 = vld [vmem:[%s7] sm:$0xf]
      %v4629 = vld [vmem:[%s7 + $0x4] sm:$0xf]
      %v4630 = vld [vmem:[%s7 + $0x8] sm:$0xf]
      %v4631 = vld [vmem:[%s7 + $0xc] sm:$0xf]
      %v4632 = vld [vmem:[%s7 + $0x10] sm:$0xf]
      %v4633 = vld [vmem:[%s7 + $0x14] sm:$0xf]
      %v4634 = vld [vmem:[%s7 + $0x18] sm:$0xf]
      %v4635 = vld [vmem:[%s7 + $0x1c] sm:$0xf]
      %v4636 = vld [vmem:[%s7 + $0x20] sm:$0xf]
      %v4637 = vld [vmem:[%s7 + $0x24] sm:$0xf]
      %v4638 = vld [vmem:[%s7 + $0x28] sm:$0xf]
      %v4639 = vld [vmem:[%s7 + $0x2c] sm:$0xf]
      %v4640 = vld [vmem:[%s7 + $0x30] sm:$0x3]
      %v4641 = vld [vmem:[%s8] sm:$0x1]
      %v4642 = vlaneseq
      %v4643 = vshrl.u32 %v4642, 7
      %v4644 = vsub.s32 0, %v4643
      %v4645 = vrot.slane %v4641, %v4644
      %v4659 = vunpack.c.l.b16 %v4628
      %v4660 = vunpack.c.l.b16 %v4629
      %v4661 = vunpack.c.l.b16 %v4630
      %v4662 = vunpack.c.l.b16 %v4631
      %v4663 = vunpack.c.l.b16 %v4632
      %v4664 = vunpack.c.l.b16 %v4633
      %v4665 = vunpack.c.l.b16 %v4634
      %v4666 = vunpack.c.l.b16 %v4635
      %v4667 = vunpack.c.l.b16 %v4636
      %v4668 = vunpack.c.l.b16 %v4637
      %v4669 = vunpack.c.l.b16 %v4638
      %v4670 = vunpack.c.l.b16 %v4639
      %v4671 = vunpack.c.l.b16 %v4640
      %v4672 = vpack.c.b16 %v4660, %v4659
      %v4673 = vpack.c.b16 %v4662, %v4661
      %v4674 = vpack.c.b16 %v4664, %v4663
      %v4675 = vpack.c.b16 %v4666, %v4665
      %v4676 = vpack.c.b16 %v4668, %v4667
      %v4677 = vpack.c.b16 %v4670, %v4669
      %v4678 = vpack.c.b16 %v4671, %v4671
      %vm4685 = vcmask 818176
      %v4687 = vsel %vm4685, %v4627, 0
      %vm4689 = vcmask 1041408
      %v4691 = vsel %vm4689, %v4678, 0
      %4693 = vmatprep.subr.bf16.mxu0 0
      %4694 = vmatpush1.bf16.msra.mxu0 %v4672
      %4695 = vmatprep.subr.bf16.mxu0 0
      %4696 = vmatpush1.bf16.msra.mxu0 %v4673
      %4697 = vmatprep.subr.bf16.mxu0 0
      %4698 = vmatpush1.bf16.msra.mxu0 %v4674
      %4699 = vmatprep.subr.bf16.mxu0 0
      %4700 = vmatpush1.bf16.msra.mxu0 %v4675
      %4701 = vmatprep.subr.bf16.mxu0 0
      %4702 = vmatpush1.bf16.msra.mxu0 %v4676
      %4703 = vmatprep.subr.bf16.mxu0 0
      %4704 = vmatpush1.bf16.msra.mxu0 %v4677
      %4705 = vmatprep.subr.bf16.mxu0 0
      %4706 = vmatpush1.bf16.msra.mxu0 %v4691
      %4707 = vmatprep.subr.bf16.mxu0 0
      %4708 = vmatpush1.bf16.msra.mxu0 0
      %4709 = vmatprep.subr.bf16.mxu0 0
      %4710 = vmatpush1.bf16.msra.mxu0 0
      %4711 = vmatprep.subr.bf16.mxu0 0
      %4712 = vmatpush1.bf16.msra.mxu0 0
      %4713 = vmatprep.subr.bf16.mxu0 0
      %4714 = vmatpush1.bf16.msra.mxu0 0
      %4715 = vmatprep.subr.bf16.mxu0 0
      %4716 = vmatpush1.bf16.msra.mxu0 0
      %4717 = vmatprep.subr.bf16.mxu0 0
      %4718 = vmatpush1.bf16.msra.mxu0 0
      %4719 = vmatprep.subr.bf16.mxu0 0
      %4720 = vmatpush1.bf16.msra.mxu0 0
      %4721 = vmatprep.subr.bf16.mxu0 0
      %4722 = vmatpush1.bf16.msra.mxu0 0
      %4723 = vmatprep.subr.bf16.mxu0 0
      %4724 = vmatpush1.bf16.msra.mxu0 0
      %4725 = vmatprep.mubr.bf16.mxu0 0
      %4726 = vmatmul.mubr.bf16.gmra.mrb[0].mxu0 %v4687
      %v4727 = vpop.f32.mrb[0].mxu0
      %v4728 = vadd.f32 %v4645, %v4727
      %v4729 = vpop.f32.mrb[0].mxu0
      %v4730 = vpop.f32.mrb[0].mxu0
      %v4731 = vpop.f32.mrb[0].mxu0
      %4732 = vdwg.mxu0
      %v4733 = vmax.f32 %v4728, 0.0
      %v4734 = vpack.c.bf16 %v4733, %v4733
      %v4737 = vunpack.c.l.s4 1966171168
      %v4738 = vunpack.c.0.s8 %v4737
      %v4739 = vlaneseq
      %v4740 = vshrl.u32 %v4739, 7
      %v4741 = vsub.s32 %v4738, %v4740
      %v4742 = vrot.slane %v4734, %v4741
      %v4743 = vcombine.high %v4742, %v4742
      %v4745 = vunpack.c.l.s4 1966171168
      %v4746 = vunpack.c.0.s8 %v4745
      %v4747 = vlaneseq
      %v4748 = vshrl.u32 %v4747, 7
      %v4749 = vsub.s32 %v4746, %v4748
      %v4750 = vrot.slane %v4742, %v4749
      %v4752 = vunpack.c.l.s4 1966171168
      %v4753 = vunpack.c.0.s8 %v4752
      %v4754 = vlaneseq
      %v4755 = vshrl.u32 %v4754, 7
      %v4756 = vsub.s32 %v4753, %v4755
      %v4757 = vrot.slane %v4743, %v4756
      %v4758 = vcombine.high %v4750, %v4750
      %v4759 = vcombine.high %v4757, %v4757
      %v4760 = vunpack.i.l.s16 %v4750
      %v4761 = vunpack.i.h.s16 %v4750
      %v4762 = vunpack.i.l.s16 %v4757
      %v4763 = vunpack.i.h.s16 %v4757
      %v4764 = vunpack.i.l.s16 %v4758
      %v4765 = vunpack.i.h.s16 %v4758
      %v4766 = vunpack.i.l.s16 %v4759
      %v4767 = vunpack.i.h.s16 %v4759
      %v4768 = vpack.i.b16 %v4760, %v4760
      %v4769 = vpack.i.b16 %v4761, %v4761
      %v4770 = vpack.i.b16 %v4762, %v4762
      %v4771 = vpack.i.b16 %v4763, %v4763
      %v4772 = vpack.i.b16 %v4764, %v4764
      %v4773 = vpack.i.b16 %v4765, %v4765
      %v4774 = vpack.i.b16 %v4766, %v4766
      %v4775 = vpack.i.b16 %v4767, %v4767
      %v4777 = vunpack.c.l.s4 286326784
      %v4778 = vunpack.c.0.s8 %v4777
      %v4779 = vlaneseq
      %v4780 = vshrl.u32 %v4779, 7
      %v4781 = vsub.s32 %v4778, %v4780
      %v4782 = vrot.slane %v4768, %v4781
      %v4784 = vunpack.c.l.s4 286326784
      %v4785 = vunpack.c.0.s8 %v4784
      %v4786 = vlaneseq
      %v4787 = vshrl.u32 %v4786, 7
      %v4788 = vsub.s32 %v4785, %v4787
      %v4789 = vrot.slane %v4769, %v4788
      %v4791 = vunpack.c.l.s4 286326784
      %v4792 = vunpack.c.0.s8 %v4791
      %v4793 = vlaneseq
      %v4794 = vshrl.u32 %v4793, 7
      %v4795 = vsub.s32 %v4792, %v4794
      %v4796 = vrot.slane %v4770, %v4795
      %v4798 = vunpack.c.l.s4 286326784
      %v4799 = vunpack.c.0.s8 %v4798
      %v4800 = vlaneseq
      %v4801 = vshrl.u32 %v4800, 7
      %v4802 = vsub.s32 %v4799, %v4801
      %v4803 = vrot.slane %v4771, %v4802
      %v4805 = vunpack.c.l.s4 286326784
      %v4806 = vunpack.c.0.s8 %v4805
      %v4807 = vlaneseq
      %v4808 = vshrl.u32 %v4807, 7
      %v4809 = vsub.s32 %v4806, %v4808
      %v4810 = vrot.slane %v4772, %v4809
      %v4812 = vunpack.c.l.s4 286326784
      %v4813 = vunpack.c.0.s8 %v4812
      %v4814 = vlaneseq
      %v4815 = vshrl.u32 %v4814, 7
      %v4816 = vsub.s32 %v4813, %v4815
      %v4817 = vrot.slane %v4773, %v4816
      %v4819 = vunpack.c.l.s4 286326784
      %v4820 = vunpack.c.0.s8 %v4819
      %v4821 = vlaneseq
      %v4822 = vshrl.u32 %v4821, 7
      %v4823 = vsub.s32 %v4820, %v4822
      %v4824 = vrot.slane %v4774, %v4823
      %v4826 = vunpack.c.l.s4 286326784
      %v4827 = vunpack.c.0.s8 %v4826
      %v4828 = vlaneseq
      %v4829 = vshrl.u32 %v4828, 7
      %v4830 = vsub.s32 %v4827, %v4829
      %v4831 = vrot.slane %v4775, %v4830
      %v4840 = vld [vmem:[#allocation4] sm:$0x1]
      %v4841 = vsel %vm587, %v4782, %v4840
      %4842 = vst [vmem:[#allocation4] sm:$0x1] %v4841
      %v4843 = vld [vmem:[#allocation4 + $0xc] sm:$0x1]
      %v4844 = vsel %vm587, %v4789, %v4843
      %4845 = vst [vmem:[#allocation4 + $0xc] sm:$0x1] %v4844
      %v4846 = vld [vmem:[#allocation4 + $0x18] sm:$0x1]
      %v4847 = vsel %vm587, %v4796, %v4846
      %4848 = vst [vmem:[#allocation4 + $0x18] sm:$0x1] %v4847
      %v4849 = vld [vmem:[#allocation4 + $0x24] sm:$0x1]
      %v4850 = vsel %vm587, %v4803, %v4849
      %4851 = vst [vmem:[#allocation4 + $0x24] sm:$0x1] %v4850
      %v4852 = vld [vmem:[#allocation4 + $0x30] sm:$0x1]
      %v4853 = vsel %vm587, %v4810, %v4852
      %4854 = vst [vmem:[#allocation4 + $0x30] sm:$0x1] %v4853
      %v4855 = vld [vmem:[#allocation4 + $0x3c] sm:$0x1]
      %v4856 = vsel %vm587, %v4817, %v4855
      %4857 = vst [vmem:[#allocation4 + $0x3c] sm:$0x1] %v4856
      %v4858 = vld [vmem:[#allocation4 + $0x48] sm:$0x1]
      %v4859 = vsel %vm587, %v4824, %v4858
      %4860 = vst [vmem:[#allocation4 + $0x48] sm:$0x1] %v4859
      %v4861 = vld [vmem:[#allocation4 + $0x54] sm:$0x1]
      %v4862 = vsel %vm587, %v4831, %v4861
      %4863 = vst [vmem:[#allocation4 + $0x54] sm:$0x1] %v4862
      %s4864 = scalar_lea.vmem %s7, 52
      %v4865 = vld [vmem:[%s4864] sm:$0xf]
      %v4866 = vld [vmem:[%s4864 + $0x4] sm:$0xf]
      %v4867 = vld [vmem:[%s4864 + $0x8] sm:$0xf]
      %v4868 = vld [vmem:[%s4864 + $0xc] sm:$0xf]
      %v4869 = vld [vmem:[%s4864 + $0x10] sm:$0xf]
      %v4870 = vld [vmem:[%s4864 + $0x14] sm:$0xf]
      %v4871 = vld [vmem:[%s4864 + $0x18] sm:$0xf]
      %v4872 = vld [vmem:[%s4864 + $0x1c] sm:$0xf]
      %v4873 = vld [vmem:[%s4864 + $0x20] sm:$0xf]
      %v4874 = vld [vmem:[%s4864 + $0x24] sm:$0xf]
      %v4875 = vld [vmem:[%s4864 + $0x28] sm:$0xf]
      %v4876 = vld [vmem:[%s4864 + $0x2c] sm:$0xf]
      %v4877 = vld [vmem:[%s4864 + $0x30] sm:$0x3]
      %v4878 = vld [vmem:[%s8 + $0x1] sm:$0x1]
      %v4879 = vlaneseq
      %v4880 = vshrl.u32 %v4879, 7
      %v4881 = vsub.s32 0, %v4880
      %v4882 = vrot.slane %v4878, %v4881
      %v4896 = vunpack.c.l.b16 %v4865
      %v4897 = vunpack.c.l.b16 %v4866
      %v4898 = vunpack.c.l.b16 %v4867
      %v4899 = vunpack.c.l.b16 %v4868
      %v4900 = vunpack.c.l.b16 %v4869
      %v4901 = vunpack.c.l.b16 %v4870
      %v4902 = vunpack.c.l.b16 %v4871
      %v4903 = vunpack.c.l.b16 %v4872
      %v4904 = vunpack.c.l.b16 %v4873
      %v4905 = vunpack.c.l.b16 %v4874
      %v4906 = vunpack.c.l.b16 %v4875
      %v4907 = vunpack.c.l.b16 %v4876
      %v4908 = vunpack.c.l.b16 %v4877
      %v4909 = vpack.c.b16 %v4897, %v4896
      %v4910 = vpack.c.b16 %v4899, %v4898
      %v4911 = vpack.c.b16 %v4901, %v4900
      %v4912 = vpack.c.b16 %v4903, %v4902
      %v4913 = vpack.c.b16 %v4905, %v4904
      %v4914 = vpack.c.b16 %v4907, %v4906
      %v4915 = vpack.c.b16 %v4908, %v4908
      %v4923 = vsel %vm4689, %v4915, 0
      %4925 = vmatprep.subr.bf16.mxu0 0
      %4926 = vmatpush1.bf16.msra.mxu0 %v4909
      %4927 = vmatprep.subr.bf16.mxu0 0
      %4928 = vmatpush1.bf16.msra.mxu0 %v4910
      %4929 = vmatprep.subr.bf16.mxu0 0
      %4930 = vmatpush1.bf16.msra.mxu0 %v4911
      %4931 = vmatprep.subr.bf16.mxu0 0
      %4932 = vmatpush1.bf16.msra.mxu0 %v4912
      %4933 = vmatprep.subr.bf16.mxu0 0
      %4934 = vmatpush1.bf16.msra.mxu0 %v4913
      %4935 = vmatprep.subr.bf16.mxu0 0
      %4936 = vmatpush1.bf16.msra.mxu0 %v4914
      %4937 = vmatprep.subr.bf16.mxu0 0
      %4938 = vmatpush1.bf16.msra.mxu0 %v4923
      %4939 = vmatprep.subr.bf16.mxu0 0
      %4940 = vmatpush1.bf16.msra.mxu0 0
      %4941 = vmatprep.subr.bf16.mxu0 0
      %4942 = vmatpush1.bf16.msra.mxu0 0
      %4943 = vmatprep.subr.bf16.mxu0 0
      %4944 = vmatpush1.bf16.msra.mxu0 0
      %4945 = vmatprep.subr.bf16.mxu0 0
      %4946 = vmatpush1.bf16.msra.mxu0 0
      %4947 = vmatprep.subr.bf16.mxu0 0
      %4948 = vmatpush1.bf16.msra.mxu0 0
      %4949 = vmatprep.subr.bf16.mxu0 0
      %4950 = vmatpush1.bf16.msra.mxu0 0
      %4951 = vmatprep.subr.bf16.mxu0 0
      %4952 = vmatpush1.bf16.msra.mxu0 0
      %4953 = vmatprep.subr.bf16.mxu0 0
      %4954 = vmatpush1.bf16.msra.mxu0 0
      %4955 = vmatprep.subr.bf16.mxu0 0
      %4956 = vmatpush1.bf16.msra.mxu0 0
      %4957 = vmatprep.mubr.bf16.mxu0 0
      %4958 = vmatmul.mubr.bf16.gmra.mrb[0].mxu0 %v4687
      %v4959 = vpop.f32.mrb[0].mxu0
      %v4960 = vadd.f32 %v4882, %v4959
      %v4961 = vpop.f32.mrb[0].mxu0
      %v4962 = vpop.f32.mrb[0].mxu0
      %v4963 = vpop.f32.mrb[0].mxu0
      %4964 = vdwg.mxu0
      %v4965 = vmax.f32 %v4960, 0.0
      %v4966 = vpack.c.bf16 %v4965, %v4965
      %v4969 = vunpack.c.l.s4 1966171168
      %v4970 = vunpack.c.0.s8 %v4969
      %v4971 = vlaneseq
      %v4972 = vshrl.u32 %v4971, 7
      %v4973 = vsub.s32 %v4970, %v4972
      %v4974 = vrot.slane %v4966, %v4973
      %v4975 = vcombine.high %v4974, %v4974
      %v4977 = vunpack.c.l.s4 1966171168
      %v4978 = vunpack.c.0.s8 %v4977
      %v4979 = vlaneseq
      %v4980 = vshrl.u32 %v4979, 7
      %v4981 = vsub.s32 %v4978, %v4980
      %v4982 = vrot.slane %v4974, %v4981
      %v4984 = vunpack.c.l.s4 1966171168
      %v4985 = vunpack.c.0.s8 %v4984
      %v4986 = vlaneseq
      %v4987 = vshrl.u32 %v4986, 7
      %v4988 = vsub.s32 %v4985, %v4987
      %v4989 = vrot.slane %v4975, %v4988
      %v4990 = vcombine.high %v4982, %v4982
      %v4991 = vcombine.high %v4989, %v4989
      %v4992 = vunpack.i.l.s16 %v4982
      %v4993 = vunpack.i.h.s16 %v4982
      %v4994 = vunpack.i.l.s16 %v4989
      %v4995 = vunpack.i.h.s16 %v4989
      %v4996 = vunpack.i.l.s16 %v4990
      %v4997 = vunpack.i.h.s16 %v4990
      %v4998 = vunpack.i.l.s16 %v4991
      %v4999 = vunpack.i.h.s16 %v4991
      %v5000 = vpack.i.b16 %v4992, %v4992
      %v5001 = vpack.i.b16 %v4993, %v4993
      %v5002 = vpack.i.b16 %v4994, %v4994
      %v5003 = vpack.i.b16 %v4995, %v4995
      %v5004 = vpack.i.b16 %v4996, %v4996
      %v5005 = vpack.i.b16 %v4997, %v4997
      %v5006 = vpack.i.b16 %v4998, %v4998
      %v5007 = vpack.i.b16 %v4999, %v4999
      %v5009 = vunpack.c.l.s4 286326784
      %v5010 = vunpack.c.0.s8 %v5009
      %v5011 = vlaneseq
      %v5012 = vshrl.u32 %v5011, 7
      %v5013 = vsub.s32 %v5010, %v5012
      %v5014 = vrot.slane %v5000, %v5013
      %v5016 = vunpack.c.l.s4 286326784
      %v5017 = vunpack.c.0.s8 %v5016
      %v5018 = vlaneseq
      %v5019 = vshrl.u32 %v5018, 7
      %v5020 = vsub.s32 %v5017, %v5019
      %v5021 = vrot.slane %v5001, %v5020
      %v5023 = vunpack.c.l.s4 286326784
      %v5024 = vunpack.c.0.s8 %v5023
      %v5025 = vlaneseq
      %v5026 = vshrl.u32 %v5025, 7
      %v5027 = vsub.s32 %v5024, %v5026
      %v5028 = vrot.slane %v5002, %v5027
      %v5030 = vunpack.c.l.s4 286326784
      %v5031 = vunpack.c.0.s8 %v5030
      %v5032 = vlaneseq
      %v5033 = vshrl.u32 %v5032, 7
      %v5034 = vsub.s32 %v5031, %v5033
      %v5035 = vrot.slane %v5003, %v5034
      %v5037 = vunpack.c.l.s4 286326784
      %v5038 = vunpack.c.0.s8 %v5037
      %v5039 = vlaneseq
      %v5040 = vshrl.u32 %v5039, 7
      %v5041 = vsub.s32 %v5038, %v5040
      %v5042 = vrot.slane %v5004, %v5041
      %v5044 = vunpack.c.l.s4 286326784
      %v5045 = vunpack.c.0.s8 %v5044
      %v5046 = vlaneseq
      %v5047 = vshrl.u32 %v5046, 7
      %v5048 = vsub.s32 %v5045, %v5047
      %v5049 = vrot.slane %v5005, %v5048
      %v5051 = vunpack.c.l.s4 286326784
      %v5052 = vunpack.c.0.s8 %v5051
      %v5053 = vlaneseq
      %v5054 = vshrl.u32 %v5053, 7
      %v5055 = vsub.s32 %v5052, %v5054
      %v5056 = vrot.slane %v5006, %v5055
      %v5058 = vunpack.c.l.s4 286326784
      %v5059 = vunpack.c.0.s8 %v5058
      %v5060 = vlaneseq
      %v5061 = vshrl.u32 %v5060, 7
      %v5062 = vsub.s32 %v5059, %v5061
      %v5063 = vrot.slane %v5007, %v5062
      %vm5072 = vcmask 1041409
      %vm5073 = vsmask.f32 7942
      %vm5074 = vmand %vm5072, %vm5073
      %v5075 = vld [vmem:[#allocation4] sm:$0x2]
      %v5076 = vsel %vm5074, %v5014, %v5075
      %5077 = vst [vmem:[#allocation4] sm:$0x2] %v5076
      %v5078 = vld [vmem:[#allocation4 + $0xc] sm:$0x2]
      %v5079 = vsel %vm5074, %v5021, %v5078
      %5080 = vst [vmem:[#allocation4 + $0xc] sm:$0x2] %v5079
      %v5081 = vld [vmem:[#allocation4 + $0x18] sm:$0x2]
      %v5082 = vsel %vm5074, %v5028, %v5081
      %5083 = vst [vmem:[#allocation4 + $0x18] sm:$0x2] %v5082
      %v5084 = vld [vmem:[#allocation4 + $0x24] sm:$0x2]
      %v5085 = vsel %vm5074, %v5035, %v5084
      %5086 = vst [vmem:[#allocation4 + $0x24] sm:$0x2] %v5085
      %v5087 = vld [vmem:[#allocation4 + $0x30] sm:$0x2]
      %v5088 = vsel %vm5074, %v5042, %v5087
      %5089 = vst [vmem:[#allocation4 + $0x30] sm:$0x2] %v5088
      %v5090 = vld [vmem:[#allocation4 + $0x3c] sm:$0x2]
      %v5091 = vsel %vm5074, %v5049, %v5090
      %5092 = vst [vmem:[#allocation4 + $0x3c] sm:$0x2] %v5091
      %v5093 = vld [vmem:[#allocation4 + $0x48] sm:$0x2]
      %v5094 = vsel %vm5074, %v5056, %v5093
      %5095 = vst [vmem:[#allocation4 + $0x48] sm:$0x2] %v5094
      %v5096 = vld [vmem:[#allocation4 + $0x54] sm:$0x2]
      %v5097 = vsel %vm5074, %v5063, %v5096
      %5098 = vst [vmem:[#allocation4 + $0x54] sm:$0x2] %v5097
      %s5099 = scalar_lea.vmem %s7, 104
      %v5100 = vld [vmem:[%s5099] sm:$0xf]
      %v5101 = vld [vmem:[%s5099 + $0x4] sm:$0xf]
      %v5102 = vld [vmem:[%s5099 + $0x8] sm:$0xf]
      %v5103 = vld [vmem:[%s5099 + $0xc] sm:$0xf]
      %v5104 = vld [vmem:[%s5099 + $0x10] sm:$0xf]
      %v5105 = vld [vmem:[%s5099 + $0x14] sm:$0xf]
      %v5106 = vld [vmem:[%s5099 + $0x18] sm:$0xf]
      %v5107 = vld [vmem:[%s5099 + $0x1c] sm:$0xf]
      %v5108 = vld [vmem:[%s5099 + $0x20] sm:$0xf]
      %v5109 = vld [vmem:[%s5099 + $0x24] sm:$0xf]
      %v5110 = vld [vmem:[%s5099 + $0x28] sm:$0xf]
      %v5111 = vld [vmem:[%s5099 + $0x2c] sm:$0xf]
      %v5112 = vld [vmem:[%s5099 + $0x30] sm:$0x3]
      %v5113 = vld [vmem:[%s8 + $0x2] sm:$0x1]
      %v5114 = vlaneseq
      %v5115 = vshrl.u32 %v5114, 7
      %v5116 = vsub.s32 0, %v5115
      %v5117 = vrot.slane %v5113, %v5116
      %v5131 = vunpack.c.l.b16 %v5100
      %v5132 = vunpack.c.l.b16 %v5101
      %v5133 = vunpack.c.l.b16 %v5102
      %v5134 = vunpack.c.l.b16 %v5103
      %v5135 = vunpack.c.l.b16 %v5104
      %v5136 = vunpack.c.l.b16 %v5105
      %v5137 = vunpack.c.l.b16 %v5106
      %v5138 = vunpack.c.l.b16 %v5107
      %v5139 = vunpack.c.l.b16 %v5108
      %v5140 = vunpack.c.l.b16 %v5109
      %v5141 = vunpack.c.l.b16 %v5110
      %v5142 = vunpack.c.l.b16 %v5111
      %v5143 = vunpack.c.l.b16 %v5112
      %v5144 = vpack.c.b16 %v5132, %v5131
      %v5145 = vpack.c.b16 %v5134, %v5133
      %v5146 = vpack.c.b16 %v5136, %v5135
      %v5147 = vpack.c.b16 %v5138, %v5137
      %v5148 = vpack.c.b16 %v5140, %v5139
      %v5149 = vpack.c.b16 %v5142, %v5141
      %v5150 = vpack.c.b16 %v5143, %v5143
      %v5158 = vsel %vm4689, %v5150, 0
      %5160 = vmatprep.subr.bf16.mxu0 0
      %5161 = vmatpush1.bf16.msra.mxu0 %v5144
      %5162 = vmatprep.subr.bf16.mxu0 0
      %5163 = vmatpush1.bf16.msra.mxu0 %v5145
      %5164 = vmatprep.subr.bf16.mxu0 0
      %5165 = vmatpush1.bf16.msra.mxu0 %v5146
      %5166 = vmatprep.subr.bf16.mxu0 0
      %5167 = vmatpush1.bf16.msra.mxu0 %v5147
      %5168 = vmatprep.subr.bf16.mxu0 0
      %5169 = vmatpush1.bf16.msra.mxu0 %v5148
      %5170 = vmatprep.subr.bf16.mxu0 0
      %5171 = vmatpush1.bf16.msra.mxu0 %v5149
      %5172 = vmatprep.subr.bf16.mxu0 0
      %5173 = vmatpush1.bf16.msra.mxu0 %v5158
      %5174 = vmatprep.subr.bf16.mxu0 0
      %5175 = vmatpush1.bf16.msra.mxu0 0
      %5176 = vmatprep.subr.bf16.mxu0 0
      %5177 = vmatpush1.bf16.msra.mxu0 0
      %5178 = vmatprep.subr.bf16.mxu0 0
      %5179 = vmatpush1.bf16.msra.mxu0 0
      %5180 = vmatprep.subr.bf16.mxu0 0
      %5181 = vmatpush1.bf16.msra.mxu0 0
      %5182 = vmatprep.subr.bf16.mxu0 0
      %5183 = vmatpush1.bf16.msra.mxu0 0
      %5184 = vmatprep.subr.bf16.mxu0 0
      %5185 = vmatpush1.bf16.msra.mxu0 0
      %5186 = vmatprep.subr.bf16.mxu0 0
      %5187 = vmatpush1.bf16.msra.mxu0 0
      %5188 = vmatprep.subr.bf16.mxu0 0
      %5189 = vmatpush1.bf16.msra.mxu0 0
      %5190 = vmatprep.subr.bf16.mxu0 0
      %5191 = vmatpush1.bf16.msra.mxu0 0
      %5192 = vmatprep.mubr.bf16.mxu0 0
      %5193 = vmatmul.mubr.bf16.gmra.mrb[0].mxu0 %v4687
      %v5194 = vpop.f32.mrb[0].mxu0
      %v5195 = vadd.f32 %v5117, %v5194
      %v5196 = vpop.f32.mrb[0].mxu0
      %v5197 = vpop.f32.mrb[0].mxu0
      %v5198 = vpop.f32.mrb[0].mxu0
      %5199 = vdwg.mxu0
      %v5200 = vmax.f32 %v5195, 0.0
      %v5201 = vpack.c.bf16 %v5200, %v5200
      %v5204 = vunpack.c.l.s4 1966171168
      %v5205 = vunpack.c.0.s8 %v5204
      %v5206 = vlaneseq
      %v5207 = vshrl.u32 %v5206, 7
      %v5208 = vsub.s32 %v5205, %v5207
      %v5209 = vrot.slane %v5201, %v5208
      %v5210 = vcombine.high %v5209, %v5209
      %v5212 = vunpack.c.l.s4 1966171168
      %v5213 = vunpack.c.0.s8 %v5212
      %v5214 = vlaneseq
      %v5215 = vshrl.u32 %v5214, 7
      %v5216 = vsub.s32 %v5213, %v5215
      %v5217 = vrot.slane %v5209, %v5216
      %v5219 = vunpack.c.l.s4 1966171168
      %v5220 = vunpack.c.0.s8 %v5219
      %v5221 = vlaneseq
      %v5222 = vshrl.u32 %v5221, 7
      %v5223 = vsub.s32 %v5220, %v5222
      %v5224 = vrot.slane %v5210, %v5223
      %v5225 = vcombine.high %v5217, %v5217
      %v5226 = vcombine.high %v5224, %v5224
      %v5227 = vunpack.i.l.s16 %v5217
      %v5228 = vunpack.i.h.s16 %v5217
      %v5229 = vunpack.i.l.s16 %v5224
      %v5230 = vunpack.i.h.s16 %v5224
      %v5231 = vunpack.i.l.s16 %v5225
      %v5232 = vunpack.i.h.s16 %v5225
      %v5233 = vunpack.i.l.s16 %v5226
      %v5234 = vunpack.i.h.s16 %v5226
      %v5235 = vpack.i.b16 %v5227, %v5227
      %v5236 = vpack.i.b16 %v5228, %v5228
      %v5237 = vpack.i.b16 %v5229, %v5229
      %v5238 = vpack.i.b16 %v5230, %v5230
      %v5239 = vpack.i.b16 %v5231, %v5231
      %v5240 = vpack.i.b16 %v5232, %v5232
      %v5241 = vpack.i.b16 %v5233, %v5233
      %v5242 = vpack.i.b16 %v5234, %v5234
      %v5244 = vunpack.c.l.s4 286326784
      %v5245 = vunpack.c.0.s8 %v5244
      %v5246 = vlaneseq
      %v5247 = vshrl.u32 %v5246, 7
      %v5248 = vsub.s32 %v5245, %v5247
      %v5249 = vrot.slane %v5235, %v5248
      %v5251 = vunpack.c.l.s4 286326784
      %v5252 = vunpack.c.0.s8 %v5251
      %v5253 = vlaneseq
      %v5254 = vshrl.u32 %v5253, 7
      %v5255 = vsub.s32 %v5252, %v5254
      %v5256 = vrot.slane %v5236, %v5255
      %v5258 = vunpack.c.l.s4 286326784
      %v5259 = vunpack.c.0.s8 %v5258
      %v5260 = vlaneseq
      %v5261 = vshrl.u32 %v5260, 7
      %v5262 = vsub.s32 %v5259, %v5261
      %v5263 = vrot.slane %v5237, %v5262
      %v5265 = vunpack.c.l.s4 286326784
      %v5266 = vunpack.c.0.s8 %v5265
      %v5267 = vlaneseq
      %v5268 = vshrl.u32 %v5267, 7
      %v5269 = vsub.s32 %v5266, %v5268
      %v5270 = vrot.slane %v5238, %v5269
      %v5272 = vunpack.c.l.s4 286326784
      %v5273 = vunpack.c.0.s8 %v5272
      %v5274 = vlaneseq
      %v5275 = vshrl.u32 %v5274, 7
      %v5276 = vsub.s32 %v5273, %v5275
      %v5277 = vrot.slane %v5239, %v5276
      %v5279 = vunpack.c.l.s4 286326784
      %v5280 = vunpack.c.0.s8 %v5279
      %v5281 = vlaneseq
      %v5282 = vshrl.u32 %v5281, 7
      %v5283 = vsub.s32 %v5280, %v5282
      %v5284 = vrot.slane %v5240, %v5283
      %v5286 = vunpack.c.l.s4 286326784
      %v5287 = vunpack.c.0.s8 %v5286
      %v5288 = vlaneseq
      %v5289 = vshrl.u32 %v5288, 7
      %v5290 = vsub.s32 %v5287, %v5289
      %v5291 = vrot.slane %v5241, %v5290
      %v5293 = vunpack.c.l.s4 286326784
      %v5294 = vunpack.c.0.s8 %v5293
      %v5295 = vlaneseq
      %v5296 = vshrl.u32 %v5295, 7
      %v5297 = vsub.s32 %v5294, %v5296
      %v5298 = vrot.slane %v5242, %v5297
      %vm5307 = vcmask 1042434
      %vm5308 = vsmask.f32 7946
      %vm5309 = vmand %vm5307, %vm5308
      %v5310 = vld [vmem:[#allocation4] sm:$0x4]
      %v5311 = vsel %vm5309, %v5249, %v5310
      %5312 = vst [vmem:[#allocation4] sm:$0x4] %v5311
      %v5313 = vld [vmem:[#allocation4 + $0xc] sm:$0x4]
      %v5314 = vsel %vm5309, %v5256, %v5313
      %5315 = vst [vmem:[#allocation4 + $0xc] sm:$0x4] %v5314
      %v5316 = vld [vmem:[#allocation4 + $0x18] sm:$0x4]
      %v5317 = vsel %vm5309, %v5263, %v5316
      %5318 = vst [vmem:[#allocation4 + $0x18] sm:$0x4] %v5317
      %v5319 = vld [vmem:[#allocation4 + $0x24] sm:$0x4]
      %v5320 = vsel %vm5309, %v5270, %v5319
      %5321 = vst [vmem:[#allocation4 + $0x24] sm:$0x4] %v5320
      %v5322 = vld [vmem:[#allocation4 + $0x30] sm:$0x4]
      %v5323 = vsel %vm5309, %v5277, %v5322
      %5324 = vst [vmem:[#allocation4 + $0x30] sm:$0x4] %v5323
      %v5325 = vld [vmem:[#allocation4 + $0x3c] sm:$0x4]
      %v5326 = vsel %vm5309, %v5284, %v5325
      %5327 = vst [vmem:[#allocation4 + $0x3c] sm:$0x4] %v5326
      %v5328 = vld [vmem:[#allocation4 + $0x48] sm:$0x4]
      %v5329 = vsel %vm5309, %v5291, %v5328
      %5330 = vst [vmem:[#allocation4 + $0x48] sm:$0x4] %v5329
      %v5331 = vld [vmem:[#allocation4 + $0x54] sm:$0x4]
      %v5332 = vsel %vm5309, %v5298, %v5331
      %5333 = vst [vmem:[#allocation4 + $0x54] sm:$0x4] %v5332
      %s5334 = scalar_lea.vmem %s7, 156
      %v5335 = vld [vmem:[%s5334] sm:$0xf]
      %v5336 = vld [vmem:[%s5334 + $0x4] sm:$0xf]
      %v5337 = vld [vmem:[%s5334 + $0x8] sm:$0xf]
      %v5338 = vld [vmem:[%s5334 + $0xc] sm:$0xf]
      %v5339 = vld [vmem:[%s5334 + $0x10] sm:$0xf]
      %v5340 = vld [vmem:[%s5334 + $0x14] sm:$0xf]
      %v5341 = vld [vmem:[%s5334 + $0x18] sm:$0xf]
      %v5342 = vld [vmem:[%s5334 + $0x1c] sm:$0xf]
      %v5343 = vld [vmem:[%s5334 + $0x20] sm:$0xf]
      %v5344 = vld [vmem:[%s5334 + $0x24] sm:$0xf]
      %v5345 = vld [vmem:[%s5334 + $0x28] sm:$0xf]
      %v5346 = vld [vmem:[%s5334 + $0x2c] sm:$0xf]
      %v5347 = vld [vmem:[%s5334 + $0x30] sm:$0x3]
      %v5348 = vld [vmem:[%s8 + $0x3] sm:$0x1]
      %v5349 = vlaneseq
      %v5350 = vshrl.u32 %v5349, 7
      %v5351 = vsub.s32 0, %v5350
      %v5352 = vrot.slane %v5348, %v5351
      %v5366 = vunpack.c.l.b16 %v5335
      %v5367 = vunpack.c.l.b16 %v5336
      %v5368 = vunpack.c.l.b16 %v5337
      %v5369 = vunpack.c.l.b16 %v5338
      %v5370 = vunpack.c.l.b16 %v5339
      %v5371 = vunpack.c.l.b16 %v5340
      %v5372 = vunpack.c.l.b16 %v5341
      %v5373 = vunpack.c.l.b16 %v5342
      %v5374 = vunpack.c.l.b16 %v5343
      %v5375 = vunpack.c.l.b16 %v5344
      %v5376 = vunpack.c.l.b16 %v5345
      %v5377 = vunpack.c.l.b16 %v5346
      %v5378 = vunpack.c.l.b16 %v5347
      %v5379 = vpack.c.b16 %v5367, %v5366
      %v5380 = vpack.c.b16 %v5369, %v5368
      %v5381 = vpack.c.b16 %v5371, %v5370
      %v5382 = vpack.c.b16 %v5373, %v5372
      %v5383 = vpack.c.b16 %v5375, %v5374
      %v5384 = vpack.c.b16 %v5377, %v5376
      %v5385 = vpack.c.b16 %v5378, %v5378
      %v5393 = vsel %vm4689, %v5385, 0
      %5395 = vmatprep.subr.bf16.mxu0 0
      %5396 = vmatpush1.bf16.msra.mxu0 %v5379
      %5397 = vmatprep.subr.bf16.mxu0 0
      %5398 = vmatpush1.bf16.msra.mxu0 %v5380
      %5399 = vmatprep.subr.bf16.mxu0 0
      %5400 = vmatpush1.bf16.msra.mxu0 %v5381
      %5401 = vmatprep.subr.bf16.mxu0 0
      %5402 = vmatpush1.bf16.msra.mxu0 %v5382
      %5403 = vmatprep.subr.bf16.mxu0 0
      %5404 = vmatpush1.bf16.msra.mxu0 %v5383
      %5405 = vmatprep.subr.bf16.mxu0 0
      %5406 = vmatpush1.bf16.msra.mxu0 %v5384
      %5407 = vmatprep.subr.bf16.mxu0 0
      %5408 = vmatpush1.bf16.msra.mxu0 %v5393
      %5409 = vmatprep.subr.bf16.mxu0 0
      %5410 = vmatpush1.bf16.msra.mxu0 0
      %5411 = vmatprep.subr.bf16.mxu0 0
      %5412 = vmatpush1.bf16.msra.mxu0 0
      %5413 = vmatprep.subr.bf16.mxu0 0
      %5414 = vmatpush1.bf16.msra.mxu0 0
      %5415 = vmatprep.subr.bf16.mxu0 0
      %5416 = vmatpush1.bf16.msra.mxu0 0
      %5417 = vmatprep.subr.bf16.mxu0 0
      %5418 = vmatpush1.bf16.msra.mxu0 0
      %5419 = vmatprep.subr.bf16.mxu0 0
      %5420 = vmatpush1.bf16.msra.mxu0 0
      %5421 = vmatprep.subr.bf16.mxu0 0
      %5422 = vmatpush1.bf16.msra.mxu0 0
      %5423 = vmatprep.subr.bf16.mxu0 0
      %5424 = vmatpush1.bf16.msra.mxu0 0
      %5425 = vmatprep.subr.bf16.mxu0 0
      %5426 = vmatpush1.bf16.msra.mxu0 0
      %5427 = vmatprep.mubr.bf16.mxu0 0
      %5428 = vmatmul.mubr.bf16.gmra.mrb[0].mxu0 %v4687
      %v5429 = vpop.f32.mrb[0].mxu0
      %v5430 = vadd.f32 %v5352, %v5429
      %v5431 = vpop.f32.mrb[0].mxu0
      %v5432 = vpop.f32.mrb[0].mxu0
      %v5433 = vpop.f32.mrb[0].mxu0
      %5434 = vdwg.mxu0
      %v5435 = vmax.f32 %v5430, 0.0
      %v5436 = vpack.c.bf16 %v5435, %v5435
      %v5439 = vunpack.c.l.s4 1966171168
      %v5440 = vunpack.c.0.s8 %v5439
      %v5441 = vlaneseq
      %v5442 = vshrl.u32 %v5441, 7
      %v5443 = vsub.s32 %v5440, %v5442
      %v5444 = vrot.slane %v5436, %v5443
      %v5445 = vcombine.high %v5444, %v5444
      %v5447 = vunpack.c.l.s4 1966171168
      %v5448 = vunpack.c.0.s8 %v5447
      %v5449 = vlaneseq
      %v5450 = vshrl.u32 %v5449, 7
      %v5451 = vsub.s32 %v5448, %v5450
      %v5452 = vrot.slane %v5444, %v5451
      %v5454 = vunpack.c.l.s4 1966171168
      %v5455 = vunpack.c.0.s8 %v5454
      %v5456 = vlaneseq
      %v5457 = vshrl.u32 %v5456, 7
      %v5458 = vsub.s32 %v5455, %v5457
      %v5459 = vrot.slane %v5445, %v5458
      %v5460 = vcombine.high %v5452, %v5452
      %v5461 = vcombine.high %v5459, %v5459
      %v5462 = vunpack.i.l.s16 %v5452
      %v5463 = vunpack.i.h.s16 %v5452
      %v5464 = vunpack.i.l.s16 %v5459
      %v5465 = vunpack.i.h.s16 %v5459
      %v5466 = vunpack.i.l.s16 %v5460
      %v5467 = vunpack.i.h.s16 %v5460
      %v5468 = vunpack.i.l.s16 %v5461
      %v5469 = vunpack.i.h.s16 %v5461
      %v5470 = vpack.i.b16 %v5462, %v5462
      %v5471 = vpack.i.b16 %v5463, %v5463
      %v5472 = vpack.i.b16 %v5464, %v5464
      %v5473 = vpack.i.b16 %v5465, %v5465
      %v5474 = vpack.i.b16 %v5466, %v5466
      %v5475 = vpack.i.b16 %v5467, %v5467
      %v5476 = vpack.i.b16 %v5468, %v5468
      %v5477 = vpack.i.b16 %v5469, %v5469
      %v5479 = vunpack.c.l.s4 286326784
      %v5480 = vunpack.c.0.s8 %v5479
      %v5481 = vlaneseq
      %v5482 = vshrl.u32 %v5481, 7
      %v5483 = vsub.s32 %v5480, %v5482
      %v5484 = vrot.slane %v5470, %v5483
      %v5486 = vunpack.c.l.s4 286326784
      %v5487 = vunpack.c.0.s8 %v5486
      %v5488 = vlaneseq
      %v5489 = vshrl.u32 %v5488, 7
      %v5490 = vsub.s32 %v5487, %v5489
      %v5491 = vrot.slane %v5471, %v5490
      %v5493 = vunpack.c.l.s4 286326784
      %v5494 = vunpack.c.0.s8 %v5493
      %v5495 = vlaneseq
      %v5496 = vshrl.u32 %v5495, 7
      %v5497 = vsub.s32 %v5494, %v5496
      %v5498 = vrot.slane %v5472, %v5497
      %v5500 = vunpack.c.l.s4 286326784
      %v5501 = vunpack.c.0.s8 %v5500
      %v5502 = vlaneseq
      %v5503 = vshrl.u32 %v5502, 7
      %v5504 = vsub.s32 %v5501, %v5503
      %v5505 = vrot.slane %v5473, %v5504
      %v5507 = vunpack.c.l.s4 286326784
      %v5508 = vunpack.c.0.s8 %v5507
      %v5509 = vlaneseq
      %v5510 = vshrl.u32 %v5509, 7
      %v5511 = vsub.s32 %v5508, %v5510
      %v5512 = vrot.slane %v5474, %v5511
      %v5514 = vunpack.c.l.s4 286326784
      %v5515 = vunpack.c.0.s8 %v5514
      %v5516 = vlaneseq
      %v5517 = vshrl.u32 %v5516, 7
      %v5518 = vsub.s32 %v5515, %v5517
      %v5519 = vrot.slane %v5475, %v5518
      %v5521 = vunpack.c.l.s4 286326784
      %v5522 = vunpack.c.0.s8 %v5521
      %v5523 = vlaneseq
      %v5524 = vshrl.u32 %v5523, 7
      %v5525 = vsub.s32 %v5522, %v5524
      %v5526 = vrot.slane %v5476, %v5525
      %v5528 = vunpack.c.l.s4 286326784
      %v5529 = vunpack.c.0.s8 %v5528
      %v5530 = vlaneseq
      %v5531 = vshrl.u32 %v5530, 7
      %v5532 = vsub.s32 %v5529, %v5531
      %v5533 = vrot.slane %v5477, %v5532
      %vm5542 = vcmask 1043459
      %vm5543 = vsmask.f32 7950
      %vm5544 = vmand %vm5542, %vm5543
      %v5545 = vld [vmem:[#allocation4] sm:$0x8]
      %v5546 = vsel %vm5544, %v5484, %v5545
      %5547 = vst [vmem:[#allocation4] sm:$0x8] %v5546
      %v5548 = vld [vmem:[#allocation4 + $0xc] sm:$0x8]
      %v5549 = vsel %vm5544, %v5491, %v5548
      %5550 = vst [vmem:[#allocation4 + $0xc] sm:$0x8] %v5549
      %v5551 = vld [vmem:[#allocation4 + $0x18] sm:$0x8]
      %v5552 = vsel %vm5544, %v5498, %v5551
      %5553 = vst [vmem:[#allocation4 + $0x18] sm:$0x8] %v5552
      %v5554 = vld [vmem:[#allocation4 + $0x24] sm:$0x8]
      %v5555 = vsel %vm5544, %v5505, %v5554
      %5556 = vst [vmem:[#allocation4 + $0x24] sm:$0x8] %v5555
      %v5557 = vld [vmem:[#allocation4 + $0x30] sm:$0x8]
      %v5558 = vsel %vm5544, %v5512, %v5557
      %5559 = vst [vmem:[#allocation4 + $0x30] sm:$0x8] %v5558
      %v5560 = vld [vmem:[#allocation4 + $0x3c] sm:$0x8]
      %v5561 = vsel %vm5544, %v5519, %v5560
      %5562 = vst [vmem:[#allocation4 + $0x3c] sm:$0x8] %v5561
      %v5563 = vld [vmem:[#allocation4 + $0x48] sm:$0x8]
      %v5564 = vsel %vm5544, %v5526, %v5563
      %5565 = vst [vmem:[#allocation4 + $0x48] sm:$0x8] %v5564
      %v5566 = vld [vmem:[#allocation4 + $0x54] sm:$0x8]
      %v5567 = vsel %vm5544, %v5533, %v5566
      %5568 = vst [vmem:[#allocation4 + $0x54] sm:$0x8] %v5567
      %s5569 = scalar_lea.vmem %s7, 208
      %v5570 = vld [vmem:[%s5569] sm:$0xf]
      %v5571 = vld [vmem:[%s5569 + $0x4] sm:$0xf]
      %v5572 = vld [vmem:[%s5569 + $0x8] sm:$0xf]
      %v5573 = vld [vmem:[%s5569 + $0xc] sm:$0xf]
      %v5574 = vld [vmem:[%s5569 + $0x10] sm:$0xf]
      %v5575 = vld [vmem:[%s5569 + $0x14] sm:$0xf]
      %v5576 = vld [vmem:[%s5569 + $0x18] sm:$0xf]
      %v5577 = vld [vmem:[%s5569 + $0x1c] sm:$0xf]
      %v5578 = vld [vmem:[%s5569 + $0x20] sm:$0xf]
      %v5579 = vld [vmem:[%s5569 + $0x24] sm:$0xf]
      %v5580 = vld [vmem:[%s5569 + $0x28] sm:$0xf]
      %v5581 = vld [vmem:[%s5569 + $0x2c] sm:$0xf]
      %v5582 = vld [vmem:[%s5569 + $0x30] sm:$0x3]
      %v5583 = vld [vmem:[%s8 + $0x4] sm:$0x1]
      %v5584 = vlaneseq
      %v5585 = vshrl.u32 %v5584, 7
      %v5586 = vsub.s32 0, %v5585
      %v5587 = vrot.slane %v5583, %v5586
      %v5601 = vunpack.c.l.b16 %v5570
      %v5602 = vunpack.c.l.b16 %v5571
      %v5603 = vunpack.c.l.b16 %v5572
      %v5604 = vunpack.c.l.b16 %v5573
      %v5605 = vunpack.c.l.b16 %v5574
      %v5606 = vunpack.c.l.b16 %v5575
      %v5607 = vunpack.c.l.b16 %v5576
      %v5608 = vunpack.c.l.b16 %v5577
      %v5609 = vunpack.c.l.b16 %v5578
      %v5610 = vunpack.c.l.b16 %v5579
      %v5611 = vunpack.c.l.b16 %v5580
      %v5612 = vunpack.c.l.b16 %v5581
      %v5613 = vunpack.c.l.b16 %v5582
      %v5614 = vpack.c.b16 %v5602, %v5601
      %v5615 = vpack.c.b16 %v5604, %v5603
      %v5616 = vpack.c.b16 %v5606, %v5605
      %v5617 = vpack.c.b16 %v5608, %v5607
      %v5618 = vpack.c.b16 %v5610, %v5609
      %v5619 = vpack.c.b16 %v5612, %v5611
      %v5620 = vpack.c.b16 %v5613, %v5613
      %v5628 = vsel %vm4689, %v5620, 0
      %5630 = vmatprep.subr.bf16.mxu0 0
      %5631 = vmatpush1.bf16.msra.mxu0 %v5614
      %5632 = vmatprep.subr.bf16.mxu0 0
      %5633 = vmatpush1.bf16.msra.mxu0 %v5615
      %5634 = vmatprep.subr.bf16.mxu0 0
      %5635 = vmatpush1.bf16.msra.mxu0 %v5616
      %5636 = vmatprep.subr.bf16.mxu0 0
      %5637 = vmatpush1.bf16.msra.mxu0 %v5617
      %5638 = vmatprep.subr.bf16.mxu0 0
      %5639 = vmatpush1.bf16.msra.mxu0 %v5618
      %5640 = vmatprep.subr.bf16.mxu0 0
      %5641 = vmatpush1.bf16.msra.mxu0 %v5619
      %5642 = vmatprep.subr.bf16.mxu0 0
      %5643 = vmatpush1.bf16.msra.mxu0 %v5628
      %5644 = vmatprep.subr.bf16.mxu0 0
      %5645 = vmatpush1.bf16.msra.mxu0 0
      %5646 = vmatprep.subr.bf16.mxu0 0
      %5647 = vmatpush1.bf16.msra.mxu0 0
      %5648 = vmatprep.subr.bf16.mxu0 0
      %5649 = vmatpush1.bf16.msra.mxu0 0
      %5650 = vmatprep.subr.bf16.mxu0 0
      %5651 = vmatpush1.bf16.msra.mxu0 0
      %5652 = vmatprep.subr.bf16.mxu0 0
      %5653 = vmatpush1.bf16.msra.mxu0 0
      %5654 = vmatprep.subr.bf16.mxu0 0
      %5655 = vmatpush1.bf16.msra.mxu0 0
      %5656 = vmatprep.subr.bf16.mxu0 0
      %5657 = vmatpush1.bf16.msra.mxu0 0
      %5658 = vmatprep.subr.bf16.mxu0 0
      %5659 = vmatpush1.bf16.msra.mxu0 0
      %5660 = vmatprep.subr.bf16.mxu0 0
      %5661 = vmatpush1.bf16.msra.mxu0 0
      %5662 = vmatprep.mubr.bf16.mxu0 0
      %5663 = vmatmul.mubr.bf16.gmra.mrb[0].mxu0 %v4687
      %v5664 = vpop.f32.mrb[0].mxu0
      %v5665 = vadd.f32 %v5587, %v5664
      %v5666 = vpop.f32.mrb[0].mxu0
      %v5667 = vpop.f32.mrb[0].mxu0
      %v5668 = vpop.f32.mrb[0].mxu0
      %5669 = vdwg.mxu0
      %v5670 = vmax.f32 %v5665, 0.0
      %v5671 = vpack.c.bf16 %v5670, %v5670
      %v5674 = vunpack.c.l.s4 1966171168
      %v5675 = vunpack.c.0.s8 %v5674
      %v5676 = vlaneseq
      %v5677 = vshrl.u32 %v5676, 7
      %v5678 = vsub.s32 %v5675, %v5677
      %v5679 = vrot.slane %v5671, %v5678
      %v5680 = vcombine.high %v5679, %v5679
      %v5682 = vunpack.c.l.s4 1966171168
      %v5683 = vunpack.c.0.s8 %v5682
      %v5684 = vlaneseq
      %v5685 = vshrl.u32 %v5684, 7
      %v5686 = vsub.s32 %v5683, %v5685
      %v5687 = vrot.slane %v5679, %v5686
      %v5689 = vunpack.c.l.s4 1966171168
      %v5690 = vunpack.c.0.s8 %v5689
      %v5691 = vlaneseq
      %v5692 = vshrl.u32 %v5691, 7
      %v5693 = vsub.s32 %v5690, %v5692
      %v5694 = vrot.slane %v5680, %v5693
      %v5695 = vcombine.high %v5687, %v5687
      %v5696 = vcombine.high %v5694, %v5694
      %v5697 = vunpack.i.l.s16 %v5687
      %v5698 = vunpack.i.h.s16 %v5687
      %v5699 = vunpack.i.l.s16 %v5694
      %v5700 = vunpack.i.h.s16 %v5694
      %v5701 = vunpack.i.l.s16 %v5695
      %v5702 = vunpack.i.h.s16 %v5695
      %v5703 = vunpack.i.l.s16 %v5696
      %v5704 = vunpack.i.h.s16 %v5696
      %v5705 = vpack.i.b16 %v5697, %v5697
      %v5706 = vpack.i.b16 %v5698, %v5698
      %v5707 = vpack.i.b16 %v5699, %v5699
      %v5708 = vpack.i.b16 %v5700, %v5700
      %v5709 = vpack.i.b16 %v5701, %v5701
      %v5710 = vpack.i.b16 %v5702, %v5702
      %v5711 = vpack.i.b16 %v5703, %v5703
      %v5712 = vpack.i.b16 %v5704, %v5704
      %v5714 = vunpack.c.l.s4 286326784
      %v5715 = vunpack.c.0.s8 %v5714
      %v5716 = vlaneseq
      %v5717 = vshrl.u32 %v5716, 7
      %v5718 = vsub.s32 %v5715, %v5717
      %v5719 = vrot.slane %v5705, %v5718
      %v5721 = vunpack.c.l.s4 286326784
      %v5722 = vunpack.c.0.s8 %v5721
      %v5723 = vlaneseq
      %v5724 = vshrl.u32 %v5723, 7
      %v5725 = vsub.s32 %v5722, %v5724
      %v5726 = vrot.slane %v5706, %v5725
      %v5728 = vunpack.c.l.s4 286326784
      %v5729 = vunpack.c.0.s8 %v5728
      %v5730 = vlaneseq
      %v5731 = vshrl.u32 %v5730, 7
      %v5732 = vsub.s32 %v5729, %v5731
      %v5733 = vrot.slane %v5707, %v5732
      %v5735 = vunpack.c.l.s4 286326784
      %v5736 = vunpack.c.0.s8 %v5735
      %v5737 = vlaneseq
      %v5738 = vshrl.u32 %v5737, 7
      %v5739 = vsub.s32 %v5736, %v5738
      %v5740 = vrot.slane %v5708, %v5739
      %v5742 = vunpack.c.l.s4 286326784
      %v5743 = vunpack.c.0.s8 %v5742
      %v5744 = vlaneseq
      %v5745 = vshrl.u32 %v5744, 7
      %v5746 = vsub.s32 %v5743, %v5745
      %v5747 = vrot.slane %v5709, %v5746
      %v5749 = vunpack.c.l.s4 286326784
      %v5750 = vunpack.c.0.s8 %v5749
      %v5751 = vlaneseq
      %v5752 = vshrl.u32 %v5751, 7
      %v5753 = vsub.s32 %v5750, %v5752
      %v5754 = vrot.slane %v5710, %v5753
      %v5756 = vunpack.c.l.s4 286326784
      %v5757 = vunpack.c.0.s8 %v5756
      %v5758 = vlaneseq
      %v5759 = vshrl.u32 %v5758, 7
      %v5760 = vsub.s32 %v5757, %v5759
      %v5761 = vrot.slane %v5711, %v5760
      %v5763 = vunpack.c.l.s4 286326784
      %v5764 = vunpack.c.0.s8 %v5763
      %v5765 = vlaneseq
      %v5766 = vshrl.u32 %v5765, 7
      %v5767 = vsub.s32 %v5764, %v5766
      %v5768 = vrot.slane %v5712, %v5767
      %v5777 = vld [vmem:[#allocation4 + $0x4] sm:$0x1]
      %v5778 = vsel %vm587, %v5719, %v5777
      %5779 = vst [vmem:[#allocation4 + $0x4] sm:$0x1] %v5778
      %v5780 = vld [vmem:[#allocation4 + $0x10] sm:$0x1]
      %v5781 = vsel %vm587, %v5726, %v5780
      %5782 = vst [vmem:[#allocation4 + $0x10] sm:$0x1] %v5781
      %v5783 = vld [vmem:[#allocation4 + $0x1c] sm:$0x1]
      %v5784 = vsel %vm587, %v5733, %v5783
      %5785 = vst [vmem:[#allocation4 + $0x1c] sm:$0x1] %v5784
      %v5786 = vld [vmem:[#allocation4 + $0x28] sm:$0x1]
      %v5787 = vsel %vm587, %v5740, %v5786
      %5788 = vst [vmem:[#allocation4 + $0x28] sm:$0x1] %v5787
      %v5789 = vld [vmem:[#allocation4 + $0x34] sm:$0x1]
      %v5790 = vsel %vm587, %v5747, %v5789
      %5791 = vst [vmem:[#allocation4 + $0x34] sm:$0x1] %v5790
      %v5792 = vld [vmem:[#allocation4 + $0x40] sm:$0x1]
      %v5793 = vsel %vm587, %v5754, %v5792
      %5794 = vst [vmem:[#allocation4 + $0x40] sm:$0x1] %v5793
      %v5795 = vld [vmem:[#allocation4 + $0x4c] sm:$0x1]
      %v5796 = vsel %vm587, %v5761, %v5795
      %5797 = vst [vmem:[#allocation4 + $0x4c] sm:$0x1] %v5796
      %v5798 = vld [vmem:[#allocation4 + $0x58] sm:$0x1]
      %v5799 = vsel %vm587, %v5768, %v5798
      %5800 = vst [vmem:[#allocation4 + $0x58] sm:$0x1] %v5799
      %s5801 = scalar_lea.vmem %s7, 260
      %v5802 = vld [vmem:[%s5801] sm:$0xf]
      %v5803 = vld [vmem:[%s5801 + $0x4] sm:$0xf]
      %v5804 = vld [vmem:[%s5801 + $0x8] sm:$0xf]
      %v5805 = vld [vmem:[%s5801 + $0xc] sm:$0xf]
      %v5806 = vld [vmem:[%s5801 + $0x10] sm:$0xf]
      %v5807 = vld [vmem:[%s5801 + $0x14] sm:$0xf]
      %v5808 = vld [vmem:[%s5801 + $0x18] sm:$0xf]
      %v5809 = vld [vmem:[%s5801 + $0x1c] sm:$0xf]
      %v5810 = vld [vmem:[%s5801 + $0x20] sm:$0xf]
      %v5811 = vld [vmem:[%s5801 + $0x24] sm:$0xf]
      %v5812 = vld [vmem:[%s5801 + $0x28] sm:$0xf]
      %v5813 = vld [vmem:[%s5801 + $0x2c] sm:$0xf]
      %v5814 = vld [vmem:[%s5801 + $0x30] sm:$0x3]
      %v5815 = vld [vmem:[%s8 + $0x5] sm:$0x1]
      %v5816 = vlaneseq
      %v5817 = vshrl.u32 %v5816, 7
      %v5818 = vsub.s32 0, %v5817
      %v5819 = vrot.slane %v5815, %v5818
      %v5833 = vunpack.c.l.b16 %v5802
      %v5834 = vunpack.c.l.b16 %v5803
      %v5835 = vunpack.c.l.b16 %v5804
      %v5836 = vunpack.c.l.b16 %v5805
      %v5837 = vunpack.c.l.b16 %v5806
      %v5838 = vunpack.c.l.b16 %v5807
      %v5839 = vunpack.c.l.b16 %v5808
      %v5840 = vunpack.c.l.b16 %v5809
      %v5841 = vunpack.c.l.b16 %v5810
      %v5842 = vunpack.c.l.b16 %v5811
      %v5843 = vunpack.c.l.b16 %v5812
      %v5844 = vunpack.c.l.b16 %v5813
      %v5845 = vunpack.c.l.b16 %v5814
      %v5846 = vpack.c.b16 %v5834, %v5833
      %v5847 = vpack.c.b16 %v5836, %v5835
      %v5848 = vpack.c.b16 %v5838, %v5837
      %v5849 = vpack.c.b16 %v5840, %v5839
      %v5850 = vpack.c.b16 %v5842, %v5841
      %v5851 = vpack.c.b16 %v5844, %v5843
      %v5852 = vpack.c.b16 %v5845, %v5845
      %v5860 = vsel %vm4689, %v5852, 0
      %5862 = vmatprep.subr.bf16.mxu0 0
      %5863 = vmatpush1.bf16.msra.mxu0 %v5846
      %5864 = vmatprep.subr.bf16.mxu0 0
      %5865 = vmatpush1.bf16.msra.mxu0 %v5847
      %5866 = vmatprep.subr.bf16.mxu0 0
      %5867 = vmatpush1.bf16.msra.mxu0 %v5848
      %5868 = vmatprep.subr.bf16.mxu0 0
      %5869 = vmatpush1.bf16.msra.mxu0 %v5849
      %5870 = vmatprep.subr.bf16.mxu0 0
      %5871 = vmatpush1.bf16.msra.mxu0 %v5850
      %5872 = vmatprep.subr.bf16.mxu0 0
      %5873 = vmatpush1.bf16.msra.mxu0 %v5851
      %5874 = vmatprep.subr.bf16.mxu0 0
      %5875 = vmatpush1.bf16.msra.mxu0 %v5860
      %5876 = vmatprep.subr.bf16.mxu0 0
      %5877 = vmatpush1.bf16.msra.mxu0 0
      %5878 = vmatprep.subr.bf16.mxu0 0
      %5879 = vmatpush1.bf16.msra.mxu0 0
      %5880 = vmatprep.subr.bf16.mxu0 0
      %5881 = vmatpush1.bf16.msra.mxu0 0
      %5882 = vmatprep.subr.bf16.mxu0 0
      %5883 = vmatpush1.bf16.msra.mxu0 0
      %5884 = vmatprep.subr.bf16.mxu0 0
      %5885 = vmatpush1.bf16.msra.mxu0 0
      %5886 = vmatprep.subr.bf16.mxu0 0
      %5887 = vmatpush1.bf16.msra.mxu0 0
      %5888 = vmatprep.subr.bf16.mxu0 0
      %5889 = vmatpush1.bf16.msra.mxu0 0
      %5890 = vmatprep.subr.bf16.mxu0 0
      %5891 = vmatpush1.bf16.msra.mxu0 0
      %5892 = vmatprep.subr.bf16.mxu0 0
      %5893 = vmatpush1.bf16.msra.mxu0 0
      %5894 = vmatprep.mubr.bf16.mxu0 0
      %5895 = vmatmul.mubr.bf16.gmra.mrb[0].mxu0 %v4687
      %v5896 = vpop.f32.mrb[0].mxu0
      %v5897 = vadd.f32 %v5819, %v5896
      %v5898 = vpop.f32.mrb[0].mxu0
      %v5899 = vpop.f32.mrb[0].mxu0
      %v5900 = vpop.f32.mrb[0].mxu0
      %5901 = vdwg.mxu0
      %v5902 = vmax.f32 %v5897, 0.0
      %v5903 = vpack.c.bf16 %v5902, %v5902
      %v5906 = vunpack.c.l.s4 1966171168
      %v5907 = vunpack.c.0.s8 %v5906
      %v5908 = vlaneseq
      %v5909 = vshrl.u32 %v5908, 7
      %v5910 = vsub.s32 %v5907, %v5909
      %v5911 = vrot.slane %v5903, %v5910
      %v5912 = vcombine.high %v5911, %v5911
      %v5914 = vunpack.c.l.s4 1966171168
      %v5915 = vunpack.c.0.s8 %v5914
      %v5916 = vlaneseq
      %v5917 = vshrl.u32 %v5916, 7
      %v5918 = vsub.s32 %v5915, %v5917
      %v5919 = vrot.slane %v5911, %v5918
      %v5921 = vunpack.c.l.s4 1966171168
      %v5922 = vunpack.c.0.s8 %v5921
      %v5923 = vlaneseq
      %v5924 = vshrl.u32 %v5923, 7
      %v5925 = vsub.s32 %v5922, %v5924
      %v5926 = vrot.slane %v5912, %v5925
      %v5927 = vcombine.high %v5919, %v5919
      %v5928 = vcombine.high %v5926, %v5926
      %v5929 = vunpack.i.l.s16 %v5919
      %v5930 = vunpack.i.h.s16 %v5919
      %v5931 = vunpack.i.l.s16 %v5926
      %v5932 = vunpack.i.h.s16 %v5926
      %v5933 = vunpack.i.l.s16 %v5927
      %v5934 = vunpack.i.h.s16 %v5927
      %v5935 = vunpack.i.l.s16 %v5928
      %v5936 = vunpack.i.h.s16 %v5928
      %v5937 = vpack.i.b16 %v5929, %v5929
      %v5938 = vpack.i.b16 %v5930, %v5930
      %v5939 = vpack.i.b16 %v5931, %v5931
      %v5940 = vpack.i.b16 %v5932, %v5932
      %v5941 = vpack.i.b16 %v5933, %v5933
      %v5942 = vpack.i.b16 %v5934, %v5934
      %v5943 = vpack.i.b16 %v5935, %v5935
      %v5944 = vpack.i.b16 %v5936, %v5936
      %v5946 = vunpack.c.l.s4 286326784
      %v5947 = vunpack.c.0.s8 %v5946
      %v5948 = vlaneseq
      %v5949 = vshrl.u32 %v5948, 7
      %v5950 = vsub.s32 %v5947, %v5949
      %v5951 = vrot.slane %v5937, %v5950
      %v5953 = vunpack.c.l.s4 286326784
      %v5954 = vunpack.c.0.s8 %v5953
      %v5955 = vlaneseq
      %v5956 = vshrl.u32 %v5955, 7
      %v5957 = vsub.s32 %v5954, %v5956
      %v5958 = vrot.slane %v5938, %v5957
      %v5960 = vunpack.c.l.s4 286326784
      %v5961 = vunpack.c.0.s8 %v5960
      %v5962 = vlaneseq
      %v5963 = vshrl.u32 %v5962, 7
      %v5964 = vsub.s32 %v5961, %v5963
      %v5965 = vrot.slane %v5939, %v5964
      %v5967 = vunpack.c.l.s4 286326784
      %v5968 = vunpack.c.0.s8 %v5967
      %v5969 = vlaneseq
      %v5970 = vshrl.u32 %v5969, 7
      %v5971 = vsub.s32 %v5968, %v5970
      %v5972 = vrot.slane %v5940, %v5971
      %v5974 = vunpack.c.l.s4 286326784
      %v5975 = vunpack.c.0.s8 %v5974
      %v5976 = vlaneseq
      %v5977 = vshrl.u32 %v5976, 7
      %v5978 = vsub.s32 %v5975, %v5977
      %v5979 = vrot.slane %v5941, %v5978
      %v5981 = vunpack.c.l.s4 286326784
      %v5982 = vunpack.c.0.s8 %v5981
      %v5983 = vlaneseq
      %v5984 = vshrl.u32 %v5983, 7
      %v5985 = vsub.s32 %v5982, %v5984
      %v5986 = vrot.slane %v5942, %v5985
      %v5988 = vunpack.c.l.s4 286326784
      %v5989 = vunpack.c.0.s8 %v5988
      %v5990 = vlaneseq
      %v5991 = vshrl.u32 %v5990, 7
      %v5992 = vsub.s32 %v5989, %v5991
      %v5993 = vrot.slane %v5943, %v5992
      %v5995 = vunpack.c.l.s4 286326784
      %v5996 = vunpack.c.0.s8 %v5995
      %v5997 = vlaneseq
      %v5998 = vshrl.u32 %v5997, 7
      %v5999 = vsub.s32 %v5996, %v5998
      %v6000 = vrot.slane %v5944, %v5999
      %v6009 = vld [vmem:[#allocation4 + $0x4] sm:$0x2]
      %v6010 = vsel %vm5074, %v5951, %v6009
      %6011 = vst [vmem:[#allocation4 + $0x4] sm:$0x2] %v6010
      %v6012 = vld [vmem:[#allocation4 + $0x10] sm:$0x2]
      %v6013 = vsel %vm5074, %v5958, %v6012
      %6014 = vst [vmem:[#allocation4 + $0x10] sm:$0x2] %v6013
      %v6015 = vld [vmem:[#allocation4 + $0x1c] sm:$0x2]
      %v6016 = vsel %vm5074, %v5965, %v6015
      %6017 = vst [vmem:[#allocation4 + $0x1c] sm:$0x2] %v6016
      %v6018 = vld [vmem:[#allocation4 + $0x28] sm:$0x2]
      %v6019 = vsel %vm5074, %v5972, %v6018
      %6020 = vst [vmem:[#allocation4 + $0x28] sm:$0x2] %v6019
      %v6021 = vld [vmem:[#allocation4 + $0x34] sm:$0x2]
      %v6022 = vsel %vm5074, %v5979, %v6021
      %6023 = vst [vmem:[#allocation4 + $0x34] sm:$0x2] %v6022
      %v6024 = vld [vmem:[#allocation4 + $0x40] sm:$0x2]
      %v6025 = vsel %vm5074, %v5986, %v6024
      %6026 = vst [vmem:[#allocation4 + $0x40] sm:$0x2] %v6025
      %v6027 = vld [vmem:[#allocation4 + $0x4c] sm:$0x2]
      %v6028 = vsel %vm5074, %v5993, %v6027
      %6029 = vst [vmem:[#allocation4 + $0x4c] sm:$0x2] %v6028
      %v6030 = vld [vmem:[#allocation4 + $0x58] sm:$0x2]
      %v6031 = vsel %vm5074, %v6000, %v6030
      %6032 = vst [vmem:[#allocation4 + $0x58] sm:$0x2] %v6031
      %s6033 = scalar_lea.vmem %s7, 312
      %v6034 = vld [vmem:[%s6033] sm:$0xf]
      %v6035 = vld [vmem:[%s6033 + $0x4] sm:$0xf]
      %v6036 = vld [vmem:[%s6033 + $0x8] sm:$0xf]
      %v6037 = vld [vmem:[%s6033 + $0xc] sm:$0xf]
      %v6038 = vld [vmem:[%s6033 + $0x10] sm:$0xf]
      %v6039 = vld [vmem:[%s6033 + $0x14] sm:$0xf]
      %v6040 = vld [vmem:[%s6033 + $0x18] sm:$0xf]
      %v6041 = vld [vmem:[%s6033 + $0x1c] sm:$0xf]
      %v6042 = vld [vmem:[%s6033 + $0x20] sm:$0xf]
      %v6043 = vld [vmem:[%s6033 + $0x24] sm:$0xf]
      %v6044 = vld [vmem:[%s6033 + $0x28] sm:$0xf]
      %v6045 = vld [vmem:[%s6033 + $0x2c] sm:$0xf]
      %v6046 = vld [vmem:[%s6033 + $0x30] sm:$0x3]
      %v6047 = vld [vmem:[%s8 + $0x6] sm:$0x1]
      %v6048 = vlaneseq
      %v6049 = vshrl.u32 %v6048, 7
      %v6050 = vsub.s32 0, %v6049
      %v6051 = vrot.slane %v6047, %v6050
      %v6065 = vunpack.c.l.b16 %v6034
      %v6066 = vunpack.c.l.b16 %v6035
      %v6067 = vunpack.c.l.b16 %v6036
      %v6068 = vunpack.c.l.b16 %v6037
      %v6069 = vunpack.c.l.b16 %v6038
      %v6070 = vunpack.c.l.b16 %v6039
      %v6071 = vunpack.c.l.b16 %v6040
      %v6072 = vunpack.c.l.b16 %v6041
      %v6073 = vunpack.c.l.b16 %v6042
      %v6074 = vunpack.c.l.b16 %v6043
      %v6075 = vunpack.c.l.b16 %v6044
      %v6076 = vunpack.c.l.b16 %v6045
      %v6077 = vunpack.c.l.b16 %v6046
      %v6078 = vpack.c.b16 %v6066, %v6065
      %v6079 = vpack.c.b16 %v6068, %v6067
      %v6080 = vpack.c.b16 %v6070, %v6069
      %v6081 = vpack.c.b16 %v6072, %v6071
      %v6082 = vpack.c.b16 %v6074, %v6073
      %v6083 = vpack.c.b16 %v6076, %v6075
      %v6084 = vpack.c.b16 %v6077, %v6077
      %v6092 = vsel %vm4689, %v6084, 0
      %6094 = vmatprep.subr.bf16.mxu0 0
      %6095 = vmatpush1.bf16.msra.mxu0 %v6078
      %6096 = vmatprep.subr.bf16.mxu0 0
      %6097 = vmatpush1.bf16.msra.mxu0 %v6079
      %6098 = vmatprep.subr.bf16.mxu0 0
      %6099 = vmatpush1.bf16.msra.mxu0 %v6080
      %6100 = vmatprep.subr.bf16.mxu0 0
      %6101 = vmatpush1.bf16.msra.mxu0 %v6081
      %6102 = vmatprep.subr.bf16.mxu0 0
      %6103 = vmatpush1.bf16.msra.mxu0 %v6082
      %6104 = vmatprep.subr.bf16.mxu0 0
      %6105 = vmatpush1.bf16.msra.mxu0 %v6083
      %6106 = vmatprep.subr.bf16.mxu0 0
      %6107 = vmatpush1.bf16.msra.mxu0 %v6092
      %6108 = vmatprep.subr.bf16.mxu0 0
      %6109 = vmatpush1.bf16.msra.mxu0 0
      %6110 = vmatprep.subr.bf16.mxu0 0
      %6111 = vmatpush1.bf16.msra.mxu0 0
      %6112 = vmatprep.subr.bf16.mxu0 0
      %6113 = vmatpush1.bf16.msra.mxu0 0
      %6114 = vmatprep.subr.bf16.mxu0 0
      %6115 = vmatpush1.bf16.msra.mxu0 0
      %6116 = vmatprep.subr.bf16.mxu0 0
      %6117 = vmatpush1.bf16.msra.mxu0 0
      %6118 = vmatprep.subr.bf16.mxu0 0
      %6119 = vmatpush1.bf16.msra.mxu0 0
      %6120 = vmatprep.subr.bf16.mxu0 0
      %6121 = vmatpush1.bf16.msra.mxu0 0
      %6122 = vmatprep.subr.bf16.mxu0 0
      %6123 = vmatpush1.bf16.msra.mxu0 0
      %6124 = vmatprep.subr.bf16.mxu0 0
      %6125 = vmatpush1.bf16.msra.mxu0 0
      %6126 = vmatprep.mubr.bf16.mxu0 0
      %6127 = vmatmul.mubr.bf16.gmra.mrb[0].mxu0 %v4687
      %v6128 = vpop.f32.mrb[0].mxu0
      %v6129 = vadd.f32 %v6051, %v6128
      %v6130 = vpop.f32.mrb[0].mxu0
      %v6131 = vpop.f32.mrb[0].mxu0
      %v6132 = vpop.f32.mrb[0].mxu0
      %6133 = vdwg.mxu0
      %v6134 = vmax.f32 %v6129, 0.0
      %v6135 = vpack.c.bf16 %v6134, %v6134
      %v6138 = vunpack.c.l.s4 1966171168
      %v6139 = vunpack.c.0.s8 %v6138
      %v6140 = vlaneseq
      %v6141 = vshrl.u32 %v6140, 7
      %v6142 = vsub.s32 %v6139, %v6141
      %v6143 = vrot.slane %v6135, %v6142
      %v6144 = vcombine.high %v6143, %v6143
      %v6146 = vunpack.c.l.s4 1966171168
      %v6147 = vunpack.c.0.s8 %v6146
      %v6148 = vlaneseq
      %v6149 = vshrl.u32 %v6148, 7
      %v6150 = vsub.s32 %v6147, %v6149
      %v6151 = vrot.slane %v6143, %v6150
      %v6153 = vunpack.c.l.s4 1966171168
      %v6154 = vunpack.c.0.s8 %v6153
      %v6155 = vlaneseq
      %v6156 = vshrl.u32 %v6155, 7
      %v6157 = vsub.s32 %v6154, %v6156
      %v6158 = vrot.slane %v6144, %v6157
      %v6159 = vcombine.high %v6151, %v6151
      %v6160 = vcombine.high %v6158, %v6158
      %v6161 = vunpack.i.l.s16 %v6151
      %v6162 = vunpack.i.h.s16 %v6151
      %v6163 = vunpack.i.l.s16 %v6158
      %v6164 = vunpack.i.h.s16 %v6158
      %v6165 = vunpack.i.l.s16 %v6159
      %v6166 = vunpack.i.h.s16 %v6159
      %v6167 = vunpack.i.l.s16 %v6160
      %v6168 = vunpack.i.h.s16 %v6160
      %v6169 = vpack.i.b16 %v6161, %v6161
      %v6170 = vpack.i.b16 %v6162, %v6162
      %v6171 = vpack.i.b16 %v6163, %v6163
      %v6172 = vpack.i.b16 %v6164, %v6164
      %v6173 = vpack.i.b16 %v6165, %v6165
      %v6174 = vpack.i.b16 %v6166, %v6166
      %v6175 = vpack.i.b16 %v6167, %v6167
      %v6176 = vpack.i.b16 %v6168, %v6168
      %v6178 = vunpack.c.l.s4 286326784
      %v6179 = vunpack.c.0.s8 %v6178
      %v6180 = vlaneseq
      %v6181 = vshrl.u32 %v6180, 7
      %v6182 = vsub.s32 %v6179, %v6181
      %v6183 = vrot.slane %v6169, %v6182
      %v6185 = vunpack.c.l.s4 286326784
      %v6186 = vunpack.c.0.s8 %v6185
      %v6187 = vlaneseq
      %v6188 = vshrl.u32 %v6187, 7
      %v6189 = vsub.s32 %v6186, %v6188
      %v6190 = vrot.slane %v6170, %v6189
      %v6192 = vunpack.c.l.s4 286326784
      %v6193 = vunpack.c.0.s8 %v6192
      %v6194 = vlaneseq
      %v6195 = vshrl.u32 %v6194, 7
      %v6196 = vsub.s32 %v6193, %v6195
      %v6197 = vrot.slane %v6171, %v6196
      %v6199 = vunpack.c.l.s4 286326784
      %v6200 = vunpack.c.0.s8 %v6199
      %v6201 = vlaneseq
      %v6202 = vshrl.u32 %v6201, 7
      %v6203 = vsub.s32 %v6200, %v6202
      %v6204 = vrot.slane %v6172, %v6203
      %v6206 = vunpack.c.l.s4 286326784
      %v6207 = vunpack.c.0.s8 %v6206
      %v6208 = vlaneseq
      %v6209 = vshrl.u32 %v6208, 7
      %v6210 = vsub.s32 %v6207, %v6209
      %v6211 = vrot.slane %v6173, %v6210
      %v6213 = vunpack.c.l.s4 286326784
      %v6214 = vunpack.c.0.s8 %v6213
      %v6215 = vlaneseq
      %v6216 = vshrl.u32 %v6215, 7
      %v6217 = vsub.s32 %v6214, %v6216
      %v6218 = vrot.slane %v6174, %v6217
      %v6220 = vunpack.c.l.s4 286326784
      %v6221 = vunpack.c.0.s8 %v6220
      %v6222 = vlaneseq
      %v6223 = vshrl.u32 %v6222, 7
      %v6224 = vsub.s32 %v6221, %v6223
      %v6225 = vrot.slane %v6175, %v6224
      %v6227 = vunpack.c.l.s4 286326784
      %v6228 = vunpack.c.0.s8 %v6227
      %v6229 = vlaneseq
      %v6230 = vshrl.u32 %v6229, 7
      %v6231 = vsub.s32 %v6228, %v6230
      %v6232 = vrot.slane %v6176, %v6231
      %v6241 = vld [vmem:[#allocation4 + $0x4] sm:$0x4]
      %v6242 = vsel %vm5309, %v6183, %v6241
      %6243 = vst [vmem:[#allocation4 + $0x4] sm:$0x4] %v6242
      %v6244 = vld [vmem:[#allocation4 + $0x10] sm:$0x4]
      %v6245 = vsel %vm5309, %v6190, %v6244
      %6246 = vst [vmem:[#allocation4 + $0x10] sm:$0x4] %v6245
      %v6247 = vld [vmem:[#allocation4 + $0x1c] sm:$0x4]
      %v6248 = vsel %vm5309, %v6197, %v6247
      %6249 = vst [vmem:[#allocation4 + $0x1c] sm:$0x4] %v6248
      %v6250 = vld [vmem:[#allocation4 + $0x28] sm:$0x4]
      %v6251 = vsel %vm5309, %v6204, %v6250
      %6252 = vst [vmem:[#allocation4 + $0x28] sm:$0x4] %v6251
      %v6253 = vld [vmem:[#allocation4 + $0x34] sm:$0x4]
      %v6254 = vsel %vm5309, %v6211, %v6253
      %6255 = vst [vmem:[#allocation4 + $0x34] sm:$0x4] %v6254
      %v6256 = vld [vmem:[#allocation4 + $0x40] sm:$0x4]
      %v6257 = vsel %vm5309, %v6218, %v6256
      %6258 = vst [vmem:[#allocation4 + $0x40] sm:$0x4] %v6257
      %v6259 = vld [vmem:[#allocation4 + $0x4c] sm:$0x4]
      %v6260 = vsel %vm5309, %v6225, %v6259
      %6261 = vst [vmem:[#allocation4 + $0x4c] sm:$0x4] %v6260
      %v6262 = vld [vmem:[#allocation4 + $0x58] sm:$0x4]
      %v6263 = vsel %vm5309, %v6232, %v6262
      %6264 = vst [vmem:[#allocation4 + $0x58] sm:$0x4] %v6263
      %s6265 = scalar_lea.vmem %s7, 364
      %v6266 = vld [vmem:[%s6265] sm:$0xf]
      %v6267 = vld [vmem:[%s6265 + $0x4] sm:$0xf]
      %v6268 = vld [vmem:[%s6265 + $0x8] sm:$0xf]
      %v6269 = vld [vmem:[%s6265 + $0xc] sm:$0xf]
      %v6270 = vld [vmem:[%s6265 + $0x10] sm:$0xf]
      %v6271 = vld [vmem:[%s6265 + $0x14] sm:$0xf]
      %v6272 = vld [vmem:[%s6265 + $0x18] sm:$0xf]
      %v6273 = vld [vmem:[%s6265 + $0x1c] sm:$0xf]
      %v6274 = vld [vmem:[%s6265 + $0x20] sm:$0xf]
      %v6275 = vld [vmem:[%s6265 + $0x24] sm:$0xf]
      %v6276 = vld [vmem:[%s6265 + $0x28] sm:$0xf]
      %v6277 = vld [vmem:[%s6265 + $0x2c] sm:$0xf]
      %v6278 = vld [vmem:[%s6265 + $0x30] sm:$0x3]
      %v6279 = vld [vmem:[%s8 + $0x7] sm:$0x1]
      %v6280 = vlaneseq
      %v6281 = vshrl.u32 %v6280, 7
      %v6282 = vsub.s32 0, %v6281
      %v6283 = vrot.slane %v6279, %v6282
      %v6297 = vunpack.c.l.b16 %v6266
      %v6298 = vunpack.c.l.b16 %v6267
      %v6299 = vunpack.c.l.b16 %v6268
      %v6300 = vunpack.c.l.b16 %v6269
      %v6301 = vunpack.c.l.b16 %v6270
      %v6302 = vunpack.c.l.b16 %v6271
      %v6303 = vunpack.c.l.b16 %v6272
      %v6304 = vunpack.c.l.b16 %v6273
      %v6305 = vunpack.c.l.b16 %v6274
      %v6306 = vunpack.c.l.b16 %v6275
      %v6307 = vunpack.c.l.b16 %v6276
      %v6308 = vunpack.c.l.b16 %v6277
      %v6309 = vunpack.c.l.b16 %v6278
      %v6310 = vpack.c.b16 %v6298, %v6297
      %v6311 = vpack.c.b16 %v6300, %v6299
      %v6312 = vpack.c.b16 %v6302, %v6301
      %v6313 = vpack.c.b16 %v6304, %v6303
      %v6314 = vpack.c.b16 %v6306, %v6305
      %v6315 = vpack.c.b16 %v6308, %v6307
      %v6316 = vpack.c.b16 %v6309, %v6309
      %v6324 = vsel %vm4689, %v6316, 0
      %6326 = vmatprep.subr.bf16.mxu0 0
      %6327 = vmatpush1.bf16.msra.mxu0 %v6310
      %6328 = vmatprep.subr.bf16.mxu0 0
      %6329 = vmatpush1.bf16.msra.mxu0 %v6311
      %6330 = vmatprep.subr.bf16.mxu0 0
      %6331 = vmatpush1.bf16.msra.mxu0 %v6312
      %6332 = vmatprep.subr.bf16.mxu0 0
      %6333 = vmatpush1.bf16.msra.mxu0 %v6313
      %6334 = vmatprep.subr.bf16.mxu0 0
      %6335 = vmatpush1.bf16.msra.mxu0 %v6314
      %6336 = vmatprep.subr.bf16.mxu0 0
      %6337 = vmatpush1.bf16.msra.mxu0 %v6315
      %6338 = vmatprep.subr.bf16.mxu0 0
      %6339 = vmatpush1.bf16.msra.mxu0 %v6324
      %6340 = vmatprep.subr.bf16.mxu0 0
      %6341 = vmatpush1.bf16.msra.mxu0 0
      %6342 = vmatprep.subr.bf16.mxu0 0
      %6343 = vmatpush1.bf16.msra.mxu0 0
      %6344 = vmatprep.subr.bf16.mxu0 0
      %6345 = vmatpush1.bf16.msra.mxu0 0
      %6346 = vmatprep.subr.bf16.mxu0 0
      %6347 = vmatpush1.bf16.msra.mxu0 0
      %6348 = vmatprep.subr.bf16.mxu0 0
      %6349 = vmatpush1.bf16.msra.mxu0 0
      %6350 = vmatprep.subr.bf16.mxu0 0
      %6351 = vmatpush1.bf16.msra.mxu0 0
      %6352 = vmatprep.subr.bf16.mxu0 0
      %6353 = vmatpush1.bf16.msra.mxu0 0
      %6354 = vmatprep.subr.bf16.mxu0 0
      %6355 = vmatpush1.bf16.msra.mxu0 0
      %6356 = vmatprep.subr.bf16.mxu0 0
      %6357 = vmatpush1.bf16.msra.mxu0 0
      %6358 = vmatprep.mubr.bf16.mxu0 0
      %6359 = vmatmul.mubr.bf16.gmra.mrb[0].mxu0 %v4687
      %v6360 = vpop.f32.mrb[0].mxu0
      %v6361 = vadd.f32 %v6283, %v6360
      %v6362 = vpop.f32.mrb[0].mxu0
      %v6363 = vpop.f32.mrb[0].mxu0
      %v6364 = vpop.f32.mrb[0].mxu0
      %6365 = vdwg.mxu0
      %v6366 = vmax.f32 %v6361, 0.0
      %v6367 = vpack.c.bf16 %v6366, %v6366
      %v6370 = vunpack.c.l.s4 1966171168
      %v6371 = vunpack.c.0.s8 %v6370
      %v6372 = vlaneseq
      %v6373 = vshrl.u32 %v6372, 7
      %v6374 = vsub.s32 %v6371, %v6373
      %v6375 = vrot.slane %v6367, %v6374
      %v6376 = vcombine.high %v6375, %v6375
      %v6378 = vunpack.c.l.s4 1966171168
      %v6379 = vunpack.c.0.s8 %v6378
      %v6380 = vlaneseq
      %v6381 = vshrl.u32 %v6380, 7
      %v6382 = vsub.s32 %v6379, %v6381
      %v6383 = vrot.slane %v6375, %v6382
      %v6385 = vunpack.c.l.s4 1966171168
      %v6386 = vunpack.c.0.s8 %v6385
      %v6387 = vlaneseq
      %v6388 = vshrl.u32 %v6387, 7
      %v6389 = vsub.s32 %v6386, %v6388
      %v6390 = vrot.slane %v6376, %v6389
      %v6391 = vcombine.high %v6383, %v6383
      %v6392 = vcombine.high %v6390, %v6390
      %v6393 = vunpack.i.l.s16 %v6383
      %v6394 = vunpack.i.h.s16 %v6383
      %v6395 = vunpack.i.l.s16 %v6390
      %v6396 = vunpack.i.h.s16 %v6390
      %v6397 = vunpack.i.l.s16 %v6391
      %v6398 = vunpack.i.h.s16 %v6391
      %v6399 = vunpack.i.l.s16 %v6392
      %v6400 = vunpack.i.h.s16 %v6392
      %v6401 = vpack.i.b16 %v6393, %v6393
      %v6402 = vpack.i.b16 %v6394, %v6394
      %v6403 = vpack.i.b16 %v6395, %v6395
      %v6404 = vpack.i.b16 %v6396, %v6396
      %v6405 = vpack.i.b16 %v6397, %v6397
      %v6406 = vpack.i.b16 %v6398, %v6398
      %v6407 = vpack.i.b16 %v6399, %v6399
      %v6408 = vpack.i.b16 %v6400, %v6400
      %v6410 = vunpack.c.l.s4 286326784
      %v6411 = vunpack.c.0.s8 %v6410
      %v6412 = vlaneseq
      %v6413 = vshrl.u32 %v6412, 7
      %v6414 = vsub.s32 %v6411, %v6413
      %v6415 = vrot.slane %v6401, %v6414
      %v6417 = vunpack.c.l.s4 286326784
      %v6418 = vunpack.c.0.s8 %v6417
      %v6419 = vlaneseq
      %v6420 = vshrl.u32 %v6419, 7
      %v6421 = vsub.s32 %v6418, %v6420
      %v6422 = vrot.slane %v6402, %v6421
      %v6424 = vunpack.c.l.s4 286326784
      %v6425 = vunpack.c.0.s8 %v6424
      %v6426 = vlaneseq
      %v6427 = vshrl.u32 %v6426, 7
      %v6428 = vsub.s32 %v6425, %v6427
      %v6429 = vrot.slane %v6403, %v6428
      %v6431 = vunpack.c.l.s4 286326784
      %v6432 = vunpack.c.0.s8 %v6431
      %v6433 = vlaneseq
      %v6434 = vshrl.u32 %v6433, 7
      %v6435 = vsub.s32 %v6432, %v6434
      %v6436 = vrot.slane %v6404, %v6435
      %v6438 = vunpack.c.l.s4 286326784
      %v6439 = vunpack.c.0.s8 %v6438
      %v6440 = vlaneseq
      %v6441 = vshrl.u32 %v6440, 7
      %v6442 = vsub.s32 %v6439, %v6441
      %v6443 = vrot.slane %v6405, %v6442
      %v6445 = vunpack.c.l.s4 286326784
      %v6446 = vunpack.c.0.s8 %v6445
      %v6447 = vlaneseq
      %v6448 = vshrl.u32 %v6447, 7
      %v6449 = vsub.s32 %v6446, %v6448
      %v6450 = vrot.slane %v6406, %v6449
      %v6452 = vunpack.c.l.s4 286326784
      %v6453 = vunpack.c.0.s8 %v6452
      %v6454 = vlaneseq
      %v6455 = vshrl.u32 %v6454, 7
      %v6456 = vsub.s32 %v6453, %v6455
      %v6457 = vrot.slane %v6407, %v6456
      %v6459 = vunpack.c.l.s4 286326784
      %v6460 = vunpack.c.0.s8 %v6459
      %v6461 = vlaneseq
      %v6462 = vshrl.u32 %v6461, 7
      %v6463 = vsub.s32 %v6460, %v6462
      %v6464 = vrot.slane %v6408, %v6463
      %v6473 = vld [vmem:[#allocation4 + $0x4] sm:$0x8]
      %v6474 = vsel %vm5544, %v6415, %v6473
      %6475 = vst [vmem:[#allocation4 + $0x4] sm:$0x8] %v6474
      %v6476 = vld [vmem:[#allocation4 + $0x10] sm:$0x8]
      %v6477 = vsel %vm5544, %v6422, %v6476
      %6478 = vst [vmem:[#allocation4 + $0x10] sm:$0x8] %v6477
      %v6479 = vld [vmem:[#allocation4 + $0x1c] sm:$0x8]
      %v6480 = vsel %vm5544, %v6429, %v6479
      %6481 = vst [vmem:[#allocation4 + $0x1c] sm:$0x8] %v6480
      %v6482 = vld [vmem:[#allocation4 + $0x28] sm:$0x8]
      %v6483 = vsel %vm5544, %v6436, %v6482
      %6484 = vst [vmem:[#allocation4 + $0x28] sm:$0x8] %v6483
      %v6485 = vld [vmem:[#allocation4 + $0x34] sm:$0x8]
      %v6486 = vsel %vm5544, %v6443, %v6485
      %6487 = vst [vmem:[#allocation4 + $0x34] sm:$0x8] %v6486
      %v6488 = vld [vmem:[#allocation4 + $0x40] sm:$0x8]
      %v6489 = vsel %vm5544, %v6450, %v6488
      %6490 = vst [vmem:[#allocation4 + $0x40] sm:$0x8] %v6489
      %v6491 = vld [vmem:[#allocation4 + $0x4c] sm:$0x8]
      %v6492 = vsel %vm5544, %v6457, %v6491
      %6493 = vst [vmem:[#allocation4 + $0x4c] sm:$0x8] %v6492
      %v6494 = vld [vmem:[#allocation4 + $0x58] sm:$0x8]
      %v6495 = vsel %vm5544, %v6464, %v6494
      %6496 = vst [vmem:[#allocation4 + $0x58] sm:$0x8] %v6495
      %v6497 = vld [vmem:[%s10] sm:$0x3]
      %v6499 = vlaneseq
      %v6500 = vshrl.u32 %v6499, 7
      %v6501 = vsub.s32 0, %v6500
      %v6502 = vrot.slane %v6497, %v6501
      %v6503 = vlaneseq
      %v6504 = vshrl.u32 %v6503, 7
      %v6505 = vsub.s32 1, %v6504
      %v6506 = vrot.slane %v6497, %v6505
      %v6509 = vadd.f32 %v6502, 0.0
      %v6510 = vadd.f32 %v6506, 0.0
      %v6511 = vld [vmem:[#allocation4] sm:$0xf]
      %v6512 = vld [vmem:[#allocation4 + $0x4] sm:$0xf]
      %v6513 = vld [vmem:[#allocation4 + $0xc] sm:$0xf]
      %v6514 = vld [vmem:[#allocation4 + $0x10] sm:$0xf]
      %v6515 = vld [vmem:[#allocation4 + $0x18] sm:$0xf]
      %v6516 = vld [vmem:[#allocation4 + $0x1c] sm:$0xf]
      %v6517 = vld [vmem:[#allocation4 + $0x24] sm:$0xf]
      %v6518 = vld [vmem:[#allocation4 + $0x28] sm:$0xf]
      %v6519 = vld [vmem:[#allocation4 + $0x30] sm:$0xf]
      %v6520 = vld [vmem:[#allocation4 + $0x34] sm:$0xf]
      %v6521 = vld [vmem:[#allocation4 + $0x3c] sm:$0xf]
      %v6522 = vld [vmem:[#allocation4 + $0x40] sm:$0xf]
      %v6523 = vld [vmem:[#allocation4 + $0x48] sm:$0xf]
      %v6524 = vld [vmem:[#allocation4 + $0x4c] sm:$0xf]
      %v6525 = vld [vmem:[#allocation4 + $0x54] sm:$0xf]
      %v6526 = vld [vmem:[#allocation4 + $0x58] sm:$0xf]
      %v6527 = vld [vmem:[%s9] sm:$0xff]
      %v6528 = vld [vmem:[%s9 + $0x8] sm:$0xff]
      %v6529 = vld [vmem:[%s9 + $0x10] sm:$0xff]
      %v6530 = vld [vmem:[%s9 + $0x18] sm:$0xff]
      %v6531 = vld [vmem:[%s9 + $0x20] sm:$0xff]
      %v6532 = vld [vmem:[%s9 + $0x28] sm:$0xff]
      %v6533 = vld [vmem:[%s9 + $0x30] sm:$0xff]
      %v6534 = vld [vmem:[%s9 + $0x38] sm:$0xff]
      %v6535 = vld [vmem:[%s9 + $0x40] sm:$0xff]
      %v6536 = vld [vmem:[%s9 + $0x48] sm:$0xff]
      %v6537 = vld [vmem:[%s9 + $0x50] sm:$0xff]
      %v6538 = vld [vmem:[%s9 + $0x58] sm:$0xff]
      %v6539 = vld [vmem:[%s9 + $0x60] sm:$0xff]
      %v6540 = vld [vmem:[%s9 + $0x68] sm:$0xff]
      %v6541 = vld [vmem:[%s9 + $0x70] sm:$0xff]
      %v6542 = vld [vmem:[%s9 + $0x78] sm:$0xff]
      %v6559 = vunpack.c.l.b16 %v6511
      %v6560 = vunpack.c.l.b16 %v6512
      %v6561 = vunpack.c.l.b16 %v6513
      %v6562 = vunpack.c.l.b16 %v6514
      %v6563 = vunpack.c.l.b16 %v6515
      %v6564 = vunpack.c.l.b16 %v6516
      %v6565 = vunpack.c.l.b16 %v6517
      %v6566 = vunpack.c.l.b16 %v6518
      %v6567 = vunpack.c.l.b16 %v6519
      %v6568 = vunpack.c.l.b16 %v6520
      %v6569 = vunpack.c.l.b16 %v6521
      %v6570 = vunpack.c.l.b16 %v6522
      %v6571 = vunpack.c.l.b16 %v6523
      %v6572 = vunpack.c.l.b16 %v6524
      %v6573 = vunpack.c.l.b16 %v6525
      %v6574 = vunpack.c.l.b16 %v6526
      %v6575 = vpack.c.b16 %v6560, %v6559
      %v6576 = vpack.c.b16 %v6562, %v6561
      %v6577 = vpack.c.b16 %v6564, %v6563
      %v6578 = vpack.c.b16 %v6566, %v6565
      %v6579 = vpack.c.b16 %v6568, %v6567
      %v6580 = vpack.c.b16 %v6570, %v6569
      %v6581 = vpack.c.b16 %v6572, %v6571
      %v6582 = vpack.c.b16 %v6574, %v6573
      %v6607 = vunpack.c.l.b16 %v6527
      %v6608 = vunpack.c.h.b16 %v6527
      %v6609 = vunpack.c.l.b16 %v6528
      %v6610 = vunpack.c.h.b16 %v6528
      %v6611 = vunpack.c.l.b16 %v6529
      %v6612 = vunpack.c.h.b16 %v6529
      %v6613 = vunpack.c.l.b16 %v6530
      %v6614 = vunpack.c.h.b16 %v6530
      %v6615 = vunpack.c.l.b16 %v6531
      %v6616 = vunpack.c.h.b16 %v6531
      %v6617 = vunpack.c.l.b16 %v6532
      %v6618 = vunpack.c.h.b16 %v6532
      %v6619 = vunpack.c.l.b16 %v6533
      %v6620 = vunpack.c.h.b16 %v6533
      %v6621 = vunpack.c.l.b16 %v6534
      %v6622 = vunpack.c.h.b16 %v6534
      %v6623 = vunpack.c.l.b16 %v6535
      %v6624 = vunpack.c.h.b16 %v6535
      %v6625 = vunpack.c.l.b16 %v6536
      %v6626 = vunpack.c.h.b16 %v6536
      %v6627 = vunpack.c.l.b16 %v6537
      %v6628 = vunpack.c.h.b16 %v6537
      %v6629 = vunpack.c.l.b16 %v6538
      %v6630 = vunpack.c.h.b16 %v6538
      %v6631 = vunpack.c.l.b16 %v6539
      %v6632 = vunpack.c.h.b16 %v6539
      %v6633 = vunpack.c.l.b16 %v6540
      %v6634 = vunpack.c.h.b16 %v6540
      %v6635 = vunpack.c.l.b16 %v6541
      %v6636 = vunpack.c.h.b16 %v6541
      %v6637 = vunpack.c.l.b16 %v6542
      %v6638 = vunpack.c.h.b16 %v6542
      %v6639 = vpack.c.b16 %v6609, %v6607
      %v6640 = vpack.c.b16 %v6610, %v6608
      %v6641 = vpack.c.b16 %v6613, %v6611
      %v6642 = vpack.c.b16 %v6614, %v6612
      %v6643 = vpack.c.b16 %v6617, %v6615
      %v6644 = vpack.c.b16 %v6618, %v6616
      %v6645 = vpack.c.b16 %v6621, %v6619
      %v6646 = vpack.c.b16 %v6622, %v6620
      %v6647 = vpack.c.b16 %v6625, %v6623
      %v6648 = vpack.c.b16 %v6626, %v6624
      %v6649 = vpack.c.b16 %v6629, %v6627
      %v6650 = vpack.c.b16 %v6630, %v6628
      %v6651 = vpack.c.b16 %v6633, %v6631
      %v6652 = vpack.c.b16 %v6634, %v6632
      %v6653 = vpack.c.b16 %v6637, %v6635
      %v6654 = vpack.c.b16 %v6638, %v6636
      %6671 = vmatprep.subr.bf16.mxu0 %v6640
      %6672 = vmatpush1.bf16.msra.mxu0 %v6639
      %6673 = vmatprep.subr.bf16.mxu0 %v6642
      %6674 = vmatpush1.bf16.msra.mxu0 %v6641
      %6675 = vmatprep.subr.bf16.mxu0 %v6644
      %6676 = vmatpush1.bf16.msra.mxu0 %v6643
      %6677 = vmatprep.subr.bf16.mxu0 %v6646
      %6678 = vmatpush1.bf16.msra.mxu0 %v6645
      %6679 = vmatprep.subr.bf16.mxu0 %v6648
      %6680 = vmatpush1.bf16.msra.mxu0 %v6647
      %6681 = vmatprep.subr.bf16.mxu0 %v6650
      %6682 = vmatpush1.bf16.msra.mxu0 %v6649
      %6683 = vmatprep.subr.bf16.mxu0 %v6652
      %6684 = vmatpush1.bf16.msra.mxu0 %v6651
      %6685 = vmatprep.subr.bf16.mxu0 %v6654
      %6686 = vmatpush1.bf16.msra.mxu0 %v6653
      %6687 = vmatprep.subr.bf16.mxu0 0
      %6688 = vmatpush1.bf16.msra.mxu0 0
      %6689 = vmatprep.subr.bf16.mxu0 0
      %6690 = vmatpush1.bf16.msra.mxu0 0
      %6691 = vmatprep.subr.bf16.mxu0 0
      %6692 = vmatpush1.bf16.msra.mxu0 0
      %6693 = vmatprep.subr.bf16.mxu0 0
      %6694 = vmatpush1.bf16.msra.mxu0 0
      %6695 = vmatprep.subr.bf16.mxu0 0
      %6696 = vmatpush1.bf16.msra.mxu0 0
      %6697 = vmatprep.subr.bf16.mxu0 0
      %6698 = vmatpush1.bf16.msra.mxu0 0
      %6699 = vmatprep.subr.bf16.mxu0 0
      %6700 = vmatpush1.bf16.msra.mxu0 0
      %6701 = vmatprep.subr.bf16.mxu0 0
      %6702 = vmatpush1.bf16.msra.mxu0 0
      %6703 = vmatprep.mubr.bf16.mxu0 0
      %6704 = vmatmul.mubr.bf16.gmra.mrb[0].mxu0 %v6575
      %v6705 = vpop.f32.mrb[0].mxu0
      %v6706 = vadd.f32 0.0, %v6705
      %v6707 = vpop.f32.mrb[0].mxu0
      %v6708 = vadd.f32 0.0, %v6707
      %v6709 = vpop.f32.mrb[0].mxu0
      %v6710 = vadd.f32 0.0, %v6709
      %v6711 = vpop.f32.mrb[0].mxu0
      %v6712 = vadd.f32 0.0, %v6711
      %6713 = vmatprep.mubr.bf16.mxu0 0
      %6714 = vmatmul.mubr.bf16.gmra.mrb[0].mxu0 %v6576
      %v6715 = vpop.f32.mrb[0].mxu0
      %v6716 = vadd.f32 0.0, %v6715
      %v6717 = vpop.f32.mrb[0].mxu0
      %v6718 = vadd.f32 0.0, %v6717
      %v6719 = vpop.f32.mrb[0].mxu0
      %v6720 = vadd.f32 0.0, %v6719
      %v6721 = vpop.f32.mrb[0].mxu0
      %v6722 = vadd.f32 0.0, %v6721
      %6723 = vmatprep.mubr.bf16.mxu0 0
      %6724 = vmatmul.mubr.bf16.gmra.mrb[0].mxu0 %v6577
      %v6725 = vpop.f32.mrb[0].mxu0
      %v6726 = vadd.f32 0.0, %v6725
      %v6727 = vpop.f32.mrb[0].mxu0
      %v6728 = vadd.f32 0.0, %v6727
      %v6729 = vpop.f32.mrb[0].mxu0
      %v6730 = vadd.f32 0.0, %v6729
      %v6731 = vpop.f32.mrb[0].mxu0
      %v6732 = vadd.f32 0.0, %v6731
      %6733 = vmatprep.mubr.bf16.mxu0 0
      %6734 = vmatmul.mubr.bf16.gmra.mrb[0].mxu0 %v6578
      %v6735 = vpop.f32.mrb[0].mxu0
      %v6736 = vadd.f32 0.0, %v6735
      %v6737 = vpop.f32.mrb[0].mxu0
      %v6738 = vadd.f32 0.0, %v6737
      %v6739 = vpop.f32.mrb[0].mxu0
      %v6740 = vadd.f32 0.0, %v6739
      %v6741 = vpop.f32.mrb[0].mxu0
      %v6742 = vadd.f32 0.0, %v6741
      %6743 = vmatprep.mubr.bf16.mxu0 0
      %6744 = vmatmul.mubr.bf16.gmra.mrb[0].mxu0 %v6579
      %v6745 = vpop.f32.mrb[0].mxu0
      %v6746 = vadd.f32 0.0, %v6745
      %v6747 = vpop.f32.mrb[0].mxu0
      %v6748 = vadd.f32 0.0, %v6747
      %v6749 = vpop.f32.mrb[0].mxu0
      %v6750 = vadd.f32 0.0, %v6749
      %v6751 = vpop.f32.mrb[0].mxu0
      %v6752 = vadd.f32 0.0, %v6751
      %6753 = vmatprep.mubr.bf16.mxu0 0
      %6754 = vmatmul.mubr.bf16.gmra.mrb[0].mxu0 %v6580
      %v6755 = vpop.f32.mrb[0].mxu0
      %v6756 = vadd.f32 0.0, %v6755
      %v6757 = vpop.f32.mrb[0].mxu0
      %v6758 = vadd.f32 0.0, %v6757
      %v6759 = vpop.f32.mrb[0].mxu0
      %v6760 = vadd.f32 0.0, %v6759
      %v6761 = vpop.f32.mrb[0].mxu0
      %v6762 = vadd.f32 0.0, %v6761
      %6763 = vmatprep.mubr.bf16.mxu0 0
      %6764 = vmatmul.mubr.bf16.gmra.mrb[0].mxu0 %v6581
      %v6765 = vpop.f32.mrb[0].mxu0
      %v6766 = vadd.f32 0.0, %v6765
      %v6767 = vpop.f32.mrb[0].mxu0
      %v6768 = vadd.f32 0.0, %v6767
      %v6769 = vpop.f32.mrb[0].mxu0
      %v6770 = vadd.f32 0.0, %v6769
      %v6771 = vpop.f32.mrb[0].mxu0
      %v6772 = vadd.f32 0.0, %v6771
      %6773 = vmatprep.mubr.bf16.mxu0 0
      %6774 = vmatmul.mubr.bf16.gmra.mrb[0].mxu0 %v6582
      %v6775 = vpop.f32.mrb[0].mxu0
      %v6776 = vadd.f32 0.0, %v6775
      %v6777 = vpop.f32.mrb[0].mxu0
      %v6778 = vadd.f32 0.0, %v6777
      %v6779 = vpop.f32.mrb[0].mxu0
      %v6780 = vadd.f32 0.0, %v6779
      %v6781 = vpop.f32.mrb[0].mxu0
      %v6782 = vadd.f32 0.0, %v6781
      %6783 = vdwg.mxu0
      %v6784 = vadd.f32 %v6509, %v6706
      %v6785 = vadd.f32 %v6510, %v6708
      %v6786 = vadd.f32 %v6509, %v6710
      %v6787 = vadd.f32 %v6510, %v6712
      %v6788 = vadd.f32 %v6509, %v6716
      %v6789 = vadd.f32 %v6510, %v6718
      %v6790 = vadd.f32 %v6509, %v6720
      %v6791 = vadd.f32 %v6510, %v6722
      %v6792 = vadd.f32 %v6509, %v6726
      %v6793 = vadd.f32 %v6510, %v6728
      %v6794 = vadd.f32 %v6509, %v6730
      %v6795 = vadd.f32 %v6510, %v6732
      %v6796 = vadd.f32 %v6509, %v6736
      %v6797 = vadd.f32 %v6510, %v6738
      %v6798 = vadd.f32 %v6509, %v6740
      %v6799 = vadd.f32 %v6510, %v6742
      %v6800 = vadd.f32 %v6509, %v6746
      %v6801 = vadd.f32 %v6510, %v6748
      %v6802 = vadd.f32 %v6509, %v6750
      %v6803 = vadd.f32 %v6510, %v6752
      %v6804 = vadd.f32 %v6509, %v6756
      %v6805 = vadd.f32 %v6510, %v6758
      %v6806 = vadd.f32 %v6509, %v6760
      %v6807 = vadd.f32 %v6510, %v6762
      %v6808 = vadd.f32 %v6509, %v6766
      %v6809 = vadd.f32 %v6510, %v6768
      %v6810 = vadd.f32 %v6509, %v6770
      %v6811 = vadd.f32 %v6510, %v6772
      %v6812 = vadd.f32 %v6509, %v6776
      %v6813 = vadd.f32 %v6510, %v6778
      %v6814 = vadd.f32 %v6509, %v6780
      %v6815 = vadd.f32 %v6510, %v6782
      %v6816 = vld [vmem:[#allocation4] sm:$0xf]
      %v6817 = vld [vmem:[#allocation4 + $0x4] sm:$0xf]
      %v6818 = vld [vmem:[#allocation4 + $0x8] sm:$0x1]
      %v6819 = vld [vmem:[#allocation4 + $0xc] sm:$0xf]
      %v6820 = vld [vmem:[#allocation4 + $0x10] sm:$0xf]
      %v6821 = vld [vmem:[#allocation4 + $0x14] sm:$0x1]
      %v6822 = vld [vmem:[#allocation4 + $0x18] sm:$0xf]
      %v6823 = vld [vmem:[#allocation4 + $0x1c] sm:$0xf]
      %v6824 = vld [vmem:[#allocation4 + $0x20] sm:$0x1]
      %v6825 = vld [vmem:[#allocation4 + $0x24] sm:$0xf]
      %v6826 = vld [vmem:[#allocation4 + $0x28] sm:$0xf]
      %v6827 = vld [vmem:[#allocation4 + $0x2c] sm:$0x1]
      %v6828 = vld [vmem:[#allocation4 + $0x30] sm:$0xf]
      %v6829 = vld [vmem:[#allocation4 + $0x34] sm:$0xf]
      %v6830 = vld [vmem:[#allocation4 + $0x38] sm:$0x1]
      %v6831 = vld [vmem:[#allocation4 + $0x3c] sm:$0xf]
      %v6832 = vld [vmem:[#allocation4 + $0x40] sm:$0xf]
      %v6833 = vld [vmem:[#allocation4 + $0x44] sm:$0x1]
      %v6834 = vld [vmem:[#allocation4 + $0x48] sm:$0xf]
      %v6835 = vld [vmem:[#allocation4 + $0x4c] sm:$0xf]
      %v6836 = vld [vmem:[#allocation4 + $0x50] sm:$0x1]
      %v6837 = vld [vmem:[#allocation4 + $0x54] sm:$0xf]
      %v6838 = vld [vmem:[#allocation4 + $0x58] sm:$0xf]
      %v6839 = vld [vmem:[#allocation4 + $0x5c] sm:$0x1]
      %v6841 = vshrl.u32 %v6816, 16
      %v6843 = vrot.slane %v6841, 4
      %v6844 = vshll.u32 %v6816, 16
      %v6846 = vrot.slane %v6844, 5
      %v6847 = vor.u32 %v6843, %v6846
      %v6848 = vrot.slane %v6847, 4
      %v6850 = vshll.u32 %v6817, 16
      %v6852 = vrot.slane %v6850, 5
      %v6853 = vsel %vm1298, %v6848, %v6852
      %v6854 = vshrl.u32 %v6817, 16
      %v6856 = vrot.slane %v6854, 4
      %v6857 = vor.u32 %v6856, %v6852
      %v6858 = vrot.slane %v6857, 4
      %v6860 = vshll.u32 %v6818, 16
      %v6862 = vrot.slane %v6860, 5
      %v6863 = vsel %vm1298, %v6858, %v6862
      %v6865 = vshrl.u32 %v6819, 16
      %v6867 = vrot.slane %v6865, 4
      %v6868 = vshll.u32 %v6819, 16
      %v6870 = vrot.slane %v6868, 5
      %v6871 = vor.u32 %v6867, %v6870
      %v6872 = vrot.slane %v6871, 4
      %v6874 = vshll.u32 %v6820, 16
      %v6876 = vrot.slane %v6874, 5
      %v6877 = vsel %vm1298, %v6872, %v6876
      %v6878 = vshrl.u32 %v6820, 16
      %v6880 = vrot.slane %v6878, 4
      %v6881 = vor.u32 %v6880, %v6876
      %v6882 = vrot.slane %v6881, 4
      %v6884 = vshll.u32 %v6821, 16
      %v6886 = vrot.slane %v6884, 5
      %v6887 = vsel %vm1298, %v6882, %v6886
      %v6889 = vshrl.u32 %v6822, 16
      %v6891 = vrot.slane %v6889, 4
      %v6892 = vshll.u32 %v6822, 16
      %v6894 = vrot.slane %v6892, 5
      %v6895 = vor.u32 %v6891, %v6894
      %v6896 = vrot.slane %v6895, 4
      %v6898 = vshll.u32 %v6823, 16
      %v6900 = vrot.slane %v6898, 5
      %v6901 = vsel %vm1298, %v6896, %v6900
      %v6902 = vshrl.u32 %v6823, 16
      %v6904 = vrot.slane %v6902, 4
      %v6905 = vor.u32 %v6904, %v6900
      %v6906 = vrot.slane %v6905, 4
      %v6908 = vshll.u32 %v6824, 16
      %v6910 = vrot.slane %v6908, 5
      %v6911 = vsel %vm1298, %v6906, %v6910
      %v6913 = vshrl.u32 %v6825, 16
      %v6915 = vrot.slane %v6913, 4
      %v6916 = vshll.u32 %v6825, 16
      %v6918 = vrot.slane %v6916, 5
      %v6919 = vor.u32 %v6915, %v6918
      %v6920 = vrot.slane %v6919, 4
      %v6922 = vshll.u32 %v6826, 16
      %v6924 = vrot.slane %v6922, 5
      %v6925 = vsel %vm1298, %v6920, %v6924
      %v6926 = vshrl.u32 %v6826, 16
      %v6928 = vrot.slane %v6926, 4
      %v6929 = vor.u32 %v6928, %v6924
      %v6930 = vrot.slane %v6929, 4
      %v6932 = vshll.u32 %v6827, 16
      %v6934 = vrot.slane %v6932, 5
      %v6935 = vsel %vm1298, %v6930, %v6934
      %v6937 = vshrl.u32 %v6828, 16
      %v6939 = vrot.slane %v6937, 4
      %v6940 = vshll.u32 %v6828, 16
      %v6942 = vrot.slane %v6940, 5
      %v6943 = vor.u32 %v6939, %v6942
      %v6944 = vrot.slane %v6943, 4
      %v6946 = vshll.u32 %v6829, 16
      %v6948 = vrot.slane %v6946, 5
      %v6949 = vsel %vm1298, %v6944, %v6948
      %v6950 = vshrl.u32 %v6829, 16
      %v6952 = vrot.slane %v6950, 4
      %v6953 = vor.u32 %v6952, %v6948
      %v6954 = vrot.slane %v6953, 4
      %v6956 = vshll.u32 %v6830, 16
      %v6958 = vrot.slane %v6956, 5
      %v6959 = vsel %vm1298, %v6954, %v6958
      %v6961 = vshrl.u32 %v6831, 16
      %v6963 = vrot.slane %v6961, 4
      %v6964 = vshll.u32 %v6831, 16
      %v6966 = vrot.slane %v6964, 5
      %v6967 = vor.u32 %v6963, %v6966
      %v6968 = vrot.slane %v6967, 4
      %v6970 = vshll.u32 %v6832, 16
      %v6972 = vrot.slane %v6970, 5
      %v6973 = vsel %vm1298, %v6968, %v6972
      %v6974 = vshrl.u32 %v6832, 16
      %v6976 = vrot.slane %v6974, 4
      %v6977 = vor.u32 %v6976, %v6972
      %v6978 = vrot.slane %v6977, 4
      %v6980 = vshll.u32 %v6833, 16
      %v6982 = vrot.slane %v6980, 5
      %v6983 = vsel %vm1298, %v6978, %v6982
      %v6985 = vshrl.u32 %v6834, 16
      %v6987 = vrot.slane %v6985, 4
      %v6988 = vshll.u32 %v6834, 16
      %v6990 = vrot.slane %v6988, 5
      %v6991 = vor.u32 %v6987, %v6990
      %v6992 = vrot.slane %v6991, 4
      %v6994 = vshll.u32 %v6835, 16
      %v6996 = vrot.slane %v6994, 5
      %v6997 = vsel %vm1298, %v6992, %v6996
      %v6998 = vshrl.u32 %v6835, 16
      %v7000 = vrot.slane %v6998, 4
      %v7001 = vor.u32 %v7000, %v6996
      %v7002 = vrot.slane %v7001, 4
      %v7004 = vshll.u32 %v6836, 16
      %v7006 = vrot.slane %v7004, 5
      %v7007 = vsel %vm1298, %v7002, %v7006
      %v7009 = vshrl.u32 %v6837, 16
      %v7011 = vrot.slane %v7009, 4
      %v7012 = vshll.u32 %v6837, 16
      %v7014 = vrot.slane %v7012, 5
      %v7015 = vor.u32 %v7011, %v7014
      %v7016 = vrot.slane %v7015, 4
      %v7018 = vshll.u32 %v6838, 16
      %v7020 = vrot.slane %v7018, 5
      %v7021 = vsel %vm1298, %v7016, %v7020
      %v7022 = vshrl.u32 %v6838, 16
      %v7024 = vrot.slane %v7022, 4
      %v7025 = vor.u32 %v7024, %v7020
      %v7026 = vrot.slane %v7025, 4
      %v7028 = vshll.u32 %v6839, 16
      %v7030 = vrot.slane %v7028, 5
      %v7031 = vsel %vm1298, %v7026, %v7030
      %s7032 = scalar_lea.vmem %s9, 128
      %v7033 = vld [vmem:[%s7032] sm:$0xff]
      %v7034 = vld [vmem:[%s7032 + $0x8] sm:$0xff]
      %v7035 = vld [vmem:[%s7032 + $0x10] sm:$0xff]
      %v7036 = vld [vmem:[%s7032 + $0x18] sm:$0xff]
      %v7037 = vld [vmem:[%s7032 + $0x20] sm:$0xff]
      %v7038 = vld [vmem:[%s7032 + $0x28] sm:$0xff]
      %v7039 = vld [vmem:[%s7032 + $0x30] sm:$0xff]
      %v7040 = vld [vmem:[%s7032 + $0x38] sm:$0xff]
      %v7041 = vld [vmem:[%s7032 + $0x40] sm:$0xff]
      %v7042 = vld [vmem:[%s7032 + $0x48] sm:$0xff]
      %v7043 = vld [vmem:[%s7032 + $0x50] sm:$0xff]
      %v7044 = vld [vmem:[%s7032 + $0x58] sm:$0xff]
      %v7045 = vld [vmem:[%s7032 + $0x60] sm:$0xff]
      %v7046 = vld [vmem:[%s7032 + $0x68] sm:$0xff]
      %v7047 = vld [vmem:[%s7032 + $0x70] sm:$0xff]
      %v7048 = vld [vmem:[%s7032 + $0x78] sm:$0xff]
      %v7049 = vunpack.c.l.b16 %v6853
      %v7050 = vunpack.c.l.b16 %v6863
      %v7051 = vunpack.c.l.b16 %v6877
      %v7052 = vunpack.c.l.b16 %v6887
      %v7053 = vunpack.c.l.b16 %v6901
      %v7054 = vunpack.c.l.b16 %v6911
      %v7055 = vunpack.c.l.b16 %v6925
      %v7056 = vunpack.c.l.b16 %v6935
      %v7057 = vunpack.c.l.b16 %v6949
      %v7058 = vunpack.c.l.b16 %v6959
      %v7059 = vunpack.c.l.b16 %v6973
      %v7060 = vunpack.c.l.b16 %v6983
      %v7061 = vunpack.c.l.b16 %v6997
      %v7062 = vunpack.c.l.b16 %v7007
      %v7063 = vunpack.c.l.b16 %v7021
      %v7064 = vunpack.c.l.b16 %v7031
      %v7065 = vpack.c.b16 %v7050, %v7049
      %v7066 = vpack.c.b16 %v7052, %v7051
      %v7067 = vpack.c.b16 %v7054, %v7053
      %v7068 = vpack.c.b16 %v7056, %v7055
      %v7069 = vpack.c.b16 %v7058, %v7057
      %v7070 = vpack.c.b16 %v7060, %v7059
      %v7071 = vpack.c.b16 %v7062, %v7061
      %v7072 = vpack.c.b16 %v7064, %v7063
      %v7097 = vunpack.c.l.b16 %v7033
      %v7098 = vunpack.c.h.b16 %v7033
      %v7099 = vunpack.c.l.b16 %v7034
      %v7100 = vunpack.c.h.b16 %v7034
      %v7101 = vunpack.c.l.b16 %v7035
      %v7102 = vunpack.c.h.b16 %v7035
      %v7103 = vunpack.c.l.b16 %v7036
      %v7104 = vunpack.c.h.b16 %v7036
      %v7105 = vunpack.c.l.b16 %v7037
      %v7106 = vunpack.c.h.b16 %v7037
      %v7107 = vunpack.c.l.b16 %v7038
      %v7108 = vunpack.c.h.b16 %v7038
      %v7109 = vunpack.c.l.b16 %v7039
      %v7110 = vunpack.c.h.b16 %v7039
      %v7111 = vunpack.c.l.b16 %v7040
      %v7112 = vunpack.c.h.b16 %v7040
      %v7113 = vunpack.c.l.b16 %v7041
      %v7114 = vunpack.c.h.b16 %v7041
      %v7115 = vunpack.c.l.b16 %v7042
      %v7116 = vunpack.c.h.b16 %v7042
      %v7117 = vunpack.c.l.b16 %v7043
      %v7118 = vunpack.c.h.b16 %v7043
      %v7119 = vunpack.c.l.b16 %v7044
      %v7120 = vunpack.c.h.b16 %v7044
      %v7121 = vunpack.c.l.b16 %v7045
      %v7122 = vunpack.c.h.b16 %v7045
      %v7123 = vunpack.c.l.b16 %v7046
      %v7124 = vunpack.c.h.b16 %v7046
      %v7125 = vunpack.c.l.b16 %v7047
      %v7126 = vunpack.c.h.b16 %v7047
      %v7127 = vunpack.c.l.b16 %v7048
      %v7128 = vunpack.c.h.b16 %v7048
      %v7129 = vpack.c.b16 %v7099, %v7097
      %v7130 = vpack.c.b16 %v7100, %v7098
      %v7131 = vpack.c.b16 %v7103, %v7101
      %v7132 = vpack.c.b16 %v7104, %v7102
      %v7133 = vpack.c.b16 %v7107, %v7105
      %v7134 = vpack.c.b16 %v7108, %v7106
      %v7135 = vpack.c.b16 %v7111, %v7109
      %v7136 = vpack.c.b16 %v7112, %v7110
      %v7137 = vpack.c.b16 %v7115, %v7113
      %v7138 = vpack.c.b16 %v7116, %v7114
      %v7139 = vpack.c.b16 %v7119, %v7117
      %v7140 = vpack.c.b16 %v7120, %v7118
      %v7141 = vpack.c.b16 %v7123, %v7121
      %v7142 = vpack.c.b16 %v7124, %v7122
      %v7143 = vpack.c.b16 %v7127, %v7125
      %v7144 = vpack.c.b16 %v7128, %v7126
      %7161 = vmatprep.subr.bf16.mxu0 %v7130
      %7162 = vmatpush1.bf16.msra.mxu0 %v7129
      %7163 = vmatprep.subr.bf16.mxu0 %v7132
      %7164 = vmatpush1.bf16.msra.mxu0 %v7131
      %7165 = vmatprep.subr.bf16.mxu0 %v7134
      %7166 = vmatpush1.bf16.msra.mxu0 %v7133
      %7167 = vmatprep.subr.bf16.mxu0 %v7136
      %7168 = vmatpush1.bf16.msra.mxu0 %v7135
      %7169 = vmatprep.subr.bf16.mxu0 %v7138
      %7170 = vmatpush1.bf16.msra.mxu0 %v7137
      %7171 = vmatprep.subr.bf16.mxu0 %v7140
      %7172 = vmatpush1.bf16.msra.mxu0 %v7139
      %7173 = vmatprep.subr.bf16.mxu0 %v7142
      %7174 = vmatpush1.bf16.msra.mxu0 %v7141
      %7175 = vmatprep.subr.bf16.mxu0 %v7144
      %7176 = vmatpush1.bf16.msra.mxu0 %v7143
      %7177 = vmatprep.subr.bf16.mxu0 0
      %7178 = vmatpush1.bf16.msra.mxu0 0
      %7179 = vmatprep.subr.bf16.mxu0 0
      %7180 = vmatpush1.bf16.msra.mxu0 0
      %7181 = vmatprep.subr.bf16.mxu0 0
      %7182 = vmatpush1.bf16.msra.mxu0 0
      %7183 = vmatprep.subr.bf16.mxu0 0
      %7184 = vmatpush1.bf16.msra.mxu0 0
      %7185 = vmatprep.subr.bf16.mxu0 0
      %7186 = vmatpush1.bf16.msra.mxu0 0
      %7187 = vmatprep.subr.bf16.mxu0 0
      %7188 = vmatpush1.bf16.msra.mxu0 0
      %7189 = vmatprep.subr.bf16.mxu0 0
      %7190 = vmatpush1.bf16.msra.mxu0 0
      %7191 = vmatprep.subr.bf16.mxu0 0
      %7192 = vmatpush1.bf16.msra.mxu0 0
      %7193 = vmatprep.mubr.bf16.mxu0 0
      %7194 = vmatmul.mubr.bf16.gmra.mrb[0].mxu0 %v7065
      %v7195 = vpop.f32.mrb[0].mxu0
      %v7196 = vadd.f32 0.0, %v7195
      %v7197 = vpop.f32.mrb[0].mxu0
      %v7198 = vadd.f32 0.0, %v7197
      %v7199 = vpop.f32.mrb[0].mxu0
      %v7200 = vadd.f32 0.0, %v7199
      %v7201 = vpop.f32.mrb[0].mxu0
      %v7202 = vadd.f32 0.0, %v7201
      %7203 = vmatprep.mubr.bf16.mxu0 0
      %7204 = vmatmul.mubr.bf16.gmra.mrb[0].mxu0 %v7066
      %v7205 = vpop.f32.mrb[0].mxu0
      %v7206 = vadd.f32 0.0, %v7205
      %v7207 = vpop.f32.mrb[0].mxu0
      %v7208 = vadd.f32 0.0, %v7207
      %v7209 = vpop.f32.mrb[0].mxu0
      %v7210 = vadd.f32 0.0, %v7209
      %v7211 = vpop.f32.mrb[0].mxu0
      %v7212 = vadd.f32 0.0, %v7211
      %7213 = vmatprep.mubr.bf16.mxu0 0
      %7214 = vmatmul.mubr.bf16.gmra.mrb[0].mxu0 %v7067
      %v7215 = vpop.f32.mrb[0].mxu0
      %v7216 = vadd.f32 0.0, %v7215
      %v7217 = vpop.f32.mrb[0].mxu0
      %v7218 = vadd.f32 0.0, %v7217
      %v7219 = vpop.f32.mrb[0].mxu0
      %v7220 = vadd.f32 0.0, %v7219
      %v7221 = vpop.f32.mrb[0].mxu0
      %v7222 = vadd.f32 0.0, %v7221
      %7223 = vmatprep.mubr.bf16.mxu0 0
      %7224 = vmatmul.mubr.bf16.gmra.mrb[0].mxu0 %v7068
      %v7225 = vpop.f32.mrb[0].mxu0
      %v7226 = vadd.f32 0.0, %v7225
      %v7227 = vpop.f32.mrb[0].mxu0
      %v7228 = vadd.f32 0.0, %v7227
      %v7229 = vpop.f32.mrb[0].mxu0
      %v7230 = vadd.f32 0.0, %v7229
      %v7231 = vpop.f32.mrb[0].mxu0
      %v7232 = vadd.f32 0.0, %v7231
      %7233 = vmatprep.mubr.bf16.mxu0 0
      %7234 = vmatmul.mubr.bf16.gmra.mrb[0].mxu0 %v7069
      %v7235 = vpop.f32.mrb[0].mxu0
      %v7236 = vadd.f32 0.0, %v7235
      %v7237 = vpop.f32.mrb[0].mxu0
      %v7238 = vadd.f32 0.0, %v7237
      %v7239 = vpop.f32.mrb[0].mxu0
      %v7240 = vadd.f32 0.0, %v7239
      %v7241 = vpop.f32.mrb[0].mxu0
      %v7242 = vadd.f32 0.0, %v7241
      %7243 = vmatprep.mubr.bf16.mxu0 0
      %7244 = vmatmul.mubr.bf16.gmra.mrb[0].mxu0 %v7070
      %v7245 = vpop.f32.mrb[0].mxu0
      %v7246 = vadd.f32 0.0, %v7245
      %v7247 = vpop.f32.mrb[0].mxu0
      %v7248 = vadd.f32 0.0, %v7247
      %v7249 = vpop.f32.mrb[0].mxu0
      %v7250 = vadd.f32 0.0, %v7249
      %v7251 = vpop.f32.mrb[0].mxu0
      %v7252 = vadd.f32 0.0, %v7251
      %7253 = vmatprep.mubr.bf16.mxu0 0
      %7254 = vmatmul.mubr.bf16.gmra.mrb[0].mxu0 %v7071
      %v7255 = vpop.f32.mrb[0].mxu0
      %v7256 = vadd.f32 0.0, %v7255
      %v7257 = vpop.f32.mrb[0].mxu0
      %v7258 = vadd.f32 0.0, %v7257
      %v7259 = vpop.f32.mrb[0].mxu0
      %v7260 = vadd.f32 0.0, %v7259
      %v7261 = vpop.f32.mrb[0].mxu0
      %v7262 = vadd.f32 0.0, %v7261
      %7263 = vmatprep.mubr.bf16.mxu0 0
      %7264 = vmatmul.mubr.bf16.gmra.mrb[0].mxu0 %v7072
      %v7265 = vpop.f32.mrb[0].mxu0
      %v7266 = vadd.f32 0.0, %v7265
      %v7267 = vpop.f32.mrb[0].mxu0
      %v7268 = vadd.f32 0.0, %v7267
      %v7269 = vpop.f32.mrb[0].mxu0
      %v7270 = vadd.f32 0.0, %v7269
      %v7271 = vpop.f32.mrb[0].mxu0
      %v7272 = vadd.f32 0.0, %v7271
      %7273 = vdwg.mxu0
      %v7274 = vadd.f32 %v6784, %v7196
      %v7275 = vadd.f32 %v6785, %v7198
      %v7276 = vadd.f32 %v6786, %v7200
      %v7277 = vadd.f32 %v6787, %v7202
      %v7278 = vadd.f32 %v6788, %v7206
      %v7279 = vadd.f32 %v6789, %v7208
      %v7280 = vadd.f32 %v6790, %v7210
      %v7281 = vadd.f32 %v6791, %v7212
      %v7282 = vadd.f32 %v6792, %v7216
      %v7283 = vadd.f32 %v6793, %v7218
      %v7284 = vadd.f32 %v6794, %v7220
      %v7285 = vadd.f32 %v6795, %v7222
      %v7286 = vadd.f32 %v6796, %v7226
      %v7287 = vadd.f32 %v6797, %v7228
      %v7288 = vadd.f32 %v6798, %v7230
      %v7289 = vadd.f32 %v6799, %v7232
      %v7290 = vadd.f32 %v6800, %v7236
      %v7291 = vadd.f32 %v6801, %v7238
      %v7292 = vadd.f32 %v6802, %v7240
      %v7293 = vadd.f32 %v6803, %v7242
      %v7294 = vadd.f32 %v6804, %v7246
      %v7295 = vadd.f32 %v6805, %v7248
      %v7296 = vadd.f32 %v6806, %v7250
      %v7297 = vadd.f32 %v6807, %v7252
      %v7298 = vadd.f32 %v6808, %v7256
      %v7299 = vadd.f32 %v6809, %v7258
      %v7300 = vadd.f32 %v6810, %v7260
      %v7301 = vadd.f32 %v6811, %v7262
      %v7302 = vadd.f32 %v6812, %v7266
      %v7303 = vadd.f32 %v6813, %v7268
      %v7304 = vadd.f32 %v6814, %v7270
      %v7305 = vadd.f32 %v6815, %v7272
      %v7306 = vld [vmem:[#allocation4] sm:$0xe]
      %v7307 = vld [vmem:[#allocation4 + $0xc] sm:$0xe]
      %v7308 = vld [vmem:[#allocation4 + $0x18] sm:$0xe]
      %v7309 = vld [vmem:[#allocation4 + $0x24] sm:$0xe]
      %v7310 = vld [vmem:[#allocation4 + $0x30] sm:$0xe]
      %v7311 = vld [vmem:[#allocation4 + $0x3c] sm:$0xe]
      %v7312 = vld [vmem:[#allocation4 + $0x48] sm:$0xe]
      %v7313 = vld [vmem:[#allocation4 + $0x54] sm:$0xe]
      %v7338 = vrot.slane %v7306, 5
      %v7339 = vrot.slane %v7338, 4
      %v7340 = vrot.slane %v6817, 5
      %v7341 = vsel %vm1731, %v7339, %v7340
      %v7342 = vrot.slane %v7340, 4
      %v7343 = vrot.slane %v6818, 5
      %v7344 = vsel %vm1731, %v7342, %v7343
      %v7345 = vrot.slane %v7307, 5
      %v7346 = vrot.slane %v7345, 4
      %v7347 = vrot.slane %v6820, 5
      %v7348 = vsel %vm1731, %v7346, %v7347
      %v7349 = vrot.slane %v7347, 4
      %v7350 = vrot.slane %v6821, 5
      %v7351 = vsel %vm1731, %v7349, %v7350
      %v7352 = vrot.slane %v7308, 5
      %v7353 = vrot.slane %v7352, 4
      %v7354 = vrot.slane %v6823, 5
      %v7355 = vsel %vm1731, %v7353, %v7354
      %v7356 = vrot.slane %v7354, 4
      %v7357 = vrot.slane %v6824, 5
      %v7358 = vsel %vm1731, %v7356, %v7357
      %v7359 = vrot.slane %v7309, 5
      %v7360 = vrot.slane %v7359, 4
      %v7361 = vrot.slane %v6826, 5
      %v7362 = vsel %vm1731, %v7360, %v7361
      %v7363 = vrot.slane %v7361, 4
      %v7364 = vrot.slane %v6827, 5
      %v7365 = vsel %vm1731, %v7363, %v7364
      %v7366 = vrot.slane %v7310, 5
      %v7367 = vrot.slane %v7366, 4
      %v7368 = vrot.slane %v6829, 5
      %v7369 = vsel %vm1731, %v7367, %v7368
      %v7370 = vrot.slane %v7368, 4
      %v7371 = vrot.slane %v6830, 5
      %v7372 = vsel %vm1731, %v7370, %v7371
      %v7373 = vrot.slane %v7311, 5
      %v7374 = vrot.slane %v7373, 4
      %v7375 = vrot.slane %v6832, 5
      %v7376 = vsel %vm1731, %v7374, %v7375
      %v7377 = vrot.slane %v7375, 4
      %v7378 = vrot.slane %v6833, 5
      %v7379 = vsel %vm1731, %v7377, %v7378
      %v7380 = vrot.slane %v7312, 5
      %v7381 = vrot.slane %v7380, 4
      %v7382 = vrot.slane %v6835, 5
      %v7383 = vsel %vm1731, %v7381, %v7382
      %v7384 = vrot.slane %v7382, 4
      %v7385 = vrot.slane %v6836, 5
      %v7386 = vsel %vm1731, %v7384, %v7385
      %v7387 = vrot.slane %v7313, 5
      %v7388 = vrot.slane %v7387, 4
      %v7389 = vrot.slane %v6838, 5
      %v7390 = vsel %vm1731, %v7388, %v7389
      %v7391 = vrot.slane %v7389, 4
      %v7392 = vrot.slane %v6839, 5
      %v7393 = vsel %vm1731, %v7391, %v7392
      %s7394 = scalar_lea.vmem %s9, 256
      %v7395 = vld [vmem:[%s7394] sm:$0xff]
      %v7396 = vld [vmem:[%s7394 + $0x8] sm:$0xff]
      %v7397 = vld [vmem:[%s7394 + $0x10] sm:$0xff]
      %v7398 = vld [vmem:[%s7394 + $0x18] sm:$0xff]
      %v7399 = vld [vmem:[%s7394 + $0x20] sm:$0xff]
      %v7400 = vld [vmem:[%s7394 + $0x28] sm:$0xff]
      %v7401 = vld [vmem:[%s7394 + $0x30] sm:$0xff]
      %v7402 = vld [vmem:[%s7394 + $0x38] sm:$0xff]
      %v7403 = vld [vmem:[%s7394 + $0x40] sm:$0xff]
      %v7404 = vld [vmem:[%s7394 + $0x48] sm:$0xff]
      %v7405 = vld [vmem:[%s7394 + $0x50] sm:$0xff]
      %v7406 = vld [vmem:[%s7394 + $0x58] sm:$0xff]
      %v7407 = vld [vmem:[%s7394 + $0x60] sm:$0xff]
      %v7408 = vld [vmem:[%s7394 + $0x68] sm:$0xff]
      %v7409 = vld [vmem:[%s7394 + $0x70] sm:$0xff]
      %v7410 = vld [vmem:[%s7394 + $0x78] sm:$0xff]
      %v7411 = vunpack.c.l.b16 %v7341
      %v7412 = vunpack.c.l.b16 %v7344
      %v7413 = vunpack.c.l.b16 %v7348
      %v7414 = vunpack.c.l.b16 %v7351
      %v7415 = vunpack.c.l.b16 %v7355
      %v7416 = vunpack.c.l.b16 %v7358
      %v7417 = vunpack.c.l.b16 %v7362
      %v7418 = vunpack.c.l.b16 %v7365
      %v7419 = vunpack.c.l.b16 %v7369
      %v7420 = vunpack.c.l.b16 %v7372
      %v7421 = vunpack.c.l.b16 %v7376
      %v7422 = vunpack.c.l.b16 %v7379
      %v7423 = vunpack.c.l.b16 %v7383
      %v7424 = vunpack.c.l.b16 %v7386
      %v7425 = vunpack.c.l.b16 %v7390
      %v7426 = vunpack.c.l.b16 %v7393
      %v7427 = vpack.c.b16 %v7412, %v7411
      %v7428 = vpack.c.b16 %v7414, %v7413
      %v7429 = vpack.c.b16 %v7416, %v7415
      %v7430 = vpack.c.b16 %v7418, %v7417
      %v7431 = vpack.c.b16 %v7420, %v7419
      %v7432 = vpack.c.b16 %v7422, %v7421
      %v7433 = vpack.c.b16 %v7424, %v7423
      %v7434 = vpack.c.b16 %v7426, %v7425
      %v7459 = vunpack.c.l.b16 %v7395
      %v7460 = vunpack.c.h.b16 %v7395
      %v7461 = vunpack.c.l.b16 %v7396
      %v7462 = vunpack.c.h.b16 %v7396
      %v7463 = vunpack.c.l.b16 %v7397
      %v7464 = vunpack.c.h.b16 %v7397
      %v7465 = vunpack.c.l.b16 %v7398
      %v7466 = vunpack.c.h.b16 %v7398
      %v7467 = vunpack.c.l.b16 %v7399
      %v7468 = vunpack.c.h.b16 %v7399
      %v7469 = vunpack.c.l.b16 %v7400
      %v7470 = vunpack.c.h.b16 %v7400
      %v7471 = vunpack.c.l.b16 %v7401
      %v7472 = vunpack.c.h.b16 %v7401
      %v7473 = vunpack.c.l.b16 %v7402
      %v7474 = vunpack.c.h.b16 %v7402
      %v7475 = vunpack.c.l.b16 %v7403
      %v7476 = vunpack.c.h.b16 %v7403
      %v7477 = vunpack.c.l.b16 %v7404
      %v7478 = vunpack.c.h.b16 %v7404
      %v7479 = vunpack.c.l.b16 %v7405
      %v7480 = vunpack.c.h.b16 %v7405
      %v7481 = vunpack.c.l.b16 %v7406
      %v7482 = vunpack.c.h.b16 %v7406
      %v7483 = vunpack.c.l.b16 %v7407
      %v7484 = vunpack.c.h.b16 %v7407
      %v7485 = vunpack.c.l.b16 %v7408
      %v7486 = vunpack.c.h.b16 %v7408
      %v7487 = vunpack.c.l.b16 %v7409
      %v7488 = vunpack.c.h.b16 %v7409
      %v7489 = vunpack.c.l.b16 %v7410
      %v7490 = vunpack.c.h.b16 %v7410
      %v7491 = vpack.c.b16 %v7461, %v7459
      %v7492 = vpack.c.b16 %v7462, %v7460
      %v7493 = vpack.c.b16 %v7465, %v7463
      %v7494 = vpack.c.b16 %v7466, %v7464
      %v7495 = vpack.c.b16 %v7469, %v7467
      %v7496 = vpack.c.b16 %v7470, %v7468
      %v7497 = vpack.c.b16 %v7473, %v7471
      %v7498 = vpack.c.b16 %v7474, %v7472
      %v7499 = vpack.c.b16 %v7477, %v7475
      %v7500 = vpack.c.b16 %v7478, %v7476
      %v7501 = vpack.c.b16 %v7481, %v7479
      %v7502 = vpack.c.b16 %v7482, %v7480
      %v7503 = vpack.c.b16 %v7485, %v7483
      %v7504 = vpack.c.b16 %v7486, %v7484
      %v7505 = vpack.c.b16 %v7489, %v7487
      %v7506 = vpack.c.b16 %v7490, %v7488
      %7523 = vmatprep.subr.bf16.mxu0 %v7492
      %7524 = vmatpush1.bf16.msra.mxu0 %v7491
      %7525 = vmatprep.subr.bf16.mxu0 %v7494
      %7526 = vmatpush1.bf16.msra.mxu0 %v7493
      %7527 = vmatprep.subr.bf16.mxu0 %v7496
      %7528 = vmatpush1.bf16.msra.mxu0 %v7495
      %7529 = vmatprep.subr.bf16.mxu0 %v7498
      %7530 = vmatpush1.bf16.msra.mxu0 %v7497
      %7531 = vmatprep.subr.bf16.mxu0 %v7500
      %7532 = vmatpush1.bf16.msra.mxu0 %v7499
      %7533 = vmatprep.subr.bf16.mxu0 %v7502
      %7534 = vmatpush1.bf16.msra.mxu0 %v7501
      %7535 = vmatprep.subr.bf16.mxu0 %v7504
      %7536 = vmatpush1.bf16.msra.mxu0 %v7503
      %7537 = vmatprep.subr.bf16.mxu0 %v7506
      %7538 = vmatpush1.bf16.msra.mxu0 %v7505
      %7539 = vmatprep.subr.bf16.mxu0 0
      %7540 = vmatpush1.bf16.msra.mxu0 0
      %7541 = vmatprep.subr.bf16.mxu0 0
      %7542 = vmatpush1.bf16.msra.mxu0 0
      %7543 = vmatprep.subr.bf16.mxu0 0
      %7544 = vmatpush1.bf16.msra.mxu0 0
      %7545 = vmatprep.subr.bf16.mxu0 0
      %7546 = vmatpush1.bf16.msra.mxu0 0
      %7547 = vmatprep.subr.bf16.mxu0 0
      %7548 = vmatpush1.bf16.msra.mxu0 0
      %7549 = vmatprep.subr.bf16.mxu0 0
      %7550 = vmatpush1.bf16.msra.mxu0 0
      %7551 = vmatprep.subr.bf16.mxu0 0
      %7552 = vmatpush1.bf16.msra.mxu0 0
      %7553 = vmatprep.subr.bf16.mxu0 0
      %7554 = vmatpush1.bf16.msra.mxu0 0
      %7555 = vmatprep.mubr.bf16.mxu0 0
      %7556 = vmatmul.mubr.bf16.gmra.mrb[0].mxu0 %v7427
      %v7557 = vpop.f32.mrb[0].mxu0
      %v7558 = vadd.f32 0.0, %v7557
      %v7559 = vpop.f32.mrb[0].mxu0
      %v7560 = vadd.f32 0.0, %v7559
      %v7561 = vpop.f32.mrb[0].mxu0
      %v7562 = vadd.f32 0.0, %v7561
      %v7563 = vpop.f32.mrb[0].mxu0
      %v7564 = vadd.f32 0.0, %v7563
      %7565 = vmatprep.mubr.bf16.mxu0 0
      %7566 = vmatmul.mubr.bf16.gmra.mrb[0].mxu0 %v7428
      %v7567 = vpop.f32.mrb[0].mxu0
      %v7568 = vadd.f32 0.0, %v7567
      %v7569 = vpop.f32.mrb[0].mxu0
      %v7570 = vadd.f32 0.0, %v7569
      %v7571 = vpop.f32.mrb[0].mxu0
      %v7572 = vadd.f32 0.0, %v7571
      %v7573 = vpop.f32.mrb[0].mxu0
      %v7574 = vadd.f32 0.0, %v7573
      %7575 = vmatprep.mubr.bf16.mxu0 0
      %7576 = vmatmul.mubr.bf16.gmra.mrb[0].mxu0 %v7429
      %v7577 = vpop.f32.mrb[0].mxu0
      %v7578 = vadd.f32 0.0, %v7577
      %v7579 = vpop.f32.mrb[0].mxu0
      %v7580 = vadd.f32 0.0, %v7579
      %v7581 = vpop.f32.mrb[0].mxu0
      %v7582 = vadd.f32 0.0, %v7581
      %v7583 = vpop.f32.mrb[0].mxu0
      %v7584 = vadd.f32 0.0, %v7583
      %7585 = vmatprep.mubr.bf16.mxu0 0
      %7586 = vmatmul.mubr.bf16.gmra.mrb[0].mxu0 %v7430
      %v7587 = vpop.f32.mrb[0].mxu0
      %v7588 = vadd.f32 0.0, %v7587
      %v7589 = vpop.f32.mrb[0].mxu0
      %v7590 = vadd.f32 0.0, %v7589
      %v7591 = vpop.f32.mrb[0].mxu0
      %v7592 = vadd.f32 0.0, %v7591
      %v7593 = vpop.f32.mrb[0].mxu0
      %v7594 = vadd.f32 0.0, %v7593
      %7595 = vmatprep.mubr.bf16.mxu0 0
      %7596 = vmatmul.mubr.bf16.gmra.mrb[0].mxu0 %v7431
      %v7597 = vpop.f32.mrb[0].mxu0
      %v7598 = vadd.f32 0.0, %v7597
      %v7599 = vpop.f32.mrb[0].mxu0
      %v7600 = vadd.f32 0.0, %v7599
      %v7601 = vpop.f32.mrb[0].mxu0
      %v7602 = vadd.f32 0.0, %v7601
      %v7603 = vpop.f32.mrb[0].mxu0
      %v7604 = vadd.f32 0.0, %v7603
      %7605 = vmatprep.mubr.bf16.mxu0 0
      %7606 = vmatmul.mubr.bf16.gmra.mrb[0].mxu0 %v7432
      %v7607 = vpop.f32.mrb[0].mxu0
      %v7608 = vadd.f32 0.0, %v7607
      %v7609 = vpop.f32.mrb[0].mxu0
      %v7610 = vadd.f32 0.0, %v7609
      %v7611 = vpop.f32.mrb[0].mxu0
      %v7612 = vadd.f32 0.0, %v7611
      %v7613 = vpop.f32.mrb[0].mxu0
      %v7614 = vadd.f32 0.0, %v7613
      %7615 = vmatprep.mubr.bf16.mxu0 0
      %7616 = vmatmul.mubr.bf16.gmra.mrb[0].mxu0 %v7433
      %v7617 = vpop.f32.mrb[0].mxu0
      %v7618 = vadd.f32 0.0, %v7617
      %v7619 = vpop.f32.mrb[0].mxu0
      %v7620 = vadd.f32 0.0, %v7619
      %v7621 = vpop.f32.mrb[0].mxu0
      %v7622 = vadd.f32 0.0, %v7621
      %v7623 = vpop.f32.mrb[0].mxu0
      %v7624 = vadd.f32 0.0, %v7623
      %7625 = vmatprep.mubr.bf16.mxu0 0
      %7626 = vmatmul.mubr.bf16.gmra.mrb[0].mxu0 %v7434
      %v7627 = vpop.f32.mrb[0].mxu0
      %v7628 = vadd.f32 0.0, %v7627
      %v7629 = vpop.f32.mrb[0].mxu0
      %v7630 = vadd.f32 0.0, %v7629
      %v7631 = vpop.f32.mrb[0].mxu0
      %v7632 = vadd.f32 0.0, %v7631
      %v7633 = vpop.f32.mrb[0].mxu0
      %v7634 = vadd.f32 0.0, %v7633
      %7635 = vdwg.mxu0
      %v7636 = vadd.f32 %v7274, %v7558
      %v7637 = vadd.f32 %v7275, %v7560
      %v7638 = vadd.f32 %v7276, %v7562
      %v7639 = vadd.f32 %v7277, %v7564
      %v7640 = vadd.f32 %v7278, %v7568
      %v7641 = vadd.f32 %v7279, %v7570
      %v7642 = vadd.f32 %v7280, %v7572
      %v7643 = vadd.f32 %v7281, %v7574
      %v7644 = vadd.f32 %v7282, %v7578
      %v7645 = vadd.f32 %v7283, %v7580
      %v7646 = vadd.f32 %v7284, %v7582
      %v7647 = vadd.f32 %v7285, %v7584
      %v7648 = vadd.f32 %v7286, %v7588
      %v7649 = vadd.f32 %v7287, %v7590
      %v7650 = vadd.f32 %v7288, %v7592
      %v7651 = vadd.f32 %v7289, %v7594
      %v7652 = vadd.f32 %v7290, %v7598
      %v7653 = vadd.f32 %v7291, %v7600
      %v7654 = vadd.f32 %v7292, %v7602
      %v7655 = vadd.f32 %v7293, %v7604
      %v7656 = vadd.f32 %v7294, %v7608
      %v7657 = vadd.f32 %v7295, %v7610
      %v7658 = vadd.f32 %v7296, %v7612
      %v7659 = vadd.f32 %v7297, %v7614
      %v7660 = vadd.f32 %v7298, %v7618
      %v7661 = vadd.f32 %v7299, %v7620
      %v7662 = vadd.f32 %v7300, %v7622
      %v7663 = vadd.f32 %v7301, %v7624
      %v7664 = vadd.f32 %v7302, %v7628
      %v7665 = vadd.f32 %v7303, %v7630
      %v7666 = vadd.f32 %v7304, %v7632
      %v7667 = vadd.f32 %v7305, %v7634
      %v7668 = vmax.f32 %v7636, 0.0
      %v7669 = vmax.f32 %v7637, 0.0
      %v7670 = vmax.f32 %v7638, 0.0
      %v7671 = vmax.f32 %v7639, 0.0
      %v7672 = vmax.f32 %v7640, 0.0
      %v7673 = vmax.f32 %v7641, 0.0
      %v7674 = vmax.f32 %v7642, 0.0
      %v7675 = vmax.f32 %v7643, 0.0
      %v7676 = vmax.f32 %v7644, 0.0
      %v7677 = vmax.f32 %v7645, 0.0
      %v7678 = vmax.f32 %v7646, 0.0
      %v7679 = vmax.f32 %v7647, 0.0
      %v7680 = vmax.f32 %v7648, 0.0
      %v7681 = vmax.f32 %v7649, 0.0
      %v7682 = vmax.f32 %v7650, 0.0
      %v7683 = vmax.f32 %v7651, 0.0
      %v7684 = vmax.f32 %v7652, 0.0
      %v7685 = vmax.f32 %v7653, 0.0
      %v7686 = vmax.f32 %v7654, 0.0
      %v7687 = vmax.f32 %v7655, 0.0
      %v7688 = vmax.f32 %v7656, 0.0
      %v7689 = vmax.f32 %v7657, 0.0
      %v7690 = vmax.f32 %v7658, 0.0
      %v7691 = vmax.f32 %v7659, 0.0
      %v7692 = vmax.f32 %v7660, 0.0
      %v7693 = vmax.f32 %v7661, 0.0
      %v7694 = vmax.f32 %v7662, 0.0
      %v7695 = vmax.f32 %v7663, 0.0
      %v7696 = vmax.f32 %v7664, 0.0
      %v7697 = vmax.f32 %v7665, 0.0
      %v7698 = vmax.f32 %v7666, 0.0
      %v7699 = vmax.f32 %v7667, 0.0
      %v7700 = vpack.c.bf16 %v7670, %v7668
      %v7701 = vpack.c.bf16 %v7671, %v7669
      %v7702 = vpack.c.bf16 %v7674, %v7672
      %v7703 = vpack.c.bf16 %v7675, %v7673
      %v7704 = vpack.c.bf16 %v7678, %v7676
      %v7705 = vpack.c.bf16 %v7679, %v7677
      %v7706 = vpack.c.bf16 %v7682, %v7680
      %v7707 = vpack.c.bf16 %v7683, %v7681
      %v7708 = vpack.c.bf16 %v7686, %v7684
      %v7709 = vpack.c.bf16 %v7687, %v7685
      %v7710 = vpack.c.bf16 %v7690, %v7688
      %v7711 = vpack.c.bf16 %v7691, %v7689
      %v7712 = vpack.c.bf16 %v7694, %v7692
      %v7713 = vpack.c.bf16 %v7695, %v7693
      %v7714 = vpack.c.bf16 %v7698, %v7696
      %v7715 = vpack.c.bf16 %v7699, %v7697
      %v7732 = vunpack.c.l.b16 %v7700
      %v7733 = vunpack.c.l.b16 %v7701
      %v7734 = vunpack.c.h.b16 %v7700
      %v7735 = vunpack.c.h.b16 %v7701
      %v7736 = vunpack.c.l.b16 %v7702
      %v7737 = vunpack.c.l.b16 %v7703
      %v7738 = vunpack.c.h.b16 %v7702
      %v7739 = vunpack.c.h.b16 %v7703
      %v7740 = vunpack.c.l.b16 %v7704
      %v7741 = vunpack.c.l.b16 %v7705
      %v7742 = vunpack.c.h.b16 %v7704
      %v7743 = vunpack.c.h.b16 %v7705
      %v7744 = vunpack.c.l.b16 %v7706
      %v7745 = vunpack.c.l.b16 %v7707
      %v7746 = vunpack.c.h.b16 %v7706
      %v7747 = vunpack.c.h.b16 %v7707
      %v7748 = vunpack.c.l.b16 %v7708
      %v7749 = vunpack.c.l.b16 %v7709
      %v7750 = vunpack.c.h.b16 %v7708
      %v7751 = vunpack.c.h.b16 %v7709
      %v7752 = vunpack.c.l.b16 %v7710
      %v7753 = vunpack.c.l.b16 %v7711
      %v7754 = vunpack.c.h.b16 %v7710
      %v7755 = vunpack.c.h.b16 %v7711
      %v7756 = vunpack.c.l.b16 %v7712
      %v7757 = vunpack.c.l.b16 %v7713
      %v7758 = vunpack.c.h.b16 %v7712
      %v7759 = vunpack.c.h.b16 %v7713
      %v7760 = vunpack.c.l.b16 %v7714
      %v7761 = vunpack.c.l.b16 %v7715
      %v7762 = vunpack.c.h.b16 %v7714
      %v7763 = vunpack.c.h.b16 %v7715
      %v7764 = vpack.c.b16 %v7733, %v7732
      %v7765 = vpack.c.b16 %v7735, %v7734
      %v7766 = vpack.c.b16 %v7737, %v7736
      %v7767 = vpack.c.b16 %v7739, %v7738
      %v7768 = vpack.c.b16 %v7741, %v7740
      %v7769 = vpack.c.b16 %v7743, %v7742
      %v7770 = vpack.c.b16 %v7745, %v7744
      %v7771 = vpack.c.b16 %v7747, %v7746
      %v7772 = vpack.c.b16 %v7749, %v7748
      %v7773 = vpack.c.b16 %v7751, %v7750
      %v7774 = vpack.c.b16 %v7753, %v7752
      %v7775 = vpack.c.b16 %v7755, %v7754
      %v7776 = vpack.c.b16 %v7757, %v7756
      %v7777 = vpack.c.b16 %v7759, %v7758
      %v7778 = vpack.c.b16 %v7761, %v7760
      %v7779 = vpack.c.b16 %v7763, %v7762
      %v7781 = vshrl.u32 %v7764, 16
      %v7783 = vrot.slane %v7781, 7
      %v7784 = vshll.u32 %v7764, 16
      %v7786 = vor.u32 %v7783, %v7784
      %v7787 = vrot.slane %v7783, 4
      %v7789 = vshrl.u32 %v7765, 16
      %v7791 = vrot.slane %v7789, 7
      %v7792 = vshll.u32 %v7765, 16
      %v7794 = vor.u32 %v7791, %v7792
      %v7795 = vsel %vm800, %v7787, %v7794
      %v7796 = vrot.slane %v7791, 4
      %v7798 = vshrl.u32 %v7766, 16
      %v7800 = vrot.slane %v7798, 7
      %v7801 = vshll.u32 %v7766, 16
      %v7803 = vor.u32 %v7800, %v7801
      %v7804 = vrot.slane %v7800, 4
      %v7806 = vshrl.u32 %v7767, 16
      %v7808 = vrot.slane %v7806, 7
      %v7809 = vshll.u32 %v7767, 16
      %v7811 = vor.u32 %v7808, %v7809
      %v7812 = vsel %vm800, %v7804, %v7811
      %v7813 = vrot.slane %v7808, 4
      %v7815 = vshrl.u32 %v7768, 16
      %v7817 = vrot.slane %v7815, 7
      %v7818 = vshll.u32 %v7768, 16
      %v7820 = vor.u32 %v7817, %v7818
      %v7821 = vrot.slane %v7817, 4
      %v7823 = vshrl.u32 %v7769, 16
      %v7825 = vrot.slane %v7823, 7
      %v7826 = vshll.u32 %v7769, 16
      %v7828 = vor.u32 %v7825, %v7826
      %v7829 = vsel %vm800, %v7821, %v7828
      %v7830 = vrot.slane %v7825, 4
      %v7832 = vshrl.u32 %v7770, 16
      %v7834 = vrot.slane %v7832, 7
      %v7835 = vshll.u32 %v7770, 16
      %v7837 = vor.u32 %v7834, %v7835
      %v7838 = vrot.slane %v7834, 4
      %v7840 = vshrl.u32 %v7771, 16
      %v7842 = vrot.slane %v7840, 7
      %v7843 = vshll.u32 %v7771, 16
      %v7845 = vor.u32 %v7842, %v7843
      %v7846 = vsel %vm800, %v7838, %v7845
      %v7847 = vrot.slane %v7842, 4
      %v7849 = vshrl.u32 %v7772, 16
      %v7851 = vrot.slane %v7849, 7
      %v7852 = vshll.u32 %v7772, 16
      %v7854 = vor.u32 %v7851, %v7852
      %v7855 = vrot.slane %v7851, 4
      %v7857 = vshrl.u32 %v7773, 16
      %v7859 = vrot.slane %v7857, 7
      %v7860 = vshll.u32 %v7773, 16
      %v7862 = vor.u32 %v7859, %v7860
      %v7863 = vsel %vm800, %v7855, %v7862
      %v7864 = vrot.slane %v7859, 4
      %v7866 = vshrl.u32 %v7774, 16
      %v7868 = vrot.slane %v7866, 7
      %v7869 = vshll.u32 %v7774, 16
      %v7871 = vor.u32 %v7868, %v7869
      %v7872 = vrot.slane %v7868, 4
      %v7874 = vshrl.u32 %v7775, 16
      %v7876 = vrot.slane %v7874, 7
      %v7877 = vshll.u32 %v7775, 16
      %v7879 = vor.u32 %v7876, %v7877
      %v7880 = vsel %vm800, %v7872, %v7879
      %v7881 = vrot.slane %v7876, 4
      %v7883 = vshrl.u32 %v7776, 16
      %v7885 = vrot.slane %v7883, 7
      %v7886 = vshll.u32 %v7776, 16
      %v7888 = vor.u32 %v7885, %v7886
      %v7889 = vrot.slane %v7885, 4
      %v7891 = vshrl.u32 %v7777, 16
      %v7893 = vrot.slane %v7891, 7
      %v7894 = vshll.u32 %v7777, 16
      %v7896 = vor.u32 %v7893, %v7894
      %v7897 = vsel %vm800, %v7889, %v7896
      %v7898 = vrot.slane %v7893, 4
      %v7900 = vshrl.u32 %v7778, 16
      %v7902 = vrot.slane %v7900, 7
      %v7903 = vshll.u32 %v7778, 16
      %v7905 = vor.u32 %v7902, %v7903
      %v7906 = vrot.slane %v7902, 4
      %v7908 = vshrl.u32 %v7779, 16
      %v7910 = vrot.slane %v7908, 7
      %v7911 = vshll.u32 %v7779, 16
      %v7913 = vor.u32 %v7910, %v7911
      %v7914 = vsel %vm800, %v7906, %v7913
      %v7915 = vrot.slane %v7910, 4
      %v7940 = vld [vmem:[#allocation5] sm:$0xff]
      %v7941 = vsel %vm2270, %v7786, %v7940
      %7942 = vst [vmem:[#allocation5] sm:$0xff] %v7941
      %7943 = vst [vmem:[#allocation5 + $0x8] sm:$0xff] %v7795
      %v7944 = vld [vmem:[#allocation5 + $0x10] sm:$0x11]
      %v7945 = vsel %vm562, %v7796, %v7944
      %7946 = vst [vmem:[#allocation5 + $0x10] sm:$0x11] %v7945
      %v7947 = vld [vmem:[#allocation5 + $0x18] sm:$0xff]
      %v7948 = vsel %vm2270, %v7803, %v7947
      %7949 = vst [vmem:[#allocation5 + $0x18] sm:$0xff] %v7948
      %7950 = vst [vmem:[#allocation5 + $0x20] sm:$0xff] %v7812
      %v7951 = vld [vmem:[#allocation5 + $0x28] sm:$0x11]
      %v7952 = vsel %vm562, %v7813, %v7951
      %7953 = vst [vmem:[#allocation5 + $0x28] sm:$0x11] %v7952
      %v7954 = vld [vmem:[#allocation5 + $0x30] sm:$0xff]
      %v7955 = vsel %vm2270, %v7820, %v7954
      %7956 = vst [vmem:[#allocation5 + $0x30] sm:$0xff] %v7955
      %7957 = vst [vmem:[#allocation5 + $0x38] sm:$0xff] %v7829
      %v7958 = vld [vmem:[#allocation5 + $0x40] sm:$0x11]
      %v7959 = vsel %vm562, %v7830, %v7958
      %7960 = vst [vmem:[#allocation5 + $0x40] sm:$0x11] %v7959
      %v7961 = vld [vmem:[#allocation5 + $0x48] sm:$0xff]
      %v7962 = vsel %vm2270, %v7837, %v7961
      %7963 = vst [vmem:[#allocation5 + $0x48] sm:$0xff] %v7962
      %7964 = vst [vmem:[#allocation5 + $0x50] sm:$0xff] %v7846
      %v7965 = vld [vmem:[#allocation5 + $0x58] sm:$0x11]
      %v7966 = vsel %vm562, %v7847, %v7965
      %7967 = vst [vmem:[#allocation5 + $0x58] sm:$0x11] %v7966
      %v7968 = vld [vmem:[#allocation5 + $0x60] sm:$0xff]
      %v7969 = vsel %vm2270, %v7854, %v7968
      %7970 = vst [vmem:[#allocation5 + $0x60] sm:$0xff] %v7969
      %7971 = vst [vmem:[#allocation5 + $0x68] sm:$0xff] %v7863
      %v7972 = vld [vmem:[#allocation5 + $0x70] sm:$0x11]
      %v7973 = vsel %vm562, %v7864, %v7972
      %7974 = vst [vmem:[#allocation5 + $0x70] sm:$0x11] %v7973
      %v7975 = vld [vmem:[#allocation5 + $0x78] sm:$0xff]
      %v7976 = vsel %vm2270, %v7871, %v7975
      %7977 = vst [vmem:[#allocation5 + $0x78] sm:$0xff] %v7976
      %7978 = vst [vmem:[#allocation5 + $0x80] sm:$0xff] %v7880
      %v7979 = vld [vmem:[#allocation5 + $0x88] sm:$0x11]
      %v7980 = vsel %vm562, %v7881, %v7979
      %7981 = vst [vmem:[#allocation5 + $0x88] sm:$0x11] %v7980
      %v7982 = vld [vmem:[#allocation5 + $0x90] sm:$0xff]
      %v7983 = vsel %vm2270, %v7888, %v7982
      %7984 = vst [vmem:[#allocation5 + $0x90] sm:$0xff] %v7983
      %7985 = vst [vmem:[#allocation5 + $0x98] sm:$0xff] %v7897
      %v7986 = vld [vmem:[#allocation5 + $0xa0] sm:$0x11]
      %v7987 = vsel %vm562, %v7898, %v7986
      %7988 = vst [vmem:[#allocation5 + $0xa0] sm:$0x11] %v7987
      %v7989 = vld [vmem:[#allocation5 + $0xa8] sm:$0xff]
      %v7990 = vsel %vm2270, %v7905, %v7989
      %7991 = vst [vmem:[#allocation5 + $0xa8] sm:$0xff] %v7990
      %7992 = vst [vmem:[#allocation5 + $0xb0] sm:$0xff] %v7914
      %v7993 = vld [vmem:[#allocation5 + $0xb8] sm:$0x11]
      %v7994 = vsel %vm562, %v7915, %v7993
      %7995 = vst [vmem:[#allocation5 + $0xb8] sm:$0x11] %v7994
      %v7996 = vld [vmem:[%s12] sm:$0x1]
      %v7998 = vlaneseq
      %v7999 = vshrl.u32 %v7998, 7
      %v8000 = vsub.s32 0, %v7999
      %v8001 = vrot.slane %v7996, %v8000
      %v8003 = vadd.f32 %v8001, 0.0
      %v8004 = vld [vmem:[#allocation5] sm:$0xff]
      %v8005 = vld [vmem:[#allocation5 + $0x8] sm:$0xff]
      %v8006 = vld [vmem:[#allocation5 + $0x18] sm:$0xff]
      %v8007 = vld [vmem:[#allocation5 + $0x20] sm:$0xff]
      %v8008 = vld [vmem:[#allocation5 + $0x30] sm:$0xff]
      %v8009 = vld [vmem:[#allocation5 + $0x38] sm:$0xff]
      %v8010 = vld [vmem:[#allocation5 + $0x48] sm:$0xff]
      %v8011 = vld [vmem:[#allocation5 + $0x50] sm:$0xff]
      %v8012 = vld [vmem:[#allocation5 + $0x60] sm:$0xff]
      %v8013 = vld [vmem:[#allocation5 + $0x68] sm:$0xff]
      %v8014 = vld [vmem:[#allocation5 + $0x78] sm:$0xff]
      %v8015 = vld [vmem:[#allocation5 + $0x80] sm:$0xff]
      %v8016 = vld [vmem:[#allocation5 + $0x90] sm:$0xff]
      %v8017 = vld [vmem:[#allocation5 + $0x98] sm:$0xff]
      %v8018 = vld [vmem:[#allocation5 + $0xa8] sm:$0xff]
      %v8019 = vld [vmem:[#allocation5 + $0xb0] sm:$0xff]
      %v8020 = vld [vmem:[%s11] sm:$0xf]
      %v8021 = vld [vmem:[%s11 + $0x4] sm:$0xf]
      %v8022 = vld [vmem:[%s11 + $0x8] sm:$0xf]
      %v8023 = vld [vmem:[%s11 + $0xc] sm:$0xf]
      %v8024 = vld [vmem:[%s11 + $0x10] sm:$0xf]
      %v8025 = vld [vmem:[%s11 + $0x14] sm:$0xf]
      %v8026 = vld [vmem:[%s11 + $0x18] sm:$0xf]
      %v8027 = vld [vmem:[%s11 + $0x1c] sm:$0xf]
      %v8028 = vld [vmem:[%s11 + $0x20] sm:$0xf]
      %v8029 = vld [vmem:[%s11 + $0x24] sm:$0xf]
      %v8030 = vld [vmem:[%s11 + $0x28] sm:$0xf]
      %v8031 = vld [vmem:[%s11 + $0x2c] sm:$0xf]
      %v8032 = vld [vmem:[%s11 + $0x30] sm:$0xf]
      %v8033 = vld [vmem:[%s11 + $0x34] sm:$0xf]
      %v8034 = vld [vmem:[%s11 + $0x38] sm:$0xf]
      %v8035 = vld [vmem:[%s11 + $0x3c] sm:$0xf]
      %v8036 = vld [vmem:[%s11 + $0x40] sm:$0xf]
      %v8037 = vld [vmem:[%s11 + $0x44] sm:$0xf]
      %v8038 = vld [vmem:[%s11 + $0x48] sm:$0xf]
      %v8039 = vld [vmem:[%s11 + $0x4c] sm:$0xf]
      %v8040 = vld [vmem:[%s11 + $0x50] sm:$0xf]
      %v8041 = vld [vmem:[%s11 + $0x54] sm:$0xf]
      %v8042 = vld [vmem:[%s11 + $0x58] sm:$0xf]
      %v8043 = vld [vmem:[%s11 + $0x5c] sm:$0xf]
      %v8044 = vld [vmem:[%s11 + $0x60] sm:$0xf]
      %v8045 = vld [vmem:[%s11 + $0x64] sm:$0xf]
      %v8046 = vld [vmem:[%s11 + $0x68] sm:$0xf]
      %v8047 = vld [vmem:[%s11 + $0x6c] sm:$0xf]
      %v8048 = vld [vmem:[%s11 + $0x70] sm:$0xf]
      %v8049 = vld [vmem:[%s11 + $0x74] sm:$0xf]
      %v8050 = vld [vmem:[%s11 + $0x78] sm:$0xf]
      %v8051 = vld [vmem:[%s11 + $0x7c] sm:$0xf]
      %v8068 = vunpack.c.l.b16 %v8004
      %v8069 = vunpack.c.h.b16 %v8004
      %v8070 = vunpack.c.l.b16 %v8005
      %v8071 = vunpack.c.h.b16 %v8005
      %v8072 = vunpack.c.l.b16 %v8006
      %v8073 = vunpack.c.h.b16 %v8006
      %v8074 = vunpack.c.l.b16 %v8007
      %v8075 = vunpack.c.h.b16 %v8007
      %v8076 = vunpack.c.l.b16 %v8008
      %v8077 = vunpack.c.h.b16 %v8008
      %v8078 = vunpack.c.l.b16 %v8009
      %v8079 = vunpack.c.h.b16 %v8009
      %v8080 = vunpack.c.l.b16 %v8010
      %v8081 = vunpack.c.h.b16 %v8010
      %v8082 = vunpack.c.l.b16 %v8011
      %v8083 = vunpack.c.h.b16 %v8011
      %v8084 = vunpack.c.l.b16 %v8012
      %v8085 = vunpack.c.h.b16 %v8012
      %v8086 = vunpack.c.l.b16 %v8013
      %v8087 = vunpack.c.h.b16 %v8013
      %v8088 = vunpack.c.l.b16 %v8014
      %v8089 = vunpack.c.h.b16 %v8014
      %v8090 = vunpack.c.l.b16 %v8015
      %v8091 = vunpack.c.h.b16 %v8015
      %v8092 = vunpack.c.l.b16 %v8016
      %v8093 = vunpack.c.h.b16 %v8016
      %v8094 = vunpack.c.l.b16 %v8017
      %v8095 = vunpack.c.h.b16 %v8017
      %v8096 = vunpack.c.l.b16 %v8018
      %v8097 = vunpack.c.h.b16 %v8018
      %v8098 = vunpack.c.l.b16 %v8019
      %v8099 = vunpack.c.h.b16 %v8019
      %v8100 = vpack.c.b16 %v8070, %v8068
      %v8101 = vpack.c.b16 %v8071, %v8069
      %v8102 = vpack.c.b16 %v8074, %v8072
      %v8103 = vpack.c.b16 %v8075, %v8073
      %v8104 = vpack.c.b16 %v8078, %v8076
      %v8105 = vpack.c.b16 %v8079, %v8077
      %v8106 = vpack.c.b16 %v8082, %v8080
      %v8107 = vpack.c.b16 %v8083, %v8081
      %v8108 = vpack.c.b16 %v8086, %v8084
      %v8109 = vpack.c.b16 %v8087, %v8085
      %v8110 = vpack.c.b16 %v8090, %v8088
      %v8111 = vpack.c.b16 %v8091, %v8089
      %v8112 = vpack.c.b16 %v8094, %v8092
      %v8113 = vpack.c.b16 %v8095, %v8093
      %v8114 = vpack.c.b16 %v8098, %v8096
      %v8115 = vpack.c.b16 %v8099, %v8097
      %v8164 = vunpack.c.l.b16 %v8020
      %v8165 = vunpack.c.l.b16 %v8021
      %v8166 = vunpack.c.l.b16 %v8022
      %v8167 = vunpack.c.l.b16 %v8023
      %v8168 = vunpack.c.l.b16 %v8024
      %v8169 = vunpack.c.l.b16 %v8025
      %v8170 = vunpack.c.l.b16 %v8026
      %v8171 = vunpack.c.l.b16 %v8027
      %v8172 = vunpack.c.l.b16 %v8028
      %v8173 = vunpack.c.l.b16 %v8029
      %v8174 = vunpack.c.l.b16 %v8030
      %v8175 = vunpack.c.l.b16 %v8031
      %v8176 = vunpack.c.l.b16 %v8032
      %v8177 = vunpack.c.l.b16 %v8033
      %v8178 = vunpack.c.l.b16 %v8034
      %v8179 = vunpack.c.l.b16 %v8035
      %v8180 = vunpack.c.l.b16 %v8036
      %v8181 = vunpack.c.l.b16 %v8037
      %v8182 = vunpack.c.l.b16 %v8038
      %v8183 = vunpack.c.l.b16 %v8039
      %v8184 = vunpack.c.l.b16 %v8040
      %v8185 = vunpack.c.l.b16 %v8041
      %v8186 = vunpack.c.l.b16 %v8042
      %v8187 = vunpack.c.l.b16 %v8043
      %v8188 = vunpack.c.l.b16 %v8044
      %v8189 = vunpack.c.l.b16 %v8045
      %v8190 = vunpack.c.l.b16 %v8046
      %v8191 = vunpack.c.l.b16 %v8047
      %v8192 = vunpack.c.l.b16 %v8048
      %v8193 = vunpack.c.l.b16 %v8049
      %v8194 = vunpack.c.l.b16 %v8050
      %v8195 = vunpack.c.l.b16 %v8051
      %v8196 = vpack.c.b16 %v8165, %v8164
      %v8197 = vpack.c.b16 %v8167, %v8166
      %v8198 = vpack.c.b16 %v8169, %v8168
      %v8199 = vpack.c.b16 %v8171, %v8170
      %v8200 = vpack.c.b16 %v8173, %v8172
      %v8201 = vpack.c.b16 %v8175, %v8174
      %v8202 = vpack.c.b16 %v8177, %v8176
      %v8203 = vpack.c.b16 %v8179, %v8178
      %v8204 = vpack.c.b16 %v8181, %v8180
      %v8205 = vpack.c.b16 %v8183, %v8182
      %v8206 = vpack.c.b16 %v8185, %v8184
      %v8207 = vpack.c.b16 %v8187, %v8186
      %v8208 = vpack.c.b16 %v8189, %v8188
      %v8209 = vpack.c.b16 %v8191, %v8190
      %v8210 = vpack.c.b16 %v8193, %v8192
      %v8211 = vpack.c.b16 %v8195, %v8194
      %8228 = vmatprep.subr.bf16.mxu0 0
      %8229 = vmatpush1.bf16.msra.mxu0 %v8196
      %8230 = vmatprep.subr.bf16.mxu0 0
      %8231 = vmatpush1.bf16.msra.mxu0 %v8197
      %8232 = vmatprep.subr.bf16.mxu0 0
      %8233 = vmatpush1.bf16.msra.mxu0 %v8198
      %8234 = vmatprep.subr.bf16.mxu0 0
      %8235 = vmatpush1.bf16.msra.mxu0 %v8199
      %8236 = vmatprep.subr.bf16.mxu0 0
      %8237 = vmatpush1.bf16.msra.mxu0 %v8200
      %8238 = vmatprep.subr.bf16.mxu0 0
      %8239 = vmatpush1.bf16.msra.mxu0 %v8201
      %8240 = vmatprep.subr.bf16.mxu0 0
      %8241 = vmatpush1.bf16.msra.mxu0 %v8202
      %8242 = vmatprep.subr.bf16.mxu0 0
      %8243 = vmatpush1.bf16.msra.mxu0 %v8203
      %8244 = vmatprep.subr.bf16.mxu0 0
      %8245 = vmatpush1.bf16.msra.mxu0 %v8204
      %8246 = vmatprep.subr.bf16.mxu0 0
      %8247 = vmatpush1.bf16.msra.mxu0 %v8205
      %8248 = vmatprep.subr.bf16.mxu0 0
      %8249 = vmatpush1.bf16.msra.mxu0 %v8206
      %8250 = vmatprep.subr.bf16.mxu0 0
      %8251 = vmatpush1.bf16.msra.mxu0 %v8207
      %8252 = vmatprep.subr.bf16.mxu0 0
      %8253 = vmatpush1.bf16.msra.mxu0 %v8208
      %8254 = vmatprep.subr.bf16.mxu0 0
      %8255 = vmatpush1.bf16.msra.mxu0 %v8209
      %8256 = vmatprep.subr.bf16.mxu0 0
      %8257 = vmatpush1.bf16.msra.mxu0 %v8210
      %8258 = vmatprep.subr.bf16.mxu0 0
      %8259 = vmatpush1.bf16.msra.mxu0 %v8211
      %8260 = vmatprep.mubr.bf16.mxu0 %v8101
      %8261 = vmatmul.mubr.bf16.gmra.mrb[0].mxu0 %v8100
      %v8262 = vpop.f32.mrb[0].mxu0
      %v8263 = vadd.f32 0.0, %v8262
      %v8264 = vpop.f32.mrb[0].mxu0
      %v8265 = vpop.f32.mrb[0].mxu0
      %v8266 = vadd.f32 0.0, %v8265
      %v8267 = vpop.f32.mrb[0].mxu0
      %8268 = vmatprep.mubr.bf16.mxu0 %v8103
      %8269 = vmatmul.mubr.bf16.gmra.mrb[0].mxu0 %v8102
      %v8270 = vpop.f32.mrb[0].mxu0
      %v8271 = vadd.f32 0.0, %v8270
      %v8272 = vpop.f32.mrb[0].mxu0
      %v8273 = vpop.f32.mrb[0].mxu0
      %v8274 = vadd.f32 0.0, %v8273
      %v8275 = vpop.f32.mrb[0].mxu0
      %8276 = vmatprep.mubr.bf16.mxu0 %v8105
      %8277 = vmatmul.mubr.bf16.gmra.mrb[0].mxu0 %v8104
      %v8278 = vpop.f32.mrb[0].mxu0
      %v8279 = vadd.f32 0.0, %v8278
      %v8280 = vpop.f32.mrb[0].mxu0
      %v8281 = vpop.f32.mrb[0].mxu0
      %v8282 = vadd.f32 0.0, %v8281
      %v8283 = vpop.f32.mrb[0].mxu0
      %8284 = vmatprep.mubr.bf16.mxu0 %v8107
      %8285 = vmatmul.mubr.bf16.gmra.mrb[0].mxu0 %v8106
      %v8286 = vpop.f32.mrb[0].mxu0
      %v8287 = vadd.f32 0.0, %v8286
      %v8288 = vpop.f32.mrb[0].mxu0
      %v8289 = vpop.f32.mrb[0].mxu0
      %v8290 = vadd.f32 0.0, %v8289
      %v8291 = vpop.f32.mrb[0].mxu0
      %8292 = vmatprep.mubr.bf16.mxu0 %v8109
      %8293 = vmatmul.mubr.bf16.gmra.mrb[0].mxu0 %v8108
      %v8294 = vpop.f32.mrb[0].mxu0
      %v8295 = vadd.f32 0.0, %v8294
      %v8296 = vpop.f32.mrb[0].mxu0
      %v8297 = vpop.f32.mrb[0].mxu0
      %v8298 = vadd.f32 0.0, %v8297
      %v8299 = vpop.f32.mrb[0].mxu0
      %8300 = vmatprep.mubr.bf16.mxu0 %v8111
      %8301 = vmatmul.mubr.bf16.gmra.mrb[0].mxu0 %v8110
      %v8302 = vpop.f32.mrb[0].mxu0
      %v8303 = vadd.f32 0.0, %v8302
      %v8304 = vpop.f32.mrb[0].mxu0
      %v8305 = vpop.f32.mrb[0].mxu0
      %v8306 = vadd.f32 0.0, %v8305
      %v8307 = vpop.f32.mrb[0].mxu0
      %8308 = vmatprep.mubr.bf16.mxu0 %v8113
      %8309 = vmatmul.mubr.bf16.gmra.mrb[0].mxu0 %v8112
      %v8310 = vpop.f32.mrb[0].mxu0
      %v8311 = vadd.f32 0.0, %v8310
      %v8312 = vpop.f32.mrb[0].mxu0
      %v8313 = vpop.f32.mrb[0].mxu0
      %v8314 = vadd.f32 0.0, %v8313
      %v8315 = vpop.f32.mrb[0].mxu0
      %8316 = vmatprep.mubr.bf16.mxu0 %v8115
      %8317 = vmatmul.mubr.bf16.gmra.mrb[0].mxu0 %v8114
      %v8318 = vpop.f32.mrb[0].mxu0
      %v8319 = vadd.f32 0.0, %v8318
      %v8320 = vpop.f32.mrb[0].mxu0
      %v8321 = vpop.f32.mrb[0].mxu0
      %v8322 = vadd.f32 0.0, %v8321
      %v8323 = vpop.f32.mrb[0].mxu0
      %8324 = vdwg.mxu0
      %v8325 = vadd.f32 %v8003, %v8263
      %v8326 = vadd.f32 %v8003, %v8266
      %v8327 = vadd.f32 %v8003, %v8271
      %v8328 = vadd.f32 %v8003, %v8274
      %v8329 = vadd.f32 %v8003, %v8279
      %v8330 = vadd.f32 %v8003, %v8282
      %v8331 = vadd.f32 %v8003, %v8287
      %v8332 = vadd.f32 %v8003, %v8290
      %v8333 = vadd.f32 %v8003, %v8295
      %v8334 = vadd.f32 %v8003, %v8298
      %v8335 = vadd.f32 %v8003, %v8303
      %v8336 = vadd.f32 %v8003, %v8306
      %v8337 = vadd.f32 %v8003, %v8311
      %v8338 = vadd.f32 %v8003, %v8314
      %v8339 = vadd.f32 %v8003, %v8319
      %v8340 = vadd.f32 %v8003, %v8322
      %v8341 = vld [vmem:[#allocation5] sm:$0xff]
      %v8342 = vld [vmem:[#allocation5 + $0x8] sm:$0xff]
      %v8343 = vld [vmem:[#allocation5 + $0x10] sm:$0x11]
      %v8344 = vld [vmem:[#allocation5 + $0x18] sm:$0xff]
      %v8345 = vld [vmem:[#allocation5 + $0x20] sm:$0xff]
      %v8346 = vld [vmem:[#allocation5 + $0x28] sm:$0x11]
      %v8347 = vld [vmem:[#allocation5 + $0x30] sm:$0xff]
      %v8348 = vld [vmem:[#allocation5 + $0x38] sm:$0xff]
      %v8349 = vld [vmem:[#allocation5 + $0x40] sm:$0x11]
      %v8350 = vld [vmem:[#allocation5 + $0x48] sm:$0xff]
      %v8351 = vld [vmem:[#allocation5 + $0x50] sm:$0xff]
      %v8352 = vld [vmem:[#allocation5 + $0x58] sm:$0x11]
      %v8353 = vld [vmem:[#allocation5 + $0x60] sm:$0xff]
      %v8354 = vld [vmem:[#allocation5 + $0x68] sm:$0xff]
      %v8355 = vld [vmem:[#allocation5 + $0x70] sm:$0x11]
      %v8356 = vld [vmem:[#allocation5 + $0x78] sm:$0xff]
      %v8357 = vld [vmem:[#allocation5 + $0x80] sm:$0xff]
      %v8358 = vld [vmem:[#allocation5 + $0x88] sm:$0x11]
      %v8359 = vld [vmem:[#allocation5 + $0x90] sm:$0xff]
      %v8360 = vld [vmem:[#allocation5 + $0x98] sm:$0xff]
      %v8361 = vld [vmem:[#allocation5 + $0xa0] sm:$0x11]
      %v8362 = vld [vmem:[#allocation5 + $0xa8] sm:$0xff]
      %v8363 = vld [vmem:[#allocation5 + $0xb0] sm:$0xff]
      %v8364 = vld [vmem:[#allocation5 + $0xb8] sm:$0x11]
      %v8366 = vshrl.u32 %v8341, 16
      %v8368 = vrot.slane %v8366, 4
      %v8369 = vshll.u32 %v8341, 16
      %v8371 = vrot.slane %v8369, 5
      %v8372 = vor.u32 %v8368, %v8371
      %v8373 = vrot.slane %v8372, 4
      %v8375 = vshll.u32 %v8342, 16
      %v8377 = vrot.slane %v8375, 5
      %v8378 = vsel %vm1298, %v8373, %v8377
      %v8379 = vshrl.u32 %v8342, 16
      %v8381 = vrot.slane %v8379, 4
      %v8382 = vor.u32 %v8381, %v8377
      %v8383 = vrot.slane %v8382, 4
      %v8385 = vshll.u32 %v8343, 16
      %v8387 = vrot.slane %v8385, 5
      %v8388 = vsel %vm1298, %v8383, %v8387
      %v8390 = vshrl.u32 %v8344, 16
      %v8392 = vrot.slane %v8390, 4
      %v8393 = vshll.u32 %v8344, 16
      %v8395 = vrot.slane %v8393, 5
      %v8396 = vor.u32 %v8392, %v8395
      %v8397 = vrot.slane %v8396, 4
      %v8399 = vshll.u32 %v8345, 16
      %v8401 = vrot.slane %v8399, 5
      %v8402 = vsel %vm1298, %v8397, %v8401
      %v8403 = vshrl.u32 %v8345, 16
      %v8405 = vrot.slane %v8403, 4
      %v8406 = vor.u32 %v8405, %v8401
      %v8407 = vrot.slane %v8406, 4
      %v8409 = vshll.u32 %v8346, 16
      %v8411 = vrot.slane %v8409, 5
      %v8412 = vsel %vm1298, %v8407, %v8411
      %v8414 = vshrl.u32 %v8347, 16
      %v8416 = vrot.slane %v8414, 4
      %v8417 = vshll.u32 %v8347, 16
      %v8419 = vrot.slane %v8417, 5
      %v8420 = vor.u32 %v8416, %v8419
      %v8421 = vrot.slane %v8420, 4
      %v8423 = vshll.u32 %v8348, 16
      %v8425 = vrot.slane %v8423, 5
      %v8426 = vsel %vm1298, %v8421, %v8425
      %v8427 = vshrl.u32 %v8348, 16
      %v8429 = vrot.slane %v8427, 4
      %v8430 = vor.u32 %v8429, %v8425
      %v8431 = vrot.slane %v8430, 4
      %v8433 = vshll.u32 %v8349, 16
      %v8435 = vrot.slane %v8433, 5
      %v8436 = vsel %vm1298, %v8431, %v8435
      %v8438 = vshrl.u32 %v8350, 16
      %v8440 = vrot.slane %v8438, 4
      %v8441 = vshll.u32 %v8350, 16
      %v8443 = vrot.slane %v8441, 5
      %v8444 = vor.u32 %v8440, %v8443
      %v8445 = vrot.slane %v8444, 4
      %v8447 = vshll.u32 %v8351, 16
      %v8449 = vrot.slane %v8447, 5
      %v8450 = vsel %vm1298, %v8445, %v8449
      %v8451 = vshrl.u32 %v8351, 16
      %v8453 = vrot.slane %v8451, 4
      %v8454 = vor.u32 %v8453, %v8449
      %v8455 = vrot.slane %v8454, 4
      %v8457 = vshll.u32 %v8352, 16
      %v8459 = vrot.slane %v8457, 5
      %v8460 = vsel %vm1298, %v8455, %v8459
      %v8462 = vshrl.u32 %v8353, 16
      %v8464 = vrot.slane %v8462, 4
      %v8465 = vshll.u32 %v8353, 16
      %v8467 = vrot.slane %v8465, 5
      %v8468 = vor.u32 %v8464, %v8467
      %v8469 = vrot.slane %v8468, 4
      %v8471 = vshll.u32 %v8354, 16
      %v8473 = vrot.slane %v8471, 5
      %v8474 = vsel %vm1298, %v8469, %v8473
      %v8475 = vshrl.u32 %v8354, 16
      %v8477 = vrot.slane %v8475, 4
      %v8478 = vor.u32 %v8477, %v8473
      %v8479 = vrot.slane %v8478, 4
      %v8481 = vshll.u32 %v8355, 16
      %v8483 = vrot.slane %v8481, 5
      %v8484 = vsel %vm1298, %v8479, %v8483
      %v8486 = vshrl.u32 %v8356, 16
      %v8488 = vrot.slane %v8486, 4
      %v8489 = vshll.u32 %v8356, 16
      %v8491 = vrot.slane %v8489, 5
      %v8492 = vor.u32 %v8488, %v8491
      %v8493 = vrot.slane %v8492, 4
      %v8495 = vshll.u32 %v8357, 16
      %v8497 = vrot.slane %v8495, 5
      %v8498 = vsel %vm1298, %v8493, %v8497
      %v8499 = vshrl.u32 %v8357, 16
      %v8501 = vrot.slane %v8499, 4
      %v8502 = vor.u32 %v8501, %v8497
      %v8503 = vrot.slane %v8502, 4
      %v8505 = vshll.u32 %v8358, 16
      %v8507 = vrot.slane %v8505, 5
      %v8508 = vsel %vm1298, %v8503, %v8507
      %v8510 = vshrl.u32 %v8359, 16
      %v8512 = vrot.slane %v8510, 4
      %v8513 = vshll.u32 %v8359, 16
      %v8515 = vrot.slane %v8513, 5
      %v8516 = vor.u32 %v8512, %v8515
      %v8517 = vrot.slane %v8516, 4
      %v8519 = vshll.u32 %v8360, 16
      %v8521 = vrot.slane %v8519, 5
      %v8522 = vsel %vm1298, %v8517, %v8521
      %v8523 = vshrl.u32 %v8360, 16
      %v8525 = vrot.slane %v8523, 4
      %v8526 = vor.u32 %v8525, %v8521
      %v8527 = vrot.slane %v8526, 4
      %v8529 = vshll.u32 %v8361, 16
      %v8531 = vrot.slane %v8529, 5
      %v8532 = vsel %vm1298, %v8527, %v8531
      %v8534 = vshrl.u32 %v8362, 16
      %v8536 = vrot.slane %v8534, 4
      %v8537 = vshll.u32 %v8362, 16
      %v8539 = vrot.slane %v8537, 5
      %v8540 = vor.u32 %v8536, %v8539
      %v8541 = vrot.slane %v8540, 4
      %v8543 = vshll.u32 %v8363, 16
      %v8545 = vrot.slane %v8543, 5
      %v8546 = vsel %vm1298, %v8541, %v8545
      %v8547 = vshrl.u32 %v8363, 16
      %v8549 = vrot.slane %v8547, 4
      %v8550 = vor.u32 %v8549, %v8545
      %v8551 = vrot.slane %v8550, 4
      %v8553 = vshll.u32 %v8364, 16
      %v8555 = vrot.slane %v8553, 5
      %v8556 = vsel %vm1298, %v8551, %v8555
      %s8557 = scalar_lea.vmem %s11, 128
      %v8558 = vld [vmem:[%s8557] sm:$0xf]
      %v8559 = vld [vmem:[%s8557 + $0x4] sm:$0xf]
      %v8560 = vld [vmem:[%s8557 + $0x8] sm:$0xf]
      %v8561 = vld [vmem:[%s8557 + $0xc] sm:$0xf]
      %v8562 = vld [vmem:[%s8557 + $0x10] sm:$0xf]
      %v8563 = vld [vmem:[%s8557 + $0x14] sm:$0xf]
      %v8564 = vld [vmem:[%s8557 + $0x18] sm:$0xf]
      %v8565 = vld [vmem:[%s8557 + $0x1c] sm:$0xf]
      %v8566 = vld [vmem:[%s8557 + $0x20] sm:$0xf]
      %v8567 = vld [vmem:[%s8557 + $0x24] sm:$0xf]
      %v8568 = vld [vmem:[%s8557 + $0x28] sm:$0xf]
      %v8569 = vld [vmem:[%s8557 + $0x2c] sm:$0xf]
      %v8570 = vld [vmem:[%s8557 + $0x30] sm:$0xf]
      %v8571 = vld [vmem:[%s8557 + $0x34] sm:$0xf]
      %v8572 = vld [vmem:[%s8557 + $0x38] sm:$0xf]
      %v8573 = vld [vmem:[%s8557 + $0x3c] sm:$0xf]
      %v8574 = vld [vmem:[%s8557 + $0x40] sm:$0xf]
      %v8575 = vld [vmem:[%s8557 + $0x44] sm:$0xf]
      %v8576 = vld [vmem:[%s8557 + $0x48] sm:$0xf]
      %v8577 = vld [vmem:[%s8557 + $0x4c] sm:$0xf]
      %v8578 = vld [vmem:[%s8557 + $0x50] sm:$0xf]
      %v8579 = vld [vmem:[%s8557 + $0x54] sm:$0xf]
      %v8580 = vld [vmem:[%s8557 + $0x58] sm:$0xf]
      %v8581 = vld [vmem:[%s8557 + $0x5c] sm:$0xf]
      %v8582 = vld [vmem:[%s8557 + $0x60] sm:$0xf]
      %v8583 = vld [vmem:[%s8557 + $0x64] sm:$0xf]
      %v8584 = vld [vmem:[%s8557 + $0x68] sm:$0xf]
      %v8585 = vld [vmem:[%s8557 + $0x6c] sm:$0xf]
      %v8586 = vld [vmem:[%s8557 + $0x70] sm:$0xf]
      %v8587 = vld [vmem:[%s8557 + $0x74] sm:$0xf]
      %v8588 = vld [vmem:[%s8557 + $0x78] sm:$0xf]
      %v8589 = vld [vmem:[%s8557 + $0x7c] sm:$0xf]
      %v8590 = vunpack.c.l.b16 %v8378
      %v8591 = vunpack.c.h.b16 %v8378
      %v8592 = vunpack.c.l.b16 %v8388
      %v8593 = vunpack.c.h.b16 %v8388
      %v8594 = vunpack.c.l.b16 %v8402
      %v8595 = vunpack.c.h.b16 %v8402
      %v8596 = vunpack.c.l.b16 %v8412
      %v8597 = vunpack.c.h.b16 %v8412
      %v8598 = vunpack.c.l.b16 %v8426
      %v8599 = vunpack.c.h.b16 %v8426
      %v8600 = vunpack.c.l.b16 %v8436
      %v8601 = vunpack.c.h.b16 %v8436
      %v8602 = vunpack.c.l.b16 %v8450
      %v8603 = vunpack.c.h.b16 %v8450
      %v8604 = vunpack.c.l.b16 %v8460
      %v8605 = vunpack.c.h.b16 %v8460
      %v8606 = vunpack.c.l.b16 %v8474
      %v8607 = vunpack.c.h.b16 %v8474
      %v8608 = vunpack.c.l.b16 %v8484
      %v8609 = vunpack.c.h.b16 %v8484
      %v8610 = vunpack.c.l.b16 %v8498
      %v8611 = vunpack.c.h.b16 %v8498
      %v8612 = vunpack.c.l.b16 %v8508
      %v8613 = vunpack.c.h.b16 %v8508
      %v8614 = vunpack.c.l.b16 %v8522
      %v8615 = vunpack.c.h.b16 %v8522
      %v8616 = vunpack.c.l.b16 %v8532
      %v8617 = vunpack.c.h.b16 %v8532
      %v8618 = vunpack.c.l.b16 %v8546
      %v8619 = vunpack.c.h.b16 %v8546
      %v8620 = vunpack.c.l.b16 %v8556
      %v8621 = vunpack.c.h.b16 %v8556
      %v8622 = vpack.c.b16 %v8592, %v8590
      %v8623 = vpack.c.b16 %v8593, %v8591
      %v8624 = vpack.c.b16 %v8596, %v8594
      %v8625 = vpack.c.b16 %v8597, %v8595
      %v8626 = vpack.c.b16 %v8600, %v8598
      %v8627 = vpack.c.b16 %v8601, %v8599
      %v8628 = vpack.c.b16 %v8604, %v8602
      %v8629 = vpack.c.b16 %v8605, %v8603
      %v8630 = vpack.c.b16 %v8608, %v8606
      %v8631 = vpack.c.b16 %v8609, %v8607
      %v8632 = vpack.c.b16 %v8612, %v8610
      %v8633 = vpack.c.b16 %v8613, %v8611
      %v8634 = vpack.c.b16 %v8616, %v8614
      %v8635 = vpack.c.b16 %v8617, %v8615
      %v8636 = vpack.c.b16 %v8620, %v8618
      %v8637 = vpack.c.b16 %v8621, %v8619
      %v8686 = vunpack.c.l.b16 %v8558
      %v8687 = vunpack.c.l.b16 %v8559
      %v8688 = vunpack.c.l.b16 %v8560
      %v8689 = vunpack.c.l.b16 %v8561
      %v8690 = vunpack.c.l.b16 %v8562
      %v8691 = vunpack.c.l.b16 %v8563
      %v8692 = vunpack.c.l.b16 %v8564
      %v8693 = vunpack.c.l.b16 %v8565
      %v8694 = vunpack.c.l.b16 %v8566
      %v8695 = vunpack.c.l.b16 %v8567
      %v8696 = vunpack.c.l.b16 %v8568
      %v8697 = vunpack.c.l.b16 %v8569
      %v8698 = vunpack.c.l.b16 %v8570
      %v8699 = vunpack.c.l.b16 %v8571
      %v8700 = vunpack.c.l.b16 %v8572
      %v8701 = vunpack.c.l.b16 %v8573
      %v8702 = vunpack.c.l.b16 %v8574
      %v8703 = vunpack.c.l.b16 %v8575
      %v8704 = vunpack.c.l.b16 %v8576
      %v8705 = vunpack.c.l.b16 %v8577
      %v8706 = vunpack.c.l.b16 %v8578
      %v8707 = vunpack.c.l.b16 %v8579
      %v8708 = vunpack.c.l.b16 %v8580
      %v8709 = vunpack.c.l.b16 %v8581
      %v8710 = vunpack.c.l.b16 %v8582
      %v8711 = vunpack.c.l.b16 %v8583
      %v8712 = vunpack.c.l.b16 %v8584
      %v8713 = vunpack.c.l.b16 %v8585
      %v8714 = vunpack.c.l.b16 %v8586
      %v8715 = vunpack.c.l.b16 %v8587
      %v8716 = vunpack.c.l.b16 %v8588
      %v8717 = vunpack.c.l.b16 %v8589
      %v8718 = vpack.c.b16 %v8687, %v8686
      %v8719 = vpack.c.b16 %v8689, %v8688
      %v8720 = vpack.c.b16 %v8691, %v8690
      %v8721 = vpack.c.b16 %v8693, %v8692
      %v8722 = vpack.c.b16 %v8695, %v8694
      %v8723 = vpack.c.b16 %v8697, %v8696
      %v8724 = vpack.c.b16 %v8699, %v8698
      %v8725 = vpack.c.b16 %v8701, %v8700
      %v8726 = vpack.c.b16 %v8703, %v8702
      %v8727 = vpack.c.b16 %v8705, %v8704
      %v8728 = vpack.c.b16 %v8707, %v8706
      %v8729 = vpack.c.b16 %v8709, %v8708
      %v8730 = vpack.c.b16 %v8711, %v8710
      %v8731 = vpack.c.b16 %v8713, %v8712
      %v8732 = vpack.c.b16 %v8715, %v8714
      %v8733 = vpack.c.b16 %v8717, %v8716
      %8750 = vmatprep.subr.bf16.mxu0 0
      %8751 = vmatpush1.bf16.msra.mxu0 %v8718
      %8752 = vmatprep.subr.bf16.mxu0 0
      %8753 = vmatpush1.bf16.msra.mxu0 %v8719
      %8754 = vmatprep.subr.bf16.mxu0 0
      %8755 = vmatpush1.bf16.msra.mxu0 %v8720
      %8756 = vmatprep.subr.bf16.mxu0 0
      %8757 = vmatpush1.bf16.msra.mxu0 %v8721
      %8758 = vmatprep.subr.bf16.mxu0 0
      %8759 = vmatpush1.bf16.msra.mxu0 %v8722
      %8760 = vmatprep.subr.bf16.mxu0 0
      %8761 = vmatpush1.bf16.msra.mxu0 %v8723
      %8762 = vmatprep.subr.bf16.mxu0 0
      %8763 = vmatpush1.bf16.msra.mxu0 %v8724
      %8764 = vmatprep.subr.bf16.mxu0 0
      %8765 = vmatpush1.bf16.msra.mxu0 %v8725
      %8766 = vmatprep.subr.bf16.mxu0 0
      %8767 = vmatpush1.bf16.msra.mxu0 %v8726
      %8768 = vmatprep.subr.bf16.mxu0 0
      %8769 = vmatpush1.bf16.msra.mxu0 %v8727
      %8770 = vmatprep.subr.bf16.mxu0 0
      %8771 = vmatpush1.bf16.msra.mxu0 %v8728
      %8772 = vmatprep.subr.bf16.mxu0 0
      %8773 = vmatpush1.bf16.msra.mxu0 %v8729
      %8774 = vmatprep.subr.bf16.mxu0 0
      %8775 = vmatpush1.bf16.msra.mxu0 %v8730
      %8776 = vmatprep.subr.bf16.mxu0 0
      %8777 = vmatpush1.bf16.msra.mxu0 %v8731
      %8778 = vmatprep.subr.bf16.mxu0 0
      %8779 = vmatpush1.bf16.msra.mxu0 %v8732
      %8780 = vmatprep.subr.bf16.mxu0 0
      %8781 = vmatpush1.bf16.msra.mxu0 %v8733
      %8782 = vmatprep.mubr.bf16.mxu0 %v8623
      %8783 = vmatmul.mubr.bf16.gmra.mrb[0].mxu0 %v8622
      %v8784 = vpop.f32.mrb[0].mxu0
      %v8785 = vadd.f32 0.0, %v8784
      %v8786 = vpop.f32.mrb[0].mxu0
      %v8787 = vpop.f32.mrb[0].mxu0
      %v8788 = vadd.f32 0.0, %v8787
      %v8789 = vpop.f32.mrb[0].mxu0
      %8790 = vmatprep.mubr.bf16.mxu0 %v8625
      %8791 = vmatmul.mubr.bf16.gmra.mrb[0].mxu0 %v8624
      %v8792 = vpop.f32.mrb[0].mxu0
      %v8793 = vadd.f32 0.0, %v8792
      %v8794 = vpop.f32.mrb[0].mxu0
      %v8795 = vpop.f32.mrb[0].mxu0
      %v8796 = vadd.f32 0.0, %v8795
      %v8797 = vpop.f32.mrb[0].mxu0
      %8798 = vmatprep.mubr.bf16.mxu0 %v8627
      %8799 = vmatmul.mubr.bf16.gmra.mrb[0].mxu0 %v8626
      %v8800 = vpop.f32.mrb[0].mxu0
      %v8801 = vadd.f32 0.0, %v8800
      %v8802 = vpop.f32.mrb[0].mxu0
      %v8803 = vpop.f32.mrb[0].mxu0
      %v8804 = vadd.f32 0.0, %v8803
      %v8805 = vpop.f32.mrb[0].mxu0
      %8806 = vmatprep.mubr.bf16.mxu0 %v8629
      %8807 = vmatmul.mubr.bf16.gmra.mrb[0].mxu0 %v8628
      %v8808 = vpop.f32.mrb[0].mxu0
      %v8809 = vadd.f32 0.0, %v8808
      %v8810 = vpop.f32.mrb[0].mxu0
      %v8811 = vpop.f32.mrb[0].mxu0
      %v8812 = vadd.f32 0.0, %v8811
      %v8813 = vpop.f32.mrb[0].mxu0
      %8814 = vmatprep.mubr.bf16.mxu0 %v8631
      %8815 = vmatmul.mubr.bf16.gmra.mrb[0].mxu0 %v8630
      %v8816 = vpop.f32.mrb[0].mxu0
      %v8817 = vadd.f32 0.0, %v8816
      %v8818 = vpop.f32.mrb[0].mxu0
      %v8819 = vpop.f32.mrb[0].mxu0
      %v8820 = vadd.f32 0.0, %v8819
      %v8821 = vpop.f32.mrb[0].mxu0
      %8822 = vmatprep.mubr.bf16.mxu0 %v8633
      %8823 = vmatmul.mubr.bf16.gmra.mrb[0].mxu0 %v8632
      %v8824 = vpop.f32.mrb[0].mxu0
      %v8825 = vadd.f32 0.0, %v8824
      %v8826 = vpop.f32.mrb[0].mxu0
      %v8827 = vpop.f32.mrb[0].mxu0
      %v8828 = vadd.f32 0.0, %v8827
      %v8829 = vpop.f32.mrb[0].mxu0
      %8830 = vmatprep.mubr.bf16.mxu0 %v8635
      %8831 = vmatmul.mubr.bf16.gmra.mrb[0].mxu0 %v8634
      %v8832 = vpop.f32.mrb[0].mxu0
      %v8833 = vadd.f32 0.0, %v8832
      %v8834 = vpop.f32.mrb[0].mxu0
      %v8835 = vpop.f32.mrb[0].mxu0
      %v8836 = vadd.f32 0.0, %v8835
      %v8837 = vpop.f32.mrb[0].mxu0
      %8838 = vmatprep.mubr.bf16.mxu0 %v8637
      %8839 = vmatmul.mubr.bf16.gmra.mrb[0].mxu0 %v8636
      %v8840 = vpop.f32.mrb[0].mxu0
      %v8841 = vadd.f32 0.0, %v8840
      %v8842 = vpop.f32.mrb[0].mxu0
      %v8843 = vpop.f32.mrb[0].mxu0
      %v8844 = vadd.f32 0.0, %v8843
      %v8845 = vpop.f32.mrb[0].mxu0
      %8846 = vdwg.mxu0
      %v8847 = vadd.f32 %v8325, %v8785
      %v8848 = vadd.f32 %v8326, %v8788
      %v8849 = vadd.f32 %v8327, %v8793
      %v8850 = vadd.f32 %v8328, %v8796
      %v8851 = vadd.f32 %v8329, %v8801
      %v8852 = vadd.f32 %v8330, %v8804
      %v8853 = vadd.f32 %v8331, %v8809
      %v8854 = vadd.f32 %v8332, %v8812
      %v8855 = vadd.f32 %v8333, %v8817
      %v8856 = vadd.f32 %v8334, %v8820
      %v8857 = vadd.f32 %v8335, %v8825
      %v8858 = vadd.f32 %v8336, %v8828
      %v8859 = vadd.f32 %v8337, %v8833
      %v8860 = vadd.f32 %v8338, %v8836
      %v8861 = vadd.f32 %v8339, %v8841
      %v8862 = vadd.f32 %v8340, %v8844
      %v8863 = vld [vmem:[#allocation5] sm:$0xee]
      %v8864 = vld [vmem:[#allocation5 + $0x18] sm:$0xee]
      %v8865 = vld [vmem:[#allocation5 + $0x30] sm:$0xee]
      %v8866 = vld [vmem:[#allocation5 + $0x48] sm:$0xee]
      %v8867 = vld [vmem:[#allocation5 + $0x60] sm:$0xee]
      %v8868 = vld [vmem:[#allocation5 + $0x78] sm:$0xee]
      %v8869 = vld [vmem:[#allocation5 + $0x90] sm:$0xee]
      %v8870 = vld [vmem:[#allocation5 + $0xa8] sm:$0xee]
      %v8895 = vrot.slane %v8863, 5
      %v8896 = vrot.slane %v8895, 4
      %v8897 = vrot.slane %v8342, 5
      %v8898 = vsel %vm1731, %v8896, %v8897
      %v8899 = vrot.slane %v8897, 4
      %v8900 = vrot.slane %v8343, 5
      %v8901 = vsel %vm1731, %v8899, %v8900
      %v8902 = vrot.slane %v8864, 5
      %v8903 = vrot.slane %v8902, 4
      %v8904 = vrot.slane %v8345, 5
      %v8905 = vsel %vm1731, %v8903, %v8904
      %v8906 = vrot.slane %v8904, 4
      %v8907 = vrot.slane %v8346, 5
      %v8908 = vsel %vm1731, %v8906, %v8907
      %v8909 = vrot.slane %v8865, 5
      %v8910 = vrot.slane %v8909, 4
      %v8911 = vrot.slane %v8348, 5
      %v8912 = vsel %vm1731, %v8910, %v8911
      %v8913 = vrot.slane %v8911, 4
      %v8914 = vrot.slane %v8349, 5
      %v8915 = vsel %vm1731, %v8913, %v8914
      %v8916 = vrot.slane %v8866, 5
      %v8917 = vrot.slane %v8916, 4
      %v8918 = vrot.slane %v8351, 5
      %v8919 = vsel %vm1731, %v8917, %v8918
      %v8920 = vrot.slane %v8918, 4
      %v8921 = vrot.slane %v8352, 5
      %v8922 = vsel %vm1731, %v8920, %v8921
      %v8923 = vrot.slane %v8867, 5
      %v8924 = vrot.slane %v8923, 4
      %v8925 = vrot.slane %v8354, 5
      %v8926 = vsel %vm1731, %v8924, %v8925
      %v8927 = vrot.slane %v8925, 4
      %v8928 = vrot.slane %v8355, 5
      %v8929 = vsel %vm1731, %v8927, %v8928
      %v8930 = vrot.slane %v8868, 5
      %v8931 = vrot.slane %v8930, 4
      %v8932 = vrot.slane %v8357, 5
      %v8933 = vsel %vm1731, %v8931, %v8932
      %v8934 = vrot.slane %v8932, 4
      %v8935 = vrot.slane %v8358, 5
      %v8936 = vsel %vm1731, %v8934, %v8935
      %v8937 = vrot.slane %v8869, 5
      %v8938 = vrot.slane %v8937, 4
      %v8939 = vrot.slane %v8360, 5
      %v8940 = vsel %vm1731, %v8938, %v8939
      %v8941 = vrot.slane %v8939, 4
      %v8942 = vrot.slane %v8361, 5
      %v8943 = vsel %vm1731, %v8941, %v8942
      %v8944 = vrot.slane %v8870, 5
      %v8945 = vrot.slane %v8944, 4
      %v8946 = vrot.slane %v8363, 5
      %v8947 = vsel %vm1731, %v8945, %v8946
      %v8948 = vrot.slane %v8946, 4
      %v8949 = vrot.slane %v8364, 5
      %v8950 = vsel %vm1731, %v8948, %v8949
      %s8951 = scalar_lea.vmem %s11, 256
      %v8952 = vld [vmem:[%s8951] sm:$0xf]
      %v8953 = vld [vmem:[%s8951 + $0x4] sm:$0xf]
      %v8954 = vld [vmem:[%s8951 + $0x8] sm:$0xf]
      %v8955 = vld [vmem:[%s8951 + $0xc] sm:$0xf]
      %v8956 = vld [vmem:[%s8951 + $0x10] sm:$0xf]
      %v8957 = vld [vmem:[%s8951 + $0x14] sm:$0xf]
      %v8958 = vld [vmem:[%s8951 + $0x18] sm:$0xf]
      %v8959 = vld [vmem:[%s8951 + $0x1c] sm:$0xf]
      %v8960 = vld [vmem:[%s8951 + $0x20] sm:$0xf]
      %v8961 = vld [vmem:[%s8951 + $0x24] sm:$0xf]
      %v8962 = vld [vmem:[%s8951 + $0x28] sm:$0xf]
      %v8963 = vld [vmem:[%s8951 + $0x2c] sm:$0xf]
      %v8964 = vld [vmem:[%s8951 + $0x30] sm:$0xf]
      %v8965 = vld [vmem:[%s8951 + $0x34] sm:$0xf]
      %v8966 = vld [vmem:[%s8951 + $0x38] sm:$0xf]
      %v8967 = vld [vmem:[%s8951 + $0x3c] sm:$0xf]
      %v8968 = vld [vmem:[%s8951 + $0x40] sm:$0xf]
      %v8969 = vld [vmem:[%s8951 + $0x44] sm:$0xf]
      %v8970 = vld [vmem:[%s8951 + $0x48] sm:$0xf]
      %v8971 = vld [vmem:[%s8951 + $0x4c] sm:$0xf]
      %v8972 = vld [vmem:[%s8951 + $0x50] sm:$0xf]
      %v8973 = vld [vmem:[%s8951 + $0x54] sm:$0xf]
      %v8974 = vld [vmem:[%s8951 + $0x58] sm:$0xf]
      %v8975 = vld [vmem:[%s8951 + $0x5c] sm:$0xf]
      %v8976 = vld [vmem:[%s8951 + $0x60] sm:$0xf]
      %v8977 = vld [vmem:[%s8951 + $0x64] sm:$0xf]
      %v8978 = vld [vmem:[%s8951 + $0x68] sm:$0xf]
      %v8979 = vld [vmem:[%s8951 + $0x6c] sm:$0xf]
      %v8980 = vld [vmem:[%s8951 + $0x70] sm:$0xf]
      %v8981 = vld [vmem:[%s8951 + $0x74] sm:$0xf]
      %v8982 = vld [vmem:[%s8951 + $0x78] sm:$0xf]
      %v8983 = vld [vmem:[%s8951 + $0x7c] sm:$0xf]
      %v8984 = vunpack.c.l.b16 %v8898
      %v8985 = vunpack.c.h.b16 %v8898
      %v8986 = vunpack.c.l.b16 %v8901
      %v8987 = vunpack.c.h.b16 %v8901
      %v8988 = vunpack.c.l.b16 %v8905
      %v8989 = vunpack.c.h.b16 %v8905
      %v8990 = vunpack.c.l.b16 %v8908
      %v8991 = vunpack.c.h.b16 %v8908
      %v8992 = vunpack.c.l.b16 %v8912
      %v8993 = vunpack.c.h.b16 %v8912
      %v8994 = vunpack.c.l.b16 %v8915
      %v8995 = vunpack.c.h.b16 %v8915
      %v8996 = vunpack.c.l.b16 %v8919
      %v8997 = vunpack.c.h.b16 %v8919
      %v8998 = vunpack.c.l.b16 %v8922
      %v8999 = vunpack.c.h.b16 %v8922
      %v9000 = vunpack.c.l.b16 %v8926
      %v9001 = vunpack.c.h.b16 %v8926
      %v9002 = vunpack.c.l.b16 %v8929
      %v9003 = vunpack.c.h.b16 %v8929
      %v9004 = vunpack.c.l.b16 %v8933
      %v9005 = vunpack.c.h.b16 %v8933
      %v9006 = vunpack.c.l.b16 %v8936
      %v9007 = vunpack.c.h.b16 %v8936
      %v9008 = vunpack.c.l.b16 %v8940
      %v9009 = vunpack.c.h.b16 %v8940
      %v9010 = vunpack.c.l.b16 %v8943
      %v9011 = vunpack.c.h.b16 %v8943
      %v9012 = vunpack.c.l.b16 %v8947
      %v9013 = vunpack.c.h.b16 %v8947
      %v9014 = vunpack.c.l.b16 %v8950
      %v9015 = vunpack.c.h.b16 %v8950
      %v9016 = vpack.c.b16 %v8986, %v8984
      %v9017 = vpack.c.b16 %v8987, %v8985
      %v9018 = vpack.c.b16 %v8990, %v8988
      %v9019 = vpack.c.b16 %v8991, %v8989
      %v9020 = vpack.c.b16 %v8994, %v8992
      %v9021 = vpack.c.b16 %v8995, %v8993
      %v9022 = vpack.c.b16 %v8998, %v8996
      %v9023 = vpack.c.b16 %v8999, %v8997
      %v9024 = vpack.c.b16 %v9002, %v9000
      %v9025 = vpack.c.b16 %v9003, %v9001
      %v9026 = vpack.c.b16 %v9006, %v9004
      %v9027 = vpack.c.b16 %v9007, %v9005
      %v9028 = vpack.c.b16 %v9010, %v9008
      %v9029 = vpack.c.b16 %v9011, %v9009
      %v9030 = vpack.c.b16 %v9014, %v9012
      %v9031 = vpack.c.b16 %v9015, %v9013
      %v9080 = vunpack.c.l.b16 %v8952
      %v9081 = vunpack.c.l.b16 %v8953
      %v9082 = vunpack.c.l.b16 %v8954
      %v9083 = vunpack.c.l.b16 %v8955
      %v9084 = vunpack.c.l.b16 %v8956
      %v9085 = vunpack.c.l.b16 %v8957
      %v9086 = vunpack.c.l.b16 %v8958
      %v9087 = vunpack.c.l.b16 %v8959
      %v9088 = vunpack.c.l.b16 %v8960
      %v9089 = vunpack.c.l.b16 %v8961
      %v9090 = vunpack.c.l.b16 %v8962
      %v9091 = vunpack.c.l.b16 %v8963
      %v9092 = vunpack.c.l.b16 %v8964
      %v9093 = vunpack.c.l.b16 %v8965
      %v9094 = vunpack.c.l.b16 %v8966
      %v9095 = vunpack.c.l.b16 %v8967
      %v9096 = vunpack.c.l.b16 %v8968
      %v9097 = vunpack.c.l.b16 %v8969
      %v9098 = vunpack.c.l.b16 %v8970
      %v9099 = vunpack.c.l.b16 %v8971
      %v9100 = vunpack.c.l.b16 %v8972
      %v9101 = vunpack.c.l.b16 %v8973
      %v9102 = vunpack.c.l.b16 %v8974
      %v9103 = vunpack.c.l.b16 %v8975
      %v9104 = vunpack.c.l.b16 %v8976
      %v9105 = vunpack.c.l.b16 %v8977
      %v9106 = vunpack.c.l.b16 %v8978
      %v9107 = vunpack.c.l.b16 %v8979
      %v9108 = vunpack.c.l.b16 %v8980
      %v9109 = vunpack.c.l.b16 %v8981
      %v9110 = vunpack.c.l.b16 %v8982
      %v9111 = vunpack.c.l.b16 %v8983
      %v9112 = vpack.c.b16 %v9081, %v9080
      %v9113 = vpack.c.b16 %v9083, %v9082
      %v9114 = vpack.c.b16 %v9085, %v9084
      %v9115 = vpack.c.b16 %v9087, %v9086
      %v9116 = vpack.c.b16 %v9089, %v9088
      %v9117 = vpack.c.b16 %v9091, %v9090
      %v9118 = vpack.c.b16 %v9093, %v9092
      %v9119 = vpack.c.b16 %v9095, %v9094
      %v9120 = vpack.c.b16 %v9097, %v9096
      %v9121 = vpack.c.b16 %v9099, %v9098
      %v9122 = vpack.c.b16 %v9101, %v9100
      %v9123 = vpack.c.b16 %v9103, %v9102
      %v9124 = vpack.c.b16 %v9105, %v9104
      %v9125 = vpack.c.b16 %v9107, %v9106
      %v9126 = vpack.c.b16 %v9109, %v9108
      %v9127 = vpack.c.b16 %v9111, %v9110
      %9144 = vmatprep.subr.bf16.mxu0 0
      %9145 = vmatpush1.bf16.msra.mxu0 %v9112
      %9146 = vmatprep.subr.bf16.mxu0 0
      %9147 = vmatpush1.bf16.msra.mxu0 %v9113
      %9148 = vmatprep.subr.bf16.mxu0 0
      %9149 = vmatpush1.bf16.msra.mxu0 %v9114
      %9150 = vmatprep.subr.bf16.mxu0 0
      %9151 = vmatpush1.bf16.msra.mxu0 %v9115
      %9152 = vmatprep.subr.bf16.mxu0 0
      %9153 = vmatpush1.bf16.msra.mxu0 %v9116
      %9154 = vmatprep.subr.bf16.mxu0 0
      %9155 = vmatpush1.bf16.msra.mxu0 %v9117
      %9156 = vmatprep.subr.bf16.mxu0 0
      %9157 = vmatpush1.bf16.msra.mxu0 %v9118
      %9158 = vmatprep.subr.bf16.mxu0 0
      %9159 = vmatpush1.bf16.msra.mxu0 %v9119
      %9160 = vmatprep.subr.bf16.mxu0 0
      %9161 = vmatpush1.bf16.msra.mxu0 %v9120
      %9162 = vmatprep.subr.bf16.mxu0 0
      %9163 = vmatpush1.bf16.msra.mxu0 %v9121
      %9164 = vmatprep.subr.bf16.mxu0 0
      %9165 = vmatpush1.bf16.msra.mxu0 %v9122
      %9166 = vmatprep.subr.bf16.mxu0 0
      %9167 = vmatpush1.bf16.msra.mxu0 %v9123
      %9168 = vmatprep.subr.bf16.mxu0 0
      %9169 = vmatpush1.bf16.msra.mxu0 %v9124
      %9170 = vmatprep.subr.bf16.mxu0 0
      %9171 = vmatpush1.bf16.msra.mxu0 %v9125
      %9172 = vmatprep.subr.bf16.mxu0 0
      %9173 = vmatpush1.bf16.msra.mxu0 %v9126
      %9174 = vmatprep.subr.bf16.mxu0 0
      %9175 = vmatpush1.bf16.msra.mxu0 %v9127
      %9176 = vmatprep.mubr.bf16.mxu0 %v9017
      %9177 = vmatmul.mubr.bf16.gmra.mrb[0].mxu0 %v9016
      %v9178 = vpop.f32.mrb[0].mxu0
      %v9179 = vadd.f32 0.0, %v9178
      %v9180 = vpop.f32.mrb[0].mxu0
      %v9181 = vpop.f32.mrb[0].mxu0
      %v9182 = vadd.f32 0.0, %v9181
      %v9183 = vpop.f32.mrb[0].mxu0
      %9184 = vmatprep.mubr.bf16.mxu0 %v9019
      %9185 = vmatmul.mubr.bf16.gmra.mrb[0].mxu0 %v9018
      %v9186 = vpop.f32.mrb[0].mxu0
      %v9187 = vadd.f32 0.0, %v9186
      %v9188 = vpop.f32.mrb[0].mxu0
      %v9189 = vpop.f32.mrb[0].mxu0
      %v9190 = vadd.f32 0.0, %v9189
      %v9191 = vpop.f32.mrb[0].mxu0
      %9192 = vmatprep.mubr.bf16.mxu0 %v9021
      %9193 = vmatmul.mubr.bf16.gmra.mrb[0].mxu0 %v9020
      %v9194 = vpop.f32.mrb[0].mxu0
      %v9195 = vadd.f32 0.0, %v9194
      %v9196 = vpop.f32.mrb[0].mxu0
      %v9197 = vpop.f32.mrb[0].mxu0
      %v9198 = vadd.f32 0.0, %v9197
      %v9199 = vpop.f32.mrb[0].mxu0
      %9200 = vmatprep.mubr.bf16.mxu0 %v9023
      %9201 = vmatmul.mubr.bf16.gmra.mrb[0].mxu0 %v9022
      %v9202 = vpop.f32.mrb[0].mxu0
      %v9203 = vadd.f32 0.0, %v9202
      %v9204 = vpop.f32.mrb[0].mxu0
      %v9205 = vpop.f32.mrb[0].mxu0
      %v9206 = vadd.f32 0.0, %v9205
      %v9207 = vpop.f32.mrb[0].mxu0
      %9208 = vmatprep.mubr.bf16.mxu0 %v9025
      %9209 = vmatmul.mubr.bf16.gmra.mrb[0].mxu0 %v9024
      %v9210 = vpop.f32.mrb[0].mxu0
      %v9211 = vadd.f32 0.0, %v9210
      %v9212 = vpop.f32.mrb[0].mxu0
      %v9213 = vpop.f32.mrb[0].mxu0
      %v9214 = vadd.f32 0.0, %v9213
      %v9215 = vpop.f32.mrb[0].mxu0
      %9216 = vmatprep.mubr.bf16.mxu0 %v9027
      %9217 = vmatmul.mubr.bf16.gmra.mrb[0].mxu0 %v9026
      %v9218 = vpop.f32.mrb[0].mxu0
      %v9219 = vadd.f32 0.0, %v9218
      %v9220 = vpop.f32.mrb[0].mxu0
      %v9221 = vpop.f32.mrb[0].mxu0
      %v9222 = vadd.f32 0.0, %v9221
      %v9223 = vpop.f32.mrb[0].mxu0
      %9224 = vmatprep.mubr.bf16.mxu0 %v9029
      %9225 = vmatmul.mubr.bf16.gmra.mrb[0].mxu0 %v9028
      %v9226 = vpop.f32.mrb[0].mxu0
      %v9227 = vadd.f32 0.0, %v9226
      %v9228 = vpop.f32.mrb[0].mxu0
      %v9229 = vpop.f32.mrb[0].mxu0
      %v9230 = vadd.f32 0.0, %v9229
      %v9231 = vpop.f32.mrb[0].mxu0
      %9232 = vmatprep.mubr.bf16.mxu0 %v9031
      %9233 = vmatmul.mubr.bf16.gmra.mrb[0].mxu0 %v9030
      %v9234 = vpop.f32.mrb[0].mxu0
      %v9235 = vadd.f32 0.0, %v9234
      %v9236 = vpop.f32.mrb[0].mxu0
      %v9237 = vpop.f32.mrb[0].mxu0
      %v9238 = vadd.f32 0.0, %v9237
      %v9239 = vpop.f32.mrb[0].mxu0
      %9240 = vdwg.mxu0
      %v9241 = vadd.f32 %v8847, %v9179
      %v9242 = vadd.f32 %v8848, %v9182
      %v9243 = vadd.f32 %v8849, %v9187
      %v9244 = vadd.f32 %v8850, %v9190
      %v9245 = vadd.f32 %v8851, %v9195
      %v9246 = vadd.f32 %v8852, %v9198
      %v9247 = vadd.f32 %v8853, %v9203
      %v9248 = vadd.f32 %v8854, %v9206
      %v9249 = vadd.f32 %v8855, %v9211
      %v9250 = vadd.f32 %v8856, %v9214
      %v9251 = vadd.f32 %v8857, %v9219
      %v9252 = vadd.f32 %v8858, %v9222
      %v9253 = vadd.f32 %v8859, %v9227
      %v9254 = vadd.f32 %v8860, %v9230
      %v9255 = vadd.f32 %v8861, %v9235
      %v9256 = vadd.f32 %v8862, %v9238
      %v9257 = vmax.f32 %v9241, 0.0
      %v9258 = vmax.f32 %v9242, 0.0
      %v9259 = vmax.f32 %v9243, 0.0
      %v9260 = vmax.f32 %v9244, 0.0
      %v9261 = vmax.f32 %v9245, 0.0
      %v9262 = vmax.f32 %v9246, 0.0
      %v9263 = vmax.f32 %v9247, 0.0
      %v9264 = vmax.f32 %v9248, 0.0
      %v9265 = vmax.f32 %v9249, 0.0
      %v9266 = vmax.f32 %v9250, 0.0
      %v9267 = vmax.f32 %v9251, 0.0
      %v9268 = vmax.f32 %v9252, 0.0
      %v9269 = vmax.f32 %v9253, 0.0
      %v9270 = vmax.f32 %v9254, 0.0
      %v9271 = vmax.f32 %v9255, 0.0
      %v9272 = vmax.f32 %v9256, 0.0
      %v9273 = vpack.c.bf16 %v9258, %v9257
      %v9274 = vpack.c.bf16 %v9260, %v9259
      %v9275 = vpack.c.bf16 %v9262, %v9261
      %v9276 = vpack.c.bf16 %v9264, %v9263
      %v9277 = vpack.c.bf16 %v9266, %v9265
      %v9278 = vpack.c.bf16 %v9268, %v9267
      %v9279 = vpack.c.bf16 %v9270, %v9269
      %v9280 = vpack.c.bf16 %v9272, %v9271
      %v9289 = vunpack.c.l.b16 %v9273
      %v9290 = vunpack.c.h.b16 %v9273
      %v9291 = vunpack.c.l.b16 %v9274
      %v9292 = vunpack.c.h.b16 %v9274
      %v9293 = vunpack.c.l.b16 %v9275
      %v9294 = vunpack.c.h.b16 %v9275
      %v9295 = vunpack.c.l.b16 %v9276
      %v9296 = vunpack.c.h.b16 %v9276
      %v9297 = vunpack.c.l.b16 %v9277
      %v9298 = vunpack.c.h.b16 %v9277
      %v9299 = vunpack.c.l.b16 %v9278
      %v9300 = vunpack.c.h.b16 %v9278
      %v9301 = vunpack.c.l.b16 %v9279
      %v9302 = vunpack.c.h.b16 %v9279
      %v9303 = vunpack.c.l.b16 %v9280
      %v9304 = vunpack.c.h.b16 %v9280
      %v9305 = vpack.c.b16 %v9289, %v9289
      %v9306 = vpack.c.b16 %v9290, %v9290
      %v9307 = vpack.c.b16 %v9291, %v9291
      %v9308 = vpack.c.b16 %v9292, %v9292
      %v9309 = vpack.c.b16 %v9293, %v9293
      %v9310 = vpack.c.b16 %v9294, %v9294
      %v9311 = vpack.c.b16 %v9295, %v9295
      %v9312 = vpack.c.b16 %v9296, %v9296
      %v9313 = vpack.c.b16 %v9297, %v9297
      %v9314 = vpack.c.b16 %v9298, %v9298
      %v9315 = vpack.c.b16 %v9299, %v9299
      %v9316 = vpack.c.b16 %v9300, %v9300
      %v9317 = vpack.c.b16 %v9301, %v9301
      %v9318 = vpack.c.b16 %v9302, %v9302
      %v9319 = vpack.c.b16 %v9303, %v9303
      %v9320 = vpack.c.b16 %v9304, %v9304
      %v9322 = vshrl.u32 %v9305, 16
      %v9324 = vrot.slane %v9322, 7
      %v9325 = vshll.u32 %v9305, 16
      %v9327 = vor.u32 %v9324, %v9325
      %v9328 = vrot.slane %v9324, 4
      %v9330 = vshrl.u32 %v9306, 16
      %v9332 = vrot.slane %v9330, 7
      %v9333 = vshll.u32 %v9306, 16
      %v9335 = vor.u32 %v9332, %v9333
      %v9336 = vsel %vm800, %v9328, %v9335
      %v9337 = vrot.slane %v9332, 4
      %v9339 = vshrl.u32 %v9307, 16
      %v9341 = vrot.slane %v9339, 7
      %v9342 = vshll.u32 %v9307, 16
      %v9344 = vor.u32 %v9341, %v9342
      %v9345 = vrot.slane %v9341, 4
      %v9347 = vshrl.u32 %v9308, 16
      %v9349 = vrot.slane %v9347, 7
      %v9350 = vshll.u32 %v9308, 16
      %v9352 = vor.u32 %v9349, %v9350
      %v9353 = vsel %vm800, %v9345, %v9352
      %v9354 = vrot.slane %v9349, 4
      %v9356 = vshrl.u32 %v9309, 16
      %v9358 = vrot.slane %v9356, 7
      %v9359 = vshll.u32 %v9309, 16
      %v9361 = vor.u32 %v9358, %v9359
      %v9362 = vrot.slane %v9358, 4
      %v9364 = vshrl.u32 %v9310, 16
      %v9366 = vrot.slane %v9364, 7
      %v9367 = vshll.u32 %v9310, 16
      %v9369 = vor.u32 %v9366, %v9367
      %v9370 = vsel %vm800, %v9362, %v9369
      %v9371 = vrot.slane %v9366, 4
      %v9373 = vshrl.u32 %v9311, 16
      %v9375 = vrot.slane %v9373, 7
      %v9376 = vshll.u32 %v9311, 16
      %v9378 = vor.u32 %v9375, %v9376
      %v9379 = vrot.slane %v9375, 4
      %v9381 = vshrl.u32 %v9312, 16
      %v9383 = vrot.slane %v9381, 7
      %v9384 = vshll.u32 %v9312, 16
      %v9386 = vor.u32 %v9383, %v9384
      %v9387 = vsel %vm800, %v9379, %v9386
      %v9388 = vrot.slane %v9383, 4
      %v9390 = vshrl.u32 %v9313, 16
      %v9392 = vrot.slane %v9390, 7
      %v9393 = vshll.u32 %v9313, 16
      %v9395 = vor.u32 %v9392, %v9393
      %v9396 = vrot.slane %v9392, 4
      %v9398 = vshrl.u32 %v9314, 16
      %v9400 = vrot.slane %v9398, 7
      %v9401 = vshll.u32 %v9314, 16
      %v9403 = vor.u32 %v9400, %v9401
      %v9404 = vsel %vm800, %v9396, %v9403
      %v9405 = vrot.slane %v9400, 4
      %v9407 = vshrl.u32 %v9315, 16
      %v9409 = vrot.slane %v9407, 7
      %v9410 = vshll.u32 %v9315, 16
      %v9412 = vor.u32 %v9409, %v9410
      %v9413 = vrot.slane %v9409, 4
      %v9415 = vshrl.u32 %v9316, 16
      %v9417 = vrot.slane %v9415, 7
      %v9418 = vshll.u32 %v9316, 16
      %v9420 = vor.u32 %v9417, %v9418
      %v9421 = vsel %vm800, %v9413, %v9420
      %v9422 = vrot.slane %v9417, 4
      %v9424 = vshrl.u32 %v9317, 16
      %v9426 = vrot.slane %v9424, 7
      %v9427 = vshll.u32 %v9317, 16
      %v9429 = vor.u32 %v9426, %v9427
      %v9430 = vrot.slane %v9426, 4
      %v9432 = vshrl.u32 %v9318, 16
      %v9434 = vrot.slane %v9432, 7
      %v9435 = vshll.u32 %v9318, 16
      %v9437 = vor.u32 %v9434, %v9435
      %v9438 = vsel %vm800, %v9430, %v9437
      %v9439 = vrot.slane %v9434, 4
      %v9441 = vshrl.u32 %v9319, 16
      %v9443 = vrot.slane %v9441, 7
      %v9444 = vshll.u32 %v9319, 16
      %v9446 = vor.u32 %v9443, %v9444
      %v9447 = vrot.slane %v9443, 4
      %v9449 = vshrl.u32 %v9320, 16
      %v9451 = vrot.slane %v9449, 7
      %v9452 = vshll.u32 %v9320, 16
      %v9454 = vor.u32 %v9451, %v9452
      %v9455 = vsel %vm800, %v9447, %v9454
      %v9456 = vrot.slane %v9451, 4
      %v9481 = vld [vmem:[#allocation6] sm:$0xf]
      %v9482 = vsel %vm2267, %v9327, %v9481
      %9483 = vst [vmem:[#allocation6] sm:$0xf] %v9482
      %9484 = vst [vmem:[#allocation6 + $0x4] sm:$0xf] %v9336
      %v9485 = vld [vmem:[#allocation6 + $0x8] sm:$0x1]
      %v9486 = vsel %vm558, %v9337, %v9485
      %9487 = vst [vmem:[#allocation6 + $0x8] sm:$0x1] %v9486
      %v9488 = vld [vmem:[#allocation6 + $0xc] sm:$0xf]
      %v9489 = vsel %vm2267, %v9344, %v9488
      %9490 = vst [vmem:[#allocation6 + $0xc] sm:$0xf] %v9489
      %9491 = vst [vmem:[#allocation6 + $0x10] sm:$0xf] %v9353
      %v9492 = vld [vmem:[#allocation6 + $0x14] sm:$0x1]
      %v9493 = vsel %vm558, %v9354, %v9492
      %9494 = vst [vmem:[#allocation6 + $0x14] sm:$0x1] %v9493
      %v9495 = vld [vmem:[#allocation6 + $0x18] sm:$0xf]
      %v9496 = vsel %vm2267, %v9361, %v9495
      %9497 = vst [vmem:[#allocation6 + $0x18] sm:$0xf] %v9496
      %9498 = vst [vmem:[#allocation6 + $0x1c] sm:$0xf] %v9370
      %v9499 = vld [vmem:[#allocation6 + $0x20] sm:$0x1]
      %v9500 = vsel %vm558, %v9371, %v9499
      %9501 = vst [vmem:[#allocation6 + $0x20] sm:$0x1] %v9500
      %v9502 = vld [vmem:[#allocation6 + $0x24] sm:$0xf]
      %v9503 = vsel %vm2267, %v9378, %v9502
      %9504 = vst [vmem:[#allocation6 + $0x24] sm:$0xf] %v9503
      %9505 = vst [vmem:[#allocation6 + $0x28] sm:$0xf] %v9387
      %v9506 = vld [vmem:[#allocation6 + $0x2c] sm:$0x1]
      %v9507 = vsel %vm558, %v9388, %v9506
      %9508 = vst [vmem:[#allocation6 + $0x2c] sm:$0x1] %v9507
      %v9509 = vld [vmem:[#allocation6 + $0x30] sm:$0xf]
      %v9510 = vsel %vm2267, %v9395, %v9509
      %9511 = vst [vmem:[#allocation6 + $0x30] sm:$0xf] %v9510
      %9512 = vst [vmem:[#allocation6 + $0x34] sm:$0xf] %v9404
      %v9513 = vld [vmem:[#allocation6 + $0x38] sm:$0x1]
      %v9514 = vsel %vm558, %v9405, %v9513
      %9515 = vst [vmem:[#allocation6 + $0x38] sm:$0x1] %v9514
      %v9516 = vld [vmem:[#allocation6 + $0x3c] sm:$0xf]
      %v9517 = vsel %vm2267, %v9412, %v9516
      %9518 = vst [vmem:[#allocation6 + $0x3c] sm:$0xf] %v9517
      %9519 = vst [vmem:[#allocation6 + $0x40] sm:$0xf] %v9421
      %v9520 = vld [vmem:[#allocation6 + $0x44] sm:$0x1]
      %v9521 = vsel %vm558, %v9422, %v9520
      %9522 = vst [vmem:[#allocation6 + $0x44] sm:$0x1] %v9521
      %v9523 = vld [vmem:[#allocation6 + $0x48] sm:$0xf]
      %v9524 = vsel %vm2267, %v9429, %v9523
      %9525 = vst [vmem:[#allocation6 + $0x48] sm:$0xf] %v9524
      %9526 = vst [vmem:[#allocation6 + $0x4c] sm:$0xf] %v9438
      %v9527 = vld [vmem:[#allocation6 + $0x50] sm:$0x1]
      %v9528 = vsel %vm558, %v9439, %v9527
      %9529 = vst [vmem:[#allocation6 + $0x50] sm:$0x1] %v9528
      %v9530 = vld [vmem:[#allocation6 + $0x54] sm:$0xf]
      %v9531 = vsel %vm2267, %v9446, %v9530
      %9532 = vst [vmem:[#allocation6 + $0x54] sm:$0xf] %v9531
      %9533 = vst [vmem:[#allocation6 + $0x58] sm:$0xf] %v9455
      %v9534 = vld [vmem:[#allocation6 + $0x5c] sm:$0x1]
      %v9535 = vsel %vm558, %v9456, %v9534
      %9536 = vst [vmem:[#allocation6 + $0x5c] sm:$0x1] %v9535
      %v9537 = vld [vmem:[%s14] sm:$0x1]
      %v9539 = vlaneseq
      %v9540 = vshrl.u32 %v9539, 7
      %v9541 = vsub.s32 0, %v9540
      %v9542 = vrot.slane %v9537, %v9541
      %v9544 = vadd.f32 %v9542, 0.0
      %v9545 = vld [vmem:[#allocation6] sm:$0xf]
      %v9546 = vld [vmem:[#allocation6 + $0x4] sm:$0xf]
      %v9547 = vld [vmem:[#allocation6 + $0xc] sm:$0xf]
      %v9548 = vld [vmem:[#allocation6 + $0x10] sm:$0xf]
      %v9549 = vld [vmem:[#allocation6 + $0x18] sm:$0xf]
      %v9550 = vld [vmem:[#allocation6 + $0x1c] sm:$0xf]
      %v9551 = vld [vmem:[#allocation6 + $0x24] sm:$0xf]
      %v9552 = vld [vmem:[#allocation6 + $0x28] sm:$0xf]
      %v9553 = vld [vmem:[#allocation6 + $0x30] sm:$0xf]
      %v9554 = vld [vmem:[#allocation6 + $0x34] sm:$0xf]
      %v9555 = vld [vmem:[#allocation6 + $0x3c] sm:$0xf]
      %v9556 = vld [vmem:[#allocation6 + $0x40] sm:$0xf]
      %v9557 = vld [vmem:[#allocation6 + $0x48] sm:$0xf]
      %v9558 = vld [vmem:[#allocation6 + $0x4c] sm:$0xf]
      %v9559 = vld [vmem:[#allocation6 + $0x54] sm:$0xf]
      %v9560 = vld [vmem:[#allocation6 + $0x58] sm:$0xf]
      %v9561 = vld [vmem:[%s13] sm:$0xf]
      %v9562 = vld [vmem:[%s13 + $0x4] sm:$0xf]
      %v9563 = vld [vmem:[%s13 + $0x8] sm:$0xf]
      %v9564 = vld [vmem:[%s13 + $0xc] sm:$0xf]
      %v9565 = vld [vmem:[%s13 + $0x10] sm:$0xf]
      %v9566 = vld [vmem:[%s13 + $0x14] sm:$0xf]
      %v9567 = vld [vmem:[%s13 + $0x18] sm:$0xf]
      %v9568 = vld [vmem:[%s13 + $0x1c] sm:$0xf]
      %v9569 = vld [vmem:[%s13 + $0x20] sm:$0xf]
      %v9570 = vld [vmem:[%s13 + $0x24] sm:$0xf]
      %v9571 = vld [vmem:[%s13 + $0x28] sm:$0xf]
      %v9572 = vld [vmem:[%s13 + $0x2c] sm:$0xf]
      %v9573 = vld [vmem:[%s13 + $0x30] sm:$0xf]
      %v9574 = vld [vmem:[%s13 + $0x34] sm:$0xf]
      %v9575 = vld [vmem:[%s13 + $0x38] sm:$0xf]
      %v9576 = vld [vmem:[%s13 + $0x3c] sm:$0xf]
      %v9593 = vunpack.c.l.b16 %v9545
      %v9594 = vunpack.c.l.b16 %v9546
      %v9595 = vunpack.c.l.b16 %v9547
      %v9596 = vunpack.c.l.b16 %v9548
      %v9597 = vunpack.c.l.b16 %v9549
      %v9598 = vunpack.c.l.b16 %v9550
      %v9599 = vunpack.c.l.b16 %v9551
      %v9600 = vunpack.c.l.b16 %v9552
      %v9601 = vunpack.c.l.b16 %v9553
      %v9602 = vunpack.c.l.b16 %v9554
      %v9603 = vunpack.c.l.b16 %v9555
      %v9604 = vunpack.c.l.b16 %v9556
      %v9605 = vunpack.c.l.b16 %v9557
      %v9606 = vunpack.c.l.b16 %v9558
      %v9607 = vunpack.c.l.b16 %v9559
      %v9608 = vunpack.c.l.b16 %v9560
      %v9609 = vpack.c.b16 %v9594, %v9593
      %v9610 = vpack.c.b16 %v9596, %v9595
      %v9611 = vpack.c.b16 %v9598, %v9597
      %v9612 = vpack.c.b16 %v9600, %v9599
      %v9613 = vpack.c.b16 %v9602, %v9601
      %v9614 = vpack.c.b16 %v9604, %v9603
      %v9615 = vpack.c.b16 %v9606, %v9605
      %v9616 = vpack.c.b16 %v9608, %v9607
      %v9641 = vunpack.c.l.b16 %v9561
      %v9642 = vunpack.c.l.b16 %v9562
      %v9643 = vunpack.c.l.b16 %v9563
      %v9644 = vunpack.c.l.b16 %v9564
      %v9645 = vunpack.c.l.b16 %v9565
      %v9646 = vunpack.c.l.b16 %v9566
      %v9647 = vunpack.c.l.b16 %v9567
      %v9648 = vunpack.c.l.b16 %v9568
      %v9649 = vunpack.c.l.b16 %v9569
      %v9650 = vunpack.c.l.b16 %v9570
      %v9651 = vunpack.c.l.b16 %v9571
      %v9652 = vunpack.c.l.b16 %v9572
      %v9653 = vunpack.c.l.b16 %v9573
      %v9654 = vunpack.c.l.b16 %v9574
      %v9655 = vunpack.c.l.b16 %v9575
      %v9656 = vunpack.c.l.b16 %v9576
      %v9657 = vpack.c.b16 %v9642, %v9641
      %v9658 = vpack.c.b16 %v9644, %v9643
      %v9659 = vpack.c.b16 %v9646, %v9645
      %v9660 = vpack.c.b16 %v9648, %v9647
      %v9661 = vpack.c.b16 %v9650, %v9649
      %v9662 = vpack.c.b16 %v9652, %v9651
      %v9663 = vpack.c.b16 %v9654, %v9653
      %v9664 = vpack.c.b16 %v9656, %v9655
      %9673 = vmatprep.subr.bf16.mxu0 0
      %9674 = vmatpush1.bf16.msra.mxu0 %v9657
      %9675 = vmatprep.subr.bf16.mxu0 0
      %9676 = vmatpush1.bf16.msra.mxu0 %v9658
      %9677 = vmatprep.subr.bf16.mxu0 0
      %9678 = vmatpush1.bf16.msra.mxu0 %v9659
      %9679 = vmatprep.subr.bf16.mxu0 0
      %9680 = vmatpush1.bf16.msra.mxu0 %v9660
      %9681 = vmatprep.subr.bf16.mxu0 0
      %9682 = vmatpush1.bf16.msra.mxu0 %v9661
      %9683 = vmatprep.subr.bf16.mxu0 0
      %9684 = vmatpush1.bf16.msra.mxu0 %v9662
      %9685 = vmatprep.subr.bf16.mxu0 0
      %9686 = vmatpush1.bf16.msra.mxu0 %v9663
      %9687 = vmatprep.subr.bf16.mxu0 0
      %9688 = vmatpush1.bf16.msra.mxu0 %v9664
      %9689 = vmatprep.subr.bf16.mxu0 0
      %9690 = vmatpush1.bf16.msra.mxu0 0
      %9691 = vmatprep.subr.bf16.mxu0 0
      %9692 = vmatpush1.bf16.msra.mxu0 0
      %9693 = vmatprep.subr.bf16.mxu0 0
      %9694 = vmatpush1.bf16.msra.mxu0 0
      %9695 = vmatprep.subr.bf16.mxu0 0
      %9696 = vmatpush1.bf16.msra.mxu0 0
      %9697 = vmatprep.subr.bf16.mxu0 0
      %9698 = vmatpush1.bf16.msra.mxu0 0
      %9699 = vmatprep.subr.bf16.mxu0 0
      %9700 = vmatpush1.bf16.msra.mxu0 0
      %9701 = vmatprep.subr.bf16.mxu0 0
      %9702 = vmatpush1.bf16.msra.mxu0 0
      %9703 = vmatprep.subr.bf16.mxu0 0
      %9704 = vmatpush1.bf16.msra.mxu0 0
      %9705 = vmatprep.mubr.bf16.mxu0 0
      %9706 = vmatmul.mubr.bf16.gmra.mrb[0].mxu0 %v9609
      %v9707 = vpop.f32.mrb[0].mxu0
      %v9708 = vadd.f32 0.0, %v9707
      %v9709 = vpop.f32.mrb[0].mxu0
      %v9710 = vpop.f32.mrb[0].mxu0
      %v9711 = vadd.f32 0.0, %v9710
      %v9712 = vpop.f32.mrb[0].mxu0
      %9713 = vmatprep.mubr.bf16.mxu0 0
      %9714 = vmatmul.mubr.bf16.gmra.mrb[0].mxu0 %v9610
      %v9715 = vpop.f32.mrb[0].mxu0
      %v9716 = vadd.f32 0.0, %v9715
      %v9717 = vpop.f32.mrb[0].mxu0
      %v9718 = vpop.f32.mrb[0].mxu0
      %v9719 = vadd.f32 0.0, %v9718
      %v9720 = vpop.f32.mrb[0].mxu0
      %9721 = vmatprep.mubr.bf16.mxu0 0
      %9722 = vmatmul.mubr.bf16.gmra.mrb[0].mxu0 %v9611
      %v9723 = vpop.f32.mrb[0].mxu0
      %v9724 = vadd.f32 0.0, %v9723
      %v9725 = vpop.f32.mrb[0].mxu0
      %v9726 = vpop.f32.mrb[0].mxu0
      %v9727 = vadd.f32 0.0, %v9726
      %v9728 = vpop.f32.mrb[0].mxu0
      %9729 = vmatprep.mubr.bf16.mxu0 0
      %9730 = vmatmul.mubr.bf16.gmra.mrb[0].mxu0 %v9612
      %v9731 = vpop.f32.mrb[0].mxu0
      %v9732 = vadd.f32 0.0, %v9731
      %v9733 = vpop.f32.mrb[0].mxu0
      %v9734 = vpop.f32.mrb[0].mxu0
      %v9735 = vadd.f32 0.0, %v9734
      %v9736 = vpop.f32.mrb[0].mxu0
      %9737 = vmatprep.mubr.bf16.mxu0 0
      %9738 = vmatmul.mubr.bf16.gmra.mrb[0].mxu0 %v9613
      %v9739 = vpop.f32.mrb[0].mxu0
      %v9740 = vadd.f32 0.0, %v9739
      %v9741 = vpop.f32.mrb[0].mxu0
      %v9742 = vpop.f32.mrb[0].mxu0
      %v9743 = vadd.f32 0.0, %v9742
      %v9744 = vpop.f32.mrb[0].mxu0
      %9745 = vmatprep.mubr.bf16.mxu0 0
      %9746 = vmatmul.mubr.bf16.gmra.mrb[0].mxu0 %v9614
      %v9747 = vpop.f32.mrb[0].mxu0
      %v9748 = vadd.f32 0.0, %v9747
      %v9749 = vpop.f32.mrb[0].mxu0
      %v9750 = vpop.f32.mrb[0].mxu0
      %v9751 = vadd.f32 0.0, %v9750
      %v9752 = vpop.f32.mrb[0].mxu0
      %9753 = vmatprep.mubr.bf16.mxu0 0
      %9754 = vmatmul.mubr.bf16.gmra.mrb[0].mxu0 %v9615
      %v9755 = vpop.f32.mrb[0].mxu0
      %v9756 = vadd.f32 0.0, %v9755
      %v9757 = vpop.f32.mrb[0].mxu0
      %v9758 = vpop.f32.mrb[0].mxu0
      %v9759 = vadd.f32 0.0, %v9758
      %v9760 = vpop.f32.mrb[0].mxu0
      %9761 = vmatprep.mubr.bf16.mxu0 0
      %9762 = vmatmul.mubr.bf16.gmra.mrb[0].mxu0 %v9616
      %v9763 = vpop.f32.mrb[0].mxu0
      %v9764 = vadd.f32 0.0, %v9763
      %v9765 = vpop.f32.mrb[0].mxu0
      %v9766 = vpop.f32.mrb[0].mxu0
      %v9767 = vadd.f32 0.0, %v9766
      %v9768 = vpop.f32.mrb[0].mxu0
      %9769 = vdwg.mxu0
      %v9770 = vadd.f32 %v9544, %v9708
      %v9771 = vadd.f32 %v9544, %v9711
      %v9772 = vadd.f32 %v9544, %v9716
      %v9773 = vadd.f32 %v9544, %v9719
      %v9774 = vadd.f32 %v9544, %v9724
      %v9775 = vadd.f32 %v9544, %v9727
      %v9776 = vadd.f32 %v9544, %v9732
      %v9777 = vadd.f32 %v9544, %v9735
      %v9778 = vadd.f32 %v9544, %v9740
      %v9779 = vadd.f32 %v9544, %v9743
      %v9780 = vadd.f32 %v9544, %v9748
      %v9781 = vadd.f32 %v9544, %v9751
      %v9782 = vadd.f32 %v9544, %v9756
      %v9783 = vadd.f32 %v9544, %v9759
      %v9784 = vadd.f32 %v9544, %v9764
      %v9785 = vadd.f32 %v9544, %v9767
      %v9786 = vld [vmem:[#allocation6] sm:$0xf]
      %v9787 = vld [vmem:[#allocation6 + $0x4] sm:$0xf]
      %v9788 = vld [vmem:[#allocation6 + $0x8] sm:$0x1]
      %v9789 = vld [vmem:[#allocation6 + $0xc] sm:$0xf]
      %v9790 = vld [vmem:[#allocation6 + $0x10] sm:$0xf]
      %v9791 = vld [vmem:[#allocation6 + $0x14] sm:$0x1]
      %v9792 = vld [vmem:[#allocation6 + $0x18] sm:$0xf]
      %v9793 = vld [vmem:[#allocation6 + $0x1c] sm:$0xf]
      %v9794 = vld [vmem:[#allocation6 + $0x20] sm:$0x1]
      %v9795 = vld [vmem:[#allocation6 + $0x24] sm:$0xf]
      %v9796 = vld [vmem:[#allocation6 + $0x28] sm:$0xf]
      %v9797 = vld [vmem:[#allocation6 + $0x2c] sm:$0x1]
      %v9798 = vld [vmem:[#allocation6 + $0x30] sm:$0xf]
      %v9799 = vld [vmem:[#allocation6 + $0x34] sm:$0xf]
      %v9800 = vld [vmem:[#allocation6 + $0x38] sm:$0x1]
      %v9801 = vld [vmem:[#allocation6 + $0x3c] sm:$0xf]
      %v9802 = vld [vmem:[#allocation6 + $0x40] sm:$0xf]
      %v9803 = vld [vmem:[#allocation6 + $0x44] sm:$0x1]
      %v9804 = vld [vmem:[#allocation6 + $0x48] sm:$0xf]
      %v9805 = vld [vmem:[#allocation6 + $0x4c] sm:$0xf]
      %v9806 = vld [vmem:[#allocation6 + $0x50] sm:$0x1]
      %v9807 = vld [vmem:[#allocation6 + $0x54] sm:$0xf]
      %v9808 = vld [vmem:[#allocation6 + $0x58] sm:$0xf]
      %v9809 = vld [vmem:[#allocation6 + $0x5c] sm:$0x1]
      %v9811 = vshrl.u32 %v9786, 16
      %v9813 = vrot.slane %v9811, 4
      %v9814 = vshll.u32 %v9786, 16
      %v9816 = vrot.slane %v9814, 5
      %v9817 = vor.u32 %v9813, %v9816
      %v9818 = vrot.slane %v9817, 4
      %v9820 = vshll.u32 %v9787, 16
      %v9822 = vrot.slane %v9820, 5
      %v9823 = vsel %vm1298, %v9818, %v9822
      %v9824 = vshrl.u32 %v9787, 16
      %v9826 = vrot.slane %v9824, 4
      %v9827 = vor.u32 %v9826, %v9822
      %v9828 = vrot.slane %v9827, 4
      %v9830 = vshll.u32 %v9788, 16
      %v9832 = vrot.slane %v9830, 5
      %v9833 = vsel %vm1298, %v9828, %v9832
      %v9835 = vshrl.u32 %v9789, 16
      %v9837 = vrot.slane %v9835, 4
      %v9838 = vshll.u32 %v9789, 16
      %v9840 = vrot.slane %v9838, 5
      %v9841 = vor.u32 %v9837, %v9840
      %v9842 = vrot.slane %v9841, 4
      %v9844 = vshll.u32 %v9790, 16
      %v9846 = vrot.slane %v9844, 5
      %v9847 = vsel %vm1298, %v9842, %v9846
      %v9848 = vshrl.u32 %v9790, 16
      %v9850 = vrot.slane %v9848, 4
      %v9851 = vor.u32 %v9850, %v9846
      %v9852 = vrot.slane %v9851, 4
      %v9854 = vshll.u32 %v9791, 16
      %v9856 = vrot.slane %v9854, 5
      %v9857 = vsel %vm1298, %v9852, %v9856
      %v9859 = vshrl.u32 %v9792, 16
      %v9861 = vrot.slane %v9859, 4
      %v9862 = vshll.u32 %v9792, 16
      %v9864 = vrot.slane %v9862, 5
      %v9865 = vor.u32 %v9861, %v9864
      %v9866 = vrot.slane %v9865, 4
      %v9868 = vshll.u32 %v9793, 16
      %v9870 = vrot.slane %v9868, 5
      %v9871 = vsel %vm1298, %v9866, %v9870
      %v9872 = vshrl.u32 %v9793, 16
      %v9874 = vrot.slane %v9872, 4
      %v9875 = vor.u32 %v9874, %v9870
      %v9876 = vrot.slane %v9875, 4
      %v9878 = vshll.u32 %v9794, 16
      %v9880 = vrot.slane %v9878, 5
      %v9881 = vsel %vm1298, %v9876, %v9880
      %v9883 = vshrl.u32 %v9795, 16
      %v9885 = vrot.slane %v9883, 4
      %v9886 = vshll.u32 %v9795, 16
      %v9888 = vrot.slane %v9886, 5
      %v9889 = vor.u32 %v9885, %v9888
      %v9890 = vrot.slane %v9889, 4
      %v9892 = vshll.u32 %v9796, 16
      %v9894 = vrot.slane %v9892, 5
      %v9895 = vsel %vm1298, %v9890, %v9894
      %v9896 = vshrl.u32 %v9796, 16
      %v9898 = vrot.slane %v9896, 4
      %v9899 = vor.u32 %v9898, %v9894
      %v9900 = vrot.slane %v9899, 4
      %v9902 = vshll.u32 %v9797, 16
      %v9904 = vrot.slane %v9902, 5
      %v9905 = vsel %vm1298, %v9900, %v9904
      %v9907 = vshrl.u32 %v9798, 16
      %v9909 = vrot.slane %v9907, 4
      %v9910 = vshll.u32 %v9798, 16
      %v9912 = vrot.slane %v9910, 5
      %v9913 = vor.u32 %v9909, %v9912
      %v9914 = vrot.slane %v9913, 4
      %v9916 = vshll.u32 %v9799, 16
      %v9918 = vrot.slane %v9916, 5
      %v9919 = vsel %vm1298, %v9914, %v9918
      %v9920 = vshrl.u32 %v9799, 16
      %v9922 = vrot.slane %v9920, 4
      %v9923 = vor.u32 %v9922, %v9918
      %v9924 = vrot.slane %v9923, 4
      %v9926 = vshll.u32 %v9800, 16
      %v9928 = vrot.slane %v9926, 5
      %v9929 = vsel %vm1298, %v9924, %v9928
      %v9931 = vshrl.u32 %v9801, 16
      %v9933 = vrot.slane %v9931, 4
      %v9934 = vshll.u32 %v9801, 16
      %v9936 = vrot.slane %v9934, 5
      %v9937 = vor.u32 %v9933, %v9936
      %v9938 = vrot.slane %v9937, 4
      %v9940 = vshll.u32 %v9802, 16
      %v9942 = vrot.slane %v9940, 5
      %v9943 = vsel %vm1298, %v9938, %v9942
      %v9944 = vshrl.u32 %v9802, 16
      %v9946 = vrot.slane %v9944, 4
      %v9947 = vor.u32 %v9946, %v9942
      %v9948 = vrot.slane %v9947, 4
      %v9950 = vshll.u32 %v9803, 16
      %v9952 = vrot.slane %v9950, 5
      %v9953 = vsel %vm1298, %v9948, %v9952
      %v9955 = vshrl.u32 %v9804, 16
      %v9957 = vrot.slane %v9955, 4
      %v9958 = vshll.u32 %v9804, 16
      %v9960 = vrot.slane %v9958, 5
      %v9961 = vor.u32 %v9957, %v9960
      %v9962 = vrot.slane %v9961, 4
      %v9964 = vshll.u32 %v9805, 16
      %v9966 = vrot.slane %v9964, 5
      %v9967 = vsel %vm1298, %v9962, %v9966
      %v9968 = vshrl.u32 %v9805, 16
      %v9970 = vrot.slane %v9968, 4
      %v9971 = vor.u32 %v9970, %v9966
      %v9972 = vrot.slane %v9971, 4
      %v9974 = vshll.u32 %v9806, 16
      %v9976 = vrot.slane %v9974, 5
      %v9977 = vsel %vm1298, %v9972, %v9976
      %v9979 = vshrl.u32 %v9807, 16
      %v9981 = vrot.slane %v9979, 4
      %v9982 = vshll.u32 %v9807, 16
      %v9984 = vrot.slane %v9982, 5
      %v9985 = vor.u32 %v9981, %v9984
      %v9986 = vrot.slane %v9985, 4
      %v9988 = vshll.u32 %v9808, 16
      %v9990 = vrot.slane %v9988, 5
      %v9991 = vsel %vm1298, %v9986, %v9990
      %v9992 = vshrl.u32 %v9808, 16
      %v9994 = vrot.slane %v9992, 4
      %v9995 = vor.u32 %v9994, %v9990
      %v9996 = vrot.slane %v9995, 4
      %v9998 = vshll.u32 %v9809, 16
      %v10000 = vrot.slane %v9998, 5
      %v10001 = vsel %vm1298, %v9996, %v10000
      %s10002 = scalar_lea.vmem %s13, 64
      %v10003 = vld [vmem:[%s10002] sm:$0xf]
      %v10004 = vld [vmem:[%s10002 + $0x4] sm:$0xf]
      %v10005 = vld [vmem:[%s10002 + $0x8] sm:$0xf]
      %v10006 = vld [vmem:[%s10002 + $0xc] sm:$0xf]
      %v10007 = vld [vmem:[%s10002 + $0x10] sm:$0xf]
      %v10008 = vld [vmem:[%s10002 + $0x14] sm:$0xf]
      %v10009 = vld [vmem:[%s10002 + $0x18] sm:$0xf]
      %v10010 = vld [vmem:[%s10002 + $0x1c] sm:$0xf]
      %v10011 = vld [vmem:[%s10002 + $0x20] sm:$0xf]
      %v10012 = vld [vmem:[%s10002 + $0x24] sm:$0xf]
      %v10013 = vld [vmem:[%s10002 + $0x28] sm:$0xf]
      %v10014 = vld [vmem:[%s10002 + $0x2c] sm:$0xf]
      %v10015 = vld [vmem:[%s10002 + $0x30] sm:$0xf]
      %v10016 = vld [vmem:[%s10002 + $0x34] sm:$0xf]
      %v10017 = vld [vmem:[%s10002 + $0x38] sm:$0xf]
      %v10018 = vld [vmem:[%s10002 + $0x3c] sm:$0xf]
      %v10019 = vunpack.c.l.b16 %v9823
      %v10020 = vunpack.c.l.b16 %v9833
      %v10021 = vunpack.c.l.b16 %v9847
      %v10022 = vunpack.c.l.b16 %v9857
      %v10023 = vunpack.c.l.b16 %v9871
      %v10024 = vunpack.c.l.b16 %v9881
      %v10025 = vunpack.c.l.b16 %v9895
      %v10026 = vunpack.c.l.b16 %v9905
      %v10027 = vunpack.c.l.b16 %v9919
      %v10028 = vunpack.c.l.b16 %v9929
      %v10029 = vunpack.c.l.b16 %v9943
      %v10030 = vunpack.c.l.b16 %v9953
      %v10031 = vunpack.c.l.b16 %v9967
      %v10032 = vunpack.c.l.b16 %v9977
      %v10033 = vunpack.c.l.b16 %v9991
      %v10034 = vunpack.c.l.b16 %v10001
      %v10035 = vpack.c.b16 %v10020, %v10019
      %v10036 = vpack.c.b16 %v10022, %v10021
      %v10037 = vpack.c.b16 %v10024, %v10023
      %v10038 = vpack.c.b16 %v10026, %v10025
      %v10039 = vpack.c.b16 %v10028, %v10027
      %v10040 = vpack.c.b16 %v10030, %v10029
      %v10041 = vpack.c.b16 %v10032, %v10031
      %v10042 = vpack.c.b16 %v10034, %v10033
      %v10067 = vunpack.c.l.b16 %v10003
      %v10068 = vunpack.c.l.b16 %v10004
      %v10069 = vunpack.c.l.b16 %v10005
      %v10070 = vunpack.c.l.b16 %v10006
      %v10071 = vunpack.c.l.b16 %v10007
      %v10072 = vunpack.c.l.b16 %v10008
      %v10073 = vunpack.c.l.b16 %v10009
      %v10074 = vunpack.c.l.b16 %v10010
      %v10075 = vunpack.c.l.b16 %v10011
      %v10076 = vunpack.c.l.b16 %v10012
      %v10077 = vunpack.c.l.b16 %v10013
      %v10078 = vunpack.c.l.b16 %v10014
      %v10079 = vunpack.c.l.b16 %v10015
      %v10080 = vunpack.c.l.b16 %v10016
      %v10081 = vunpack.c.l.b16 %v10017
      %v10082 = vunpack.c.l.b16 %v10018
      %v10083 = vpack.c.b16 %v10068, %v10067
      %v10084 = vpack.c.b16 %v10070, %v10069
      %v10085 = vpack.c.b16 %v10072, %v10071
      %v10086 = vpack.c.b16 %v10074, %v10073
      %v10087 = vpack.c.b16 %v10076, %v10075
      %v10088 = vpack.c.b16 %v10078, %v10077
      %v10089 = vpack.c.b16 %v10080, %v10079
      %v10090 = vpack.c.b16 %v10082, %v10081
      %10099 = vmatprep.subr.bf16.mxu0 0
      %10100 = vmatpush1.bf16.msra.mxu0 %v10083
      %10101 = vmatprep.subr.bf16.mxu0 0
      %10102 = vmatpush1.bf16.msra.mxu0 %v10084
      %10103 = vmatprep.subr.bf16.mxu0 0
      %10104 = vmatpush1.bf16.msra.mxu0 %v10085
      %10105 = vmatprep.subr.bf16.mxu0 0
      %10106 = vmatpush1.bf16.msra.mxu0 %v10086
      %10107 = vmatprep.subr.bf16.mxu0 0
      %10108 = vmatpush1.bf16.msra.mxu0 %v10087
      %10109 = vmatprep.subr.bf16.mxu0 0
      %10110 = vmatpush1.bf16.msra.mxu0 %v10088
      %10111 = vmatprep.subr.bf16.mxu0 0
      %10112 = vmatpush1.bf16.msra.mxu0 %v10089
      %10113 = vmatprep.subr.bf16.mxu0 0
      %10114 = vmatpush1.bf16.msra.mxu0 %v10090
      %10115 = vmatprep.subr.bf16.mxu0 0
      %10116 = vmatpush1.bf16.msra.mxu0 0
      %10117 = vmatprep.subr.bf16.mxu0 0
      %10118 = vmatpush1.bf16.msra.mxu0 0
      %10119 = vmatprep.subr.bf16.mxu0 0
      %10120 = vmatpush1.bf16.msra.mxu0 0
      %10121 = vmatprep.subr.bf16.mxu0 0
      %10122 = vmatpush1.bf16.msra.mxu0 0
      %10123 = vmatprep.subr.bf16.mxu0 0
      %10124 = vmatpush1.bf16.msra.mxu0 0
      %10125 = vmatprep.subr.bf16.mxu0 0
      %10126 = vmatpush1.bf16.msra.mxu0 0
      %10127 = vmatprep.subr.bf16.mxu0 0
      %10128 = vmatpush1.bf16.msra.mxu0 0
      %10129 = vmatprep.subr.bf16.mxu0 0
      %10130 = vmatpush1.bf16.msra.mxu0 0
      %10131 = vmatprep.mubr.bf16.mxu0 0
      %10132 = vmatmul.mubr.bf16.gmra.mrb[0].mxu0 %v10035
      %v10133 = vpop.f32.mrb[0].mxu0
      %v10134 = vadd.f32 0.0, %v10133
      %v10135 = vpop.f32.mrb[0].mxu0
      %v10136 = vpop.f32.mrb[0].mxu0
      %v10137 = vadd.f32 0.0, %v10136
      %v10138 = vpop.f32.mrb[0].mxu0
      %10139 = vmatprep.mubr.bf16.mxu0 0
      %10140 = vmatmul.mubr.bf16.gmra.mrb[0].mxu0 %v10036
      %v10141 = vpop.f32.mrb[0].mxu0
      %v10142 = vadd.f32 0.0, %v10141
      %v10143 = vpop.f32.mrb[0].mxu0
      %v10144 = vpop.f32.mrb[0].mxu0
      %v10145 = vadd.f32 0.0, %v10144
      %v10146 = vpop.f32.mrb[0].mxu0
      %10147 = vmatprep.mubr.bf16.mxu0 0
      %10148 = vmatmul.mubr.bf16.gmra.mrb[0].mxu0 %v10037
      %v10149 = vpop.f32.mrb[0].mxu0
      %v10150 = vadd.f32 0.0, %v10149
      %v10151 = vpop.f32.mrb[0].mxu0
      %v10152 = vpop.f32.mrb[0].mxu0
      %v10153 = vadd.f32 0.0, %v10152
      %v10154 = vpop.f32.mrb[0].mxu0
      %10155 = vmatprep.mubr.bf16.mxu0 0
      %10156 = vmatmul.mubr.bf16.gmra.mrb[0].mxu0 %v10038
      %v10157 = vpop.f32.mrb[0].mxu0
      %v10158 = vadd.f32 0.0, %v10157
      %v10159 = vpop.f32.mrb[0].mxu0
      %v10160 = vpop.f32.mrb[0].mxu0
      %v10161 = vadd.f32 0.0, %v10160
      %v10162 = vpop.f32.mrb[0].mxu0
      %10163 = vmatprep.mubr.bf16.mxu0 0
      %10164 = vmatmul.mubr.bf16.gmra.mrb[0].mxu0 %v10039
      %v10165 = vpop.f32.mrb[0].mxu0
      %v10166 = vadd.f32 0.0, %v10165
      %v10167 = vpop.f32.mrb[0].mxu0
      %v10168 = vpop.f32.mrb[0].mxu0
      %v10169 = vadd.f32 0.0, %v10168
      %v10170 = vpop.f32.mrb[0].mxu0
      %10171 = vmatprep.mubr.bf16.mxu0 0
      %10172 = vmatmul.mubr.bf16.gmra.mrb[0].mxu0 %v10040
      %v10173 = vpop.f32.mrb[0].mxu0
      %v10174 = vadd.f32 0.0, %v10173
      %v10175 = vpop.f32.mrb[0].mxu0
      %v10176 = vpop.f32.mrb[0].mxu0
      %v10177 = vadd.f32 0.0, %v10176
      %v10178 = vpop.f32.mrb[0].mxu0
      %10179 = vmatprep.mubr.bf16.mxu0 0
      %10180 = vmatmul.mubr.bf16.gmra.mrb[0].mxu0 %v10041
      %v10181 = vpop.f32.mrb[0].mxu0
      %v10182 = vadd.f32 0.0, %v10181
      %v10183 = vpop.f32.mrb[0].mxu0
      %v10184 = vpop.f32.mrb[0].mxu0
      %v10185 = vadd.f32 0.0, %v10184
      %v10186 = vpop.f32.mrb[0].mxu0
      %10187 = vmatprep.mubr.bf16.mxu0 0
      %10188 = vmatmul.mubr.bf16.gmra.mrb[0].mxu0 %v10042
      %v10189 = vpop.f32.mrb[0].mxu0
      %v10190 = vadd.f32 0.0, %v10189
      %v10191 = vpop.f32.mrb[0].mxu0
      %v10192 = vpop.f32.mrb[0].mxu0
      %v10193 = vadd.f32 0.0, %v10192
      %v10194 = vpop.f32.mrb[0].mxu0
      %10195 = vdwg.mxu0
      %v10196 = vadd.f32 %v9770, %v10134
      %v10197 = vadd.f32 %v9771, %v10137
      %v10198 = vadd.f32 %v9772, %v10142
      %v10199 = vadd.f32 %v9773, %v10145
      %v10200 = vadd.f32 %v9774, %v10150
      %v10201 = vadd.f32 %v9775, %v10153
      %v10202 = vadd.f32 %v9776, %v10158
      %v10203 = vadd.f32 %v9777, %v10161
      %v10204 = vadd.f32 %v9778, %v10166
      %v10205 = vadd.f32 %v9779, %v10169
      %v10206 = vadd.f32 %v9780, %v10174
      %v10207 = vadd.f32 %v9781, %v10177
      %v10208 = vadd.f32 %v9782, %v10182
      %v10209 = vadd.f32 %v9783, %v10185
      %v10210 = vadd.f32 %v9784, %v10190
      %v10211 = vadd.f32 %v9785, %v10193
      %v10212 = vld [vmem:[#allocation6] sm:$0xe]
      %v10213 = vld [vmem:[#allocation6 + $0xc] sm:$0xe]
      %v10214 = vld [vmem:[#allocation6 + $0x18] sm:$0xe]
      %v10215 = vld [vmem:[#allocation6 + $0x24] sm:$0xe]
      %v10216 = vld [vmem:[#allocation6 + $0x30] sm:$0xe]
      %v10217 = vld [vmem:[#allocation6 + $0x3c] sm:$0xe]
      %v10218 = vld [vmem:[#allocation6 + $0x48] sm:$0xe]
      %v10219 = vld [vmem:[#allocation6 + $0x54] sm:$0xe]
      %v10244 = vrot.slane %v10212, 5
      %v10245 = vrot.slane %v10244, 4
      %v10246 = vrot.slane %v9787, 5
      %v10247 = vsel %vm1731, %v10245, %v10246
      %v10248 = vrot.slane %v10246, 4
      %v10249 = vrot.slane %v9788, 5
      %v10250 = vsel %vm1731, %v10248, %v10249
      %v10251 = vrot.slane %v10213, 5
      %v10252 = vrot.slane %v10251, 4
      %v10253 = vrot.slane %v9790, 5
      %v10254 = vsel %vm1731, %v10252, %v10253
      %v10255 = vrot.slane %v10253, 4
      %v10256 = vrot.slane %v9791, 5
      %v10257 = vsel %vm1731, %v10255, %v10256
      %v10258 = vrot.slane %v10214, 5
      %v10259 = vrot.slane %v10258, 4
      %v10260 = vrot.slane %v9793, 5
      %v10261 = vsel %vm1731, %v10259, %v10260
      %v10262 = vrot.slane %v10260, 4
      %v10263 = vrot.slane %v9794, 5
      %v10264 = vsel %vm1731, %v10262, %v10263
      %v10265 = vrot.slane %v10215, 5
      %v10266 = vrot.slane %v10265, 4
      %v10267 = vrot.slane %v9796, 5
      %v10268 = vsel %vm1731, %v10266, %v10267
      %v10269 = vrot.slane %v10267, 4
      %v10270 = vrot.slane %v9797, 5
      %v10271 = vsel %vm1731, %v10269, %v10270
      %v10272 = vrot.slane %v10216, 5
      %v10273 = vrot.slane %v10272, 4
      %v10274 = vrot.slane %v9799, 5
      %v10275 = vsel %vm1731, %v10273, %v10274
      %v10276 = vrot.slane %v10274, 4
      %v10277 = vrot.slane %v9800, 5
      %v10278 = vsel %vm1731, %v10276, %v10277
      %v10279 = vrot.slane %v10217, 5
      %v10280 = vrot.slane %v10279, 4
      %v10281 = vrot.slane %v9802, 5
      %v10282 = vsel %vm1731, %v10280, %v10281
      %v10283 = vrot.slane %v10281, 4
      %v10284 = vrot.slane %v9803, 5
      %v10285 = vsel %vm1731, %v10283, %v10284
      %v10286 = vrot.slane %v10218, 5
      %v10287 = vrot.slane %v10286, 4
      %v10288 = vrot.slane %v9805, 5
      %v10289 = vsel %vm1731, %v10287, %v10288
      %v10290 = vrot.slane %v10288, 4
      %v10291 = vrot.slane %v9806, 5
      %v10292 = vsel %vm1731, %v10290, %v10291
      %v10293 = vrot.slane %v10219, 5
      %v10294 = vrot.slane %v10293, 4
      %v10295 = vrot.slane %v9808, 5
      %v10296 = vsel %vm1731, %v10294, %v10295
      %v10297 = vrot.slane %v10295, 4
      %v10298 = vrot.slane %v9809, 5
      %v10299 = vsel %vm1731, %v10297, %v10298
      %s10300 = scalar_lea.vmem %s13, 128
      %v10301 = vld [vmem:[%s10300] sm:$0xf]
      %v10302 = vld [vmem:[%s10300 + $0x4] sm:$0xf]
      %v10303 = vld [vmem:[%s10300 + $0x8] sm:$0xf]
      %v10304 = vld [vmem:[%s10300 + $0xc] sm:$0xf]
      %v10305 = vld [vmem:[%s10300 + $0x10] sm:$0xf]
      %v10306 = vld [vmem:[%s10300 + $0x14] sm:$0xf]
      %v10307 = vld [vmem:[%s10300 + $0x18] sm:$0xf]
      %v10308 = vld [vmem:[%s10300 + $0x1c] sm:$0xf]
      %v10309 = vld [vmem:[%s10300 + $0x20] sm:$0xf]
      %v10310 = vld [vmem:[%s10300 + $0x24] sm:$0xf]
      %v10311 = vld [vmem:[%s10300 + $0x28] sm:$0xf]
      %v10312 = vld [vmem:[%s10300 + $0x2c] sm:$0xf]
      %v10313 = vld [vmem:[%s10300 + $0x30] sm:$0xf]
      %v10314 = vld [vmem:[%s10300 + $0x34] sm:$0xf]
      %v10315 = vld [vmem:[%s10300 + $0x38] sm:$0xf]
      %v10316 = vld [vmem:[%s10300 + $0x3c] sm:$0xf]
      %v10317 = vunpack.c.l.b16 %v10247
      %v10318 = vunpack.c.l.b16 %v10250
      %v10319 = vunpack.c.l.b16 %v10254
      %v10320 = vunpack.c.l.b16 %v10257
      %v10321 = vunpack.c.l.b16 %v10261
      %v10322 = vunpack.c.l.b16 %v10264
      %v10323 = vunpack.c.l.b16 %v10268
      %v10324 = vunpack.c.l.b16 %v10271
      %v10325 = vunpack.c.l.b16 %v10275
      %v10326 = vunpack.c.l.b16 %v10278
      %v10327 = vunpack.c.l.b16 %v10282
      %v10328 = vunpack.c.l.b16 %v10285
      %v10329 = vunpack.c.l.b16 %v10289
      %v10330 = vunpack.c.l.b16 %v10292
      %v10331 = vunpack.c.l.b16 %v10296
      %v10332 = vunpack.c.l.b16 %v10299
      %v10333 = vpack.c.b16 %v10318, %v10317
      %v10334 = vpack.c.b16 %v10320, %v10319
      %v10335 = vpack.c.b16 %v10322, %v10321
      %v10336 = vpack.c.b16 %v10324, %v10323
      %v10337 = vpack.c.b16 %v10326, %v10325
      %v10338 = vpack.c.b16 %v10328, %v10327
      %v10339 = vpack.c.b16 %v10330, %v10329
      %v10340 = vpack.c.b16 %v10332, %v10331
      %v10365 = vunpack.c.l.b16 %v10301
      %v10366 = vunpack.c.l.b16 %v10302
      %v10367 = vunpack.c.l.b16 %v10303
      %v10368 = vunpack.c.l.b16 %v10304
      %v10369 = vunpack.c.l.b16 %v10305
      %v10370 = vunpack.c.l.b16 %v10306
      %v10371 = vunpack.c.l.b16 %v10307
      %v10372 = vunpack.c.l.b16 %v10308
      %v10373 = vunpack.c.l.b16 %v10309
      %v10374 = vunpack.c.l.b16 %v10310
      %v10375 = vunpack.c.l.b16 %v10311
      %v10376 = vunpack.c.l.b16 %v10312
      %v10377 = vunpack.c.l.b16 %v10313
      %v10378 = vunpack.c.l.b16 %v10314
      %v10379 = vunpack.c.l.b16 %v10315
      %v10380 = vunpack.c.l.b16 %v10316
      %v10381 = vpack.c.b16 %v10366, %v10365
      %v10382 = vpack.c.b16 %v10368, %v10367
      %v10383 = vpack.c.b16 %v10370, %v10369
      %v10384 = vpack.c.b16 %v10372, %v10371
      %v10385 = vpack.c.b16 %v10374, %v10373
      %v10386 = vpack.c.b16 %v10376, %v10375
      %v10387 = vpack.c.b16 %v10378, %v10377
      %v10388 = vpack.c.b16 %v10380, %v10379
      %10397 = vmatprep.subr.bf16.mxu0 0
      %10398 = vmatpush1.bf16.msra.mxu0 %v10381
      %10399 = vmatprep.subr.bf16.mxu0 0
      %10400 = vmatpush1.bf16.msra.mxu0 %v10382
      %10401 = vmatprep.subr.bf16.mxu0 0
      %10402 = vmatpush1.bf16.msra.mxu0 %v10383
      %10403 = vmatprep.subr.bf16.mxu0 0
      %10404 = vmatpush1.bf16.msra.mxu0 %v10384
      %10405 = vmatprep.subr.bf16.mxu0 0
      %10406 = vmatpush1.bf16.msra.mxu0 %v10385
      %10407 = vmatprep.subr.bf16.mxu0 0
      %10408 = vmatpush1.bf16.msra.mxu0 %v10386
      %10409 = vmatprep.subr.bf16.mxu0 0
      %10410 = vmatpush1.bf16.msra.mxu0 %v10387
      %10411 = vmatprep.subr.bf16.mxu0 0
      %10412 = vmatpush1.bf16.msra.mxu0 %v10388
      %10413 = vmatprep.subr.bf16.mxu0 0
      %10414 = vmatpush1.bf16.msra.mxu0 0
      %10415 = vmatprep.subr.bf16.mxu0 0
      %10416 = vmatpush1.bf16.msra.mxu0 0
      %10417 = vmatprep.subr.bf16.mxu0 0
      %10418 = vmatpush1.bf16.msra.mxu0 0
      %10419 = vmatprep.subr.bf16.mxu0 0
      %10420 = vmatpush1.bf16.msra.mxu0 0
      %10421 = vmatprep.subr.bf16.mxu0 0
      %10422 = vmatpush1.bf16.msra.mxu0 0
      %10423 = vmatprep.subr.bf16.mxu0 0
      %10424 = vmatpush1.bf16.msra.mxu0 0
      %10425 = vmatprep.subr.bf16.mxu0 0
      %10426 = vmatpush1.bf16.msra.mxu0 0
      %10427 = vmatprep.subr.bf16.mxu0 0
      %10428 = vmatpush1.bf16.msra.mxu0 0
      %10429 = vmatprep.mubr.bf16.mxu0 0
      %10430 = vmatmul.mubr.bf16.gmra.mrb[0].mxu0 %v10333
      %v10431 = vpop.f32.mrb[0].mxu0
      %v10432 = vadd.f32 0.0, %v10431
      %v10433 = vpop.f32.mrb[0].mxu0
      %v10434 = vpop.f32.mrb[0].mxu0
      %v10435 = vadd.f32 0.0, %v10434
      %v10436 = vpop.f32.mrb[0].mxu0
      %10437 = vmatprep.mubr.bf16.mxu0 0
      %10438 = vmatmul.mubr.bf16.gmra.mrb[0].mxu0 %v10334
      %v10439 = vpop.f32.mrb[0].mxu0
      %v10440 = vadd.f32 0.0, %v10439
      %v10441 = vpop.f32.mrb[0].mxu0
      %v10442 = vpop.f32.mrb[0].mxu0
      %v10443 = vadd.f32 0.0, %v10442
      %v10444 = vpop.f32.mrb[0].mxu0
      %10445 = vmatprep.mubr.bf16.mxu0 0
      %10446 = vmatmul.mubr.bf16.gmra.mrb[0].mxu0 %v10335
      %v10447 = vpop.f32.mrb[0].mxu0
      %v10448 = vadd.f32 0.0, %v10447
      %v10449 = vpop.f32.mrb[0].mxu0
      %v10450 = vpop.f32.mrb[0].mxu0
      %v10451 = vadd.f32 0.0, %v10450
      %v10452 = vpop.f32.mrb[0].mxu0
      %10453 = vmatprep.mubr.bf16.mxu0 0
      %10454 = vmatmul.mubr.bf16.gmra.mrb[0].mxu0 %v10336
      %v10455 = vpop.f32.mrb[0].mxu0
      %v10456 = vadd.f32 0.0, %v10455
      %v10457 = vpop.f32.mrb[0].mxu0
      %v10458 = vpop.f32.mrb[0].mxu0
      %v10459 = vadd.f32 0.0, %v10458
      %v10460 = vpop.f32.mrb[0].mxu0
      %10461 = vmatprep.mubr.bf16.mxu0 0
      %10462 = vmatmul.mubr.bf16.gmra.mrb[0].mxu0 %v10337
      %v10463 = vpop.f32.mrb[0].mxu0
      %v10464 = vadd.f32 0.0, %v10463
      %v10465 = vpop.f32.mrb[0].mxu0
      %v10466 = vpop.f32.mrb[0].mxu0
      %v10467 = vadd.f32 0.0, %v10466
      %v10468 = vpop.f32.mrb[0].mxu0
      %10469 = vmatprep.mubr.bf16.mxu0 0
      %10470 = vmatmul.mubr.bf16.gmra.mrb[0].mxu0 %v10338
      %v10471 = vpop.f32.mrb[0].mxu0
      %v10472 = vadd.f32 0.0, %v10471
      %v10473 = vpop.f32.mrb[0].mxu0
      %v10474 = vpop.f32.mrb[0].mxu0
      %v10475 = vadd.f32 0.0, %v10474
      %v10476 = vpop.f32.mrb[0].mxu0
      %10477 = vmatprep.mubr.bf16.mxu0 0
      %10478 = vmatmul.mubr.bf16.gmra.mrb[0].mxu0 %v10339
      %v10479 = vpop.f32.mrb[0].mxu0
      %v10480 = vadd.f32 0.0, %v10479
      %v10481 = vpop.f32.mrb[0].mxu0
      %v10482 = vpop.f32.mrb[0].mxu0
      %v10483 = vadd.f32 0.0, %v10482
      %v10484 = vpop.f32.mrb[0].mxu0
      %10485 = vmatprep.mubr.bf16.mxu0 0
      %10486 = vmatmul.mubr.bf16.gmra.mrb[0].mxu0 %v10340
      %v10487 = vpop.f32.mrb[0].mxu0
      %v10488 = vadd.f32 0.0, %v10487
      %v10489 = vpop.f32.mrb[0].mxu0
      %v10490 = vpop.f32.mrb[0].mxu0
      %v10491 = vadd.f32 0.0, %v10490
      %v10492 = vpop.f32.mrb[0].mxu0
      %10493 = vdwg.mxu0
      %v10494 = vadd.f32 %v10196, %v10432
      %v10495 = vadd.f32 %v10197, %v10435
      %v10496 = vadd.f32 %v10198, %v10440
      %v10497 = vadd.f32 %v10199, %v10443
      %v10498 = vadd.f32 %v10200, %v10448
      %v10499 = vadd.f32 %v10201, %v10451
      %v10500 = vadd.f32 %v10202, %v10456
      %v10501 = vadd.f32 %v10203, %v10459
      %v10502 = vadd.f32 %v10204, %v10464
      %v10503 = vadd.f32 %v10205, %v10467
      %v10504 = vadd.f32 %v10206, %v10472
      %v10505 = vadd.f32 %v10207, %v10475
      %v10506 = vadd.f32 %v10208, %v10480
      %v10507 = vadd.f32 %v10209, %v10483
      %v10508 = vadd.f32 %v10210, %v10488
      %v10509 = vadd.f32 %v10211, %v10491
      %v10510 = vmax.f32 %v10494, 0.0
      %v10511 = vmax.f32 %v10495, 0.0
      %v10512 = vmax.f32 %v10496, 0.0
      %v10513 = vmax.f32 %v10497, 0.0
      %v10514 = vmax.f32 %v10498, 0.0
      %v10515 = vmax.f32 %v10499, 0.0
      %v10516 = vmax.f32 %v10500, 0.0
      %v10517 = vmax.f32 %v10501, 0.0
      %v10518 = vmax.f32 %v10502, 0.0
      %v10519 = vmax.f32 %v10503, 0.0
      %v10520 = vmax.f32 %v10504, 0.0
      %v10521 = vmax.f32 %v10505, 0.0
      %v10522 = vmax.f32 %v10506, 0.0
      %v10523 = vmax.f32 %v10507, 0.0
      %v10524 = vmax.f32 %v10508, 0.0
      %v10525 = vmax.f32 %v10509, 0.0
      %10526 = vst.msk [vmem:[%s501] sm:$0xff] %vm1102, %v10510
      %10527 = vst.msk [vmem:[%s501 + $0x8] sm:$0xff] %vm1102, %v10511
      %10528 = vst.msk [vmem:[%s501 + $0x10] sm:$0xff] %vm1102, %v10512
      %10529 = vst.msk [vmem:[%s501 + $0x18] sm:$0xff] %vm1102, %v10513
      %10530 = vst.msk [vmem:[%s501 + $0x20] sm:$0xff] %vm1102, %v10514
      %10531 = vst.msk [vmem:[%s501 + $0x28] sm:$0xff] %vm1102, %v10515
      %10532 = vst.msk [vmem:[%s501 + $0x30] sm:$0xff] %vm1102, %v10516
      %10533 = vst.msk [vmem:[%s501 + $0x38] sm:$0xff] %vm1102, %v10517
      %10534 = vst.msk [vmem:[%s501 + $0x40] sm:$0xff] %vm1102, %v10518
      %10535 = vst.msk [vmem:[%s501 + $0x48] sm:$0xff] %vm1102, %v10519
      %10536 = vst.msk [vmem:[%s501 + $0x50] sm:$0xff] %vm1102, %v10520
      %10537 = vst.msk [vmem:[%s501 + $0x58] sm:$0xff] %vm1102, %v10521
      %10538 = vst.msk [vmem:[%s501 + $0x60] sm:$0xff] %vm1102, %v10522
      %10539 = vst.msk [vmem:[%s501 + $0x68] sm:$0xff] %vm1102, %v10523
      %10540 = vst.msk [vmem:[%s501 + $0x70] sm:$0xff] %vm1102, %v10524
      %10541 = vst.msk [vmem:[%s501 + $0x78] sm:$0xff] %vm1102, %v10525
      %s10542 = smul.u32 8, %s26
      %p10543 = scmp.lt.s32.totalorder %s10542, 15
      %s10544 = scalar_select %p10543, %s10542, 15
      %s10545 = smul.addr %s10544, 2
      %s10546 = smul.addr %s10545, 8
      %s10547 = scalar_lea.vmem %s15, %s10546
      // Predicated region
      $region81: #{autoencoder_fused.1} parent=79 // pred_check
        %p10548 = pneg %p364
      $region82: #{autoencoder_fused.1} parent=79 // pred_check_branch
        %10550 = sbr.rel (%p10548) target = $region84
      $region83: #{autoencoder_fused.1} parent=79 // pred_region
        %s10551 = smul.u32 8, %s26
      $region84: #{autoencoder_fused.1} parent=79 // pred_fallthru
        _
    $region80: #{autoencoder_fused.1} parent=5 // pred_fallthru
      _
    %p10552 = scmp.le.s32.totalorder 2, %s21
    // Predicated region
    $region85: #{autoencoder_fused.1} parent=5 // pred_check
      %p10553 = pneg %p10552
    $region86: #{autoencoder_fused.1} parent=5 // pred_check_branch
      %10555 = sbr.rel (%p10553) target = $region88
    $region87: #{autoencoder_fused.1} parent=5 // pred_region
      %s10556 = ssub.s32 %s21, 2
      // Predicated region
      $region89: #{autoencoder_fused.1} parent=87 // pred_check
        %p10557 = pneg %p370
      $region90: #{autoencoder_fused.1} parent=87 // pred_check_branch
        %10559 = sbr.rel (%p10557) target = $region92
      $region91: #{autoencoder_fused.1} parent=87 // pred_region
        %s10560 = smul.u32 8, %s27
        %p10561 = scmp.lt.s32.totalorder %s10560, 15
        %s10562 = scalar_select %p10561, %s10560, 15
        %s10563 = smul.addr %s10562, 2
        %s10564 = smul.addr %s10563, 8
        %s10565 = scalar_lea.vmem %s15, %s10564
      $region92: #{autoencoder_fused.1} parent=87 // pred_fallthru
        _
    $region88: #{autoencoder_fused.1} parent=5 // pred_fallthru
      _
  $region6: #{autoencoder_fused.1} parent=0 // loop_footer
    %s25 = sadd.s32 1, %s21
  $region7: #{autoencoder_fused.1} parent=0 // loop_footer_branch
    %20 = sbr.rel target = $region3
  $region8: #{autoencoder_fused.1} parent=0 // loop_exit
    _

</llo_original>
